<compile_context>
chip_gen: v7x
topology: tpu7x:2x2x1
jax: 0.10.0
libtpu: 0.0.40
codegen_flags: <defaults>
</compile_context>

<pallas_src>
import jax
import jax.numpy as jnp
from jax import lax
from jax.experimental import pallas as pl
from jax.experimental.pallas import tpu as pltpu


_TAPS = [(kd, kh, kw) for kd in (-1, 0, 1) for kh in (-1, 0, 1) for kw in (-1, 0, 1)]


def _make_simple_rb_kernel(C, D, H, W):
    M = D * H * W
    HW = H * W

    def conv3d(inp, w, mask_ref):
        """3x3x3 SAME conv: inp (C_in, M) value, w (C_out, 27*C_in) value
        (BN scale already folded in), mask_ref (27, M) 0/1 boundary masks."""
        acc = jnp.zeros((C, M), jnp.float32)
        for k, (kd, kh, kw) in enumerate(_TAPS):
            off = kd * HW + kh * W + kw
            # shifted[:, m] == inp[:, m + off]  (wrap-around; wraps masked out below)
            shifted = inp if off == 0 else pltpu.roll(inp, (-off) % M, axis=1)
            if off != 0:
                # zero taps whose neighbour lies outside the volume (SAME padding)
                shifted = shifted * mask_ref[pl.ds(k, 1), :]
            base = k * C
            for ci in range(C):
                # (C_out, 1) * (1, M) broadcast-FMA on the VPU: with C=4 the MXU
                # would be <0.1% utilized and need relayouts / reduced precision.
                acc = acc + w[:, base + ci:base + ci + 1] * shifted[ci:ci + 1, :]
        return acc

    def kernel(x_ref, w1_ref, b1_ref, w2_ref, b2_ref, mask_ref, o_ref):
        x = x_ref[0]                                              # (C, M), lane-dense
        h = conv3d(x, w1_ref[...], mask_ref) + b1_ref[...]        # conv1 + folded BN1
        h = jnp.maximum(h, 0.0)                                   # ReLU (h stays on-chip)
        y = conv3d(h, w2_ref[...], mask_ref) + b2_ref[...] + x    # conv2 + BN2 + residual
        o_ref[0] = jnp.maximum(y, 0.0)                            # final ReLU

    return kernel


def _tap_boundary_masks(D, H, W):
    """(27, D*H*W) f32 0/1: mask[k, m]==1 iff tap k's neighbour of position m
    lies inside the (D, H, W) volume (implements the SAME zero padding)."""
    d_i, h_i, w_i = jnp.meshgrid(jnp.arange(D), jnp.arange(H), jnp.arange(W),
                                 indexing="ij")
    rows = []
    for kd, kh, kw in _TAPS:
        ok = ((d_i + kd >= 0) & (d_i + kd < D) &
              (h_i + kh >= 0) & (h_i + kh < H) &
              (w_i + kw >= 0) & (w_i + kw < W))
        rows.append(ok.reshape(-1))
    return jnp.stack(rows).astype(jnp.float32)


def simple_rb_forward(x_ncdhw, w1_2d, b1, w2_2d, b2, tap_masks):
    """x_ncdhw: (N, C, D, H, W) f32; w*_2d: (C, 27*C) scale-folded conv weights;
    b*: (C, 1) folded BN bias; tap_masks: (27, D*H*W) 0/1."""
    N, C, D, H, W = x_ncdhw.shape
    M = D * H * W
    x2d = x_ncdhw.reshape(N, C, M).astype(jnp.float32)   # free reshape, no transpose

    kernel = _make_simple_rb_kernel(C, D, H, W)
    out = pl.pallas_call(
        kernel,
        out_shape=jax.ShapeDtypeStruct((N, C, M), jnp.float32),
        grid_spec=pltpu.PrefetchScalarGridSpec(
            num_scalar_prefetch=0,
            grid=(N,),
            in_specs=[
                pl.BlockSpec((1, C, M), lambda n: (n, 0, 0)),    # x, one batch / step
                pl.BlockSpec((C, 27 * C), lambda n: (0, 0)),     # w1 (VMEM-resident)
                pl.BlockSpec((C, 1), lambda n: (0, 0)),          # b1
                pl.BlockSpec((C, 27 * C), lambda n: (0, 0)),     # w2
                pl.BlockSpec((C, 1), lambda n: (0, 0)),          # b2
                pl.BlockSpec((27, M), lambda n: (0, 0)),         # boundary masks
            ],
            out_specs=pl.BlockSpec((1, C, M), lambda n: (n, 0, 0)),
        ),
        compiler_params=pltpu.CompilerParams(
            dimension_semantics=("parallel",)),
    )(x2d, w1_2d, b1, w2_2d, b2, tap_masks)
    return out.reshape(N, C, D, H, W)


def init_params(key, C, eps=1e-5):
    """Deterministic synthetic parameters matching SimpleRB's shapes."""
    ks = jax.random.split(key, 4)

    def conv_w(k):
        # PyTorch Conv3d weight layout: (C_out, C_in, kD, kH, kW), bias=False
        return 0.1 * jax.random.normal(k, (C, C, 3, 3, 3), jnp.float32)

    def bn_fold(k):
        kg, kb, km, kv = jax.random.split(k, 4)
        gamma = 1.0 + 0.1 * jax.random.normal(kg, (C,), jnp.float32)
        beta = 0.1 * jax.random.normal(kb, (C,), jnp.float32)
        mean = 0.1 * jax.random.normal(km, (C,), jnp.float32)
        var = jax.random.uniform(kv, (C,), jnp.float32, minval=0.5, maxval=1.5)
        scale = gamma / jnp.sqrt(var + eps)      # inference-mode BN folding
        bias = beta - mean * scale
        return scale, bias

    def fold_weight(w_pt, scale):
        # (C_out, C_in, kd, kh, kw) -> (C_out, kd, kh, kw, C_in) -> (C_out, 27*C_in)
        # column index = tap_k * C_in + c_in (matches the kernel); BN scale folded.
        w = jnp.transpose(w_pt, (0, 2, 3, 4, 1)).reshape(C, 27 * C)
        return w * scale[:, None]

    w1_pt, w2_pt = conv_w(ks[0]), conv_w(ks[1])
    s1, b1 = bn_fold(ks[2])
    s2, b2 = bn_fold(ks[3])
    return dict(
        # kernel params
        w1_2d=fold_weight(w1_pt, s1), b1=b1.reshape(C, 1),
        w2_2d=fold_weight(w2_pt, s2), b2=b2.reshape(C, 1),
        # reference params
        w1_dhwio=jnp.transpose(w1_pt, (2, 3, 4, 1, 0)),
        w2_dhwio=jnp.transpose(w2_pt, (2, 3, 4, 1, 0)),
        s1=s1, b1v=b1, s2=s2, b2v=b2,
    )


def reference_forward(x_ncdhw, p):
    """Pure-JAX reference (lax.conv_general_dilated), inference-mode BN."""
    x = jnp.transpose(x_ncdhw, (0, 2, 3, 4, 1)).astype(jnp.float32)   # NDHWC

    def conv(a, w_dhwio):
        return lax.conv_general_dilated(
            a, w_dhwio, window_strides=(1, 1, 1), padding="SAME",
            dimension_numbers=("NDHWC", "DHWIO", "NDHWC"),
            precision=lax.Precision.HIGHEST)

    h = jnp.maximum(conv(x, p["w1_dhwio"]) * p["s1"] + p["b1v"], 0.0)
    y = jnp.maximum(conv(h, p["w2_dhwio"]) * p["s2"] + p["b2v"] + x, 0.0)
    return jnp.transpose(y, (0, 4, 1, 2, 3))


if __name__ == "__main__":
    key = jax.random.PRNGKey(0)
    kx, kp = jax.random.split(key)

    N, C, D, H, W = 2, 4, 8, 8, 8           # small NCDHW input, as Conv3d expects
    x = jax.random.normal(kx, (N, C, D, H, W), jnp.float32)
    p = init_params(kp, C)
    masks = _tap_boundary_masks(D, H, W)

    fwd = jax.jit(simple_rb_forward)
    out = fwd(x, p["w1_2d"], p["b1"], p["w2_2d"], p["b2"], masks)
    out = jax.block_until_ready(out)

    ref = jax.block_until_ready(reference_forward(x, p))
    assert out.shape == (N, C, D, H, W)
    max_err = jnp.max(jnp.abs(out - ref))
    assert jnp.allclose(out, ref, rtol=1e-4, atol=1e-4), f"max abs err {max_err}"

    print("KERNEL_OK")
</pallas_src>

<mosaic_0001>
module attributes {stable_mosaic.version = 11 : i64} {
  func.func @kernel(%arg0: i32, %arg1: memref<1x4x512xf32, #tpu.memory_space<vmem>>, %arg2: memref<4x108xf32, #tpu.memory_space<vmem>>, %arg3: memref<4x1xf32, #tpu.memory_space<vmem>>, %arg4: memref<4x108xf32, #tpu.memory_space<vmem>>, %arg5: memref<4x1xf32, #tpu.memory_space<vmem>>, %arg6: memref<27x512xf32, #tpu.memory_space<vmem>>, %arg7: memref<1x4x512xf32, #tpu.memory_space<vmem>>) attributes {dimension_semantics = [#tpu.dimension_semantics<parallel>], iteration_bounds = array<i64: 2>, scalar_prefetch = 0 : i64, scratch_operands = 0 : i64, tpu.core_type = #tpu.core_type<tc>, window_params = [{transform_indices = @transform_0, window_bounds = array<i64: 1, 4, 512>}, {pipeline_mode = #tpu.pipeline_mode<synchronous>, transform_indices = @transform_1, window_bounds = array<i64: 4, 108>}, {pipeline_mode = #tpu.pipeline_mode<synchronous>, transform_indices = @transform_2, window_bounds = array<i64: 4, 1>}, {pipeline_mode = #tpu.pipeline_mode<synchronous>, transform_indices = @transform_3, window_bounds = array<i64: 4, 108>}, {pipeline_mode = #tpu.pipeline_mode<synchronous>, transform_indices = @transform_4, window_bounds = array<i64: 4, 1>}, {pipeline_mode = #tpu.pipeline_mode<synchronous>, transform_indices = @transform_5, window_bounds = array<i64: 27, 512>}, {transform_indices = @transform_6, window_bounds = array<i64: 1, 4, 512>}]} {
    %c0 = arith.constant 0 : index
    %c0_0 = arith.constant 0 : index
    %c0_1 = arith.constant 0 : index
    %0 = vector.load %arg1[%c0, %c0_0, %c0_1] : memref<1x4x512xf32, #tpu.memory_space<vmem>>, vector<1x4x512xf32>
    %1 = vector.shape_cast %0 : vector<1x4x512xf32> to vector<4x512xf32>
    %c0_2 = arith.constant 0 : index
    %c0_3 = arith.constant 0 : index
    %2 = vector.load %arg2[%c0_2, %c0_3] : memref<4x108xf32, #tpu.memory_space<vmem>>, vector<4x108xf32>
    %cst = arith.constant 0.000000e+00 : f32
    %3 = vector.broadcast %cst : f32 to vector<4x512xf32>
    %c73_i32 = arith.constant 73 : i32
    %4 = tpu.dynamic_rotate %1 by %c73_i32 dim 1 : vector<4x512xf32>, i32 -> vector<4x512xf32>
    %c0_4 = arith.constant 0 : index
    %c0_5 = arith.constant 0 : index
    %5 = vector.load %arg6[%c0_4, %c0_5] : memref<27x512xf32, #tpu.memory_space<vmem>>, vector<1x512xf32>
    %6 = vector.broadcast %5 : vector<1x512xf32> to vector<4x512xf32>
    %7 = arith.mulf %4, %6 : vector<4x512xf32>
    %8 = vector.extract_strided_slice %2 {offsets = [0, 0], sizes = [4, 1], strides = [1, 1]} : vector<4x108xf32> to vector<4x1xf32>
    %9 = vector.extract_strided_slice %7 {offsets = [0, 0], sizes = [1, 512], strides = [1, 1]} : vector<4x512xf32> to vector<1x512xf32>
    %10 = vector.broadcast %8 : vector<4x1xf32> to vector<4x512xf32>
    %11 = vector.broadcast %9 : vector<1x512xf32> to vector<4x512xf32>
    %12 = arith.mulf %10, %11 : vector<4x512xf32>
    %13 = arith.addf %3, %12 : vector<4x512xf32>
    %14 = vector.extract_strided_slice %2 {offsets = [0, 1], sizes = [4, 1], strides = [1, 1]} : vector<4x108xf32> to vector<4x1xf32>
    %15 = vector.extract_strided_slice %7 {offsets = [1, 0], sizes = [1, 512], strides = [1, 1]} : vector<4x512xf32> to vector<1x512xf32>
    %16 = vector.broadcast %14 : vector<4x1xf32> to vector<4x512xf32>
    %17 = vector.broadcast %15 : vector<1x512xf32> to vector<4x512xf32>
    %18 = arith.mulf %16, %17 : vector<4x512xf32>
    %19 = arith.addf %13, %18 : vector<4x512xf32>
    %20 = vector.extract_strided_slice %2 {offsets = [0, 2], sizes = [4, 1], strides = [1, 1]} : vector<4x108xf32> to vector<4x1xf32>
    %21 = vector.extract_strided_slice %7 {offsets = [2, 0], sizes = [1, 512], strides = [1, 1]} : vector<4x512xf32> to vector<1x512xf32>
    %22 = vector.broadcast %20 : vector<4x1xf32> to vector<4x512xf32>
    %23 = vector.broadcast %21 : vector<1x512xf32> to vector<4x512xf32>
    %24 = arith.mulf %22, %23 : vector<4x512xf32>
    %25 = arith.addf %19, %24 : vector<4x512xf32>
    %26 = vector.extract_strided_slice %2 {offsets = [0, 3], sizes = [4, 1], strides = [1, 1]} : vector<4x108xf32> to vector<4x1xf32>
    %27 = vector.extract_strided_slice %7 {offsets = [3, 0], sizes = [1, 512], strides = [1, 1]} : vector<4x512xf32> to vector<1x512xf32>
    %28 = vector.broadcast %26 : vector<4x1xf32> to vector<4x512xf32>
    %29 = vector.broadcast %27 : vector<1x512xf32> to vector<4x512xf32>
    %30 = arith.mulf %28, %29 : vector<4x512xf32>
    %31 = arith.addf %25, %30 : vector<4x512xf32>
    %c72_i32 = arith.constant 72 : i32
    %32 = tpu.dynamic_rotate %1 by %c72_i32 dim 1 : vector<4x512xf32>, i32 -> vector<4x512xf32>
    %c1 = arith.constant 1 : index
    %c0_6 = arith.constant 0 : index
    %33 = vector.load %arg6[%c1, %c0_6] : memref<27x512xf32, #tpu.memory_space<vmem>>, vector<1x512xf32>
    %34 = vector.broadcast %33 : vector<1x512xf32> to vector<4x512xf32>
    %35 = arith.mulf %32, %34 : vector<4x512xf32>
    %36 = vector.extract_strided_slice %2 {offsets = [0, 4], sizes = [4, 1], strides = [1, 1]} : vector<4x108xf32> to vector<4x1xf32>
    %37 = vector.extract_strided_slice %35 {offsets = [0, 0], sizes = [1, 512], strides = [1, 1]} : vector<4x512xf32> to vector<1x512xf32>
    %38 = vector.broadcast %36 : vector<4x1xf32> to vector<4x512xf32>
    %39 = vector.broadcast %37 : vector<1x512xf32> to vector<4x512xf32>
    %40 = arith.mulf %38, %39 : vector<4x512xf32>
    %41 = arith.addf %31, %40 : vector<4x512xf32>
    %42 = vector.extract_strided_slice %2 {offsets = [0, 5], sizes = [4, 1], strides = [1, 1]} : vector<4x108xf32> to vector<4x1xf32>
    %43 = vector.extract_strided_slice %35 {offsets = [1, 0], sizes = [1, 512], strides = [1, 1]} : vector<4x512xf32> to vector<1x512xf32>
    %44 = vector.broadcast %42 : vector<4x1xf32> to vector<4x512xf32>
    %45 = vector.broadcast %43 : vector<1x512xf32> to vector<4x512xf32>
    %46 = arith.mulf %44, %45 : vector<4x512xf32>
    %47 = arith.addf %41, %46 : vector<4x512xf32>
    %48 = vector.extract_strided_slice %2 {offsets = [0, 6], sizes = [4, 1], strides = [1, 1]} : vector<4x108xf32> to vector<4x1xf32>
    %49 = vector.extract_strided_slice %35 {offsets = [2, 0], sizes = [1, 512], strides = [1, 1]} : vector<4x512xf32> to vector<1x512xf32>
    %50 = vector.broadcast %48 : vector<4x1xf32> to vector<4x512xf32>
    %51 = vector.broadcast %49 : vector<1x512xf32> to vector<4x512xf32>
    %52 = arith.mulf %50, %51 : vector<4x512xf32>
    %53 = arith.addf %47, %52 : vector<4x512xf32>
    %54 = vector.extract_strided_slice %2 {offsets = [0, 7], sizes = [4, 1], strides = [1, 1]} : vector<4x108xf32> to vector<4x1xf32>
    %55 = vector.extract_strided_slice %35 {offsets = [3, 0], sizes = [1, 512], strides = [1, 1]} : vector<4x512xf32> to vector<1x512xf32>
    %56 = vector.broadcast %54 : vector<4x1xf32> to vector<4x512xf32>
    %57 = vector.broadcast %55 : vector<1x512xf32> to vector<4x512xf32>
    %58 = arith.mulf %56, %57 : vector<4x512xf32>
    %59 = arith.addf %53, %58 : vector<4x512xf32>
    %c71_i32 = arith.constant 71 : i32
    %60 = tpu.dynamic_rotate %1 by %c71_i32 dim 1 : vector<4x512xf32>, i32 -> vector<4x512xf32>
    %c2 = arith.constant 2 : index
    %c0_7 = arith.constant 0 : index
    %61 = vector.load %arg6[%c2, %c0_7] : memref<27x512xf32, #tpu.memory_space<vmem>>, vector<1x512xf32>
    %62 = vector.broadcast %61 : vector<1x512xf32> to vector<4x512xf32>
    %63 = arith.mulf %60, %62 : vector<4x512xf32>
    %64 = vector.extract_strided_slice %2 {offsets = [0, 8], sizes = [4, 1], strides = [1, 1]} : vector<4x108xf32> to vector<4x1xf32>
    %65 = vector.extract_strided_slice %63 {offsets = [0, 0], sizes = [1, 512], strides = [1, 1]} : vector<4x512xf32> to vector<1x512xf32>
    %66 = vector.broadcast %64 : vector<4x1xf32> to vector<4x512xf32>
    %67 = vector.broadcast %65 : vector<1x512xf32> to vector<4x512xf32>
    %68 = arith.mulf %66, %67 : vector<4x512xf32>
    %69 = arith.addf %59, %68 : vector<4x512xf32>
    %70 = vector.extract_strided_slice %2 {offsets = [0, 9], sizes = [4, 1], strides = [1, 1]} : vector<4x108xf32> to vector<4x1xf32>
    %71 = vector.extract_strided_slice %63 {offsets = [1, 0], sizes = [1, 512], strides = [1, 1]} : vector<4x512xf32> to vector<1x512xf32>
    %72 = vector.broadcast %70 : vector<4x1xf32> to vector<4x512xf32>
    %73 = vector.broadcast %71 : vector<1x512xf32> to vector<4x512xf32>
    %74 = arith.mulf %72, %73 : vector<4x512xf32>
    %75 = arith.addf %69, %74 : vector<4x512xf32>
    %76 = vector.extract_strided_slice %2 {offsets = [0, 10], sizes = [4, 1], strides = [1, 1]} : vector<4x108xf32> to vector<4x1xf32>
    %77 = vector.extract_strided_slice %63 {offsets = [2, 0], sizes = [1, 512], strides = [1, 1]} : vector<4x512xf32> to vector<1x512xf32>
    %78 = vector.broadcast %76 : vector<4x1xf32> to vector<4x512xf32>
    %79 = vector.broadcast %77 : vector<1x512xf32> to vector<4x512xf32>
    %80 = arith.mulf %78, %79 : vector<4x512xf32>
    %81 = arith.addf %75, %80 : vector<4x512xf32>
    %82 = vector.extract_strided_slice %2 {offsets = [0, 11], sizes = [4, 1], strides = [1, 1]} : vector<4x108xf32> to vector<4x1xf32>
    %83 = vector.extract_strided_slice %63 {offsets = [3, 0], sizes = [1, 512], strides = [1, 1]} : vector<4x512xf32> to vector<1x512xf32>
    %84 = vector.broadcast %82 : vector<4x1xf32> to vector<4x512xf32>
    %85 = vector.broadcast %83 : vector<1x512xf32> to vector<4x512xf32>
    %86 = arith.mulf %84, %85 : vector<4x512xf32>
    %87 = arith.addf %81, %86 : vector<4x512xf32>
    %c65_i32 = arith.constant 65 : i32
    %88 = tpu.dynamic_rotate %1 by %c65_i32 dim 1 : vector<4x512xf32>, i32 -> vector<4x512xf32>
    %c3 = arith.constant 3 : index
    %c0_8 = arith.constant 0 : index
    %89 = vector.load %arg6[%c3, %c0_8] : memref<27x512xf32, #tpu.memory_space<vmem>>, vector<1x512xf32>
    %90 = vector.broadcast %89 : vector<1x512xf32> to vector<4x512xf32>
    %91 = arith.mulf %88, %90 : vector<4x512xf32>
    %92 = vector.extract_strided_slice %2 {offsets = [0, 12], sizes = [4, 1], strides = [1, 1]} : vector<4x108xf32> to vector<4x1xf32>
    %93 = vector.extract_strided_slice %91 {offsets = [0, 0], sizes = [1, 512], strides = [1, 1]} : vector<4x512xf32> to vector<1x512xf32>
    %94 = vector.broadcast %92 : vector<4x1xf32> to vector<4x512xf32>
    %95 = vector.broadcast %93 : vector<1x512xf32> to vector<4x512xf32>
    %96 = arith.mulf %94, %95 : vector<4x512xf32>
    %97 = arith.addf %87, %96 : vector<4x512xf32>
    %98 = vector.extract_strided_slice %2 {offsets = [0, 13], sizes = [4, 1], strides = [1, 1]} : vector<4x108xf32> to vector<4x1xf32>
    %99 = vector.extract_strided_slice %91 {offsets = [1, 0], sizes = [1, 512], strides = [1, 1]} : vector<4x512xf32> to vector<1x512xf32>
    %100 = vector.broadcast %98 : vector<4x1xf32> to vector<4x512xf32>
    %101 = vector.broadcast %99 : vector<1x512xf32> to vector<4x512xf32>
    %102 = arith.mulf %100, %101 : vector<4x512xf32>
    %103 = arith.addf %97, %102 : vector<4x512xf32>
    %104 = vector.extract_strided_slice %2 {offsets = [0, 14], sizes = [4, 1], strides = [1, 1]} : vector<4x108xf32> to vector<4x1xf32>
    %105 = vector.extract_strided_slice %91 {offsets = [2, 0], sizes = [1, 512], strides = [1, 1]} : vector<4x512xf32> to vector<1x512xf32>
    %106 = vector.broadcast %104 : vector<4x1xf32> to vector<4x512xf32>
    %107 = vector.broadcast %105 : vector<1x512xf32> to vector<4x512xf32>
    %108 = arith.mulf %106, %107 : vector<4x512xf32>
    %109 = arith.addf %103, %108 : vector<4x512xf32>
    %110 = vector.extract_strided_slice %2 {offsets = [0, 15], sizes = [4, 1], strides = [1, 1]} : vector<4x108xf32> to vector<4x1xf32>
    %111 = vector.extract_strided_slice %91 {offsets = [3, 0], sizes = [1, 512], strides = [1, 1]} : vector<4x512xf32> to vector<1x512xf32>
    %112 = vector.broadcast %110 : vector<4x1xf32> to vector<4x512xf32>
    %113 = vector.broadcast %111 : vector<1x512xf32> to vector<4x512xf32>
    %114 = arith.mulf %112, %113 : vector<4x512xf32>
    %115 = arith.addf %109, %114 : vector<4x512xf32>
    %c64_i32 = arith.constant 64 : i32
    %116 = tpu.dynamic_rotate %1 by %c64_i32 dim 1 : vector<4x512xf32>, i32 -> vector<4x512xf32>
    %c4 = arith.constant 4 : index
    %c0_9 = arith.constant 0 : index
    %117 = vector.load %arg6[%c4, %c0_9] : memref<27x512xf32, #tpu.memory_space<vmem>>, vector<1x512xf32>
    %118 = vector.broadcast %117 : vector<1x512xf32> to vector<4x512xf32>
    %119 = arith.mulf %116, %118 : vector<4x512xf32>
    %120 = vector.extract_strided_slice %2 {offsets = [0, 16], sizes = [4, 1], strides = [1, 1]} : vector<4x108xf32> to vector<4x1xf32>
    %121 = vector.extract_strided_slice %119 {offsets = [0, 0], sizes = [1, 512], strides = [1, 1]} : vector<4x512xf32> to vector<1x512xf32>
    %122 = vector.broadcast %120 : vector<4x1xf32> to vector<4x512xf32>
    %123 = vector.broadcast %121 : vector<1x512xf32> to vector<4x512xf32>
    %124 = arith.mulf %122, %123 : vector<4x512xf32>
    %125 = arith.addf %115, %124 : vector<4x512xf32>
    %126 = vector.extract_strided_slice %2 {offsets = [0, 17], sizes = [4, 1], strides = [1, 1]} : vector<4x108xf32> to vector<4x1xf32>
    %127 = vector.extract_strided_slice %119 {offsets = [1, 0], sizes = [1, 512], strides = [1, 1]} : vector<4x512xf32> to vector<1x512xf32>
    %128 = vector.broadcast %126 : vector<4x1xf32> to vector<4x512xf32>
    %129 = vector.broadcast %127 : vector<1x512xf32> to vector<4x512xf32>
    %130 = arith.mulf %128, %129 : vector<4x512xf32>
    %131 = arith.addf %125, %130 : vector<4x512xf32>
    %132 = vector.extract_strided_slice %2 {offsets = [0, 18], sizes = [4, 1], strides = [1, 1]} : vector<4x108xf32> to vector<4x1xf32>
    %133 = vector.extract_strided_slice %119 {offsets = [2, 0], sizes = [1, 512], strides = [1, 1]} : vector<4x512xf32> to vector<1x512xf32>
    %134 = vector.broadcast %132 : vector<4x1xf32> to vector<4x512xf32>
    %135 = vector.broadcast %133 : vector<1x512xf32> to vector<4x512xf32>
    %136 = arith.mulf %134, %135 : vector<4x512xf32>
    %137 = arith.addf %131, %136 : vector<4x512xf32>
    %138 = vector.extract_strided_slice %2 {offsets = [0, 19], sizes = [4, 1], strides = [1, 1]} : vector<4x108xf32> to vector<4x1xf32>
    %139 = vector.extract_strided_slice %119 {offsets = [3, 0], sizes = [1, 512], strides = [1, 1]} : vector<4x512xf32> to vector<1x512xf32>
    %140 = vector.broadcast %138 : vector<4x1xf32> to vector<4x512xf32>
    %141 = vector.broadcast %139 : vector<1x512xf32> to vector<4x512xf32>
    %142 = arith.mulf %140, %141 : vector<4x512xf32>
    %143 = arith.addf %137, %142 : vector<4x512xf32>
    %c63_i32 = arith.constant 63 : i32
    %144 = tpu.dynamic_rotate %1 by %c63_i32 dim 1 : vector<4x512xf32>, i32 -> vector<4x512xf32>
    %c5 = arith.constant 5 : index
    %c0_10 = arith.constant 0 : index
    %145 = vector.load %arg6[%c5, %c0_10] : memref<27x512xf32, #tpu.memory_space<vmem>>, vector<1x512xf32>
    %146 = vector.broadcast %145 : vector<1x512xf32> to vector<4x512xf32>
    %147 = arith.mulf %144, %146 : vector<4x512xf32>
    %148 = vector.extract_strided_slice %2 {offsets = [0, 20], sizes = [4, 1], strides = [1, 1]} : vector<4x108xf32> to vector<4x1xf32>
    %149 = vector.extract_strided_slice %147 {offsets = [0, 0], sizes = [1, 512], strides = [1, 1]} : vector<4x512xf32> to vector<1x512xf32>
    %150 = vector.broadcast %148 : vector<4x1xf32> to vector<4x512xf32>
    %151 = vector.broadcast %149 : vector<1x512xf32> to vector<4x512xf32>
    %152 = arith.mulf %150, %151 : vector<4x512xf32>
    %153 = arith.addf %143, %152 : vector<4x512xf32>
    %154 = vector.extract_strided_slice %2 {offsets = [0, 21], sizes = [4, 1], strides = [1, 1]} : vector<4x108xf32> to vector<4x1xf32>
    %155 = vector.extract_strided_slice %147 {offsets = [1, 0], sizes = [1, 512], strides = [1, 1]} : vector<4x512xf32> to vector<1x512xf32>
    %156 = vector.broadcast %154 : vector<4x1xf32> to vector<4x512xf32>
    %157 = vector.broadcast %155 : vector<1x512xf32> to vector<4x512xf32>
    %158 = arith.mulf %156, %157 : vector<4x512xf32>
    %159 = arith.addf %153, %158 : vector<4x512xf32>
    %160 = vector.extract_strided_slice %2 {offsets = [0, 22], sizes = [4, 1], strides = [1, 1]} : vector<4x108xf32> to vector<4x1xf32>
    %161 = vector.extract_strided_slice %147 {offsets = [2, 0], sizes = [1, 512], strides = [1, 1]} : vector<4x512xf32> to vector<1x512xf32>
    %162 = vector.broadcast %160 : vector<4x1xf32> to vector<4x512xf32>
    %163 = vector.broadcast %161 : vector<1x512xf32> to vector<4x512xf32>
    %164 = arith.mulf %162, %163 : vector<4x512xf32>
    %165 = arith.addf %159, %164 : vector<4x512xf32>
    %166 = vector.extract_strided_slice %2 {offsets = [0, 23], sizes = [4, 1], strides = [1, 1]} : vector<4x108xf32> to vector<4x1xf32>
    %167 = vector.extract_strided_slice %147 {offsets = [3, 0], sizes = [1, 512], strides = [1, 1]} : vector<4x512xf32> to vector<1x512xf32>
    %168 = vector.broadcast %166 : vector<4x1xf32> to vector<4x512xf32>
    %169 = vector.broadcast %167 : vector<1x512xf32> to vector<4x512xf32>
    %170 = arith.mulf %168, %169 : vector<4x512xf32>
    %171 = arith.addf %165, %170 : vector<4x512xf32>
    %c57_i32 = arith.constant 57 : i32
    %172 = tpu.dynamic_rotate %1 by %c57_i32 dim 1 : vector<4x512xf32>, i32 -> vector<4x512xf32>
    %c6 = arith.constant 6 : index
    %c0_11 = arith.constant 0 : index
    %173 = vector.load %arg6[%c6, %c0_11] : memref<27x512xf32, #tpu.memory_space<vmem>>, vector<1x512xf32>
    %174 = vector.broadcast %173 : vector<1x512xf32> to vector<4x512xf32>
    %175 = arith.mulf %172, %174 : vector<4x512xf32>
    %176 = vector.extract_strided_slice %2 {offsets = [0, 24], sizes = [4, 1], strides = [1, 1]} : vector<4x108xf32> to vector<4x1xf32>
    %177 = vector.extract_strided_slice %175 {offsets = [0, 0], sizes = [1, 512], strides = [1, 1]} : vector<4x512xf32> to vector<1x512xf32>
    %178 = vector.broadcast %176 : vector<4x1xf32> to vector<4x512xf32>
    %179 = vector.broadcast %177 : vector<1x512xf32> to vector<4x512xf32>
    %180 = arith.mulf %178, %179 : vector<4x512xf32>
    %181 = arith.addf %171, %180 : vector<4x512xf32>
    %182 = vector.extract_strided_slice %2 {offsets = [0, 25], sizes = [4, 1], strides = [1, 1]} : vector<4x108xf32> to vector<4x1xf32>
    %183 = vector.extract_strided_slice %175 {offsets = [1, 0], sizes = [1, 512], strides = [1, 1]} : vector<4x512xf32> to vector<1x512xf32>
    %184 = vector.broadcast %182 : vector<4x1xf32> to vector<4x512xf32>
    %185 = vector.broadcast %183 : vector<1x512xf32> to vector<4x512xf32>
    %186 = arith.mulf %184, %185 : vector<4x512xf32>
    %187 = arith.addf %181, %186 : vector<4x512xf32>
    %188 = vector.extract_strided_slice %2 {offsets = [0, 26], sizes = [4, 1], strides = [1, 1]} : vector<4x108xf32> to vector<4x1xf32>
    %189 = vector.extract_strided_slice %175 {offsets = [2, 0], sizes = [1, 512], strides = [1, 1]} : vector<4x512xf32> to vector<1x512xf32>
    %190 = vector.broadcast %188 : vector<4x1xf32> to vector<4x512xf32>
    %191 = vector.broadcast %189 : vector<1x512xf32> to vector<4x512xf32>
    %192 = arith.mulf %190, %191 : vector<4x512xf32>
    %193 = arith.addf %187, %192 : vector<4x512xf32>
    %194 = vector.extract_strided_slice %2 {offsets = [0, 27], sizes = [4, 1], strides = [1, 1]} : vector<4x108xf32> to vector<4x1xf32>
    %195 = vector.extract_strided_slice %175 {offsets = [3, 0], sizes = [1, 512], strides = [1, 1]} : vector<4x512xf32> to vector<1x512xf32>
    %196 = vector.broadcast %194 : vector<4x1xf32> to vector<4x512xf32>
    %197 = vector.broadcast %195 : vector<1x512xf32> to vector<4x512xf32>
    %198 = arith.mulf %196, %197 : vector<4x512xf32>
    %199 = arith.addf %193, %198 : vector<4x512xf32>
    %c56_i32 = arith.constant 56 : i32
    %200 = tpu.dynamic_rotate %1 by %c56_i32 dim 1 : vector<4x512xf32>, i32 -> vector<4x512xf32>
    %c7 = arith.constant 7 : index
    %c0_12 = arith.constant 0 : index
    %201 = vector.load %arg6[%c7, %c0_12] : memref<27x512xf32, #tpu.memory_space<vmem>>, vector<1x512xf32>
    %202 = vector.broadcast %201 : vector<1x512xf32> to vector<4x512xf32>
    %203 = arith.mulf %200, %202 : vector<4x512xf32>
    %204 = vector.extract_strided_slice %2 {offsets = [0, 28], sizes = [4, 1], strides = [1, 1]} : vector<4x108xf32> to vector<4x1xf32>
    %205 = vector.extract_strided_slice %203 {offsets = [0, 0], sizes = [1, 512], strides = [1, 1]} : vector<4x512xf32> to vector<1x512xf32>
    %206 = vector.broadcast %204 : vector<4x1xf32> to vector<4x512xf32>
    %207 = vector.broadcast %205 : vector<1x512xf32> to vector<4x512xf32>
    %208 = arith.mulf %206, %207 : vector<4x512xf32>
    %209 = arith.addf %199, %208 : vector<4x512xf32>
    %210 = vector.extract_strided_slice %2 {offsets = [0, 29], sizes = [4, 1], strides = [1, 1]} : vector<4x108xf32> to vector<4x1xf32>
    %211 = vector.extract_strided_slice %203 {offsets = [1, 0], sizes = [1, 512], strides = [1, 1]} : vector<4x512xf32> to vector<1x512xf32>
    %212 = vector.broadcast %210 : vector<4x1xf32> to vector<4x512xf32>
    %213 = vector.broadcast %211 : vector<1x512xf32> to vector<4x512xf32>
    %214 = arith.mulf %212, %213 : vector<4x512xf32>
    %215 = arith.addf %209, %214 : vector<4x512xf32>
    %216 = vector.extract_strided_slice %2 {offsets = [0, 30], sizes = [4, 1], strides = [1, 1]} : vector<4x108xf32> to vector<4x1xf32>
    %217 = vector.extract_strided_slice %203 {offsets = [2, 0], sizes = [1, 512], strides = [1, 1]} : vector<4x512xf32> to vector<1x512xf32>
    %218 = vector.broadcast %216 : vector<4x1xf32> to vector<4x512xf32>
    %219 = vector.broadcast %217 : vector<1x512xf32> to vector<4x512xf32>
    %220 = arith.mulf %218, %219 : vector<4x512xf32>
    %221 = arith.addf %215, %220 : vector<4x512xf32>
    %222 = vector.extract_strided_slice %2 {offsets = [0, 31], sizes = [4, 1], strides = [1, 1]} : vector<4x108xf32> to vector<4x1xf32>
    %223 = vector.extract_strided_slice %203 {offsets = [3, 0], sizes = [1, 512], strides = [1, 1]} : vector<4x512xf32> to vector<1x512xf32>
    %224 = vector.broadcast %222 : vector<4x1xf32> to vector<4x512xf32>
    %225 = vector.broadcast %223 : vector<1x512xf32> to vector<4x512xf32>
    %226 = arith.mulf %224, %225 : vector<4x512xf32>
    %227 = arith.addf %221, %226 : vector<4x512xf32>
    %c55_i32 = arith.constant 55 : i32
    %228 = tpu.dynamic_rotate %1 by %c55_i32 dim 1 : vector<4x512xf32>, i32 -> vector<4x512xf32>
    %c8 = arith.constant 8 : index
    %c0_13 = arith.constant 0 : index
    %229 = vector.load %arg6[%c8, %c0_13] : memref<27x512xf32, #tpu.memory_space<vmem>>, vector<1x512xf32>
    %230 = vector.broadcast %229 : vector<1x512xf32> to vector<4x512xf32>
    %231 = arith.mulf %228, %230 : vector<4x512xf32>
    %232 = vector.extract_strided_slice %2 {offsets = [0, 32], sizes = [4, 1], strides = [1, 1]} : vector<4x108xf32> to vector<4x1xf32>
    %233 = vector.extract_strided_slice %231 {offsets = [0, 0], sizes = [1, 512], strides = [1, 1]} : vector<4x512xf32> to vector<1x512xf32>
    %234 = vector.broadcast %232 : vector<4x1xf32> to vector<4x512xf32>
    %235 = vector.broadcast %233 : vector<1x512xf32> to vector<4x512xf32>
    %236 = arith.mulf %234, %235 : vector<4x512xf32>
    %237 = arith.addf %227, %236 : vector<4x512xf32>
    %238 = vector.extract_strided_slice %2 {offsets = [0, 33], sizes = [4, 1], strides = [1, 1]} : vector<4x108xf32> to vector<4x1xf32>
    %239 = vector.extract_strided_slice %231 {offsets = [1, 0], sizes = [1, 512], strides = [1, 1]} : vector<4x512xf32> to vector<1x512xf32>
    %240 = vector.broadcast %238 : vector<4x1xf32> to vector<4x512xf32>
    %241 = vector.broadcast %239 : vector<1x512xf32> to vector<4x512xf32>
    %242 = arith.mulf %240, %241 : vector<4x512xf32>
    %243 = arith.addf %237, %242 : vector<4x512xf32>
    %244 = vector.extract_strided_slice %2 {offsets = [0, 34], sizes = [4, 1], strides = [1, 1]} : vector<4x108xf32> to vector<4x1xf32>
    %245 = vector.extract_strided_slice %231 {offsets = [2, 0], sizes = [1, 512], strides = [1, 1]} : vector<4x512xf32> to vector<1x512xf32>
    %246 = vector.broadcast %244 : vector<4x1xf32> to vector<4x512xf32>
    %247 = vector.broadcast %245 : vector<1x512xf32> to vector<4x512xf32>
    %248 = arith.mulf %246, %247 : vector<4x512xf32>
    %249 = arith.addf %243, %248 : vector<4x512xf32>
    %250 = vector.extract_strided_slice %2 {offsets = [0, 35], sizes = [4, 1], strides = [1, 1]} : vector<4x108xf32> to vector<4x1xf32>
    %251 = vector.extract_strided_slice %231 {offsets = [3, 0], sizes = [1, 512], strides = [1, 1]} : vector<4x512xf32> to vector<1x512xf32>
    %252 = vector.broadcast %250 : vector<4x1xf32> to vector<4x512xf32>
    %253 = vector.broadcast %251 : vector<1x512xf32> to vector<4x512xf32>
    %254 = arith.mulf %252, %253 : vector<4x512xf32>
    %255 = arith.addf %249, %254 : vector<4x512xf32>
    %c9_i32 = arith.constant 9 : i32
    %256 = tpu.dynamic_rotate %1 by %c9_i32 dim 1 : vector<4x512xf32>, i32 -> vector<4x512xf32>
    %c9 = arith.constant 9 : index
    %c0_14 = arith.constant 0 : index
    %257 = vector.load %arg6[%c9, %c0_14] : memref<27x512xf32, #tpu.memory_space<vmem>>, vector<1x512xf32>
    %258 = vector.broadcast %257 : vector<1x512xf32> to vector<4x512xf32>
    %259 = arith.mulf %256, %258 : vector<4x512xf32>
    %260 = vector.extract_strided_slice %2 {offsets = [0, 36], sizes = [4, 1], strides = [1, 1]} : vector<4x108xf32> to vector<4x1xf32>
    %261 = vector.extract_strided_slice %259 {offsets = [0, 0], sizes = [1, 512], strides = [1, 1]} : vector<4x512xf32> to vector<1x512xf32>
    %262 = vector.broadcast %260 : vector<4x1xf32> to vector<4x512xf32>
    %263 = vector.broadcast %261 : vector<1x512xf32> to vector<4x512xf32>
    %264 = arith.mulf %262, %263 : vector<4x512xf32>
    %265 = arith.addf %255, %264 : vector<4x512xf32>
    %266 = vector.extract_strided_slice %2 {offsets = [0, 37], sizes = [4, 1], strides = [1, 1]} : vector<4x108xf32> to vector<4x1xf32>
    %267 = vector.extract_strided_slice %259 {offsets = [1, 0], sizes = [1, 512], strides = [1, 1]} : vector<4x512xf32> to vector<1x512xf32>
    %268 = vector.broadcast %266 : vector<4x1xf32> to vector<4x512xf32>
    %269 = vector.broadcast %267 : vector<1x512xf32> to vector<4x512xf32>
    %270 = arith.mulf %268, %269 : vector<4x512xf32>
    %271 = arith.addf %265, %270 : vector<4x512xf32>
    %272 = vector.extract_strided_slice %2 {offsets = [0, 38], sizes = [4, 1], strides = [1, 1]} : vector<4x108xf32> to vector<4x1xf32>
    %273 = vector.extract_strided_slice %259 {offsets = [2, 0], sizes = [1, 512], strides = [1, 1]} : vector<4x512xf32> to vector<1x512xf32>
    %274 = vector.broadcast %272 : vector<4x1xf32> to vector<4x512xf32>
    %275 = vector.broadcast %273 : vector<1x512xf32> to vector<4x512xf32>
    %276 = arith.mulf %274, %275 : vector<4x512xf32>
    %277 = arith.addf %271, %276 : vector<4x512xf32>
    %278 = vector.extract_strided_slice %2 {offsets = [0, 39], sizes = [4, 1], strides = [1, 1]} : vector<4x108xf32> to vector<4x1xf32>
    %279 = vector.extract_strided_slice %259 {offsets = [3, 0], sizes = [1, 512], strides = [1, 1]} : vector<4x512xf32> to vector<1x512xf32>
    %280 = vector.broadcast %278 : vector<4x1xf32> to vector<4x512xf32>
    %281 = vector.broadcast %279 : vector<1x512xf32> to vector<4x512xf32>
    %282 = arith.mulf %280, %281 : vector<4x512xf32>
    %283 = arith.addf %277, %282 : vector<4x512xf32>
    %c8_i32 = arith.constant 8 : i32
    %284 = tpu.dynamic_rotate %1 by %c8_i32 dim 1 : vector<4x512xf32>, i32 -> vector<4x512xf32>
    %c10 = arith.constant 10 : index
    %c0_15 = arith.constant 0 : index
    %285 = vector.load %arg6[%c10, %c0_15] : memref<27x512xf32, #tpu.memory_space<vmem>>, vector<1x512xf32>
    %286 = vector.broadcast %285 : vector<1x512xf32> to vector<4x512xf32>
    %287 = arith.mulf %284, %286 : vector<4x512xf32>
    %288 = vector.extract_strided_slice %2 {offsets = [0, 40], sizes = [4, 1], strides = [1, 1]} : vector<4x108xf32> to vector<4x1xf32>
    %289 = vector.extract_strided_slice %287 {offsets = [0, 0], sizes = [1, 512], strides = [1, 1]} : vector<4x512xf32> to vector<1x512xf32>
    %290 = vector.broadcast %288 : vector<4x1xf32> to vector<4x512xf32>
    %291 = vector.broadcast %289 : vector<1x512xf32> to vector<4x512xf32>
    %292 = arith.mulf %290, %291 : vector<4x512xf32>
    %293 = arith.addf %283, %292 : vector<4x512xf32>
    %294 = vector.extract_strided_slice %2 {offsets = [0, 41], sizes = [4, 1], strides = [1, 1]} : vector<4x108xf32> to vector<4x1xf32>
    %295 = vector.extract_strided_slice %287 {offsets = [1, 0], sizes = [1, 512], strides = [1, 1]} : vector<4x512xf32> to vector<1x512xf32>
    %296 = vector.broadcast %294 : vector<4x1xf32> to vector<4x512xf32>
    %297 = vector.broadcast %295 : vector<1x512xf32> to vector<4x512xf32>
    %298 = arith.mulf %296, %297 : vector<4x512xf32>
    %299 = arith.addf %293, %298 : vector<4x512xf32>
    %300 = vector.extract_strided_slice %2 {offsets = [0, 42], sizes = [4, 1], strides = [1, 1]} : vector<4x108xf32> to vector<4x1xf32>
    %301 = vector.extract_strided_slice %287 {offsets = [2, 0], sizes = [1, 512], strides = [1, 1]} : vector<4x512xf32> to vector<1x512xf32>
    %302 = vector.broadcast %300 : vector<4x1xf32> to vector<4x512xf32>
    %303 = vector.broadcast %301 : vector<1x512xf32> to vector<4x512xf32>
    %304 = arith.mulf %302, %303 : vector<4x512xf32>
    %305 = arith.addf %299, %304 : vector<4x512xf32>
    %306 = vector.extract_strided_slice %2 {offsets = [0, 43], sizes = [4, 1], strides = [1, 1]} : vector<4x108xf32> to vector<4x1xf32>
    %307 = vector.extract_strided_slice %287 {offsets = [3, 0], sizes = [1, 512], strides = [1, 1]} : vector<4x512xf32> to vector<1x512xf32>
    %308 = vector.broadcast %306 : vector<4x1xf32> to vector<4x512xf32>
    %309 = vector.broadcast %307 : vector<1x512xf32> to vector<4x512xf32>
    %310 = arith.mulf %308, %309 : vector<4x512xf32>
    %311 = arith.addf %305, %310 : vector<4x512xf32>
    %c7_i32 = arith.constant 7 : i32
    %312 = tpu.dynamic_rotate %1 by %c7_i32 dim 1 : vector<4x512xf32>, i32 -> vector<4x512xf32>
    %c11 = arith.constant 11 : index
    %c0_16 = arith.constant 0 : index
    %313 = vector.load %arg6[%c11, %c0_16] : memref<27x512xf32, #tpu.memory_space<vmem>>, vector<1x512xf32>
    %314 = vector.broadcast %313 : vector<1x512xf32> to vector<4x512xf32>
    %315 = arith.mulf %312, %314 : vector<4x512xf32>
    %316 = vector.extract_strided_slice %2 {offsets = [0, 44], sizes = [4, 1], strides = [1, 1]} : vector<4x108xf32> to vector<4x1xf32>
    %317 = vector.extract_strided_slice %315 {offsets = [0, 0], sizes = [1, 512], strides = [1, 1]} : vector<4x512xf32> to vector<1x512xf32>
    %318 = vector.broadcast %316 : vector<4x1xf32> to vector<4x512xf32>
    %319 = vector.broadcast %317 : vector<1x512xf32> to vector<4x512xf32>
    %320 = arith.mulf %318, %319 : vector<4x512xf32>
    %321 = arith.addf %311, %320 : vector<4x512xf32>
    %322 = vector.extract_strided_slice %2 {offsets = [0, 45], sizes = [4, 1], strides = [1, 1]} : vector<4x108xf32> to vector<4x1xf32>
    %323 = vector.extract_strided_slice %315 {offsets = [1, 0], sizes = [1, 512], strides = [1, 1]} : vector<4x512xf32> to vector<1x512xf32>
    %324 = vector.broadcast %322 : vector<4x1xf32> to vector<4x512xf32>
    %325 = vector.broadcast %323 : vector<1x512xf32> to vector<4x512xf32>
    %326 = arith.mulf %324, %325 : vector<4x512xf32>
    %327 = arith.addf %321, %326 : vector<4x512xf32>
    %328 = vector.extract_strided_slice %2 {offsets = [0, 46], sizes = [4, 1], strides = [1, 1]} : vector<4x108xf32> to vector<4x1xf32>
    %329 = vector.extract_strided_slice %315 {offsets = [2, 0], sizes = [1, 512], strides = [1, 1]} : vector<4x512xf32> to vector<1x512xf32>
    %330 = vector.broadcast %328 : vector<4x1xf32> to vector<4x512xf32>
    %331 = vector.broadcast %329 : vector<1x512xf32> to vector<4x512xf32>
    %332 = arith.mulf %330, %331 : vector<4x512xf32>
    %333 = arith.addf %327, %332 : vector<4x512xf32>
    %334 = vector.extract_strided_slice %2 {offsets = [0, 47], sizes = [4, 1], strides = [1, 1]} : vector<4x108xf32> to vector<4x1xf32>
    %335 = vector.extract_strided_slice %315 {offsets = [3, 0], sizes = [1, 512], strides = [1, 1]} : vector<4x512xf32> to vector<1x512xf32>
    %336 = vector.broadcast %334 : vector<4x1xf32> to vector<4x512xf32>
    %337 = vector.broadcast %335 : vector<1x512xf32> to vector<4x512xf32>
    %338 = arith.mulf %336, %337 : vector<4x512xf32>
    %339 = arith.addf %333, %338 : vector<4x512xf32>
    %c1_i32 = arith.constant 1 : i32
    %340 = tpu.dynamic_rotate %1 by %c1_i32 dim 1 : vector<4x512xf32>, i32 -> vector<4x512xf32>
    %c12 = arith.constant 12 : index
    %c0_17 = arith.constant 0 : index
    %341 = vector.load %arg6[%c12, %c0_17] : memref<27x512xf32, #tpu.memory_space<vmem>>, vector<1x512xf32>
    %342 = vector.broadcast %341 : vector<1x512xf32> to vector<4x512xf32>
    %343 = arith.mulf %340, %342 : vector<4x512xf32>
    %344 = vector.extract_strided_slice %2 {offsets = [0, 48], sizes = [4, 1], strides = [1, 1]} : vector<4x108xf32> to vector<4x1xf32>
    %345 = vector.extract_strided_slice %343 {offsets = [0, 0], sizes = [1, 512], strides = [1, 1]} : vector<4x512xf32> to vector<1x512xf32>
    %346 = vector.broadcast %344 : vector<4x1xf32> to vector<4x512xf32>
    %347 = vector.broadcast %345 : vector<1x512xf32> to vector<4x512xf32>
    %348 = arith.mulf %346, %347 : vector<4x512xf32>
    %349 = arith.addf %339, %348 : vector<4x512xf32>
    %350 = vector.extract_strided_slice %2 {offsets = [0, 49], sizes = [4, 1], strides = [1, 1]} : vector<4x108xf32> to vector<4x1xf32>
    %351 = vector.extract_strided_slice %343 {offsets = [1, 0], sizes = [1, 512], strides = [1, 1]} : vector<4x512xf32> to vector<1x512xf32>
    %352 = vector.broadcast %350 : vector<4x1xf32> to vector<4x512xf32>
    %353 = vector.broadcast %351 : vector<1x512xf32> to vector<4x512xf32>
    %354 = arith.mulf %352, %353 : vector<4x512xf32>
    %355 = arith.addf %349, %354 : vector<4x512xf32>
    %356 = vector.extract_strided_slice %2 {offsets = [0, 50], sizes = [4, 1], strides = [1, 1]} : vector<4x108xf32> to vector<4x1xf32>
    %357 = vector.extract_strided_slice %343 {offsets = [2, 0], sizes = [1, 512], strides = [1, 1]} : vector<4x512xf32> to vector<1x512xf32>
    %358 = vector.broadcast %356 : vector<4x1xf32> to vector<4x512xf32>
    %359 = vector.broadcast %357 : vector<1x512xf32> to vector<4x512xf32>
    %360 = arith.mulf %358, %359 : vector<4x512xf32>
    %361 = arith.addf %355, %360 : vector<4x512xf32>
    %362 = vector.extract_strided_slice %2 {offsets = [0, 51], sizes = [4, 1], strides = [1, 1]} : vector<4x108xf32> to vector<4x1xf32>
    %363 = vector.extract_strided_slice %343 {offsets = [3, 0], sizes = [1, 512], strides = [1, 1]} : vector<4x512xf32> to vector<1x512xf32>
    %364 = vector.broadcast %362 : vector<4x1xf32> to vector<4x512xf32>
    %365 = vector.broadcast %363 : vector<1x512xf32> to vector<4x512xf32>
    %366 = arith.mulf %364, %365 : vector<4x512xf32>
    %367 = arith.addf %361, %366 : vector<4x512xf32>
    %368 = vector.extract_strided_slice %2 {offsets = [0, 52], sizes = [4, 1], strides = [1, 1]} : vector<4x108xf32> to vector<4x1xf32>
    %369 = vector.extract_strided_slice %1 {offsets = [0, 0], sizes = [1, 512], strides = [1, 1]} : vector<4x512xf32> to vector<1x512xf32>
    %370 = vector.broadcast %368 : vector<4x1xf32> to vector<4x512xf32>
    %371 = vector.broadcast %369 : vector<1x512xf32> to vector<4x512xf32>
    %372 = arith.mulf %370, %371 : vector<4x512xf32>
    %373 = arith.addf %367, %372 : vector<4x512xf32>
    %374 = vector.extract_strided_slice %2 {offsets = [0, 53], sizes = [4, 1], strides = [1, 1]} : vector<4x108xf32> to vector<4x1xf32>
    %375 = vector.extract_strided_slice %1 {offsets = [1, 0], sizes = [1, 512], strides = [1, 1]} : vector<4x512xf32> to vector<1x512xf32>
    %376 = vector.broadcast %374 : vector<4x1xf32> to vector<4x512xf32>
    %377 = vector.broadcast %375 : vector<1x512xf32> to vector<4x512xf32>
    %378 = arith.mulf %376, %377 : vector<4x512xf32>
    %379 = arith.addf %373, %378 : vector<4x512xf32>
    %380 = vector.extract_strided_slice %2 {offsets = [0, 54], sizes = [4, 1], strides = [1, 1]} : vector<4x108xf32> to vector<4x1xf32>
    %381 = vector.extract_strided_slice %1 {offsets = [2, 0], sizes = [1, 512], strides = [1, 1]} : vector<4x512xf32> to vector<1x512xf32>
    %382 = vector.broadcast %380 : vector<4x1xf32> to vector<4x512xf32>
    %383 = vector.broadcast %381 : vector<1x512xf32> to vector<4x512xf32>
    %384 = arith.mulf %382, %383 : vector<4x512xf32>
    %385 = arith.addf %379, %384 : vector<4x512xf32>
    %386 = vector.extract_strided_slice %2 {offsets = [0, 55], sizes = [4, 1], strides = [1, 1]} : vector<4x108xf32> to vector<4x1xf32>
    %387 = vector.extract_strided_slice %1 {offsets = [3, 0], sizes = [1, 512], strides = [1, 1]} : vector<4x512xf32> to vector<1x512xf32>
    %388 = vector.broadcast %386 : vector<4x1xf32> to vector<4x512xf32>
    %389 = vector.broadcast %387 : vector<1x512xf32> to vector<4x512xf32>
    %390 = arith.mulf %388, %389 : vector<4x512xf32>
    %391 = arith.addf %385, %390 : vector<4x512xf32>
    %c511_i32 = arith.constant 511 : i32
    %392 = tpu.dynamic_rotate %1 by %c511_i32 dim 1 : vector<4x512xf32>, i32 -> vector<4x512xf32>
    %c14 = arith.constant 14 : index
    %c0_18 = arith.constant 0 : index
    %393 = vector.load %arg6[%c14, %c0_18] : memref<27x512xf32, #tpu.memory_space<vmem>>, vector<1x512xf32>
    %394 = vector.broadcast %393 : vector<1x512xf32> to vector<4x512xf32>
    %395 = arith.mulf %392, %394 : vector<4x512xf32>
    %396 = vector.extract_strided_slice %2 {offsets = [0, 56], sizes = [4, 1], strides = [1, 1]} : vector<4x108xf32> to vector<4x1xf32>
    %397 = vector.extract_strided_slice %395 {offsets = [0, 0], sizes = [1, 512], strides = [1, 1]} : vector<4x512xf32> to vector<1x512xf32>
    %398 = vector.broadcast %396 : vector<4x1xf32> to vector<4x512xf32>
    %399 = vector.broadcast %397 : vector<1x512xf32> to vector<4x512xf32>
    %400 = arith.mulf %398, %399 : vector<4x512xf32>
    %401 = arith.addf %391, %400 : vector<4x512xf32>
    %402 = vector.extract_strided_slice %2 {offsets = [0, 57], sizes = [4, 1], strides = [1, 1]} : vector<4x108xf32> to vector<4x1xf32>
    %403 = vector.extract_strided_slice %395 {offsets = [1, 0], sizes = [1, 512], strides = [1, 1]} : vector<4x512xf32> to vector<1x512xf32>
    %404 = vector.broadcast %402 : vector<4x1xf32> to vector<4x512xf32>
    %405 = vector.broadcast %403 : vector<1x512xf32> to vector<4x512xf32>
    %406 = arith.mulf %404, %405 : vector<4x512xf32>
    %407 = arith.addf %401, %406 : vector<4x512xf32>
    %408 = vector.extract_strided_slice %2 {offsets = [0, 58], sizes = [4, 1], strides = [1, 1]} : vector<4x108xf32> to vector<4x1xf32>
    %409 = vector.extract_strided_slice %395 {offsets = [2, 0], sizes = [1, 512], strides = [1, 1]} : vector<4x512xf32> to vector<1x512xf32>
    %410 = vector.broadcast %408 : vector<4x1xf32> to vector<4x512xf32>
    %411 = vector.broadcast %409 : vector<1x512xf32> to vector<4x512xf32>
    %412 = arith.mulf %410, %411 : vector<4x512xf32>
    %413 = arith.addf %407, %412 : vector<4x512xf32>
    %414 = vector.extract_strided_slice %2 {offsets = [0, 59], sizes = [4, 1], strides = [1, 1]} : vector<4x108xf32> to vector<4x1xf32>
    %415 = vector.extract_strided_slice %395 {offsets = [3, 0], sizes = [1, 512], strides = [1, 1]} : vector<4x512xf32> to vector<1x512xf32>
    %416 = vector.broadcast %414 : vector<4x1xf32> to vector<4x512xf32>
    %417 = vector.broadcast %415 : vector<1x512xf32> to vector<4x512xf32>
    %418 = arith.mulf %416, %417 : vector<4x512xf32>
    %419 = arith.addf %413, %418 : vector<4x512xf32>
    %c505_i32 = arith.constant 505 : i32
    %420 = tpu.dynamic_rotate %1 by %c505_i32 dim 1 : vector<4x512xf32>, i32 -> vector<4x512xf32>
    %c15 = arith.constant 15 : index
    %c0_19 = arith.constant 0 : index
    %421 = vector.load %arg6[%c15, %c0_19] : memref<27x512xf32, #tpu.memory_space<vmem>>, vector<1x512xf32>
    %422 = vector.broadcast %421 : vector<1x512xf32> to vector<4x512xf32>
    %423 = arith.mulf %420, %422 : vector<4x512xf32>
    %424 = vector.extract_strided_slice %2 {offsets = [0, 60], sizes = [4, 1], strides = [1, 1]} : vector<4x108xf32> to vector<4x1xf32>
    %425 = vector.extract_strided_slice %423 {offsets = [0, 0], sizes = [1, 512], strides = [1, 1]} : vector<4x512xf32> to vector<1x512xf32>
    %426 = vector.broadcast %424 : vector<4x1xf32> to vector<4x512xf32>
    %427 = vector.broadcast %425 : vector<1x512xf32> to vector<4x512xf32>
    %428 = arith.mulf %426, %427 : vector<4x512xf32>
    %429 = arith.addf %419, %428 : vector<4x512xf32>
    %430 = vector.extract_strided_slice %2 {offsets = [0, 61], sizes = [4, 1], strides = [1, 1]} : vector<4x108xf32> to vector<4x1xf32>
    %431 = vector.extract_strided_slice %423 {offsets = [1, 0], sizes = [1, 512], strides = [1, 1]} : vector<4x512xf32> to vector<1x512xf32>
    %432 = vector.broadcast %430 : vector<4x1xf32> to vector<4x512xf32>
    %433 = vector.broadcast %431 : vector<1x512xf32> to vector<4x512xf32>
    %434 = arith.mulf %432, %433 : vector<4x512xf32>
    %435 = arith.addf %429, %434 : vector<4x512xf32>
    %436 = vector.extract_strided_slice %2 {offsets = [0, 62], sizes = [4, 1], strides = [1, 1]} : vector<4x108xf32> to vector<4x1xf32>
    %437 = vector.extract_strided_slice %423 {offsets = [2, 0], sizes = [1, 512], strides = [1, 1]} : vector<4x512xf32> to vector<1x512xf32>
    %438 = vector.broadcast %436 : vector<4x1xf32> to vector<4x512xf32>
    %439 = vector.broadcast %437 : vector<1x512xf32> to vector<4x512xf32>
    %440 = arith.mulf %438, %439 : vector<4x512xf32>
    %441 = arith.addf %435, %440 : vector<4x512xf32>
    %442 = vector.extract_strided_slice %2 {offsets = [0, 63], sizes = [4, 1], strides = [1, 1]} : vector<4x108xf32> to vector<4x1xf32>
    %443 = vector.extract_strided_slice %423 {offsets = [3, 0], sizes = [1, 512], strides = [1, 1]} : vector<4x512xf32> to vector<1x512xf32>
    %444 = vector.broadcast %442 : vector<4x1xf32> to vector<4x512xf32>
    %445 = vector.broadcast %443 : vector<1x512xf32> to vector<4x512xf32>
    %446 = arith.mulf %444, %445 : vector<4x512xf32>
    %447 = arith.addf %441, %446 : vector<4x512xf32>
    %c504_i32 = arith.constant 504 : i32
    %448 = tpu.dynamic_rotate %1 by %c504_i32 dim 1 : vector<4x512xf32>, i32 -> vector<4x512xf32>
    %c16 = arith.constant 16 : index
    %c0_20 = arith.constant 0 : index
    %449 = vector.load %arg6[%c16, %c0_20] : memref<27x512xf32, #tpu.memory_space<vmem>>, vector<1x512xf32>
    %450 = vector.broadcast %449 : vector<1x512xf32> to vector<4x512xf32>
    %451 = arith.mulf %448, %450 : vector<4x512xf32>
    %452 = vector.extract_strided_slice %2 {offsets = [0, 64], sizes = [4, 1], strides = [1, 1]} : vector<4x108xf32> to vector<4x1xf32>
    %453 = vector.extract_strided_slice %451 {offsets = [0, 0], sizes = [1, 512], strides = [1, 1]} : vector<4x512xf32> to vector<1x512xf32>
    %454 = vector.broadcast %452 : vector<4x1xf32> to vector<4x512xf32>
    %455 = vector.broadcast %453 : vector<1x512xf32> to vector<4x512xf32>
    %456 = arith.mulf %454, %455 : vector<4x512xf32>
    %457 = arith.addf %447, %456 : vector<4x512xf32>
    %458 = vector.extract_strided_slice %2 {offsets = [0, 65], sizes = [4, 1], strides = [1, 1]} : vector<4x108xf32> to vector<4x1xf32>
    %459 = vector.extract_strided_slice %451 {offsets = [1, 0], sizes = [1, 512], strides = [1, 1]} : vector<4x512xf32> to vector<1x512xf32>
    %460 = vector.broadcast %458 : vector<4x1xf32> to vector<4x512xf32>
    %461 = vector.broadcast %459 : vector<1x512xf32> to vector<4x512xf32>
    %462 = arith.mulf %460, %461 : vector<4x512xf32>
    %463 = arith.addf %457, %462 : vector<4x512xf32>
    %464 = vector.extract_strided_slice %2 {offsets = [0, 66], sizes = [4, 1], strides = [1, 1]} : vector<4x108xf32> to vector<4x1xf32>
    %465 = vector.extract_strided_slice %451 {offsets = [2, 0], sizes = [1, 512], strides = [1, 1]} : vector<4x512xf32> to vector<1x512xf32>
    %466 = vector.broadcast %464 : vector<4x1xf32> to vector<4x512xf32>
    %467 = vector.broadcast %465 : vector<1x512xf32> to vector<4x512xf32>
    %468 = arith.mulf %466, %467 : vector<4x512xf32>
    %469 = arith.addf %463, %468 : vector<4x512xf32>
    %470 = vector.extract_strided_slice %2 {offsets = [0, 67], sizes = [4, 1], strides = [1, 1]} : vector<4x108xf32> to vector<4x1xf32>
    %471 = vector.extract_strided_slice %451 {offsets = [3, 0], sizes = [1, 512], strides = [1, 1]} : vector<4x512xf32> to vector<1x512xf32>
    %472 = vector.broadcast %470 : vector<4x1xf32> to vector<4x512xf32>
    %473 = vector.broadcast %471 : vector<1x512xf32> to vector<4x512xf32>
    %474 = arith.mulf %472, %473 : vector<4x512xf32>
    %475 = arith.addf %469, %474 : vector<4x512xf32>
    %c503_i32 = arith.constant 503 : i32
    %476 = tpu.dynamic_rotate %1 by %c503_i32 dim 1 : vector<4x512xf32>, i32 -> vector<4x512xf32>
    %c17 = arith.constant 17 : index
    %c0_21 = arith.constant 0 : index
    %477 = vector.load %arg6[%c17, %c0_21] : memref<27x512xf32, #tpu.memory_space<vmem>>, vector<1x512xf32>
    %478 = vector.broadcast %477 : vector<1x512xf32> to vector<4x512xf32>
    %479 = arith.mulf %476, %478 : vector<4x512xf32>
    %480 = vector.extract_strided_slice %2 {offsets = [0, 68], sizes = [4, 1], strides = [1, 1]} : vector<4x108xf32> to vector<4x1xf32>
    %481 = vector.extract_strided_slice %479 {offsets = [0, 0], sizes = [1, 512], strides = [1, 1]} : vector<4x512xf32> to vector<1x512xf32>
    %482 = vector.broadcast %480 : vector<4x1xf32> to vector<4x512xf32>
    %483 = vector.broadcast %481 : vector<1x512xf32> to vector<4x512xf32>
    %484 = arith.mulf %482, %483 : vector<4x512xf32>
    %485 = arith.addf %475, %484 : vector<4x512xf32>
    %486 = vector.extract_strided_slice %2 {offsets = [0, 69], sizes = [4, 1], strides = [1, 1]} : vector<4x108xf32> to vector<4x1xf32>
    %487 = vector.extract_strided_slice %479 {offsets = [1, 0], sizes = [1, 512], strides = [1, 1]} : vector<4x512xf32> to vector<1x512xf32>
    %488 = vector.broadcast %486 : vector<4x1xf32> to vector<4x512xf32>
    %489 = vector.broadcast %487 : vector<1x512xf32> to vector<4x512xf32>
    %490 = arith.mulf %488, %489 : vector<4x512xf32>
    %491 = arith.addf %485, %490 : vector<4x512xf32>
    %492 = vector.extract_strided_slice %2 {offsets = [0, 70], sizes = [4, 1], strides = [1, 1]} : vector<4x108xf32> to vector<4x1xf32>
    %493 = vector.extract_strided_slice %479 {offsets = [2, 0], sizes = [1, 512], strides = [1, 1]} : vector<4x512xf32> to vector<1x512xf32>
    %494 = vector.broadcast %492 : vector<4x1xf32> to vector<4x512xf32>
    %495 = vector.broadcast %493 : vector<1x512xf32> to vector<4x512xf32>
    %496 = arith.mulf %494, %495 : vector<4x512xf32>
    %497 = arith.addf %491, %496 : vector<4x512xf32>
    %498 = vector.extract_strided_slice %2 {offsets = [0, 71], sizes = [4, 1], strides = [1, 1]} : vector<4x108xf32> to vector<4x1xf32>
    %499 = vector.extract_strided_slice %479 {offsets = [3, 0], sizes = [1, 512], strides = [1, 1]} : vector<4x512xf32> to vector<1x512xf32>
    %500 = vector.broadcast %498 : vector<4x1xf32> to vector<4x512xf32>
    %501 = vector.broadcast %499 : vector<1x512xf32> to vector<4x512xf32>
    %502 = arith.mulf %500, %501 : vector<4x512xf32>
    %503 = arith.addf %497, %502 : vector<4x512xf32>
    %c457_i32 = arith.constant 457 : i32
    %504 = tpu.dynamic_rotate %1 by %c457_i32 dim 1 : vector<4x512xf32>, i32 -> vector<4x512xf32>
    %c18 = arith.constant 18 : index
    %c0_22 = arith.constant 0 : index
    %505 = vector.load %arg6[%c18, %c0_22] : memref<27x512xf32, #tpu.memory_space<vmem>>, vector<1x512xf32>
    %506 = vector.broadcast %505 : vector<1x512xf32> to vector<4x512xf32>
    %507 = arith.mulf %504, %506 : vector<4x512xf32>
    %508 = vector.extract_strided_slice %2 {offsets = [0, 72], sizes = [4, 1], strides = [1, 1]} : vector<4x108xf32> to vector<4x1xf32>
    %509 = vector.extract_strided_slice %507 {offsets = [0, 0], sizes = [1, 512], strides = [1, 1]} : vector<4x512xf32> to vector<1x512xf32>
    %510 = vector.broadcast %508 : vector<4x1xf32> to vector<4x512xf32>
    %511 = vector.broadcast %509 : vector<1x512xf32> to vector<4x512xf32>
    %512 = arith.mulf %510, %511 : vector<4x512xf32>
    %513 = arith.addf %503, %512 : vector<4x512xf32>
    %514 = vector.extract_strided_slice %2 {offsets = [0, 73], sizes = [4, 1], strides = [1, 1]} : vector<4x108xf32> to vector<4x1xf32>
    %515 = vector.extract_strided_slice %507 {offsets = [1, 0], sizes = [1, 512], strides = [1, 1]} : vector<4x512xf32> to vector<1x512xf32>
    %516 = vector.broadcast %514 : vector<4x1xf32> to vector<4x512xf32>
    %517 = vector.broadcast %515 : vector<1x512xf32> to vector<4x512xf32>
    %518 = arith.mulf %516, %517 : vector<4x512xf32>
    %519 = arith.addf %513, %518 : vector<4x512xf32>
    %520 = vector.extract_strided_slice %2 {offsets = [0, 74], sizes = [4, 1], strides = [1, 1]} : vector<4x108xf32> to vector<4x1xf32>
    %521 = vector.extract_strided_slice %507 {offsets = [2, 0], sizes = [1, 512], strides = [1, 1]} : vector<4x512xf32> to vector<1x512xf32>
    %522 = vector.broadcast %520 : vector<4x1xf32> to vector<4x512xf32>
    %523 = vector.broadcast %521 : vector<1x512xf32> to vector<4x512xf32>
    %524 = arith.mulf %522, %523 : vector<4x512xf32>
    %525 = arith.addf %519, %524 : vector<4x512xf32>
    %526 = vector.extract_strided_slice %2 {offsets = [0, 75], sizes = [4, 1], strides = [1, 1]} : vector<4x108xf32> to vector<4x1xf32>
    %527 = vector.extract_strided_slice %507 {offsets = [3, 0], sizes = [1, 512], strides = [1, 1]} : vector<4x512xf32> to vector<1x512xf32>
    %528 = vector.broadcast %526 : vector<4x1xf32> to vector<4x512xf32>
    %529 = vector.broadcast %527 : vector<1x512xf32> to vector<4x512xf32>
    %530 = arith.mulf %528, %529 : vector<4x512xf32>
    %531 = arith.addf %525, %530 : vector<4x512xf32>
    %c456_i32 = arith.constant 456 : i32
    %532 = tpu.dynamic_rotate %1 by %c456_i32 dim 1 : vector<4x512xf32>, i32 -> vector<4x512xf32>
    %c19 = arith.constant 19 : index
    %c0_23 = arith.constant 0 : index
    %533 = vector.load %arg6[%c19, %c0_23] : memref<27x512xf32, #tpu.memory_space<vmem>>, vector<1x512xf32>
    %534 = vector.broadcast %533 : vector<1x512xf32> to vector<4x512xf32>
    %535 = arith.mulf %532, %534 : vector<4x512xf32>
    %536 = vector.extract_strided_slice %2 {offsets = [0, 76], sizes = [4, 1], strides = [1, 1]} : vector<4x108xf32> to vector<4x1xf32>
    %537 = vector.extract_strided_slice %535 {offsets = [0, 0], sizes = [1, 512], strides = [1, 1]} : vector<4x512xf32> to vector<1x512xf32>
    %538 = vector.broadcast %536 : vector<4x1xf32> to vector<4x512xf32>
    %539 = vector.broadcast %537 : vector<1x512xf32> to vector<4x512xf32>
    %540 = arith.mulf %538, %539 : vector<4x512xf32>
    %541 = arith.addf %531, %540 : vector<4x512xf32>
    %542 = vector.extract_strided_slice %2 {offsets = [0, 77], sizes = [4, 1], strides = [1, 1]} : vector<4x108xf32> to vector<4x1xf32>
    %543 = vector.extract_strided_slice %535 {offsets = [1, 0], sizes = [1, 512], strides = [1, 1]} : vector<4x512xf32> to vector<1x512xf32>
    %544 = vector.broadcast %542 : vector<4x1xf32> to vector<4x512xf32>
    %545 = vector.broadcast %543 : vector<1x512xf32> to vector<4x512xf32>
    %546 = arith.mulf %544, %545 : vector<4x512xf32>
    %547 = arith.addf %541, %546 : vector<4x512xf32>
    %548 = vector.extract_strided_slice %2 {offsets = [0, 78], sizes = [4, 1], strides = [1, 1]} : vector<4x108xf32> to vector<4x1xf32>
    %549 = vector.extract_strided_slice %535 {offsets = [2, 0], sizes = [1, 512], strides = [1, 1]} : vector<4x512xf32> to vector<1x512xf32>
    %550 = vector.broadcast %548 : vector<4x1xf32> to vector<4x512xf32>
    %551 = vector.broadcast %549 : vector<1x512xf32> to vector<4x512xf32>
    %552 = arith.mulf %550, %551 : vector<4x512xf32>
    %553 = arith.addf %547, %552 : vector<4x512xf32>
    %554 = vector.extract_strided_slice %2 {offsets = [0, 79], sizes = [4, 1], strides = [1, 1]} : vector<4x108xf32> to vector<4x1xf32>
    %555 = vector.extract_strided_slice %535 {offsets = [3, 0], sizes = [1, 512], strides = [1, 1]} : vector<4x512xf32> to vector<1x512xf32>
    %556 = vector.broadcast %554 : vector<4x1xf32> to vector<4x512xf32>
    %557 = vector.broadcast %555 : vector<1x512xf32> to vector<4x512xf32>
    %558 = arith.mulf %556, %557 : vector<4x512xf32>
    %559 = arith.addf %553, %558 : vector<4x512xf32>
    %c455_i32 = arith.constant 455 : i32
    %560 = tpu.dynamic_rotate %1 by %c455_i32 dim 1 : vector<4x512xf32>, i32 -> vector<4x512xf32>
    %c20 = arith.constant 20 : index
    %c0_24 = arith.constant 0 : index
    %561 = vector.load %arg6[%c20, %c0_24] : memref<27x512xf32, #tpu.memory_space<vmem>>, vector<1x512xf32>
    %562 = vector.broadcast %561 : vector<1x512xf32> to vector<4x512xf32>
    %563 = arith.mulf %560, %562 : vector<4x512xf32>
    %564 = vector.extract_strided_slice %2 {offsets = [0, 80], sizes = [4, 1], strides = [1, 1]} : vector<4x108xf32> to vector<4x1xf32>
    %565 = vector.extract_strided_slice %563 {offsets = [0, 0], sizes = [1, 512], strides = [1, 1]} : vector<4x512xf32> to vector<1x512xf32>
    %566 = vector.broadcast %564 : vector<4x1xf32> to vector<4x512xf32>
    %567 = vector.broadcast %565 : vector<1x512xf32> to vector<4x512xf32>
    %568 = arith.mulf %566, %567 : vector<4x512xf32>
    %569 = arith.addf %559, %568 : vector<4x512xf32>
    %570 = vector.extract_strided_slice %2 {offsets = [0, 81], sizes = [4, 1], strides = [1, 1]} : vector<4x108xf32> to vector<4x1xf32>
    %571 = vector.extract_strided_slice %563 {offsets = [1, 0], sizes = [1, 512], strides = [1, 1]} : vector<4x512xf32> to vector<1x512xf32>
    %572 = vector.broadcast %570 : vector<4x1xf32> to vector<4x512xf32>
    %573 = vector.broadcast %571 : vector<1x512xf32> to vector<4x512xf32>
    %574 = arith.mulf %572, %573 : vector<4x512xf32>
    %575 = arith.addf %569, %574 : vector<4x512xf32>
    %576 = vector.extract_strided_slice %2 {offsets = [0, 82], sizes = [4, 1], strides = [1, 1]} : vector<4x108xf32> to vector<4x1xf32>
    %577 = vector.extract_strided_slice %563 {offsets = [2, 0], sizes = [1, 512], strides = [1, 1]} : vector<4x512xf32> to vector<1x512xf32>
    %578 = vector.broadcast %576 : vector<4x1xf32> to vector<4x512xf32>
    %579 = vector.broadcast %577 : vector<1x512xf32> to vector<4x512xf32>
    %580 = arith.mulf %578, %579 : vector<4x512xf32>
    %581 = arith.addf %575, %580 : vector<4x512xf32>
    %582 = vector.extract_strided_slice %2 {offsets = [0, 83], sizes = [4, 1], strides = [1, 1]} : vector<4x108xf32> to vector<4x1xf32>
    %583 = vector.extract_strided_slice %563 {offsets = [3, 0], sizes = [1, 512], strides = [1, 1]} : vector<4x512xf32> to vector<1x512xf32>
    %584 = vector.broadcast %582 : vector<4x1xf32> to vector<4x512xf32>
    %585 = vector.broadcast %583 : vector<1x512xf32> to vector<4x512xf32>
    %586 = arith.mulf %584, %585 : vector<4x512xf32>
    %587 = arith.addf %581, %586 : vector<4x512xf32>
    %c449_i32 = arith.constant 449 : i32
    %588 = tpu.dynamic_rotate %1 by %c449_i32 dim 1 : vector<4x512xf32>, i32 -> vector<4x512xf32>
    %c21 = arith.constant 21 : index
    %c0_25 = arith.constant 0 : index
    %589 = vector.load %arg6[%c21, %c0_25] : memref<27x512xf32, #tpu.memory_space<vmem>>, vector<1x512xf32>
    %590 = vector.broadcast %589 : vector<1x512xf32> to vector<4x512xf32>
    %591 = arith.mulf %588, %590 : vector<4x512xf32>
    %592 = vector.extract_strided_slice %2 {offsets = [0, 84], sizes = [4, 1], strides = [1, 1]} : vector<4x108xf32> to vector<4x1xf32>
    %593 = vector.extract_strided_slice %591 {offsets = [0, 0], sizes = [1, 512], strides = [1, 1]} : vector<4x512xf32> to vector<1x512xf32>
    %594 = vector.broadcast %592 : vector<4x1xf32> to vector<4x512xf32>
    %595 = vector.broadcast %593 : vector<1x512xf32> to vector<4x512xf32>
    %596 = arith.mulf %594, %595 : vector<4x512xf32>
    %597 = arith.addf %587, %596 : vector<4x512xf32>
    %598 = vector.extract_strided_slice %2 {offsets = [0, 85], sizes = [4, 1], strides = [1, 1]} : vector<4x108xf32> to vector<4x1xf32>
    %599 = vector.extract_strided_slice %591 {offsets = [1, 0], sizes = [1, 512], strides = [1, 1]} : vector<4x512xf32> to vector<1x512xf32>
    %600 = vector.broadcast %598 : vector<4x1xf32> to vector<4x512xf32>
    %601 = vector.broadcast %599 : vector<1x512xf32> to vector<4x512xf32>
    %602 = arith.mulf %600, %601 : vector<4x512xf32>
    %603 = arith.addf %597, %602 : vector<4x512xf32>
    %604 = vector.extract_strided_slice %2 {offsets = [0, 86], sizes = [4, 1], strides = [1, 1]} : vector<4x108xf32> to vector<4x1xf32>
    %605 = vector.extract_strided_slice %591 {offsets = [2, 0], sizes = [1, 512], strides = [1, 1]} : vector<4x512xf32> to vector<1x512xf32>
    %606 = vector.broadcast %604 : vector<4x1xf32> to vector<4x512xf32>
    %607 = vector.broadcast %605 : vector<1x512xf32> to vector<4x512xf32>
    %608 = arith.mulf %606, %607 : vector<4x512xf32>
    %609 = arith.addf %603, %608 : vector<4x512xf32>
    %610 = vector.extract_strided_slice %2 {offsets = [0, 87], sizes = [4, 1], strides = [1, 1]} : vector<4x108xf32> to vector<4x1xf32>
    %611 = vector.extract_strided_slice %591 {offsets = [3, 0], sizes = [1, 512], strides = [1, 1]} : vector<4x512xf32> to vector<1x512xf32>
    %612 = vector.broadcast %610 : vector<4x1xf32> to vector<4x512xf32>
    %613 = vector.broadcast %611 : vector<1x512xf32> to vector<4x512xf32>
    %614 = arith.mulf %612, %613 : vector<4x512xf32>
    %615 = arith.addf %609, %614 : vector<4x512xf32>
    %c448_i32 = arith.constant 448 : i32
    %616 = tpu.dynamic_rotate %1 by %c448_i32 dim 1 : vector<4x512xf32>, i32 -> vector<4x512xf32>
    %c22 = arith.constant 22 : index
    %c0_26 = arith.constant 0 : index
    %617 = vector.load %arg6[%c22, %c0_26] : memref<27x512xf32, #tpu.memory_space<vmem>>, vector<1x512xf32>
    %618 = vector.broadcast %617 : vector<1x512xf32> to vector<4x512xf32>
    %619 = arith.mulf %616, %618 : vector<4x512xf32>
    %620 = vector.extract_strided_slice %2 {offsets = [0, 88], sizes = [4, 1], strides = [1, 1]} : vector<4x108xf32> to vector<4x1xf32>
    %621 = vector.extract_strided_slice %619 {offsets = [0, 0], sizes = [1, 512], strides = [1, 1]} : vector<4x512xf32> to vector<1x512xf32>
    %622 = vector.broadcast %620 : vector<4x1xf32> to vector<4x512xf32>
    %623 = vector.broadcast %621 : vector<1x512xf32> to vector<4x512xf32>
    %624 = arith.mulf %622, %623 : vector<4x512xf32>
    %625 = arith.addf %615, %624 : vector<4x512xf32>
    %626 = vector.extract_strided_slice %2 {offsets = [0, 89], sizes = [4, 1], strides = [1, 1]} : vector<4x108xf32> to vector<4x1xf32>
    %627 = vector.extract_strided_slice %619 {offsets = [1, 0], sizes = [1, 512], strides = [1, 1]} : vector<4x512xf32> to vector<1x512xf32>
    %628 = vector.broadcast %626 : vector<4x1xf32> to vector<4x512xf32>
    %629 = vector.broadcast %627 : vector<1x512xf32> to vector<4x512xf32>
    %630 = arith.mulf %628, %629 : vector<4x512xf32>
    %631 = arith.addf %625, %630 : vector<4x512xf32>
    %632 = vector.extract_strided_slice %2 {offsets = [0, 90], sizes = [4, 1], strides = [1, 1]} : vector<4x108xf32> to vector<4x1xf32>
    %633 = vector.extract_strided_slice %619 {offsets = [2, 0], sizes = [1, 512], strides = [1, 1]} : vector<4x512xf32> to vector<1x512xf32>
    %634 = vector.broadcast %632 : vector<4x1xf32> to vector<4x512xf32>
    %635 = vector.broadcast %633 : vector<1x512xf32> to vector<4x512xf32>
    %636 = arith.mulf %634, %635 : vector<4x512xf32>
    %637 = arith.addf %631, %636 : vector<4x512xf32>
    %638 = vector.extract_strided_slice %2 {offsets = [0, 91], sizes = [4, 1], strides = [1, 1]} : vector<4x108xf32> to vector<4x1xf32>
    %639 = vector.extract_strided_slice %619 {offsets = [3, 0], sizes = [1, 512], strides = [1, 1]} : vector<4x512xf32> to vector<1x512xf32>
    %640 = vector.broadcast %638 : vector<4x1xf32> to vector<4x512xf32>
    %641 = vector.broadcast %639 : vector<1x512xf32> to vector<4x512xf32>
    %642 = arith.mulf %640, %641 : vector<4x512xf32>
    %643 = arith.addf %637, %642 : vector<4x512xf32>
    %c447_i32 = arith.constant 447 : i32
    %644 = tpu.dynamic_rotate %1 by %c447_i32 dim 1 : vector<4x512xf32>, i32 -> vector<4x512xf32>
    %c23 = arith.constant 23 : index
    %c0_27 = arith.constant 0 : index
    %645 = vector.load %arg6[%c23, %c0_27] : memref<27x512xf32, #tpu.memory_space<vmem>>, vector<1x512xf32>
    %646 = vector.broadcast %645 : vector<1x512xf32> to vector<4x512xf32>
    %647 = arith.mulf %644, %646 : vector<4x512xf32>
    %648 = vector.extract_strided_slice %2 {offsets = [0, 92], sizes = [4, 1], strides = [1, 1]} : vector<4x108xf32> to vector<4x1xf32>
    %649 = vector.extract_strided_slice %647 {offsets = [0, 0], sizes = [1, 512], strides = [1, 1]} : vector<4x512xf32> to vector<1x512xf32>
    %650 = vector.broadcast %648 : vector<4x1xf32> to vector<4x512xf32>
    %651 = vector.broadcast %649 : vector<1x512xf32> to vector<4x512xf32>
    %652 = arith.mulf %650, %651 : vector<4x512xf32>
    %653 = arith.addf %643, %652 : vector<4x512xf32>
    %654 = vector.extract_strided_slice %2 {offsets = [0, 93], sizes = [4, 1], strides = [1, 1]} : vector<4x108xf32> to vector<4x1xf32>
    %655 = vector.extract_strided_slice %647 {offsets = [1, 0], sizes = [1, 512], strides = [1, 1]} : vector<4x512xf32> to vector<1x512xf32>
    %656 = vector.broadcast %654 : vector<4x1xf32> to vector<4x512xf32>
    %657 = vector.broadcast %655 : vector<1x512xf32> to vector<4x512xf32>
    %658 = arith.mulf %656, %657 : vector<4x512xf32>
    %659 = arith.addf %653, %658 : vector<4x512xf32>
    %660 = vector.extract_strided_slice %2 {offsets = [0, 94], sizes = [4, 1], strides = [1, 1]} : vector<4x108xf32> to vector<4x1xf32>
    %661 = vector.extract_strided_slice %647 {offsets = [2, 0], sizes = [1, 512], strides = [1, 1]} : vector<4x512xf32> to vector<1x512xf32>
    %662 = vector.broadcast %660 : vector<4x1xf32> to vector<4x512xf32>
    %663 = vector.broadcast %661 : vector<1x512xf32> to vector<4x512xf32>
    %664 = arith.mulf %662, %663 : vector<4x512xf32>
    %665 = arith.addf %659, %664 : vector<4x512xf32>
    %666 = vector.extract_strided_slice %2 {offsets = [0, 95], sizes = [4, 1], strides = [1, 1]} : vector<4x108xf32> to vector<4x1xf32>
    %667 = vector.extract_strided_slice %647 {offsets = [3, 0], sizes = [1, 512], strides = [1, 1]} : vector<4x512xf32> to vector<1x512xf32>
    %668 = vector.broadcast %666 : vector<4x1xf32> to vector<4x512xf32>
    %669 = vector.broadcast %667 : vector<1x512xf32> to vector<4x512xf32>
    %670 = arith.mulf %668, %669 : vector<4x512xf32>
    %671 = arith.addf %665, %670 : vector<4x512xf32>
    %c441_i32 = arith.constant 441 : i32
    %672 = tpu.dynamic_rotate %1 by %c441_i32 dim 1 : vector<4x512xf32>, i32 -> vector<4x512xf32>
    %c24 = arith.constant 24 : index
    %c0_28 = arith.constant 0 : index
    %673 = vector.load %arg6[%c24, %c0_28] : memref<27x512xf32, #tpu.memory_space<vmem>>, vector<1x512xf32>
    %674 = vector.broadcast %673 : vector<1x512xf32> to vector<4x512xf32>
    %675 = arith.mulf %672, %674 : vector<4x512xf32>
    %676 = vector.extract_strided_slice %2 {offsets = [0, 96], sizes = [4, 1], strides = [1, 1]} : vector<4x108xf32> to vector<4x1xf32>
    %677 = vector.extract_strided_slice %675 {offsets = [0, 0], sizes = [1, 512], strides = [1, 1]} : vector<4x512xf32> to vector<1x512xf32>
    %678 = vector.broadcast %676 : vector<4x1xf32> to vector<4x512xf32>
    %679 = vector.broadcast %677 : vector<1x512xf32> to vector<4x512xf32>
    %680 = arith.mulf %678, %679 : vector<4x512xf32>
    %681 = arith.addf %671, %680 : vector<4x512xf32>
    %682 = vector.extract_strided_slice %2 {offsets = [0, 97], sizes = [4, 1], strides = [1, 1]} : vector<4x108xf32> to vector<4x1xf32>
    %683 = vector.extract_strided_slice %675 {offsets = [1, 0], sizes = [1, 512], strides = [1, 1]} : vector<4x512xf32> to vector<1x512xf32>
    %684 = vector.broadcast %682 : vector<4x1xf32> to vector<4x512xf32>
    %685 = vector.broadcast %683 : vector<1x512xf32> to vector<4x512xf32>
    %686 = arith.mulf %684, %685 : vector<4x512xf32>
    %687 = arith.addf %681, %686 : vector<4x512xf32>
    %688 = vector.extract_strided_slice %2 {offsets = [0, 98], sizes = [4, 1], strides = [1, 1]} : vector<4x108xf32> to vector<4x1xf32>
    %689 = vector.extract_strided_slice %675 {offsets = [2, 0], sizes = [1, 512], strides = [1, 1]} : vector<4x512xf32> to vector<1x512xf32>
    %690 = vector.broadcast %688 : vector<4x1xf32> to vector<4x512xf32>
    %691 = vector.broadcast %689 : vector<1x512xf32> to vector<4x512xf32>
    %692 = arith.mulf %690, %691 : vector<4x512xf32>
    %693 = arith.addf %687, %692 : vector<4x512xf32>
    %694 = vector.extract_strided_slice %2 {offsets = [0, 99], sizes = [4, 1], strides = [1, 1]} : vector<4x108xf32> to vector<4x1xf32>
    %695 = vector.extract_strided_slice %675 {offsets = [3, 0], sizes = [1, 512], strides = [1, 1]} : vector<4x512xf32> to vector<1x512xf32>
    %696 = vector.broadcast %694 : vector<4x1xf32> to vector<4x512xf32>
    %697 = vector.broadcast %695 : vector<1x512xf32> to vector<4x512xf32>
    %698 = arith.mulf %696, %697 : vector<4x512xf32>
    %699 = arith.addf %693, %698 : vector<4x512xf32>
    %c440_i32 = arith.constant 440 : i32
    %700 = tpu.dynamic_rotate %1 by %c440_i32 dim 1 : vector<4x512xf32>, i32 -> vector<4x512xf32>
    %c25 = arith.constant 25 : index
    %c0_29 = arith.constant 0 : index
    %701 = vector.load %arg6[%c25, %c0_29] : memref<27x512xf32, #tpu.memory_space<vmem>>, vector<1x512xf32>
    %702 = vector.broadcast %701 : vector<1x512xf32> to vector<4x512xf32>
    %703 = arith.mulf %700, %702 : vector<4x512xf32>
    %704 = vector.extract_strided_slice %2 {offsets = [0, 100], sizes = [4, 1], strides = [1, 1]} : vector<4x108xf32> to vector<4x1xf32>
    %705 = vector.extract_strided_slice %703 {offsets = [0, 0], sizes = [1, 512], strides = [1, 1]} : vector<4x512xf32> to vector<1x512xf32>
    %706 = vector.broadcast %704 : vector<4x1xf32> to vector<4x512xf32>
    %707 = vector.broadcast %705 : vector<1x512xf32> to vector<4x512xf32>
    %708 = arith.mulf %706, %707 : vector<4x512xf32>
    %709 = arith.addf %699, %708 : vector<4x512xf32>
    %710 = vector.extract_strided_slice %2 {offsets = [0, 101], sizes = [4, 1], strides = [1, 1]} : vector<4x108xf32> to vector<4x1xf32>
    %711 = vector.extract_strided_slice %703 {offsets = [1, 0], sizes = [1, 512], strides = [1, 1]} : vector<4x512xf32> to vector<1x512xf32>
    %712 = vector.broadcast %710 : vector<4x1xf32> to vector<4x512xf32>
    %713 = vector.broadcast %711 : vector<1x512xf32> to vector<4x512xf32>
    %714 = arith.mulf %712, %713 : vector<4x512xf32>
    %715 = arith.addf %709, %714 : vector<4x512xf32>
    %716 = vector.extract_strided_slice %2 {offsets = [0, 102], sizes = [4, 1], strides = [1, 1]} : vector<4x108xf32> to vector<4x1xf32>
    %717 = vector.extract_strided_slice %703 {offsets = [2, 0], sizes = [1, 512], strides = [1, 1]} : vector<4x512xf32> to vector<1x512xf32>
    %718 = vector.broadcast %716 : vector<4x1xf32> to vector<4x512xf32>
    %719 = vector.broadcast %717 : vector<1x512xf32> to vector<4x512xf32>
    %720 = arith.mulf %718, %719 : vector<4x512xf32>
    %721 = arith.addf %715, %720 : vector<4x512xf32>
    %722 = vector.extract_strided_slice %2 {offsets = [0, 103], sizes = [4, 1], strides = [1, 1]} : vector<4x108xf32> to vector<4x1xf32>
    %723 = vector.extract_strided_slice %703 {offsets = [3, 0], sizes = [1, 512], strides = [1, 1]} : vector<4x512xf32> to vector<1x512xf32>
    %724 = vector.broadcast %722 : vector<4x1xf32> to vector<4x512xf32>
    %725 = vector.broadcast %723 : vector<1x512xf32> to vector<4x512xf32>
    %726 = arith.mulf %724, %725 : vector<4x512xf32>
    %727 = arith.addf %721, %726 : vector<4x512xf32>
    %c439_i32 = arith.constant 439 : i32
    %728 = tpu.dynamic_rotate %1 by %c439_i32 dim 1 : vector<4x512xf32>, i32 -> vector<4x512xf32>
    %c26 = arith.constant 26 : index
    %c0_30 = arith.constant 0 : index
    %729 = vector.load %arg6[%c26, %c0_30] : memref<27x512xf32, #tpu.memory_space<vmem>>, vector<1x512xf32>
    %730 = vector.broadcast %729 : vector<1x512xf32> to vector<4x512xf32>
    %731 = arith.mulf %728, %730 : vector<4x512xf32>
    %732 = vector.extract_strided_slice %2 {offsets = [0, 104], sizes = [4, 1], strides = [1, 1]} : vector<4x108xf32> to vector<4x1xf32>
    %733 = vector.extract_strided_slice %731 {offsets = [0, 0], sizes = [1, 512], strides = [1, 1]} : vector<4x512xf32> to vector<1x512xf32>
    %734 = vector.broadcast %732 : vector<4x1xf32> to vector<4x512xf32>
    %735 = vector.broadcast %733 : vector<1x512xf32> to vector<4x512xf32>
    %736 = arith.mulf %734, %735 : vector<4x512xf32>
    %737 = arith.addf %727, %736 : vector<4x512xf32>
    %738 = vector.extract_strided_slice %2 {offsets = [0, 105], sizes = [4, 1], strides = [1, 1]} : vector<4x108xf32> to vector<4x1xf32>
    %739 = vector.extract_strided_slice %731 {offsets = [1, 0], sizes = [1, 512], strides = [1, 1]} : vector<4x512xf32> to vector<1x512xf32>
    %740 = vector.broadcast %738 : vector<4x1xf32> to vector<4x512xf32>
    %741 = vector.broadcast %739 : vector<1x512xf32> to vector<4x512xf32>
    %742 = arith.mulf %740, %741 : vector<4x512xf32>
    %743 = arith.addf %737, %742 : vector<4x512xf32>
    %744 = vector.extract_strided_slice %2 {offsets = [0, 106], sizes = [4, 1], strides = [1, 1]} : vector<4x108xf32> to vector<4x1xf32>
    %745 = vector.extract_strided_slice %731 {offsets = [2, 0], sizes = [1, 512], strides = [1, 1]} : vector<4x512xf32> to vector<1x512xf32>
    %746 = vector.broadcast %744 : vector<4x1xf32> to vector<4x512xf32>
    %747 = vector.broadcast %745 : vector<1x512xf32> to vector<4x512xf32>
    %748 = arith.mulf %746, %747 : vector<4x512xf32>
    %749 = arith.addf %743, %748 : vector<4x512xf32>
    %750 = vector.extract_strided_slice %2 {offsets = [0, 107], sizes = [4, 1], strides = [1, 1]} : vector<4x108xf32> to vector<4x1xf32>
    %751 = vector.extract_strided_slice %731 {offsets = [3, 0], sizes = [1, 512], strides = [1, 1]} : vector<4x512xf32> to vector<1x512xf32>
    %752 = vector.broadcast %750 : vector<4x1xf32> to vector<4x512xf32>
    %753 = vector.broadcast %751 : vector<1x512xf32> to vector<4x512xf32>
    %754 = arith.mulf %752, %753 : vector<4x512xf32>
    %755 = arith.addf %749, %754 : vector<4x512xf32>
    %c0_31 = arith.constant 0 : index
    %c0_32 = arith.constant 0 : index
    %756 = vector.load %arg3[%c0_31, %c0_32] : memref<4x1xf32, #tpu.memory_space<vmem>>, vector<4x1xf32>
    %757 = vector.broadcast %756 : vector<4x1xf32> to vector<4x512xf32>
    %758 = arith.addf %755, %757 : vector<4x512xf32>
    %cst_33 = arith.constant 0.000000e+00 : f32
    %759 = vector.broadcast %cst_33 : f32 to vector<4x512xf32>
    %760 = arith.maximumf %758, %759 : vector<4x512xf32>
    %c0_34 = arith.constant 0 : index
    %c0_35 = arith.constant 0 : index
    %761 = vector.load %arg4[%c0_34, %c0_35] : memref<4x108xf32, #tpu.memory_space<vmem>>, vector<4x108xf32>
    %cst_36 = arith.constant 0.000000e+00 : f32
    %762 = vector.broadcast %cst_36 : f32 to vector<4x512xf32>
    %c73_i32_37 = arith.constant 73 : i32
    %763 = tpu.dynamic_rotate %760 by %c73_i32_37 dim 1 : vector<4x512xf32>, i32 -> vector<4x512xf32>
    %c0_38 = arith.constant 0 : index
    %c0_39 = arith.constant 0 : index
    %764 = vector.load %arg6[%c0_38, %c0_39] : memref<27x512xf32, #tpu.memory_space<vmem>>, vector<1x512xf32>
    %765 = vector.broadcast %764 : vector<1x512xf32> to vector<4x512xf32>
    %766 = arith.mulf %763, %765 : vector<4x512xf32>
    %767 = vector.extract_strided_slice %761 {offsets = [0, 0], sizes = [4, 1], strides = [1, 1]} : vector<4x108xf32> to vector<4x1xf32>
    %768 = vector.extract_strided_slice %766 {offsets = [0, 0], sizes = [1, 512], strides = [1, 1]} : vector<4x512xf32> to vector<1x512xf32>
    %769 = vector.broadcast %767 : vector<4x1xf32> to vector<4x512xf32>
    %770 = vector.broadcast %768 : vector<1x512xf32> to vector<4x512xf32>
    %771 = arith.mulf %769, %770 : vector<4x512xf32>
    %772 = arith.addf %762, %771 : vector<4x512xf32>
    %773 = vector.extract_strided_slice %761 {offsets = [0, 1], sizes = [4, 1], strides = [1, 1]} : vector<4x108xf32> to vector<4x1xf32>
    %774 = vector.extract_strided_slice %766 {offsets = [1, 0], sizes = [1, 512], strides = [1, 1]} : vector<4x512xf32> to vector<1x512xf32>
    %775 = vector.broadcast %773 : vector<4x1xf32> to vector<4x512xf32>
    %776 = vector.broadcast %774 : vector<1x512xf32> to vector<4x512xf32>
    %777 = arith.mulf %775, %776 : vector<4x512xf32>
    %778 = arith.addf %772, %777 : vector<4x512xf32>
    %779 = vector.extract_strided_slice %761 {offsets = [0, 2], sizes = [4, 1], strides = [1, 1]} : vector<4x108xf32> to vector<4x1xf32>
    %780 = vector.extract_strided_slice %766 {offsets = [2, 0], sizes = [1, 512], strides = [1, 1]} : vector<4x512xf32> to vector<1x512xf32>
    %781 = vector.broadcast %779 : vector<4x1xf32> to vector<4x512xf32>
    %782 = vector.broadcast %780 : vector<1x512xf32> to vector<4x512xf32>
    %783 = arith.mulf %781, %782 : vector<4x512xf32>
    %784 = arith.addf %778, %783 : vector<4x512xf32>
    %785 = vector.extract_strided_slice %761 {offsets = [0, 3], sizes = [4, 1], strides = [1, 1]} : vector<4x108xf32> to vector<4x1xf32>
    %786 = vector.extract_strided_slice %766 {offsets = [3, 0], sizes = [1, 512], strides = [1, 1]} : vector<4x512xf32> to vector<1x512xf32>
    %787 = vector.broadcast %785 : vector<4x1xf32> to vector<4x512xf32>
    %788 = vector.broadcast %786 : vector<1x512xf32> to vector<4x512xf32>
    %789 = arith.mulf %787, %788 : vector<4x512xf32>
    %790 = arith.addf %784, %789 : vector<4x512xf32>
    %c72_i32_40 = arith.constant 72 : i32
    %791 = tpu.dynamic_rotate %760 by %c72_i32_40 dim 1 : vector<4x512xf32>, i32 -> vector<4x512xf32>
    %c1_41 = arith.constant 1 : index
    %c0_42 = arith.constant 0 : index
    %792 = vector.load %arg6[%c1_41, %c0_42] : memref<27x512xf32, #tpu.memory_space<vmem>>, vector<1x512xf32>
    %793 = vector.broadcast %792 : vector<1x512xf32> to vector<4x512xf32>
    %794 = arith.mulf %791, %793 : vector<4x512xf32>
    %795 = vector.extract_strided_slice %761 {offsets = [0, 4], sizes = [4, 1], strides = [1, 1]} : vector<4x108xf32> to vector<4x1xf32>
    %796 = vector.extract_strided_slice %794 {offsets = [0, 0], sizes = [1, 512], strides = [1, 1]} : vector<4x512xf32> to vector<1x512xf32>
    %797 = vector.broadcast %795 : vector<4x1xf32> to vector<4x512xf32>
    %798 = vector.broadcast %796 : vector<1x512xf32> to vector<4x512xf32>
    %799 = arith.mulf %797, %798 : vector<4x512xf32>
    %800 = arith.addf %790, %799 : vector<4x512xf32>
    %801 = vector.extract_strided_slice %761 {offsets = [0, 5], sizes = [4, 1], strides = [1, 1]} : vector<4x108xf32> to vector<4x1xf32>
    %802 = vector.extract_strided_slice %794 {offsets = [1, 0], sizes = [1, 512], strides = [1, 1]} : vector<4x512xf32> to vector<1x512xf32>
    %803 = vector.broadcast %801 : vector<4x1xf32> to vector<4x512xf32>
    %804 = vector.broadcast %802 : vector<1x512xf32> to vector<4x512xf32>
    %805 = arith.mulf %803, %804 : vector<4x512xf32>
    %806 = arith.addf %800, %805 : vector<4x512xf32>
    %807 = vector.extract_strided_slice %761 {offsets = [0, 6], sizes = [4, 1], strides = [1, 1]} : vector<4x108xf32> to vector<4x1xf32>
    %808 = vector.extract_strided_slice %794 {offsets = [2, 0], sizes = [1, 512], strides = [1, 1]} : vector<4x512xf32> to vector<1x512xf32>
    %809 = vector.broadcast %807 : vector<4x1xf32> to vector<4x512xf32>
    %810 = vector.broadcast %808 : vector<1x512xf32> to vector<4x512xf32>
    %811 = arith.mulf %809, %810 : vector<4x512xf32>
    %812 = arith.addf %806, %811 : vector<4x512xf32>
    %813 = vector.extract_strided_slice %761 {offsets = [0, 7], sizes = [4, 1], strides = [1, 1]} : vector<4x108xf32> to vector<4x1xf32>
    %814 = vector.extract_strided_slice %794 {offsets = [3, 0], sizes = [1, 512], strides = [1, 1]} : vector<4x512xf32> to vector<1x512xf32>
    %815 = vector.broadcast %813 : vector<4x1xf32> to vector<4x512xf32>
    %816 = vector.broadcast %814 : vector<1x512xf32> to vector<4x512xf32>
    %817 = arith.mulf %815, %816 : vector<4x512xf32>
    %818 = arith.addf %812, %817 : vector<4x512xf32>
    %c71_i32_43 = arith.constant 71 : i32
    %819 = tpu.dynamic_rotate %760 by %c71_i32_43 dim 1 : vector<4x512xf32>, i32 -> vector<4x512xf32>
    %c2_44 = arith.constant 2 : index
    %c0_45 = arith.constant 0 : index
    %820 = vector.load %arg6[%c2_44, %c0_45] : memref<27x512xf32, #tpu.memory_space<vmem>>, vector<1x512xf32>
    %821 = vector.broadcast %820 : vector<1x512xf32> to vector<4x512xf32>
    %822 = arith.mulf %819, %821 : vector<4x512xf32>
    %823 = vector.extract_strided_slice %761 {offsets = [0, 8], sizes = [4, 1], strides = [1, 1]} : vector<4x108xf32> to vector<4x1xf32>
    %824 = vector.extract_strided_slice %822 {offsets = [0, 0], sizes = [1, 512], strides = [1, 1]} : vector<4x512xf32> to vector<1x512xf32>
    %825 = vector.broadcast %823 : vector<4x1xf32> to vector<4x512xf32>
    %826 = vector.broadcast %824 : vector<1x512xf32> to vector<4x512xf32>
    %827 = arith.mulf %825, %826 : vector<4x512xf32>
    %828 = arith.addf %818, %827 : vector<4x512xf32>
    %829 = vector.extract_strided_slice %761 {offsets = [0, 9], sizes = [4, 1], strides = [1, 1]} : vector<4x108xf32> to vector<4x1xf32>
    %830 = vector.extract_strided_slice %822 {offsets = [1, 0], sizes = [1, 512], strides = [1, 1]} : vector<4x512xf32> to vector<1x512xf32>
    %831 = vector.broadcast %829 : vector<4x1xf32> to vector<4x512xf32>
    %832 = vector.broadcast %830 : vector<1x512xf32> to vector<4x512xf32>
    %833 = arith.mulf %831, %832 : vector<4x512xf32>
    %834 = arith.addf %828, %833 : vector<4x512xf32>
    %835 = vector.extract_strided_slice %761 {offsets = [0, 10], sizes = [4, 1], strides = [1, 1]} : vector<4x108xf32> to vector<4x1xf32>
    %836 = vector.extract_strided_slice %822 {offsets = [2, 0], sizes = [1, 512], strides = [1, 1]} : vector<4x512xf32> to vector<1x512xf32>
    %837 = vector.broadcast %835 : vector<4x1xf32> to vector<4x512xf32>
    %838 = vector.broadcast %836 : vector<1x512xf32> to vector<4x512xf32>
    %839 = arith.mulf %837, %838 : vector<4x512xf32>
    %840 = arith.addf %834, %839 : vector<4x512xf32>
    %841 = vector.extract_strided_slice %761 {offsets = [0, 11], sizes = [4, 1], strides = [1, 1]} : vector<4x108xf32> to vector<4x1xf32>
    %842 = vector.extract_strided_slice %822 {offsets = [3, 0], sizes = [1, 512], strides = [1, 1]} : vector<4x512xf32> to vector<1x512xf32>
    %843 = vector.broadcast %841 : vector<4x1xf32> to vector<4x512xf32>
    %844 = vector.broadcast %842 : vector<1x512xf32> to vector<4x512xf32>
    %845 = arith.mulf %843, %844 : vector<4x512xf32>
    %846 = arith.addf %840, %845 : vector<4x512xf32>
    %c65_i32_46 = arith.constant 65 : i32
    %847 = tpu.dynamic_rotate %760 by %c65_i32_46 dim 1 : vector<4x512xf32>, i32 -> vector<4x512xf32>
    %c3_47 = arith.constant 3 : index
    %c0_48 = arith.constant 0 : index
    %848 = vector.load %arg6[%c3_47, %c0_48] : memref<27x512xf32, #tpu.memory_space<vmem>>, vector<1x512xf32>
    %849 = vector.broadcast %848 : vector<1x512xf32> to vector<4x512xf32>
    %850 = arith.mulf %847, %849 : vector<4x512xf32>
    %851 = vector.extract_strided_slice %761 {offsets = [0, 12], sizes = [4, 1], strides = [1, 1]} : vector<4x108xf32> to vector<4x1xf32>
    %852 = vector.extract_strided_slice %850 {offsets = [0, 0], sizes = [1, 512], strides = [1, 1]} : vector<4x512xf32> to vector<1x512xf32>
    %853 = vector.broadcast %851 : vector<4x1xf32> to vector<4x512xf32>
    %854 = vector.broadcast %852 : vector<1x512xf32> to vector<4x512xf32>
    %855 = arith.mulf %853, %854 : vector<4x512xf32>
    %856 = arith.addf %846, %855 : vector<4x512xf32>
    %857 = vector.extract_strided_slice %761 {offsets = [0, 13], sizes = [4, 1], strides = [1, 1]} : vector<4x108xf32> to vector<4x1xf32>
    %858 = vector.extract_strided_slice %850 {offsets = [1, 0], sizes = [1, 512], strides = [1, 1]} : vector<4x512xf32> to vector<1x512xf32>
    %859 = vector.broadcast %857 : vector<4x1xf32> to vector<4x512xf32>
    %860 = vector.broadcast %858 : vector<1x512xf32> to vector<4x512xf32>
    %861 = arith.mulf %859, %860 : vector<4x512xf32>
    %862 = arith.addf %856, %861 : vector<4x512xf32>
    %863 = vector.extract_strided_slice %761 {offsets = [0, 14], sizes = [4, 1], strides = [1, 1]} : vector<4x108xf32> to vector<4x1xf32>
    %864 = vector.extract_strided_slice %850 {offsets = [2, 0], sizes = [1, 512], strides = [1, 1]} : vector<4x512xf32> to vector<1x512xf32>
    %865 = vector.broadcast %863 : vector<4x1xf32> to vector<4x512xf32>
    %866 = vector.broadcast %864 : vector<1x512xf32> to vector<4x512xf32>
    %867 = arith.mulf %865, %866 : vector<4x512xf32>
    %868 = arith.addf %862, %867 : vector<4x512xf32>
    %869 = vector.extract_strided_slice %761 {offsets = [0, 15], sizes = [4, 1], strides = [1, 1]} : vector<4x108xf32> to vector<4x1xf32>
    %870 = vector.extract_strided_slice %850 {offsets = [3, 0], sizes = [1, 512], strides = [1, 1]} : vector<4x512xf32> to vector<1x512xf32>
    %871 = vector.broadcast %869 : vector<4x1xf32> to vector<4x512xf32>
    %872 = vector.broadcast %870 : vector<1x512xf32> to vector<4x512xf32>
    %873 = arith.mulf %871, %872 : vector<4x512xf32>
    %874 = arith.addf %868, %873 : vector<4x512xf32>
    %c64_i32_49 = arith.constant 64 : i32
    %875 = tpu.dynamic_rotate %760 by %c64_i32_49 dim 1 : vector<4x512xf32>, i32 -> vector<4x512xf32>
    %c4_50 = arith.constant 4 : index
    %c0_51 = arith.constant 0 : index
    %876 = vector.load %arg6[%c4_50, %c0_51] : memref<27x512xf32, #tpu.memory_space<vmem>>, vector<1x512xf32>
    %877 = vector.broadcast %876 : vector<1x512xf32> to vector<4x512xf32>
    %878 = arith.mulf %875, %877 : vector<4x512xf32>
    %879 = vector.extract_strided_slice %761 {offsets = [0, 16], sizes = [4, 1], strides = [1, 1]} : vector<4x108xf32> to vector<4x1xf32>
    %880 = vector.extract_strided_slice %878 {offsets = [0, 0], sizes = [1, 512], strides = [1, 1]} : vector<4x512xf32> to vector<1x512xf32>
    %881 = vector.broadcast %879 : vector<4x1xf32> to vector<4x512xf32>
    %882 = vector.broadcast %880 : vector<1x512xf32> to vector<4x512xf32>
    %883 = arith.mulf %881, %882 : vector<4x512xf32>
    %884 = arith.addf %874, %883 : vector<4x512xf32>
    %885 = vector.extract_strided_slice %761 {offsets = [0, 17], sizes = [4, 1], strides = [1, 1]} : vector<4x108xf32> to vector<4x1xf32>
    %886 = vector.extract_strided_slice %878 {offsets = [1, 0], sizes = [1, 512], strides = [1, 1]} : vector<4x512xf32> to vector<1x512xf32>
    %887 = vector.broadcast %885 : vector<4x1xf32> to vector<4x512xf32>
    %888 = vector.broadcast %886 : vector<1x512xf32> to vector<4x512xf32>
    %889 = arith.mulf %887, %888 : vector<4x512xf32>
    %890 = arith.addf %884, %889 : vector<4x512xf32>
    %891 = vector.extract_strided_slice %761 {offsets = [0, 18], sizes = [4, 1], strides = [1, 1]} : vector<4x108xf32> to vector<4x1xf32>
    %892 = vector.extract_strided_slice %878 {offsets = [2, 0], sizes = [1, 512], strides = [1, 1]} : vector<4x512xf32> to vector<1x512xf32>
    %893 = vector.broadcast %891 : vector<4x1xf32> to vector<4x512xf32>
    %894 = vector.broadcast %892 : vector<1x512xf32> to vector<4x512xf32>
    %895 = arith.mulf %893, %894 : vector<4x512xf32>
    %896 = arith.addf %890, %895 : vector<4x512xf32>
    %897 = vector.extract_strided_slice %761 {offsets = [0, 19], sizes = [4, 1], strides = [1, 1]} : vector<4x108xf32> to vector<4x1xf32>
    %898 = vector.extract_strided_slice %878 {offsets = [3, 0], sizes = [1, 512], strides = [1, 1]} : vector<4x512xf32> to vector<1x512xf32>
    %899 = vector.broadcast %897 : vector<4x1xf32> to vector<4x512xf32>
    %900 = vector.broadcast %898 : vector<1x512xf32> to vector<4x512xf32>
    %901 = arith.mulf %899, %900 : vector<4x512xf32>
    %902 = arith.addf %896, %901 : vector<4x512xf32>
    %c63_i32_52 = arith.constant 63 : i32
    %903 = tpu.dynamic_rotate %760 by %c63_i32_52 dim 1 : vector<4x512xf32>, i32 -> vector<4x512xf32>
    %c5_53 = arith.constant 5 : index
    %c0_54 = arith.constant 0 : index
    %904 = vector.load %arg6[%c5_53, %c0_54] : memref<27x512xf32, #tpu.memory_space<vmem>>, vector<1x512xf32>
    %905 = vector.broadcast %904 : vector<1x512xf32> to vector<4x512xf32>
    %906 = arith.mulf %903, %905 : vector<4x512xf32>
    %907 = vector.extract_strided_slice %761 {offsets = [0, 20], sizes = [4, 1], strides = [1, 1]} : vector<4x108xf32> to vector<4x1xf32>
    %908 = vector.extract_strided_slice %906 {offsets = [0, 0], sizes = [1, 512], strides = [1, 1]} : vector<4x512xf32> to vector<1x512xf32>
    %909 = vector.broadcast %907 : vector<4x1xf32> to vector<4x512xf32>
    %910 = vector.broadcast %908 : vector<1x512xf32> to vector<4x512xf32>
    %911 = arith.mulf %909, %910 : vector<4x512xf32>
    %912 = arith.addf %902, %911 : vector<4x512xf32>
    %913 = vector.extract_strided_slice %761 {offsets = [0, 21], sizes = [4, 1], strides = [1, 1]} : vector<4x108xf32> to vector<4x1xf32>
    %914 = vector.extract_strided_slice %906 {offsets = [1, 0], sizes = [1, 512], strides = [1, 1]} : vector<4x512xf32> to vector<1x512xf32>
    %915 = vector.broadcast %913 : vector<4x1xf32> to vector<4x512xf32>
    %916 = vector.broadcast %914 : vector<1x512xf32> to vector<4x512xf32>
    %917 = arith.mulf %915, %916 : vector<4x512xf32>
    %918 = arith.addf %912, %917 : vector<4x512xf32>
    %919 = vector.extract_strided_slice %761 {offsets = [0, 22], sizes = [4, 1], strides = [1, 1]} : vector<4x108xf32> to vector<4x1xf32>
    %920 = vector.extract_strided_slice %906 {offsets = [2, 0], sizes = [1, 512], strides = [1, 1]} : vector<4x512xf32> to vector<1x512xf32>
    %921 = vector.broadcast %919 : vector<4x1xf32> to vector<4x512xf32>
    %922 = vector.broadcast %920 : vector<1x512xf32> to vector<4x512xf32>
    %923 = arith.mulf %921, %922 : vector<4x512xf32>
    %924 = arith.addf %918, %923 : vector<4x512xf32>
    %925 = vector.extract_strided_slice %761 {offsets = [0, 23], sizes = [4, 1], strides = [1, 1]} : vector<4x108xf32> to vector<4x1xf32>
    %926 = vector.extract_strided_slice %906 {offsets = [3, 0], sizes = [1, 512], strides = [1, 1]} : vector<4x512xf32> to vector<1x512xf32>
    %927 = vector.broadcast %925 : vector<4x1xf32> to vector<4x512xf32>
    %928 = vector.broadcast %926 : vector<1x512xf32> to vector<4x512xf32>
    %929 = arith.mulf %927, %928 : vector<4x512xf32>
    %930 = arith.addf %924, %929 : vector<4x512xf32>
    %c57_i32_55 = arith.constant 57 : i32
    %931 = tpu.dynamic_rotate %760 by %c57_i32_55 dim 1 : vector<4x512xf32>, i32 -> vector<4x512xf32>
    %c6_56 = arith.constant 6 : index
    %c0_57 = arith.constant 0 : index
    %932 = vector.load %arg6[%c6_56, %c0_57] : memref<27x512xf32, #tpu.memory_space<vmem>>, vector<1x512xf32>
    %933 = vector.broadcast %932 : vector<1x512xf32> to vector<4x512xf32>
    %934 = arith.mulf %931, %933 : vector<4x512xf32>
    %935 = vector.extract_strided_slice %761 {offsets = [0, 24], sizes = [4, 1], strides = [1, 1]} : vector<4x108xf32> to vector<4x1xf32>
    %936 = vector.extract_strided_slice %934 {offsets = [0, 0], sizes = [1, 512], strides = [1, 1]} : vector<4x512xf32> to vector<1x512xf32>
    %937 = vector.broadcast %935 : vector<4x1xf32> to vector<4x512xf32>
    %938 = vector.broadcast %936 : vector<1x512xf32> to vector<4x512xf32>
    %939 = arith.mulf %937, %938 : vector<4x512xf32>
    %940 = arith.addf %930, %939 : vector<4x512xf32>
    %941 = vector.extract_strided_slice %761 {offsets = [0, 25], sizes = [4, 1], strides = [1, 1]} : vector<4x108xf32> to vector<4x1xf32>
    %942 = vector.extract_strided_slice %934 {offsets = [1, 0], sizes = [1, 512], strides = [1, 1]} : vector<4x512xf32> to vector<1x512xf32>
    %943 = vector.broadcast %941 : vector<4x1xf32> to vector<4x512xf32>
    %944 = vector.broadcast %942 : vector<1x512xf32> to vector<4x512xf32>
    %945 = arith.mulf %943, %944 : vector<4x512xf32>
    %946 = arith.addf %940, %945 : vector<4x512xf32>
    %947 = vector.extract_strided_slice %761 {offsets = [0, 26], sizes = [4, 1], strides = [1, 1]} : vector<4x108xf32> to vector<4x1xf32>
    %948 = vector.extract_strided_slice %934 {offsets = [2, 0], sizes = [1, 512], strides = [1, 1]} : vector<4x512xf32> to vector<1x512xf32>
    %949 = vector.broadcast %947 : vector<4x1xf32> to vector<4x512xf32>
    %950 = vector.broadcast %948 : vector<1x512xf32> to vector<4x512xf32>
    %951 = arith.mulf %949, %950 : vector<4x512xf32>
    %952 = arith.addf %946, %951 : vector<4x512xf32>
    %953 = vector.extract_strided_slice %761 {offsets = [0, 27], sizes = [4, 1], strides = [1, 1]} : vector<4x108xf32> to vector<4x1xf32>
    %954 = vector.extract_strided_slice %934 {offsets = [3, 0], sizes = [1, 512], strides = [1, 1]} : vector<4x512xf32> to vector<1x512xf32>
    %955 = vector.broadcast %953 : vector<4x1xf32> to vector<4x512xf32>
    %956 = vector.broadcast %954 : vector<1x512xf32> to vector<4x512xf32>
    %957 = arith.mulf %955, %956 : vector<4x512xf32>
    %958 = arith.addf %952, %957 : vector<4x512xf32>
    %c56_i32_58 = arith.constant 56 : i32
    %959 = tpu.dynamic_rotate %760 by %c56_i32_58 dim 1 : vector<4x512xf32>, i32 -> vector<4x512xf32>
    %c7_59 = arith.constant 7 : index
    %c0_60 = arith.constant 0 : index
    %960 = vector.load %arg6[%c7_59, %c0_60] : memref<27x512xf32, #tpu.memory_space<vmem>>, vector<1x512xf32>
    %961 = vector.broadcast %960 : vector<1x512xf32> to vector<4x512xf32>
    %962 = arith.mulf %959, %961 : vector<4x512xf32>
    %963 = vector.extract_strided_slice %761 {offsets = [0, 28], sizes = [4, 1], strides = [1, 1]} : vector<4x108xf32> to vector<4x1xf32>
    %964 = vector.extract_strided_slice %962 {offsets = [0, 0], sizes = [1, 512], strides = [1, 1]} : vector<4x512xf32> to vector<1x512xf32>
    %965 = vector.broadcast %963 : vector<4x1xf32> to vector<4x512xf32>
    %966 = vector.broadcast %964 : vector<1x512xf32> to vector<4x512xf32>
    %967 = arith.mulf %965, %966 : vector<4x512xf32>
    %968 = arith.addf %958, %967 : vector<4x512xf32>
    %969 = vector.extract_strided_slice %761 {offsets = [0, 29], sizes = [4, 1], strides = [1, 1]} : vector<4x108xf32> to vector<4x1xf32>
    %970 = vector.extract_strided_slice %962 {offsets = [1, 0], sizes = [1, 512], strides = [1, 1]} : vector<4x512xf32> to vector<1x512xf32>
    %971 = vector.broadcast %969 : vector<4x1xf32> to vector<4x512xf32>
    %972 = vector.broadcast %970 : vector<1x512xf32> to vector<4x512xf32>
    %973 = arith.mulf %971, %972 : vector<4x512xf32>
    %974 = arith.addf %968, %973 : vector<4x512xf32>
    %975 = vector.extract_strided_slice %761 {offsets = [0, 30], sizes = [4, 1], strides = [1, 1]} : vector<4x108xf32> to vector<4x1xf32>
    %976 = vector.extract_strided_slice %962 {offsets = [2, 0], sizes = [1, 512], strides = [1, 1]} : vector<4x512xf32> to vector<1x512xf32>
    %977 = vector.broadcast %975 : vector<4x1xf32> to vector<4x512xf32>
    %978 = vector.broadcast %976 : vector<1x512xf32> to vector<4x512xf32>
    %979 = arith.mulf %977, %978 : vector<4x512xf32>
    %980 = arith.addf %974, %979 : vector<4x512xf32>
    %981 = vector.extract_strided_slice %761 {offsets = [0, 31], sizes = [4, 1], strides = [1, 1]} : vector<4x108xf32> to vector<4x1xf32>
    %982 = vector.extract_strided_slice %962 {offsets = [3, 0], sizes = [1, 512], strides = [1, 1]} : vector<4x512xf32> to vector<1x512xf32>
    %983 = vector.broadcast %981 : vector<4x1xf32> to vector<4x512xf32>
    %984 = vector.broadcast %982 : vector<1x512xf32> to vector<4x512xf32>
    %985 = arith.mulf %983, %984 : vector<4x512xf32>
    %986 = arith.addf %980, %985 : vector<4x512xf32>
    %c55_i32_61 = arith.constant 55 : i32
    %987 = tpu.dynamic_rotate %760 by %c55_i32_61 dim 1 : vector<4x512xf32>, i32 -> vector<4x512xf32>
    %c8_62 = arith.constant 8 : index
    %c0_63 = arith.constant 0 : index
    %988 = vector.load %arg6[%c8_62, %c0_63] : memref<27x512xf32, #tpu.memory_space<vmem>>, vector<1x512xf32>
    %989 = vector.broadcast %988 : vector<1x512xf32> to vector<4x512xf32>
    %990 = arith.mulf %987, %989 : vector<4x512xf32>
    %991 = vector.extract_strided_slice %761 {offsets = [0, 32], sizes = [4, 1], strides = [1, 1]} : vector<4x108xf32> to vector<4x1xf32>
    %992 = vector.extract_strided_slice %990 {offsets = [0, 0], sizes = [1, 512], strides = [1, 1]} : vector<4x512xf32> to vector<1x512xf32>
    %993 = vector.broadcast %991 : vector<4x1xf32> to vector<4x512xf32>
    %994 = vector.broadcast %992 : vector<1x512xf32> to vector<4x512xf32>
    %995 = arith.mulf %993, %994 : vector<4x512xf32>
    %996 = arith.addf %986, %995 : vector<4x512xf32>
    %997 = vector.extract_strided_slice %761 {offsets = [0, 33], sizes = [4, 1], strides = [1, 1]} : vector<4x108xf32> to vector<4x1xf32>
    %998 = vector.extract_strided_slice %990 {offsets = [1, 0], sizes = [1, 512], strides = [1, 1]} : vector<4x512xf32> to vector<1x512xf32>
    %999 = vector.broadcast %997 : vector<4x1xf32> to vector<4x512xf32>
    %1000 = vector.broadcast %998 : vector<1x512xf32> to vector<4x512xf32>
    %1001 = arith.mulf %999, %1000 : vector<4x512xf32>
    %1002 = arith.addf %996, %1001 : vector<4x512xf32>
    %1003 = vector.extract_strided_slice %761 {offsets = [0, 34], sizes = [4, 1], strides = [1, 1]} : vector<4x108xf32> to vector<4x1xf32>
    %1004 = vector.extract_strided_slice %990 {offsets = [2, 0], sizes = [1, 512], strides = [1, 1]} : vector<4x512xf32> to vector<1x512xf32>
    %1005 = vector.broadcast %1003 : vector<4x1xf32> to vector<4x512xf32>
    %1006 = vector.broadcast %1004 : vector<1x512xf32> to vector<4x512xf32>
    %1007 = arith.mulf %1005, %1006 : vector<4x512xf32>
    %1008 = arith.addf %1002, %1007 : vector<4x512xf32>
    %1009 = vector.extract_strided_slice %761 {offsets = [0, 35], sizes = [4, 1], strides = [1, 1]} : vector<4x108xf32> to vector<4x1xf32>
    %1010 = vector.extract_strided_slice %990 {offsets = [3, 0], sizes = [1, 512], strides = [1, 1]} : vector<4x512xf32> to vector<1x512xf32>
    %1011 = vector.broadcast %1009 : vector<4x1xf32> to vector<4x512xf32>
    %1012 = vector.broadcast %1010 : vector<1x512xf32> to vector<4x512xf32>
    %1013 = arith.mulf %1011, %1012 : vector<4x512xf32>
    %1014 = arith.addf %1008, %1013 : vector<4x512xf32>
    %c9_i32_64 = arith.constant 9 : i32
    %1015 = tpu.dynamic_rotate %760 by %c9_i32_64 dim 1 : vector<4x512xf32>, i32 -> vector<4x512xf32>
    %c9_65 = arith.constant 9 : index
    %c0_66 = arith.constant 0 : index
    %1016 = vector.load %arg6[%c9_65, %c0_66] : memref<27x512xf32, #tpu.memory_space<vmem>>, vector<1x512xf32>
    %1017 = vector.broadcast %1016 : vector<1x512xf32> to vector<4x512xf32>
    %1018 = arith.mulf %1015, %1017 : vector<4x512xf32>
    %1019 = vector.extract_strided_slice %761 {offsets = [0, 36], sizes = [4, 1], strides = [1, 1]} : vector<4x108xf32> to vector<4x1xf32>
    %1020 = vector.extract_strided_slice %1018 {offsets = [0, 0], sizes = [1, 512], strides = [1, 1]} : vector<4x512xf32> to vector<1x512xf32>
    %1021 = vector.broadcast %1019 : vector<4x1xf32> to vector<4x512xf32>
    %1022 = vector.broadcast %1020 : vector<1x512xf32> to vector<4x512xf32>
    %1023 = arith.mulf %1021, %1022 : vector<4x512xf32>
    %1024 = arith.addf %1014, %1023 : vector<4x512xf32>
    %1025 = vector.extract_strided_slice %761 {offsets = [0, 37], sizes = [4, 1], strides = [1, 1]} : vector<4x108xf32> to vector<4x1xf32>
    %1026 = vector.extract_strided_slice %1018 {offsets = [1, 0], sizes = [1, 512], strides = [1, 1]} : vector<4x512xf32> to vector<1x512xf32>
    %1027 = vector.broadcast %1025 : vector<4x1xf32> to vector<4x512xf32>
    %1028 = vector.broadcast %1026 : vector<1x512xf32> to vector<4x512xf32>
    %1029 = arith.mulf %1027, %1028 : vector<4x512xf32>
    %1030 = arith.addf %1024, %1029 : vector<4x512xf32>
    %1031 = vector.extract_strided_slice %761 {offsets = [0, 38], sizes = [4, 1], strides = [1, 1]} : vector<4x108xf32> to vector<4x1xf32>
    %1032 = vector.extract_strided_slice %1018 {offsets = [2, 0], sizes = [1, 512], strides = [1, 1]} : vector<4x512xf32> to vector<1x512xf32>
    %1033 = vector.broadcast %1031 : vector<4x1xf32> to vector<4x512xf32>
    %1034 = vector.broadcast %1032 : vector<1x512xf32> to vector<4x512xf32>
    %1035 = arith.mulf %1033, %1034 : vector<4x512xf32>
    %1036 = arith.addf %1030, %1035 : vector<4x512xf32>
    %1037 = vector.extract_strided_slice %761 {offsets = [0, 39], sizes = [4, 1], strides = [1, 1]} : vector<4x108xf32> to vector<4x1xf32>
    %1038 = vector.extract_strided_slice %1018 {offsets = [3, 0], sizes = [1, 512], strides = [1, 1]} : vector<4x512xf32> to vector<1x512xf32>
    %1039 = vector.broadcast %1037 : vector<4x1xf32> to vector<4x512xf32>
    %1040 = vector.broadcast %1038 : vector<1x512xf32> to vector<4x512xf32>
    %1041 = arith.mulf %1039, %1040 : vector<4x512xf32>
    %1042 = arith.addf %1036, %1041 : vector<4x512xf32>
    %c8_i32_67 = arith.constant 8 : i32
    %1043 = tpu.dynamic_rotate %760 by %c8_i32_67 dim 1 : vector<4x512xf32>, i32 -> vector<4x512xf32>
    %c10_68 = arith.constant 10 : index
    %c0_69 = arith.constant 0 : index
    %1044 = vector.load %arg6[%c10_68, %c0_69] : memref<27x512xf32, #tpu.memory_space<vmem>>, vector<1x512xf32>
    %1045 = vector.broadcast %1044 : vector<1x512xf32> to vector<4x512xf32>
    %1046 = arith.mulf %1043, %1045 : vector<4x512xf32>
    %1047 = vector.extract_strided_slice %761 {offsets = [0, 40], sizes = [4, 1], strides = [1, 1]} : vector<4x108xf32> to vector<4x1xf32>
    %1048 = vector.extract_strided_slice %1046 {offsets = [0, 0], sizes = [1, 512], strides = [1, 1]} : vector<4x512xf32> to vector<1x512xf32>
    %1049 = vector.broadcast %1047 : vector<4x1xf32> to vector<4x512xf32>
    %1050 = vector.broadcast %1048 : vector<1x512xf32> to vector<4x512xf32>
    %1051 = arith.mulf %1049, %1050 : vector<4x512xf32>
    %1052 = arith.addf %1042, %1051 : vector<4x512xf32>
    %1053 = vector.extract_strided_slice %761 {offsets = [0, 41], sizes = [4, 1], strides = [1, 1]} : vector<4x108xf32> to vector<4x1xf32>
    %1054 = vector.extract_strided_slice %1046 {offsets = [1, 0], sizes = [1, 512], strides = [1, 1]} : vector<4x512xf32> to vector<1x512xf32>
    %1055 = vector.broadcast %1053 : vector<4x1xf32> to vector<4x512xf32>
    %1056 = vector.broadcast %1054 : vector<1x512xf32> to vector<4x512xf32>
    %1057 = arith.mulf %1055, %1056 : vector<4x512xf32>
    %1058 = arith.addf %1052, %1057 : vector<4x512xf32>
    %1059 = vector.extract_strided_slice %761 {offsets = [0, 42], sizes = [4, 1], strides = [1, 1]} : vector<4x108xf32> to vector<4x1xf32>
    %1060 = vector.extract_strided_slice %1046 {offsets = [2, 0], sizes = [1, 512], strides = [1, 1]} : vector<4x512xf32> to vector<1x512xf32>
    %1061 = vector.broadcast %1059 : vector<4x1xf32> to vector<4x512xf32>
    %1062 = vector.broadcast %1060 : vector<1x512xf32> to vector<4x512xf32>
    %1063 = arith.mulf %1061, %1062 : vector<4x512xf32>
    %1064 = arith.addf %1058, %1063 : vector<4x512xf32>
    %1065 = vector.extract_strided_slice %761 {offsets = [0, 43], sizes = [4, 1], strides = [1, 1]} : vector<4x108xf32> to vector<4x1xf32>
    %1066 = vector.extract_strided_slice %1046 {offsets = [3, 0], sizes = [1, 512], strides = [1, 1]} : vector<4x512xf32> to vector<1x512xf32>
    %1067 = vector.broadcast %1065 : vector<4x1xf32> to vector<4x512xf32>
    %1068 = vector.broadcast %1066 : vector<1x512xf32> to vector<4x512xf32>
    %1069 = arith.mulf %1067, %1068 : vector<4x512xf32>
    %1070 = arith.addf %1064, %1069 : vector<4x512xf32>
    %c7_i32_70 = arith.constant 7 : i32
    %1071 = tpu.dynamic_rotate %760 by %c7_i32_70 dim 1 : vector<4x512xf32>, i32 -> vector<4x512xf32>
    %c11_71 = arith.constant 11 : index
    %c0_72 = arith.constant 0 : index
    %1072 = vector.load %arg6[%c11_71, %c0_72] : memref<27x512xf32, #tpu.memory_space<vmem>>, vector<1x512xf32>
    %1073 = vector.broadcast %1072 : vector<1x512xf32> to vector<4x512xf32>
    %1074 = arith.mulf %1071, %1073 : vector<4x512xf32>
    %1075 = vector.extract_strided_slice %761 {offsets = [0, 44], sizes = [4, 1], strides = [1, 1]} : vector<4x108xf32> to vector<4x1xf32>
    %1076 = vector.extract_strided_slice %1074 {offsets = [0, 0], sizes = [1, 512], strides = [1, 1]} : vector<4x512xf32> to vector<1x512xf32>
    %1077 = vector.broadcast %1075 : vector<4x1xf32> to vector<4x512xf32>
    %1078 = vector.broadcast %1076 : vector<1x512xf32> to vector<4x512xf32>
    %1079 = arith.mulf %1077, %1078 : vector<4x512xf32>
    %1080 = arith.addf %1070, %1079 : vector<4x512xf32>
    %1081 = vector.extract_strided_slice %761 {offsets = [0, 45], sizes = [4, 1], strides = [1, 1]} : vector<4x108xf32> to vector<4x1xf32>
    %1082 = vector.extract_strided_slice %1074 {offsets = [1, 0], sizes = [1, 512], strides = [1, 1]} : vector<4x512xf32> to vector<1x512xf32>
    %1083 = vector.broadcast %1081 : vector<4x1xf32> to vector<4x512xf32>
    %1084 = vector.broadcast %1082 : vector<1x512xf32> to vector<4x512xf32>
    %1085 = arith.mulf %1083, %1084 : vector<4x512xf32>
    %1086 = arith.addf %1080, %1085 : vector<4x512xf32>
    %1087 = vector.extract_strided_slice %761 {offsets = [0, 46], sizes = [4, 1], strides = [1, 1]} : vector<4x108xf32> to vector<4x1xf32>
    %1088 = vector.extract_strided_slice %1074 {offsets = [2, 0], sizes = [1, 512], strides = [1, 1]} : vector<4x512xf32> to vector<1x512xf32>
    %1089 = vector.broadcast %1087 : vector<4x1xf32> to vector<4x512xf32>
    %1090 = vector.broadcast %1088 : vector<1x512xf32> to vector<4x512xf32>
    %1091 = arith.mulf %1089, %1090 : vector<4x512xf32>
    %1092 = arith.addf %1086, %1091 : vector<4x512xf32>
    %1093 = vector.extract_strided_slice %761 {offsets = [0, 47], sizes = [4, 1], strides = [1, 1]} : vector<4x108xf32> to vector<4x1xf32>
    %1094 = vector.extract_strided_slice %1074 {offsets = [3, 0], sizes = [1, 512], strides = [1, 1]} : vector<4x512xf32> to vector<1x512xf32>
    %1095 = vector.broadcast %1093 : vector<4x1xf32> to vector<4x512xf32>
    %1096 = vector.broadcast %1094 : vector<1x512xf32> to vector<4x512xf32>
    %1097 = arith.mulf %1095, %1096 : vector<4x512xf32>
    %1098 = arith.addf %1092, %1097 : vector<4x512xf32>
    %c1_i32_73 = arith.constant 1 : i32
    %1099 = tpu.dynamic_rotate %760 by %c1_i32_73 dim 1 : vector<4x512xf32>, i32 -> vector<4x512xf32>
    %c12_74 = arith.constant 12 : index
    %c0_75 = arith.constant 0 : index
    %1100 = vector.load %arg6[%c12_74, %c0_75] : memref<27x512xf32, #tpu.memory_space<vmem>>, vector<1x512xf32>
    %1101 = vector.broadcast %1100 : vector<1x512xf32> to vector<4x512xf32>
    %1102 = arith.mulf %1099, %1101 : vector<4x512xf32>
    %1103 = vector.extract_strided_slice %761 {offsets = [0, 48], sizes = [4, 1], strides = [1, 1]} : vector<4x108xf32> to vector<4x1xf32>
    %1104 = vector.extract_strided_slice %1102 {offsets = [0, 0], sizes = [1, 512], strides = [1, 1]} : vector<4x512xf32> to vector<1x512xf32>
    %1105 = vector.broadcast %1103 : vector<4x1xf32> to vector<4x512xf32>
    %1106 = vector.broadcast %1104 : vector<1x512xf32> to vector<4x512xf32>
    %1107 = arith.mulf %1105, %1106 : vector<4x512xf32>
    %1108 = arith.addf %1098, %1107 : vector<4x512xf32>
    %1109 = vector.extract_strided_slice %761 {offsets = [0, 49], sizes = [4, 1], strides = [1, 1]} : vector<4x108xf32> to vector<4x1xf32>
    %1110 = vector.extract_strided_slice %1102 {offsets = [1, 0], sizes = [1, 512], strides = [1, 1]} : vector<4x512xf32> to vector<1x512xf32>
    %1111 = vector.broadcast %1109 : vector<4x1xf32> to vector<4x512xf32>
    %1112 = vector.broadcast %1110 : vector<1x512xf32> to vector<4x512xf32>
    %1113 = arith.mulf %1111, %1112 : vector<4x512xf32>
    %1114 = arith.addf %1108, %1113 : vector<4x512xf32>
    %1115 = vector.extract_strided_slice %761 {offsets = [0, 50], sizes = [4, 1], strides = [1, 1]} : vector<4x108xf32> to vector<4x1xf32>
    %1116 = vector.extract_strided_slice %1102 {offsets = [2, 0], sizes = [1, 512], strides = [1, 1]} : vector<4x512xf32> to vector<1x512xf32>
    %1117 = vector.broadcast %1115 : vector<4x1xf32> to vector<4x512xf32>
    %1118 = vector.broadcast %1116 : vector<1x512xf32> to vector<4x512xf32>
    %1119 = arith.mulf %1117, %1118 : vector<4x512xf32>
    %1120 = arith.addf %1114, %1119 : vector<4x512xf32>
    %1121 = vector.extract_strided_slice %761 {offsets = [0, 51], sizes = [4, 1], strides = [1, 1]} : vector<4x108xf32> to vector<4x1xf32>
    %1122 = vector.extract_strided_slice %1102 {offsets = [3, 0], sizes = [1, 512], strides = [1, 1]} : vector<4x512xf32> to vector<1x512xf32>
    %1123 = vector.broadcast %1121 : vector<4x1xf32> to vector<4x512xf32>
    %1124 = vector.broadcast %1122 : vector<1x512xf32> to vector<4x512xf32>
    %1125 = arith.mulf %1123, %1124 : vector<4x512xf32>
    %1126 = arith.addf %1120, %1125 : vector<4x512xf32>
    %1127 = vector.extract_strided_slice %761 {offsets = [0, 52], sizes = [4, 1], strides = [1, 1]} : vector<4x108xf32> to vector<4x1xf32>
    %1128 = vector.extract_strided_slice %760 {offsets = [0, 0], sizes = [1, 512], strides = [1, 1]} : vector<4x512xf32> to vector<1x512xf32>
    %1129 = vector.broadcast %1127 : vector<4x1xf32> to vector<4x512xf32>
    %1130 = vector.broadcast %1128 : vector<1x512xf32> to vector<4x512xf32>
    %1131 = arith.mulf %1129, %1130 : vector<4x512xf32>
    %1132 = arith.addf %1126, %1131 : vector<4x512xf32>
    %1133 = vector.extract_strided_slice %761 {offsets = [0, 53], sizes = [4, 1], strides = [1, 1]} : vector<4x108xf32> to vector<4x1xf32>
    %1134 = vector.extract_strided_slice %760 {offsets = [1, 0], sizes = [1, 512], strides = [1, 1]} : vector<4x512xf32> to vector<1x512xf32>
    %1135 = vector.broadcast %1133 : vector<4x1xf32> to vector<4x512xf32>
    %1136 = vector.broadcast %1134 : vector<1x512xf32> to vector<4x512xf32>
    %1137 = arith.mulf %1135, %1136 : vector<4x512xf32>
    %1138 = arith.addf %1132, %1137 : vector<4x512xf32>
    %1139 = vector.extract_strided_slice %761 {offsets = [0, 54], sizes = [4, 1], strides = [1, 1]} : vector<4x108xf32> to vector<4x1xf32>
    %1140 = vector.extract_strided_slice %760 {offsets = [2, 0], sizes = [1, 512], strides = [1, 1]} : vector<4x512xf32> to vector<1x512xf32>
    %1141 = vector.broadcast %1139 : vector<4x1xf32> to vector<4x512xf32>
    %1142 = vector.broadcast %1140 : vector<1x512xf32> to vector<4x512xf32>
    %1143 = arith.mulf %1141, %1142 : vector<4x512xf32>
    %1144 = arith.addf %1138, %1143 : vector<4x512xf32>
    %1145 = vector.extract_strided_slice %761 {offsets = [0, 55], sizes = [4, 1], strides = [1, 1]} : vector<4x108xf32> to vector<4x1xf32>
    %1146 = vector.extract_strided_slice %760 {offsets = [3, 0], sizes = [1, 512], strides = [1, 1]} : vector<4x512xf32> to vector<1x512xf32>
    %1147 = vector.broadcast %1145 : vector<4x1xf32> to vector<4x512xf32>
    %1148 = vector.broadcast %1146 : vector<1x512xf32> to vector<4x512xf32>
    %1149 = arith.mulf %1147, %1148 : vector<4x512xf32>
    %1150 = arith.addf %1144, %1149 : vector<4x512xf32>
    %c511_i32_76 = arith.constant 511 : i32
    %1151 = tpu.dynamic_rotate %760 by %c511_i32_76 dim 1 : vector<4x512xf32>, i32 -> vector<4x512xf32>
    %c14_77 = arith.constant 14 : index
    %c0_78 = arith.constant 0 : index
    %1152 = vector.load %arg6[%c14_77, %c0_78] : memref<27x512xf32, #tpu.memory_space<vmem>>, vector<1x512xf32>
    %1153 = vector.broadcast %1152 : vector<1x512xf32> to vector<4x512xf32>
    %1154 = arith.mulf %1151, %1153 : vector<4x512xf32>
    %1155 = vector.extract_strided_slice %761 {offsets = [0, 56], sizes = [4, 1], strides = [1, 1]} : vector<4x108xf32> to vector<4x1xf32>
    %1156 = vector.extract_strided_slice %1154 {offsets = [0, 0], sizes = [1, 512], strides = [1, 1]} : vector<4x512xf32> to vector<1x512xf32>
    %1157 = vector.broadcast %1155 : vector<4x1xf32> to vector<4x512xf32>
    %1158 = vector.broadcast %1156 : vector<1x512xf32> to vector<4x512xf32>
    %1159 = arith.mulf %1157, %1158 : vector<4x512xf32>
    %1160 = arith.addf %1150, %1159 : vector<4x512xf32>
    %1161 = vector.extract_strided_slice %761 {offsets = [0, 57], sizes = [4, 1], strides = [1, 1]} : vector<4x108xf32> to vector<4x1xf32>
    %1162 = vector.extract_strided_slice %1154 {offsets = [1, 0], sizes = [1, 512], strides = [1, 1]} : vector<4x512xf32> to vector<1x512xf32>
    %1163 = vector.broadcast %1161 : vector<4x1xf32> to vector<4x512xf32>
    %1164 = vector.broadcast %1162 : vector<1x512xf32> to vector<4x512xf32>
    %1165 = arith.mulf %1163, %1164 : vector<4x512xf32>
    %1166 = arith.addf %1160, %1165 : vector<4x512xf32>
    %1167 = vector.extract_strided_slice %761 {offsets = [0, 58], sizes = [4, 1], strides = [1, 1]} : vector<4x108xf32> to vector<4x1xf32>
    %1168 = vector.extract_strided_slice %1154 {offsets = [2, 0], sizes = [1, 512], strides = [1, 1]} : vector<4x512xf32> to vector<1x512xf32>
    %1169 = vector.broadcast %1167 : vector<4x1xf32> to vector<4x512xf32>
    %1170 = vector.broadcast %1168 : vector<1x512xf32> to vector<4x512xf32>
    %1171 = arith.mulf %1169, %1170 : vector<4x512xf32>
    %1172 = arith.addf %1166, %1171 : vector<4x512xf32>
    %1173 = vector.extract_strided_slice %761 {offsets = [0, 59], sizes = [4, 1], strides = [1, 1]} : vector<4x108xf32> to vector<4x1xf32>
    %1174 = vector.extract_strided_slice %1154 {offsets = [3, 0], sizes = [1, 512], strides = [1, 1]} : vector<4x512xf32> to vector<1x512xf32>
    %1175 = vector.broadcast %1173 : vector<4x1xf32> to vector<4x512xf32>
    %1176 = vector.broadcast %1174 : vector<1x512xf32> to vector<4x512xf32>
    %1177 = arith.mulf %1175, %1176 : vector<4x512xf32>
    %1178 = arith.addf %1172, %1177 : vector<4x512xf32>
    %c505_i32_79 = arith.constant 505 : i32
    %1179 = tpu.dynamic_rotate %760 by %c505_i32_79 dim 1 : vector<4x512xf32>, i32 -> vector<4x512xf32>
    %c15_80 = arith.constant 15 : index
    %c0_81 = arith.constant 0 : index
    %1180 = vector.load %arg6[%c15_80, %c0_81] : memref<27x512xf32, #tpu.memory_space<vmem>>, vector<1x512xf32>
    %1181 = vector.broadcast %1180 : vector<1x512xf32> to vector<4x512xf32>
    %1182 = arith.mulf %1179, %1181 : vector<4x512xf32>
    %1183 = vector.extract_strided_slice %761 {offsets = [0, 60], sizes = [4, 1], strides = [1, 1]} : vector<4x108xf32> to vector<4x1xf32>
    %1184 = vector.extract_strided_slice %1182 {offsets = [0, 0], sizes = [1, 512], strides = [1, 1]} : vector<4x512xf32> to vector<1x512xf32>
    %1185 = vector.broadcast %1183 : vector<4x1xf32> to vector<4x512xf32>
    %1186 = vector.broadcast %1184 : vector<1x512xf32> to vector<4x512xf32>
    %1187 = arith.mulf %1185, %1186 : vector<4x512xf32>
    %1188 = arith.addf %1178, %1187 : vector<4x512xf32>
    %1189 = vector.extract_strided_slice %761 {offsets = [0, 61], sizes = [4, 1], strides = [1, 1]} : vector<4x108xf32> to vector<4x1xf32>
    %1190 = vector.extract_strided_slice %1182 {offsets = [1, 0], sizes = [1, 512], strides = [1, 1]} : vector<4x512xf32> to vector<1x512xf32>
    %1191 = vector.broadcast %1189 : vector<4x1xf32> to vector<4x512xf32>
    %1192 = vector.broadcast %1190 : vector<1x512xf32> to vector<4x512xf32>
    %1193 = arith.mulf %1191, %1192 : vector<4x512xf32>
    %1194 = arith.addf %1188, %1193 : vector<4x512xf32>
    %1195 = vector.extract_strided_slice %761 {offsets = [0, 62], sizes = [4, 1], strides = [1, 1]} : vector<4x108xf32> to vector<4x1xf32>
    %1196 = vector.extract_strided_slice %1182 {offsets = [2, 0], sizes = [1, 512], strides = [1, 1]} : vector<4x512xf32> to vector<1x512xf32>
    %1197 = vector.broadcast %1195 : vector<4x1xf32> to vector<4x512xf32>
    %1198 = vector.broadcast %1196 : vector<1x512xf32> to vector<4x512xf32>
    %1199 = arith.mulf %1197, %1198 : vector<4x512xf32>
    %1200 = arith.addf %1194, %1199 : vector<4x512xf32>
    %1201 = vector.extract_strided_slice %761 {offsets = [0, 63], sizes = [4, 1], strides = [1, 1]} : vector<4x108xf32> to vector<4x1xf32>
    %1202 = vector.extract_strided_slice %1182 {offsets = [3, 0], sizes = [1, 512], strides = [1, 1]} : vector<4x512xf32> to vector<1x512xf32>
    %1203 = vector.broadcast %1201 : vector<4x1xf32> to vector<4x512xf32>
    %1204 = vector.broadcast %1202 : vector<1x512xf32> to vector<4x512xf32>
    %1205 = arith.mulf %1203, %1204 : vector<4x512xf32>
    %1206 = arith.addf %1200, %1205 : vector<4x512xf32>
    %c504_i32_82 = arith.constant 504 : i32
    %1207 = tpu.dynamic_rotate %760 by %c504_i32_82 dim 1 : vector<4x512xf32>, i32 -> vector<4x512xf32>
    %c16_83 = arith.constant 16 : index
    %c0_84 = arith.constant 0 : index
    %1208 = vector.load %arg6[%c16_83, %c0_84] : memref<27x512xf32, #tpu.memory_space<vmem>>, vector<1x512xf32>
    %1209 = vector.broadcast %1208 : vector<1x512xf32> to vector<4x512xf32>
    %1210 = arith.mulf %1207, %1209 : vector<4x512xf32>
    %1211 = vector.extract_strided_slice %761 {offsets = [0, 64], sizes = [4, 1], strides = [1, 1]} : vector<4x108xf32> to vector<4x1xf32>
    %1212 = vector.extract_strided_slice %1210 {offsets = [0, 0], sizes = [1, 512], strides = [1, 1]} : vector<4x512xf32> to vector<1x512xf32>
    %1213 = vector.broadcast %1211 : vector<4x1xf32> to vector<4x512xf32>
    %1214 = vector.broadcast %1212 : vector<1x512xf32> to vector<4x512xf32>
    %1215 = arith.mulf %1213, %1214 : vector<4x512xf32>
    %1216 = arith.addf %1206, %1215 : vector<4x512xf32>
    %1217 = vector.extract_strided_slice %761 {offsets = [0, 65], sizes = [4, 1], strides = [1, 1]} : vector<4x108xf32> to vector<4x1xf32>
    %1218 = vector.extract_strided_slice %1210 {offsets = [1, 0], sizes = [1, 512], strides = [1, 1]} : vector<4x512xf32> to vector<1x512xf32>
    %1219 = vector.broadcast %1217 : vector<4x1xf32> to vector<4x512xf32>
    %1220 = vector.broadcast %1218 : vector<1x512xf32> to vector<4x512xf32>
    %1221 = arith.mulf %1219, %1220 : vector<4x512xf32>
    %1222 = arith.addf %1216, %1221 : vector<4x512xf32>
    %1223 = vector.extract_strided_slice %761 {offsets = [0, 66], sizes = [4, 1], strides = [1, 1]} : vector<4x108xf32> to vector<4x1xf32>
    %1224 = vector.extract_strided_slice %1210 {offsets = [2, 0], sizes = [1, 512], strides = [1, 1]} : vector<4x512xf32> to vector<1x512xf32>
    %1225 = vector.broadcast %1223 : vector<4x1xf32> to vector<4x512xf32>
    %1226 = vector.broadcast %1224 : vector<1x512xf32> to vector<4x512xf32>
    %1227 = arith.mulf %1225, %1226 : vector<4x512xf32>
    %1228 = arith.addf %1222, %1227 : vector<4x512xf32>
    %1229 = vector.extract_strided_slice %761 {offsets = [0, 67], sizes = [4, 1], strides = [1, 1]} : vector<4x108xf32> to vector<4x1xf32>
    %1230 = vector.extract_strided_slice %1210 {offsets = [3, 0], sizes = [1, 512], strides = [1, 1]} : vector<4x512xf32> to vector<1x512xf32>
    %1231 = vector.broadcast %1229 : vector<4x1xf32> to vector<4x512xf32>
    %1232 = vector.broadcast %1230 : vector<1x512xf32> to vector<4x512xf32>
    %1233 = arith.mulf %1231, %1232 : vector<4x512xf32>
    %1234 = arith.addf %1228, %1233 : vector<4x512xf32>
    %c503_i32_85 = arith.constant 503 : i32
    %1235 = tpu.dynamic_rotate %760 by %c503_i32_85 dim 1 : vector<4x512xf32>, i32 -> vector<4x512xf32>
    %c17_86 = arith.constant 17 : index
    %c0_87 = arith.constant 0 : index
    %1236 = vector.load %arg6[%c17_86, %c0_87] : memref<27x512xf32, #tpu.memory_space<vmem>>, vector<1x512xf32>
    %1237 = vector.broadcast %1236 : vector<1x512xf32> to vector<4x512xf32>
    %1238 = arith.mulf %1235, %1237 : vector<4x512xf32>
    %1239 = vector.extract_strided_slice %761 {offsets = [0, 68], sizes = [4, 1], strides = [1, 1]} : vector<4x108xf32> to vector<4x1xf32>
    %1240 = vector.extract_strided_slice %1238 {offsets = [0, 0], sizes = [1, 512], strides = [1, 1]} : vector<4x512xf32> to vector<1x512xf32>
    %1241 = vector.broadcast %1239 : vector<4x1xf32> to vector<4x512xf32>
    %1242 = vector.broadcast %1240 : vector<1x512xf32> to vector<4x512xf32>
    %1243 = arith.mulf %1241, %1242 : vector<4x512xf32>
    %1244 = arith.addf %1234, %1243 : vector<4x512xf32>
    %1245 = vector.extract_strided_slice %761 {offsets = [0, 69], sizes = [4, 1], strides = [1, 1]} : vector<4x108xf32> to vector<4x1xf32>
    %1246 = vector.extract_strided_slice %1238 {offsets = [1, 0], sizes = [1, 512], strides = [1, 1]} : vector<4x512xf32> to vector<1x512xf32>
    %1247 = vector.broadcast %1245 : vector<4x1xf32> to vector<4x512xf32>
    %1248 = vector.broadcast %1246 : vector<1x512xf32> to vector<4x512xf32>
    %1249 = arith.mulf %1247, %1248 : vector<4x512xf32>
    %1250 = arith.addf %1244, %1249 : vector<4x512xf32>
    %1251 = vector.extract_strided_slice %761 {offsets = [0, 70], sizes = [4, 1], strides = [1, 1]} : vector<4x108xf32> to vector<4x1xf32>
    %1252 = vector.extract_strided_slice %1238 {offsets = [2, 0], sizes = [1, 512], strides = [1, 1]} : vector<4x512xf32> to vector<1x512xf32>
    %1253 = vector.broadcast %1251 : vector<4x1xf32> to vector<4x512xf32>
    %1254 = vector.broadcast %1252 : vector<1x512xf32> to vector<4x512xf32>
    %1255 = arith.mulf %1253, %1254 : vector<4x512xf32>
    %1256 = arith.addf %1250, %1255 : vector<4x512xf32>
    %1257 = vector.extract_strided_slice %761 {offsets = [0, 71], sizes = [4, 1], strides = [1, 1]} : vector<4x108xf32> to vector<4x1xf32>
    %1258 = vector.extract_strided_slice %1238 {offsets = [3, 0], sizes = [1, 512], strides = [1, 1]} : vector<4x512xf32> to vector<1x512xf32>
    %1259 = vector.broadcast %1257 : vector<4x1xf32> to vector<4x512xf32>
    %1260 = vector.broadcast %1258 : vector<1x512xf32> to vector<4x512xf32>
    %1261 = arith.mulf %1259, %1260 : vector<4x512xf32>
    %1262 = arith.addf %1256, %1261 : vector<4x512xf32>
    %c457_i32_88 = arith.constant 457 : i32
    %1263 = tpu.dynamic_rotate %760 by %c457_i32_88 dim 1 : vector<4x512xf32>, i32 -> vector<4x512xf32>
    %c18_89 = arith.constant 18 : index
    %c0_90 = arith.constant 0 : index
    %1264 = vector.load %arg6[%c18_89, %c0_90] : memref<27x512xf32, #tpu.memory_space<vmem>>, vector<1x512xf32>
    %1265 = vector.broadcast %1264 : vector<1x512xf32> to vector<4x512xf32>
    %1266 = arith.mulf %1263, %1265 : vector<4x512xf32>
    %1267 = vector.extract_strided_slice %761 {offsets = [0, 72], sizes = [4, 1], strides = [1, 1]} : vector<4x108xf32> to vector<4x1xf32>
    %1268 = vector.extract_strided_slice %1266 {offsets = [0, 0], sizes = [1, 512], strides = [1, 1]} : vector<4x512xf32> to vector<1x512xf32>
    %1269 = vector.broadcast %1267 : vector<4x1xf32> to vector<4x512xf32>
    %1270 = vector.broadcast %1268 : vector<1x512xf32> to vector<4x512xf32>
    %1271 = arith.mulf %1269, %1270 : vector<4x512xf32>
    %1272 = arith.addf %1262, %1271 : vector<4x512xf32>
    %1273 = vector.extract_strided_slice %761 {offsets = [0, 73], sizes = [4, 1], strides = [1, 1]} : vector<4x108xf32> to vector<4x1xf32>
    %1274 = vector.extract_strided_slice %1266 {offsets = [1, 0], sizes = [1, 512], strides = [1, 1]} : vector<4x512xf32> to vector<1x512xf32>
    %1275 = vector.broadcast %1273 : vector<4x1xf32> to vector<4x512xf32>
    %1276 = vector.broadcast %1274 : vector<1x512xf32> to vector<4x512xf32>
    %1277 = arith.mulf %1275, %1276 : vector<4x512xf32>
    %1278 = arith.addf %1272, %1277 : vector<4x512xf32>
    %1279 = vector.extract_strided_slice %761 {offsets = [0, 74], sizes = [4, 1], strides = [1, 1]} : vector<4x108xf32> to vector<4x1xf32>
    %1280 = vector.extract_strided_slice %1266 {offsets = [2, 0], sizes = [1, 512], strides = [1, 1]} : vector<4x512xf32> to vector<1x512xf32>
    %1281 = vector.broadcast %1279 : vector<4x1xf32> to vector<4x512xf32>
    %1282 = vector.broadcast %1280 : vector<1x512xf32> to vector<4x512xf32>
    %1283 = arith.mulf %1281, %1282 : vector<4x512xf32>
    %1284 = arith.addf %1278, %1283 : vector<4x512xf32>
    %1285 = vector.extract_strided_slice %761 {offsets = [0, 75], sizes = [4, 1], strides = [1, 1]} : vector<4x108xf32> to vector<4x1xf32>
    %1286 = vector.extract_strided_slice %1266 {offsets = [3, 0], sizes = [1, 512], strides = [1, 1]} : vector<4x512xf32> to vector<1x512xf32>
    %1287 = vector.broadcast %1285 : vector<4x1xf32> to vector<4x512xf32>
    %1288 = vector.broadcast %1286 : vector<1x512xf32> to vector<4x512xf32>
    %1289 = arith.mulf %1287, %1288 : vector<4x512xf32>
    %1290 = arith.addf %1284, %1289 : vector<4x512xf32>
    %c456_i32_91 = arith.constant 456 : i32
    %1291 = tpu.dynamic_rotate %760 by %c456_i32_91 dim 1 : vector<4x512xf32>, i32 -> vector<4x512xf32>
    %c19_92 = arith.constant 19 : index
    %c0_93 = arith.constant 0 : index
    %1292 = vector.load %arg6[%c19_92, %c0_93] : memref<27x512xf32, #tpu.memory_space<vmem>>, vector<1x512xf32>
    %1293 = vector.broadcast %1292 : vector<1x512xf32> to vector<4x512xf32>
    %1294 = arith.mulf %1291, %1293 : vector<4x512xf32>
    %1295 = vector.extract_strided_slice %761 {offsets = [0, 76], sizes = [4, 1], strides = [1, 1]} : vector<4x108xf32> to vector<4x1xf32>
    %1296 = vector.extract_strided_slice %1294 {offsets = [0, 0], sizes = [1, 512], strides = [1, 1]} : vector<4x512xf32> to vector<1x512xf32>
    %1297 = vector.broadcast %1295 : vector<4x1xf32> to vector<4x512xf32>
    %1298 = vector.broadcast %1296 : vector<1x512xf32> to vector<4x512xf32>
    %1299 = arith.mulf %1297, %1298 : vector<4x512xf32>
    %1300 = arith.addf %1290, %1299 : vector<4x512xf32>
    %1301 = vector.extract_strided_slice %761 {offsets = [0, 77], sizes = [4, 1], strides = [1, 1]} : vector<4x108xf32> to vector<4x1xf32>
    %1302 = vector.extract_strided_slice %1294 {offsets = [1, 0], sizes = [1, 512], strides = [1, 1]} : vector<4x512xf32> to vector<1x512xf32>
    %1303 = vector.broadcast %1301 : vector<4x1xf32> to vector<4x512xf32>
    %1304 = vector.broadcast %1302 : vector<1x512xf32> to vector<4x512xf32>
    %1305 = arith.mulf %1303, %1304 : vector<4x512xf32>
    %1306 = arith.addf %1300, %1305 : vector<4x512xf32>
    %1307 = vector.extract_strided_slice %761 {offsets = [0, 78], sizes = [4, 1], strides = [1, 1]} : vector<4x108xf32> to vector<4x1xf32>
    %1308 = vector.extract_strided_slice %1294 {offsets = [2, 0], sizes = [1, 512], strides = [1, 1]} : vector<4x512xf32> to vector<1x512xf32>
    %1309 = vector.broadcast %1307 : vector<4x1xf32> to vector<4x512xf32>
    %1310 = vector.broadcast %1308 : vector<1x512xf32> to vector<4x512xf32>
    %1311 = arith.mulf %1309, %1310 : vector<4x512xf32>
    %1312 = arith.addf %1306, %1311 : vector<4x512xf32>
    %1313 = vector.extract_strided_slice %761 {offsets = [0, 79], sizes = [4, 1], strides = [1, 1]} : vector<4x108xf32> to vector<4x1xf32>
    %1314 = vector.extract_strided_slice %1294 {offsets = [3, 0], sizes = [1, 512], strides = [1, 1]} : vector<4x512xf32> to vector<1x512xf32>
    %1315 = vector.broadcast %1313 : vector<4x1xf32> to vector<4x512xf32>
    %1316 = vector.broadcast %1314 : vector<1x512xf32> to vector<4x512xf32>
    %1317 = arith.mulf %1315, %1316 : vector<4x512xf32>
    %1318 = arith.addf %1312, %1317 : vector<4x512xf32>
    %c455_i32_94 = arith.constant 455 : i32
    %1319 = tpu.dynamic_rotate %760 by %c455_i32_94 dim 1 : vector<4x512xf32>, i32 -> vector<4x512xf32>
    %c20_95 = arith.constant 20 : index
    %c0_96 = arith.constant 0 : index
    %1320 = vector.load %arg6[%c20_95, %c0_96] : memref<27x512xf32, #tpu.memory_space<vmem>>, vector<1x512xf32>
    %1321 = vector.broadcast %1320 : vector<1x512xf32> to vector<4x512xf32>
    %1322 = arith.mulf %1319, %1321 : vector<4x512xf32>
    %1323 = vector.extract_strided_slice %761 {offsets = [0, 80], sizes = [4, 1], strides = [1, 1]} : vector<4x108xf32> to vector<4x1xf32>
    %1324 = vector.extract_strided_slice %1322 {offsets = [0, 0], sizes = [1, 512], strides = [1, 1]} : vector<4x512xf32> to vector<1x512xf32>
    %1325 = vector.broadcast %1323 : vector<4x1xf32> to vector<4x512xf32>
    %1326 = vector.broadcast %1324 : vector<1x512xf32> to vector<4x512xf32>
    %1327 = arith.mulf %1325, %1326 : vector<4x512xf32>
    %1328 = arith.addf %1318, %1327 : vector<4x512xf32>
    %1329 = vector.extract_strided_slice %761 {offsets = [0, 81], sizes = [4, 1], strides = [1, 1]} : vector<4x108xf32> to vector<4x1xf32>
    %1330 = vector.extract_strided_slice %1322 {offsets = [1, 0], sizes = [1, 512], strides = [1, 1]} : vector<4x512xf32> to vector<1x512xf32>
    %1331 = vector.broadcast %1329 : vector<4x1xf32> to vector<4x512xf32>
    %1332 = vector.broadcast %1330 : vector<1x512xf32> to vector<4x512xf32>
    %1333 = arith.mulf %1331, %1332 : vector<4x512xf32>
    %1334 = arith.addf %1328, %1333 : vector<4x512xf32>
    %1335 = vector.extract_strided_slice %761 {offsets = [0, 82], sizes = [4, 1], strides = [1, 1]} : vector<4x108xf32> to vector<4x1xf32>
    %1336 = vector.extract_strided_slice %1322 {offsets = [2, 0], sizes = [1, 512], strides = [1, 1]} : vector<4x512xf32> to vector<1x512xf32>
    %1337 = vector.broadcast %1335 : vector<4x1xf32> to vector<4x512xf32>
    %1338 = vector.broadcast %1336 : vector<1x512xf32> to vector<4x512xf32>
    %1339 = arith.mulf %1337, %1338 : vector<4x512xf32>
    %1340 = arith.addf %1334, %1339 : vector<4x512xf32>
    %1341 = vector.extract_strided_slice %761 {offsets = [0, 83], sizes = [4, 1], strides = [1, 1]} : vector<4x108xf32> to vector<4x1xf32>
    %1342 = vector.extract_strided_slice %1322 {offsets = [3, 0], sizes = [1, 512], strides = [1, 1]} : vector<4x512xf32> to vector<1x512xf32>
    %1343 = vector.broadcast %1341 : vector<4x1xf32> to vector<4x512xf32>
    %1344 = vector.broadcast %1342 : vector<1x512xf32> to vector<4x512xf32>
    %1345 = arith.mulf %1343, %1344 : vector<4x512xf32>
    %1346 = arith.addf %1340, %1345 : vector<4x512xf32>
    %c449_i32_97 = arith.constant 449 : i32
    %1347 = tpu.dynamic_rotate %760 by %c449_i32_97 dim 1 : vector<4x512xf32>, i32 -> vector<4x512xf32>
    %c21_98 = arith.constant 21 : index
    %c0_99 = arith.constant 0 : index
    %1348 = vector.load %arg6[%c21_98, %c0_99] : memref<27x512xf32, #tpu.memory_space<vmem>>, vector<1x512xf32>
    %1349 = vector.broadcast %1348 : vector<1x512xf32> to vector<4x512xf32>
    %1350 = arith.mulf %1347, %1349 : vector<4x512xf32>
    %1351 = vector.extract_strided_slice %761 {offsets = [0, 84], sizes = [4, 1], strides = [1, 1]} : vector<4x108xf32> to vector<4x1xf32>
    %1352 = vector.extract_strided_slice %1350 {offsets = [0, 0], sizes = [1, 512], strides = [1, 1]} : vector<4x512xf32> to vector<1x512xf32>
    %1353 = vector.broadcast %1351 : vector<4x1xf32> to vector<4x512xf32>
    %1354 = vector.broadcast %1352 : vector<1x512xf32> to vector<4x512xf32>
    %1355 = arith.mulf %1353, %1354 : vector<4x512xf32>
    %1356 = arith.addf %1346, %1355 : vector<4x512xf32>
    %1357 = vector.extract_strided_slice %761 {offsets = [0, 85], sizes = [4, 1], strides = [1, 1]} : vector<4x108xf32> to vector<4x1xf32>
    %1358 = vector.extract_strided_slice %1350 {offsets = [1, 0], sizes = [1, 512], strides = [1, 1]} : vector<4x512xf32> to vector<1x512xf32>
    %1359 = vector.broadcast %1357 : vector<4x1xf32> to vector<4x512xf32>
    %1360 = vector.broadcast %1358 : vector<1x512xf32> to vector<4x512xf32>
    %1361 = arith.mulf %1359, %1360 : vector<4x512xf32>
    %1362 = arith.addf %1356, %1361 : vector<4x512xf32>
    %1363 = vector.extract_strided_slice %761 {offsets = [0, 86], sizes = [4, 1], strides = [1, 1]} : vector<4x108xf32> to vector<4x1xf32>
    %1364 = vector.extract_strided_slice %1350 {offsets = [2, 0], sizes = [1, 512], strides = [1, 1]} : vector<4x512xf32> to vector<1x512xf32>
    %1365 = vector.broadcast %1363 : vector<4x1xf32> to vector<4x512xf32>
    %1366 = vector.broadcast %1364 : vector<1x512xf32> to vector<4x512xf32>
    %1367 = arith.mulf %1365, %1366 : vector<4x512xf32>
    %1368 = arith.addf %1362, %1367 : vector<4x512xf32>
    %1369 = vector.extract_strided_slice %761 {offsets = [0, 87], sizes = [4, 1], strides = [1, 1]} : vector<4x108xf32> to vector<4x1xf32>
    %1370 = vector.extract_strided_slice %1350 {offsets = [3, 0], sizes = [1, 512], strides = [1, 1]} : vector<4x512xf32> to vector<1x512xf32>
    %1371 = vector.broadcast %1369 : vector<4x1xf32> to vector<4x512xf32>
    %1372 = vector.broadcast %1370 : vector<1x512xf32> to vector<4x512xf32>
    %1373 = arith.mulf %1371, %1372 : vector<4x512xf32>
    %1374 = arith.addf %1368, %1373 : vector<4x512xf32>
    %c448_i32_100 = arith.constant 448 : i32
    %1375 = tpu.dynamic_rotate %760 by %c448_i32_100 dim 1 : vector<4x512xf32>, i32 -> vector<4x512xf32>
    %c22_101 = arith.constant 22 : index
    %c0_102 = arith.constant 0 : index
    %1376 = vector.load %arg6[%c22_101, %c0_102] : memref<27x512xf32, #tpu.memory_space<vmem>>, vector<1x512xf32>
    %1377 = vector.broadcast %1376 : vector<1x512xf32> to vector<4x512xf32>
    %1378 = arith.mulf %1375, %1377 : vector<4x512xf32>
    %1379 = vector.extract_strided_slice %761 {offsets = [0, 88], sizes = [4, 1], strides = [1, 1]} : vector<4x108xf32> to vector<4x1xf32>
    %1380 = vector.extract_strided_slice %1378 {offsets = [0, 0], sizes = [1, 512], strides = [1, 1]} : vector<4x512xf32> to vector<1x512xf32>
    %1381 = vector.broadcast %1379 : vector<4x1xf32> to vector<4x512xf32>
    %1382 = vector.broadcast %1380 : vector<1x512xf32> to vector<4x512xf32>
    %1383 = arith.mulf %1381, %1382 : vector<4x512xf32>
    %1384 = arith.addf %1374, %1383 : vector<4x512xf32>
    %1385 = vector.extract_strided_slice %761 {offsets = [0, 89], sizes = [4, 1], strides = [1, 1]} : vector<4x108xf32> to vector<4x1xf32>
    %1386 = vector.extract_strided_slice %1378 {offsets = [1, 0], sizes = [1, 512], strides = [1, 1]} : vector<4x512xf32> to vector<1x512xf32>
    %1387 = vector.broadcast %1385 : vector<4x1xf32> to vector<4x512xf32>
    %1388 = vector.broadcast %1386 : vector<1x512xf32> to vector<4x512xf32>
    %1389 = arith.mulf %1387, %1388 : vector<4x512xf32>
    %1390 = arith.addf %1384, %1389 : vector<4x512xf32>
    %1391 = vector.extract_strided_slice %761 {offsets = [0, 90], sizes = [4, 1], strides = [1, 1]} : vector<4x108xf32> to vector<4x1xf32>
    %1392 = vector.extract_strided_slice %1378 {offsets = [2, 0], sizes = [1, 512], strides = [1, 1]} : vector<4x512xf32> to vector<1x512xf32>
    %1393 = vector.broadcast %1391 : vector<4x1xf32> to vector<4x512xf32>
    %1394 = vector.broadcast %1392 : vector<1x512xf32> to vector<4x512xf32>
    %1395 = arith.mulf %1393, %1394 : vector<4x512xf32>
    %1396 = arith.addf %1390, %1395 : vector<4x512xf32>
    %1397 = vector.extract_strided_slice %761 {offsets = [0, 91], sizes = [4, 1], strides = [1, 1]} : vector<4x108xf32> to vector<4x1xf32>
    %1398 = vector.extract_strided_slice %1378 {offsets = [3, 0], sizes = [1, 512], strides = [1, 1]} : vector<4x512xf32> to vector<1x512xf32>
    %1399 = vector.broadcast %1397 : vector<4x1xf32> to vector<4x512xf32>
    %1400 = vector.broadcast %1398 : vector<1x512xf32> to vector<4x512xf32>
    %1401 = arith.mulf %1399, %1400 : vector<4x512xf32>
    %1402 = arith.addf %1396, %1401 : vector<4x512xf32>
    %c447_i32_103 = arith.constant 447 : i32
    %1403 = tpu.dynamic_rotate %760 by %c447_i32_103 dim 1 : vector<4x512xf32>, i32 -> vector<4x512xf32>
    %c23_104 = arith.constant 23 : index
    %c0_105 = arith.constant 0 : index
    %1404 = vector.load %arg6[%c23_104, %c0_105] : memref<27x512xf32, #tpu.memory_space<vmem>>, vector<1x512xf32>
    %1405 = vector.broadcast %1404 : vector<1x512xf32> to vector<4x512xf32>
    %1406 = arith.mulf %1403, %1405 : vector<4x512xf32>
    %1407 = vector.extract_strided_slice %761 {offsets = [0, 92], sizes = [4, 1], strides = [1, 1]} : vector<4x108xf32> to vector<4x1xf32>
    %1408 = vector.extract_strided_slice %1406 {offsets = [0, 0], sizes = [1, 512], strides = [1, 1]} : vector<4x512xf32> to vector<1x512xf32>
    %1409 = vector.broadcast %1407 : vector<4x1xf32> to vector<4x512xf32>
    %1410 = vector.broadcast %1408 : vector<1x512xf32> to vector<4x512xf32>
    %1411 = arith.mulf %1409, %1410 : vector<4x512xf32>
    %1412 = arith.addf %1402, %1411 : vector<4x512xf32>
    %1413 = vector.extract_strided_slice %761 {offsets = [0, 93], sizes = [4, 1], strides = [1, 1]} : vector<4x108xf32> to vector<4x1xf32>
    %1414 = vector.extract_strided_slice %1406 {offsets = [1, 0], sizes = [1, 512], strides = [1, 1]} : vector<4x512xf32> to vector<1x512xf32>
    %1415 = vector.broadcast %1413 : vector<4x1xf32> to vector<4x512xf32>
    %1416 = vector.broadcast %1414 : vector<1x512xf32> to vector<4x512xf32>
    %1417 = arith.mulf %1415, %1416 : vector<4x512xf32>
    %1418 = arith.addf %1412, %1417 : vector<4x512xf32>
    %1419 = vector.extract_strided_slice %761 {offsets = [0, 94], sizes = [4, 1], strides = [1, 1]} : vector<4x108xf32> to vector<4x1xf32>
    %1420 = vector.extract_strided_slice %1406 {offsets = [2, 0], sizes = [1, 512], strides = [1, 1]} : vector<4x512xf32> to vector<1x512xf32>
    %1421 = vector.broadcast %1419 : vector<4x1xf32> to vector<4x512xf32>
    %1422 = vector.broadcast %1420 : vector<1x512xf32> to vector<4x512xf32>
    %1423 = arith.mulf %1421, %1422 : vector<4x512xf32>
    %1424 = arith.addf %1418, %1423 : vector<4x512xf32>
    %1425 = vector.extract_strided_slice %761 {offsets = [0, 95], sizes = [4, 1], strides = [1, 1]} : vector<4x108xf32> to vector<4x1xf32>
    %1426 = vector.extract_strided_slice %1406 {offsets = [3, 0], sizes = [1, 512], strides = [1, 1]} : vector<4x512xf32> to vector<1x512xf32>
    %1427 = vector.broadcast %1425 : vector<4x1xf32> to vector<4x512xf32>
    %1428 = vector.broadcast %1426 : vector<1x512xf32> to vector<4x512xf32>
    %1429 = arith.mulf %1427, %1428 : vector<4x512xf32>
    %1430 = arith.addf %1424, %1429 : vector<4x512xf32>
    %c441_i32_106 = arith.constant 441 : i32
    %1431 = tpu.dynamic_rotate %760 by %c441_i32_106 dim 1 : vector<4x512xf32>, i32 -> vector<4x512xf32>
    %c24_107 = arith.constant 24 : index
    %c0_108 = arith.constant 0 : index
    %1432 = vector.load %arg6[%c24_107, %c0_108] : memref<27x512xf32, #tpu.memory_space<vmem>>, vector<1x512xf32>
    %1433 = vector.broadcast %1432 : vector<1x512xf32> to vector<4x512xf32>
    %1434 = arith.mulf %1431, %1433 : vector<4x512xf32>
    %1435 = vector.extract_strided_slice %761 {offsets = [0, 96], sizes = [4, 1], strides = [1, 1]} : vector<4x108xf32> to vector<4x1xf32>
    %1436 = vector.extract_strided_slice %1434 {offsets = [0, 0], sizes = [1, 512], strides = [1, 1]} : vector<4x512xf32> to vector<1x512xf32>
    %1437 = vector.broadcast %1435 : vector<4x1xf32> to vector<4x512xf32>
    %1438 = vector.broadcast %1436 : vector<1x512xf32> to vector<4x512xf32>
    %1439 = arith.mulf %1437, %1438 : vector<4x512xf32>
    %1440 = arith.addf %1430, %1439 : vector<4x512xf32>
    %1441 = vector.extract_strided_slice %761 {offsets = [0, 97], sizes = [4, 1], strides = [1, 1]} : vector<4x108xf32> to vector<4x1xf32>
    %1442 = vector.extract_strided_slice %1434 {offsets = [1, 0], sizes = [1, 512], strides = [1, 1]} : vector<4x512xf32> to vector<1x512xf32>
    %1443 = vector.broadcast %1441 : vector<4x1xf32> to vector<4x512xf32>
    %1444 = vector.broadcast %1442 : vector<1x512xf32> to vector<4x512xf32>
    %1445 = arith.mulf %1443, %1444 : vector<4x512xf32>
    %1446 = arith.addf %1440, %1445 : vector<4x512xf32>
    %1447 = vector.extract_strided_slice %761 {offsets = [0, 98], sizes = [4, 1], strides = [1, 1]} : vector<4x108xf32> to vector<4x1xf32>
    %1448 = vector.extract_strided_slice %1434 {offsets = [2, 0], sizes = [1, 512], strides = [1, 1]} : vector<4x512xf32> to vector<1x512xf32>
    %1449 = vector.broadcast %1447 : vector<4x1xf32> to vector<4x512xf32>
    %1450 = vector.broadcast %1448 : vector<1x512xf32> to vector<4x512xf32>
    %1451 = arith.mulf %1449, %1450 : vector<4x512xf32>
    %1452 = arith.addf %1446, %1451 : vector<4x512xf32>
    %1453 = vector.extract_strided_slice %761 {offsets = [0, 99], sizes = [4, 1], strides = [1, 1]} : vector<4x108xf32> to vector<4x1xf32>
    %1454 = vector.extract_strided_slice %1434 {offsets = [3, 0], sizes = [1, 512], strides = [1, 1]} : vector<4x512xf32> to vector<1x512xf32>
    %1455 = vector.broadcast %1453 : vector<4x1xf32> to vector<4x512xf32>
    %1456 = vector.broadcast %1454 : vector<1x512xf32> to vector<4x512xf32>
    %1457 = arith.mulf %1455, %1456 : vector<4x512xf32>
    %1458 = arith.addf %1452, %1457 : vector<4x512xf32>
    %c440_i32_109 = arith.constant 440 : i32
    %1459 = tpu.dynamic_rotate %760 by %c440_i32_109 dim 1 : vector<4x512xf32>, i32 -> vector<4x512xf32>
    %c25_110 = arith.constant 25 : index
    %c0_111 = arith.constant 0 : index
    %1460 = vector.load %arg6[%c25_110, %c0_111] : memref<27x512xf32, #tpu.memory_space<vmem>>, vector<1x512xf32>
    %1461 = vector.broadcast %1460 : vector<1x512xf32> to vector<4x512xf32>
    %1462 = arith.mulf %1459, %1461 : vector<4x512xf32>
    %1463 = vector.extract_strided_slice %761 {offsets = [0, 100], sizes = [4, 1], strides = [1, 1]} : vector<4x108xf32> to vector<4x1xf32>
    %1464 = vector.extract_strided_slice %1462 {offsets = [0, 0], sizes = [1, 512], strides = [1, 1]} : vector<4x512xf32> to vector<1x512xf32>
    %1465 = vector.broadcast %1463 : vector<4x1xf32> to vector<4x512xf32>
    %1466 = vector.broadcast %1464 : vector<1x512xf32> to vector<4x512xf32>
    %1467 = arith.mulf %1465, %1466 : vector<4x512xf32>
    %1468 = arith.addf %1458, %1467 : vector<4x512xf32>
    %1469 = vector.extract_strided_slice %761 {offsets = [0, 101], sizes = [4, 1], strides = [1, 1]} : vector<4x108xf32> to vector<4x1xf32>
    %1470 = vector.extract_strided_slice %1462 {offsets = [1, 0], sizes = [1, 512], strides = [1, 1]} : vector<4x512xf32> to vector<1x512xf32>
    %1471 = vector.broadcast %1469 : vector<4x1xf32> to vector<4x512xf32>
    %1472 = vector.broadcast %1470 : vector<1x512xf32> to vector<4x512xf32>
    %1473 = arith.mulf %1471, %1472 : vector<4x512xf32>
    %1474 = arith.addf %1468, %1473 : vector<4x512xf32>
    %1475 = vector.extract_strided_slice %761 {offsets = [0, 102], sizes = [4, 1], strides = [1, 1]} : vector<4x108xf32> to vector<4x1xf32>
    %1476 = vector.extract_strided_slice %1462 {offsets = [2, 0], sizes = [1, 512], strides = [1, 1]} : vector<4x512xf32> to vector<1x512xf32>
    %1477 = vector.broadcast %1475 : vector<4x1xf32> to vector<4x512xf32>
    %1478 = vector.broadcast %1476 : vector<1x512xf32> to vector<4x512xf32>
    %1479 = arith.mulf %1477, %1478 : vector<4x512xf32>
    %1480 = arith.addf %1474, %1479 : vector<4x512xf32>
    %1481 = vector.extract_strided_slice %761 {offsets = [0, 103], sizes = [4, 1], strides = [1, 1]} : vector<4x108xf32> to vector<4x1xf32>
    %1482 = vector.extract_strided_slice %1462 {offsets = [3, 0], sizes = [1, 512], strides = [1, 1]} : vector<4x512xf32> to vector<1x512xf32>
    %1483 = vector.broadcast %1481 : vector<4x1xf32> to vector<4x512xf32>
    %1484 = vector.broadcast %1482 : vector<1x512xf32> to vector<4x512xf32>
    %1485 = arith.mulf %1483, %1484 : vector<4x512xf32>
    %1486 = arith.addf %1480, %1485 : vector<4x512xf32>
    %c439_i32_112 = arith.constant 439 : i32
    %1487 = tpu.dynamic_rotate %760 by %c439_i32_112 dim 1 : vector<4x512xf32>, i32 -> vector<4x512xf32>
    %c26_113 = arith.constant 26 : index
    %c0_114 = arith.constant 0 : index
    %1488 = vector.load %arg6[%c26_113, %c0_114] : memref<27x512xf32, #tpu.memory_space<vmem>>, vector<1x512xf32>
    %1489 = vector.broadcast %1488 : vector<1x512xf32> to vector<4x512xf32>
    %1490 = arith.mulf %1487, %1489 : vector<4x512xf32>
    %1491 = vector.extract_strided_slice %761 {offsets = [0, 104], sizes = [4, 1], strides = [1, 1]} : vector<4x108xf32> to vector<4x1xf32>
    %1492 = vector.extract_strided_slice %1490 {offsets = [0, 0], sizes = [1, 512], strides = [1, 1]} : vector<4x512xf32> to vector<1x512xf32>
    %1493 = vector.broadcast %1491 : vector<4x1xf32> to vector<4x512xf32>
    %1494 = vector.broadcast %1492 : vector<1x512xf32> to vector<4x512xf32>
    %1495 = arith.mulf %1493, %1494 : vector<4x512xf32>
    %1496 = arith.addf %1486, %1495 : vector<4x512xf32>
    %1497 = vector.extract_strided_slice %761 {offsets = [0, 105], sizes = [4, 1], strides = [1, 1]} : vector<4x108xf32> to vector<4x1xf32>
    %1498 = vector.extract_strided_slice %1490 {offsets = [1, 0], sizes = [1, 512], strides = [1, 1]} : vector<4x512xf32> to vector<1x512xf32>
    %1499 = vector.broadcast %1497 : vector<4x1xf32> to vector<4x512xf32>
    %1500 = vector.broadcast %1498 : vector<1x512xf32> to vector<4x512xf32>
    %1501 = arith.mulf %1499, %1500 : vector<4x512xf32>
    %1502 = arith.addf %1496, %1501 : vector<4x512xf32>
    %1503 = vector.extract_strided_slice %761 {offsets = [0, 106], sizes = [4, 1], strides = [1, 1]} : vector<4x108xf32> to vector<4x1xf32>
    %1504 = vector.extract_strided_slice %1490 {offsets = [2, 0], sizes = [1, 512], strides = [1, 1]} : vector<4x512xf32> to vector<1x512xf32>
    %1505 = vector.broadcast %1503 : vector<4x1xf32> to vector<4x512xf32>
    %1506 = vector.broadcast %1504 : vector<1x512xf32> to vector<4x512xf32>
    %1507 = arith.mulf %1505, %1506 : vector<4x512xf32>
    %1508 = arith.addf %1502, %1507 : vector<4x512xf32>
    %1509 = vector.extract_strided_slice %761 {offsets = [0, 107], sizes = [4, 1], strides = [1, 1]} : vector<4x108xf32> to vector<4x1xf32>
    %1510 = vector.extract_strided_slice %1490 {offsets = [3, 0], sizes = [1, 512], strides = [1, 1]} : vector<4x512xf32> to vector<1x512xf32>
    %1511 = vector.broadcast %1509 : vector<4x1xf32> to vector<4x512xf32>
    %1512 = vector.broadcast %1510 : vector<1x512xf32> to vector<4x512xf32>
    %1513 = arith.mulf %1511, %1512 : vector<4x512xf32>
    %1514 = arith.addf %1508, %1513 : vector<4x512xf32>
    %c0_115 = arith.constant 0 : index
    %c0_116 = arith.constant 0 : index
    %1515 = vector.load %arg5[%c0_115, %c0_116] : memref<4x1xf32, #tpu.memory_space<vmem>>, vector<4x1xf32>
    %1516 = vector.broadcast %1515 : vector<4x1xf32> to vector<4x512xf32>
    %1517 = arith.addf %1514, %1516 : vector<4x512xf32>
    %1518 = arith.addf %1517, %1 : vector<4x512xf32>
    %cst_117 = arith.constant 0.000000e+00 : f32
    %1519 = vector.broadcast %cst_117 : f32 to vector<4x512xf32>
    %1520 = arith.maximumf %1518, %1519 : vector<4x512xf32>
    %c0_118 = arith.constant 0 : index
    %c0_119 = arith.constant 0 : index
    %c0_120 = arith.constant 0 : index
    %1521 = vector.load %arg7[%c0_118, %c0_119, %c0_120] : memref<1x4x512xf32, #tpu.memory_space<vmem>>, vector<1x4x512xf32>
    %1522 = vector.shape_cast %1521 : vector<1x4x512xf32> to vector<4x512xf32>
    %1523 = vector.shape_cast %1520 : vector<4x512xf32> to vector<1x4x512xf32>
    tpu.vector_store %arg7[%c0_118, %c0_119, %c0_120], %1523 {strides = array<i32>} : memref<1x4x512xf32, #tpu.memory_space<vmem>>, vector<1x4x512xf32>,
    return
  }
  func.func @transform_0(%arg0: i32) -> (i32, i32, i32) {
    %c0_i32 = arith.constant 0 : i32
    %c0_i32_0 = arith.constant 0 : i32
    %c0_i32_1 = arith.constant 0 : i32
    return %arg0, %c0_i32, %c0_i32_0 : i32, i32, i32
  }
  func.func @transform_1(%arg0: i32) -> (i32, i32) {
    %c0_i32 = arith.constant 0 : i32
    %c0_i32_0 = arith.constant 0 : i32
    %c0_i32_1 = arith.constant 0 : i32
    return %c0_i32, %c0_i32_0 : i32, i32
  }
  func.func @transform_2(%arg0: i32) -> (i32, i32) {
    %c0_i32 = arith.constant 0 : i32
    %c0_i32_0 = arith.constant 0 : i32
    %c0_i32_1 = arith.constant 0 : i32
    return %c0_i32, %c0_i32_0 : i32, i32
  }
  func.func @transform_3(%arg0: i32) -> (i32, i32) {
    %c0_i32 = arith.constant 0 : i32
    %c0_i32_0 = arith.constant 0 : i32
    %c0_i32_1 = arith.constant 0 : i32
    return %c0_i32, %c0_i32_0 : i32, i32
  }
  func.func @transform_4(%arg0: i32) -> (i32, i32) {
    %c0_i32 = arith.constant 0 : i32
    %c0_i32_0 = arith.constant 0 : i32
    %c0_i32_1 = arith.constant 0 : i32
    return %c0_i32, %c0_i32_0 : i32, i32
  }
  func.func @transform_5(%arg0: i32) -> (i32, i32) {
    %c0_i32 = arith.constant 0 : i32
    %c0_i32_0 = arith.constant 0 : i32
    %c0_i32_1 = arith.constant 0 : i32
    return %c0_i32, %c0_i32_0 : i32, i32
  }
  func.func @transform_6(%arg0: i32) -> (i32, i32, i32) {
    %c0_i32 = arith.constant 0 : i32
    %c0_i32_0 = arith.constant 0 : i32
    %c0_i32_1 = arith.constant 0 : i32
    return %arg0, %c0_i32, %c0_i32_0 : i32, i32, i32
  }
}

</mosaic_0001>

<llo_original>
// kernel: simple_rb_forward.1
$region0: #{simple_rb_forward.1}
  #allocation0 [shape = 'u32[]', space=smem, size = 0x4, offset = 0x4, fixed_abs, tag = 'smem constant byte address 0x4 - core index']
  #allocation1 [shape = 'u32[144,128]{1,0:T(1,128)}', space=vmem, size = 0x12000, scoped, tag = 'internal scratch']
  %s0 = inlined_call_operand.vmem [shape: f32[2,4,512], index: 0, kind: input, shape index: {}]
  %s1 = inlined_call_operand.vmem [shape: f32[4,108], index: 1, kind: input, shape index: {}]
  %s2 = inlined_call_operand.vmem [shape: f32[4,1], index: 2, kind: input, shape index: {}]
  %s3 = inlined_call_operand.vmem [shape: f32[4,108], index: 3, kind: input, shape index: {}]
  %s4 = inlined_call_operand.vmem [shape: f32[4,1], index: 4, kind: input, shape index: {}]
  %s5 = inlined_call_operand.vmem [shape: f32[27,512], index: 5, kind: input, shape index: {}]
  %s6 = inlined_call_operand.vmem [shape: f32[2,4,512], index: 6, kind: output, shape index: {}]
  %s7 = sld [smem:[#allocation0]]
  $region57: #{simple_rb_forward.1} parent=0
    _
  %s9 = ssub.s32 1, %s7
  %s10 = scalar_select 0, %s9, %s7
  loop: start=0, step=1, limit=4
  $region2: #{simple_rb_forward.1} parent=0 // loop_pre_header
    _
  $region3: #{simple_rb_forward.1} parent=0 // loop_header
    %s12 = sphi 0, %s16
    %p13 = scmp.ge.s32.totalorder %s12, 4
    %s22 = sphi 0, %s24
    %s25 = sphi 0, %s22
    %s26 = sphi 0, %s25
    %s42 = sphi 0, %s26
    %s46 = sphi 0, %s46
    %s48 = sphi 0, %s46
    %s49 = sphi 0, %s48
    %s63 = sphi 0, %s49
    %s67 = sphi 0, %s67
    %s69 = sphi 0, %s67
    %s70 = sphi 0, %s69
    %s84 = sphi 0, %s70
    %s88 = sphi 0, %s88
    %s90 = sphi 0, %s88
    %s91 = sphi 0, %s90
    %s105 = sphi 0, %s91
    %s109 = sphi 0, %s109
    %s111 = sphi 0, %s109
    %s112 = sphi 0, %s111
    %s126 = sphi 0, %s112
    %s130 = sphi 0, %s130
    %s132 = sphi 0, %s130
    %s133 = sphi 0, %s132
    %s147 = sphi 0, %s133
    %s153 = sphi 0, %s155
    %s156 = sphi 0, %s153
    %s157 = sphi 0, %s156
    %s173 = sphi 0, %s157
  $region4: #{simple_rb_forward.1} parent=0 // loop_header_branch
    %15 = sbr.rel (%p13) target = $region8
  $region5: #{simple_rb_forward.1} parent=0 // loop_body
    %s17 = ssub.s32 %s12, 1
    %s18 = ssub.s32 %s12, 2
    %s19 = sadd.s32 %s12, 1
    %s20 = ssub.s32 %s12, %s19
    %p21 = scmp.eq.s32.totalorder %s20, 0
    %s23 = sadd.s32 %s22, 1
    %s24 = scalar_select %p21, %s22, %s23
    %p27 = pneg %p21
    %p28 = scmp.eq.s32.totalorder %s12, 1
    %p29 = por %p27, %p28
    %p30 = scmp.ne.s32.totalorder %s22, %s25
    %p31 = scmp.eq.s32.totalorder %s12, 0
    %p32 = por %p30, %p31
    %p33 = scmp.ne.s32.totalorder %s22, %s25
    %p34 = scmp.eq.s32.totalorder %s17, 1
    %p35 = por %p33, %p34
    %p36 = scmp.ne.s32.totalorder %s25, %s26
    %p37 = scmp.eq.s32.totalorder %s17, 0
    %p38 = por %p36, %p37
    %p39 = scmp.ne.s32.totalorder %s25, %s26
    %p40 = scmp.eq.s32.totalorder %s18, 1
    %p41 = por %p39, %p40
    %p43 = scmp.ne.s32.totalorder %s26, %s42
    %p44 = scmp.eq.s32.totalorder %s18, 0
    %p45 = por %p43, %p44
    %s47 = sadd.s32 %s46, 1
    %p50 = scmp.eq.s32.totalorder %s12, 1
    %p51 = scmp.ne.s32.totalorder %s46, %s48
    %p52 = scmp.eq.s32.totalorder %s12, 0
    %p53 = por %p51, %p52
    %p54 = scmp.ne.s32.totalorder %s46, %s48
    %p55 = scmp.eq.s32.totalorder %s17, 1
    %p56 = por %p54, %p55
    %p57 = scmp.ne.s32.totalorder %s48, %s49
    %p58 = scmp.eq.s32.totalorder %s17, 0
    %p59 = por %p57, %p58
    %p60 = scmp.ne.s32.totalorder %s48, %s49
    %p61 = scmp.eq.s32.totalorder %s18, 1
    %p62 = por %p60, %p61
    %p64 = scmp.ne.s32.totalorder %s49, %s63
    %p65 = scmp.eq.s32.totalorder %s18, 0
    %p66 = por %p64, %p65
    %s68 = sadd.s32 %s67, 1
    %p71 = scmp.eq.s32.totalorder %s12, 1
    %p72 = scmp.ne.s32.totalorder %s67, %s69
    %p73 = scmp.eq.s32.totalorder %s12, 0
    %p74 = por %p72, %p73
    %p75 = scmp.ne.s32.totalorder %s67, %s69
    %p76 = scmp.eq.s32.totalorder %s17, 1
    %p77 = por %p75, %p76
    %p78 = scmp.ne.s32.totalorder %s69, %s70
    %p79 = scmp.eq.s32.totalorder %s17, 0
    %p80 = por %p78, %p79
    %p81 = scmp.ne.s32.totalorder %s69, %s70
    %p82 = scmp.eq.s32.totalorder %s18, 1
    %p83 = por %p81, %p82
    %p85 = scmp.ne.s32.totalorder %s70, %s84
    %p86 = scmp.eq.s32.totalorder %s18, 0
    %p87 = por %p85, %p86
    %s89 = sadd.s32 %s88, 1
    %p92 = scmp.eq.s32.totalorder %s12, 1
    %p93 = scmp.ne.s32.totalorder %s88, %s90
    %p94 = scmp.eq.s32.totalorder %s12, 0
    %p95 = por %p93, %p94
    %p96 = scmp.ne.s32.totalorder %s88, %s90
    %p97 = scmp.eq.s32.totalorder %s17, 1
    %p98 = por %p96, %p97
    %p99 = scmp.ne.s32.totalorder %s90, %s91
    %p100 = scmp.eq.s32.totalorder %s17, 0
    %p101 = por %p99, %p100
    %p102 = scmp.ne.s32.totalorder %s90, %s91
    %p103 = scmp.eq.s32.totalorder %s18, 1
    %p104 = por %p102, %p103
    %p106 = scmp.ne.s32.totalorder %s91, %s105
    %p107 = scmp.eq.s32.totalorder %s18, 0
    %p108 = por %p106, %p107
    %s110 = sadd.s32 %s109, 1
    %p113 = scmp.eq.s32.totalorder %s12, 1
    %p114 = scmp.ne.s32.totalorder %s109, %s111
    %p115 = scmp.eq.s32.totalorder %s12, 0
    %p116 = por %p114, %p115
    %p117 = scmp.ne.s32.totalorder %s109, %s111
    %p118 = scmp.eq.s32.totalorder %s17, 1
    %p119 = por %p117, %p118
    %p120 = scmp.ne.s32.totalorder %s111, %s112
    %p121 = scmp.eq.s32.totalorder %s17, 0
    %p122 = por %p120, %p121
    %p123 = scmp.ne.s32.totalorder %s111, %s112
    %p124 = scmp.eq.s32.totalorder %s18, 1
    %p125 = por %p123, %p124
    %p127 = scmp.ne.s32.totalorder %s112, %s126
    %p128 = scmp.eq.s32.totalorder %s18, 0
    %p129 = por %p127, %p128
    %s131 = sadd.s32 %s130, 1
    %p134 = scmp.eq.s32.totalorder %s12, 1
    %p135 = scmp.ne.s32.totalorder %s130, %s132
    %p136 = scmp.eq.s32.totalorder %s12, 0
    %p137 = por %p135, %p136
    %p138 = scmp.ne.s32.totalorder %s130, %s132
    %p139 = scmp.eq.s32.totalorder %s17, 1
    %p140 = por %p138, %p139
    %p141 = scmp.ne.s32.totalorder %s132, %s133
    %p142 = scmp.eq.s32.totalorder %s17, 0
    %p143 = por %p141, %p142
    %p144 = scmp.ne.s32.totalorder %s132, %s133
    %p145 = scmp.eq.s32.totalorder %s18, 1
    %p146 = por %p144, %p145
    %p148 = scmp.ne.s32.totalorder %s133, %s147
    %p149 = scmp.eq.s32.totalorder %s18, 0
    %p150 = por %p148, %p149
    %s151 = ssub.s32 %s12, %s19
    %p152 = scmp.eq.s32.totalorder %s151, 0
    %s154 = sadd.s32 %s153, 1
    %s155 = scalar_select %p152, %s153, %s154
    %p158 = pneg %p152
    %p159 = scmp.eq.s32.totalorder %s12, 1
    %p160 = por %p158, %p159
    %p161 = scmp.ne.s32.totalorder %s153, %s156
    %p162 = scmp.eq.s32.totalorder %s12, 0
    %p163 = por %p161, %p162
    %p164 = scmp.ne.s32.totalorder %s153, %s156
    %p165 = scmp.eq.s32.totalorder %s17, 1
    %p166 = por %p164, %p165
    %p167 = scmp.ne.s32.totalorder %s156, %s157
    %p168 = scmp.eq.s32.totalorder %s17, 0
    %p169 = por %p167, %p168
    %p170 = scmp.ne.s32.totalorder %s156, %s157
    %p171 = scmp.eq.s32.totalorder %s18, 1
    %p172 = por %p170, %p171
    %p174 = scmp.ne.s32.totalorder %s157, %s173
    %p175 = scmp.eq.s32.totalorder %s18, 0
    %p176 = por %p174, %p175
    %p177 = scmp.le.s32.totalorder 1, %s12
    %p178 = scmp.lt.s32.totalorder %s12, 3
    %p179 = pnand %p177, %p178
    %p180 = pneg %p179
    // Predicated region
    $region9: #{simple_rb_forward.1} parent=5 // pred_check
      _
    $region10: #{simple_rb_forward.1} parent=5 // pred_check_branch
      %182 = sbr.rel (%p179) target = $region12
    $region11: #{simple_rb_forward.1} parent=5 // pred_region
      %s183 = ssub.s32 %s12, 1
      // Predicated region
      $region13: #{simple_rb_forward.1} parent=11 // pred_check
        %p184 = pneg %p59
      $region14: #{simple_rb_forward.1} parent=11 // pred_check_branch
        %186 = sbr.rel (%p184) target = $region16
      $region15: #{simple_rb_forward.1} parent=11 // pred_region
        _
      $region16: #{simple_rb_forward.1} parent=11 // pred_fallthru
        _
      // Predicated region
      $region17: #{simple_rb_forward.1} parent=11 // pred_check
        %p187 = pneg %p80
      $region18: #{simple_rb_forward.1} parent=11 // pred_check_branch
        %189 = sbr.rel (%p187) target = $region20
      $region19: #{simple_rb_forward.1} parent=11 // pred_region
        _
      $region20: #{simple_rb_forward.1} parent=11 // pred_fallthru
        _
      // Predicated region
      $region21: #{simple_rb_forward.1} parent=11 // pred_check
        %p190 = pneg %p101
      $region22: #{simple_rb_forward.1} parent=11 // pred_check_branch
        %192 = sbr.rel (%p190) target = $region24
      $region23: #{simple_rb_forward.1} parent=11 // pred_region
        _
      $region24: #{simple_rb_forward.1} parent=11 // pred_fallthru
        _
      // Predicated region
      $region25: #{simple_rb_forward.1} parent=11 // pred_check
        %p193 = pneg %p122
      $region26: #{simple_rb_forward.1} parent=11 // pred_check_branch
        %195 = sbr.rel (%p193) target = $region28
      $region27: #{simple_rb_forward.1} parent=11 // pred_region
        _
      $region28: #{simple_rb_forward.1} parent=11 // pred_fallthru
        _
      // Predicated region
      $region29: #{simple_rb_forward.1} parent=11 // pred_check
        %p196 = pneg %p143
      $region30: #{simple_rb_forward.1} parent=11 // pred_check_branch
        %198 = sbr.rel (%p196) target = $region32
      $region31: #{simple_rb_forward.1} parent=11 // pred_region
        _
      $region32: #{simple_rb_forward.1} parent=11 // pred_fallthru
        _
    $region12: #{simple_rb_forward.1} parent=5 // pred_fallthru
      _
    %p199 = scmp.lt.s32.totalorder %s12, 2
    // Predicated region
    $region33: #{simple_rb_forward.1} parent=5 // pred_check
      %p200 = pneg %p199
    $region34: #{simple_rb_forward.1} parent=5 // pred_check_branch
      %202 = sbr.rel (%p200) target = $region36
    $region35: #{simple_rb_forward.1} parent=5 // pred_region
      // Predicated region
      $region37: #{simple_rb_forward.1} parent=35 // pred_check
        %p203 = pneg %p32
      $region38: #{simple_rb_forward.1} parent=35 // pred_check_branch
        %205 = sbr.rel (%p203) target = $region40
      $region39: #{simple_rb_forward.1} parent=35 // pred_region
        %p206 = scmp.lt.s32.totalorder %s12, 1
        %s207 = scalar_select %p206, %s12, 1
        %s208 = smul.addr %s207, 4
        %s209 = smul.addr %s208, 4
        %s210 = scalar_lea.vmem %s0, %s209
      $region40: #{simple_rb_forward.1} parent=35 // pred_fallthru
        _
    $region36: #{simple_rb_forward.1} parent=5 // pred_fallthru
      _
    %p211 = scmp.le.s32.totalorder 1, %s12
    %p212 = scmp.lt.s32.totalorder %s12, 3
    %p213 = pnand %p211, %p212
    %p214 = pneg %p213
    // Predicated region
    $region41: #{simple_rb_forward.1} parent=5 // pred_check
      _
    $region42: #{simple_rb_forward.1} parent=5 // pred_check_branch
      %216 = sbr.rel (%p213) target = $region44
    $region43: #{simple_rb_forward.1} parent=5 // pred_region
      %s217 = ssub.s32 %s12, 1
      %p218 = scmp.lt.s32.totalorder %s17, 1
      %s219 = scalar_select %p218, %s17, 1
      %s220 = smul.addr %s219, 4
      %s221 = smul.addr %s220, 4
      %s222 = scalar_lea.vmem %s0, %s221
      %p223 = pneg %p38
      %p224 = pneg %p35
      %p225 = pneg %p59
      %p226 = pneg %p56
      %p227 = pneg %p80
      %p228 = pneg %p77
      %p229 = pneg %p101
      %p230 = pneg %p98
      %p231 = pneg %p122
      %p232 = pneg %p119
      %p233 = pneg %p143
      %p234 = pneg %p140
      %p235 = pneg %p169
      %p236 = pneg %p166
      %p237 = scmp.lt.s32.totalorder %s17, 1
      %s238 = scalar_select %p237, %s17, 1
      %s239 = smul.addr %s238, 4
      %s240 = smul.addr %s239, 4
      %s241 = scalar_lea.vmem %s6, %s240
      %p242 = scmp.lt.s32.totalorder %s17, 1
      %s243 = scalar_select %p242, %s17, 1
      %s244 = smul.addr %s243, 4
      %s245 = smul.addr %s244, 4
      %s246 = scalar_lea.vmem %s0, %s245
      %p247 = scmp.lt.s32.totalorder %s17, 1
      %s248 = scalar_select %p247, %s17, 1
      %s249 = smul.addr %s248, 4
      %s250 = smul.addr %s249, 4
      %s251 = scalar_lea.vmem %s6, %s250
      %v252 = vld [vmem:[%s246] sm:$0xff]
      %v253 = vld [vmem:[%s246 + $0x8] sm:$0xff]
      %v254 = vld [vmem:[%s1] sm:$0xf]
      %v257 = vcombine.high %v252, %v252
      %v258 = vcombine.high %v253, %v253
      %261 = vrot.lane.b32.xlu0 %v252, 73
      %v262 = vpop.permute.xlu0 %261
      %263 = vrot.lane.b32.xlu0 %v257, 73
      %v264 = vpop.permute.xlu0 %263
      %265 = vrot.lane.b32.xlu0 %v253, 73
      %v266 = vpop.permute.xlu0 %265
      %267 = vrot.lane.b32.xlu0 %v258, 73
      %v268 = vpop.permute.xlu0 %267
      %v269 = vlaneseq
      %v270 = vand.u32 %v269, 127
      %vm271 = vcmp.lt.s32.totalorder %v270, 73
      %v272 = vsel %vm271, %v266, %v268
      %v273 = vsel %vm271, %v264, %v266
      %v274 = vsel %vm271, %v262, %v264
      %v275 = vsel %vm271, %v268, %v262
      %v276 = vld [vmem:[%s5] ss:$8 sm:$0xf]
      %v278 = vlaneseq
      %v279 = vshrl.u32 %v278, 7
      %v280 = vsub.s32 0, %v279
      %v281 = vrot.slane %v276, %v280
      %v282 = vlaneseq
      %v283 = vshrl.u32 %v282, 7
      %v284 = vsub.s32 1, %v283
      %v285 = vrot.slane %v276, %v284
      %v286 = vlaneseq
      %v287 = vshrl.u32 %v286, 7
      %v288 = vsub.s32 2, %v287
      %v289 = vrot.slane %v276, %v288
      %v290 = vlaneseq
      %v291 = vshrl.u32 %v290, 7
      %v292 = vsub.s32 3, %v291
      %v293 = vrot.slane %v276, %v292
      %v298 = vmul.f32 %v275, %v281
      %v299 = vmul.f32 %v274, %v285
      %v300 = vmul.f32 %v273, %v289
      %v301 = vmul.f32 %v272, %v293
      %303 = vset.pattern.permute.xlu0 0
      %304 = vperm.xlu0 %303, %v254
      %v305 = vpop.permute.xlu0 %304
      %v307 = vlaneseq
      %v308 = vshrl.u32 %v307, 7
      %v309 = vsub.s32 0, %v308
      %v310 = vrot.slane %v298, %v309
      %v311 = vlaneseq
      %v312 = vshrl.u32 %v311, 7
      %v313 = vsub.s32 0, %v312
      %v314 = vrot.slane %v299, %v313
      %v315 = vlaneseq
      %v316 = vshrl.u32 %v315, 7
      %v317 = vsub.s32 0, %v316
      %v318 = vrot.slane %v300, %v317
      %v319 = vlaneseq
      %v320 = vshrl.u32 %v319, 7
      %v321 = vsub.s32 0, %v320
      %v322 = vrot.slane %v301, %v321
      %v323 = vmul.f32 %v305, %v310
      %v324 = vmul.f32 %v305, %v314
      %v325 = vmul.f32 %v305, %v318
      %v326 = vmul.f32 %v305, %v322
      %v327 = vadd.f32 %v323, 0.0
      %v328 = vadd.f32 %v324, 0.0
      %v329 = vadd.f32 %v325, 0.0
      %v330 = vadd.f32 %v326, 0.0
      %331 = vset.pattern.permute.xlu0 1
      %332 = vperm.xlu0 %331, %v254
      %v333 = vpop.permute.xlu0 %332
      %v335 = vlaneseq
      %v336 = vshrl.u32 %v335, 7
      %v337 = vsub.s32 1, %v336
      %v338 = vrot.slane %v298, %v337
      %v339 = vlaneseq
      %v340 = vshrl.u32 %v339, 7
      %v341 = vsub.s32 1, %v340
      %v342 = vrot.slane %v299, %v341
      %v343 = vlaneseq
      %v344 = vshrl.u32 %v343, 7
      %v345 = vsub.s32 1, %v344
      %v346 = vrot.slane %v300, %v345
      %v347 = vlaneseq
      %v348 = vshrl.u32 %v347, 7
      %v349 = vsub.s32 1, %v348
      %v350 = vrot.slane %v301, %v349
      %v351 = vmul.f32 %v333, %v338
      %v352 = vmul.f32 %v333, %v342
      %v353 = vmul.f32 %v333, %v346
      %v354 = vmul.f32 %v333, %v350
      %v355 = vadd.f32 %v327, %v351
      %v356 = vadd.f32 %v328, %v352
      %v357 = vadd.f32 %v329, %v353
      %v358 = vadd.f32 %v330, %v354
      %359 = vset.pattern.permute.xlu0 2
      %360 = vperm.xlu0 %359, %v254
      %v361 = vpop.permute.xlu0 %360
      %v363 = vlaneseq
      %v364 = vshrl.u32 %v363, 7
      %v365 = vsub.s32 2, %v364
      %v366 = vrot.slane %v298, %v365
      %v367 = vlaneseq
      %v368 = vshrl.u32 %v367, 7
      %v369 = vsub.s32 2, %v368
      %v370 = vrot.slane %v299, %v369
      %v371 = vlaneseq
      %v372 = vshrl.u32 %v371, 7
      %v373 = vsub.s32 2, %v372
      %v374 = vrot.slane %v300, %v373
      %v375 = vlaneseq
      %v376 = vshrl.u32 %v375, 7
      %v377 = vsub.s32 2, %v376
      %v378 = vrot.slane %v301, %v377
      %v379 = vmul.f32 %v361, %v366
      %v380 = vmul.f32 %v361, %v370
      %v381 = vmul.f32 %v361, %v374
      %v382 = vmul.f32 %v361, %v378
      %v383 = vadd.f32 %v355, %v379
      %v384 = vadd.f32 %v356, %v380
      %v385 = vadd.f32 %v357, %v381
      %v386 = vadd.f32 %v358, %v382
      %387 = vset.pattern.permute.xlu0 3
      %388 = vperm.xlu0 %387, %v254
      %v389 = vpop.permute.xlu0 %388
      %v391 = vlaneseq
      %v392 = vshrl.u32 %v391, 7
      %v393 = vsub.s32 3, %v392
      %v394 = vrot.slane %v298, %v393
      %v395 = vlaneseq
      %v396 = vshrl.u32 %v395, 7
      %v397 = vsub.s32 3, %v396
      %v398 = vrot.slane %v299, %v397
      %v399 = vlaneseq
      %v400 = vshrl.u32 %v399, 7
      %v401 = vsub.s32 3, %v400
      %v402 = vrot.slane %v300, %v401
      %v403 = vlaneseq
      %v404 = vshrl.u32 %v403, 7
      %v405 = vsub.s32 3, %v404
      %v406 = vrot.slane %v301, %v405
      %v407 = vmul.f32 %v389, %v394
      %v408 = vmul.f32 %v389, %v398
      %v409 = vmul.f32 %v389, %v402
      %v410 = vmul.f32 %v389, %v406
      %v411 = vadd.f32 %v383, %v407
      %v412 = vadd.f32 %v384, %v408
      %v413 = vadd.f32 %v385, %v409
      %v414 = vadd.f32 %v386, %v410
      %415 = vrot.lane.b32.xlu0 %v252, 72
      %v416 = vpop.permute.xlu0 %415
      %417 = vrot.lane.b32.xlu0 %v257, 72
      %v418 = vpop.permute.xlu0 %417
      %419 = vrot.lane.b32.xlu0 %v253, 72
      %v420 = vpop.permute.xlu0 %419
      %421 = vrot.lane.b32.xlu0 %v258, 72
      %v422 = vpop.permute.xlu0 %421
      %vm423 = vcmp.lt.s32.totalorder %v270, 72
      %v424 = vsel %vm423, %v420, %v422
      %v425 = vsel %vm423, %v418, %v420
      %v426 = vsel %vm423, %v416, %v418
      %v427 = vsel %vm423, %v422, %v416
      %s428 = scalar_lea.vmem %s5, 1
      %v429 = vld [vmem:[%s428] ss:$8 sm:$0xf]
      %v431 = vlaneseq
      %v432 = vshrl.u32 %v431, 7
      %v433 = vsub.s32 0, %v432
      %v434 = vrot.slane %v429, %v433
      %v435 = vlaneseq
      %v436 = vshrl.u32 %v435, 7
      %v437 = vsub.s32 1, %v436
      %v438 = vrot.slane %v429, %v437
      %v439 = vlaneseq
      %v440 = vshrl.u32 %v439, 7
      %v441 = vsub.s32 2, %v440
      %v442 = vrot.slane %v429, %v441
      %v443 = vlaneseq
      %v444 = vshrl.u32 %v443, 7
      %v445 = vsub.s32 3, %v444
      %v446 = vrot.slane %v429, %v445
      %v451 = vmul.f32 %v427, %v434
      %v452 = vmul.f32 %v426, %v438
      %v453 = vmul.f32 %v425, %v442
      %v454 = vmul.f32 %v424, %v446
      %455 = vset.pattern.permute.xlu0 4
      %456 = vperm.xlu0 %455, %v254
      %v457 = vpop.permute.xlu0 %456
      %v459 = vlaneseq
      %v460 = vshrl.u32 %v459, 7
      %v461 = vsub.s32 0, %v460
      %v462 = vrot.slane %v451, %v461
      %v463 = vlaneseq
      %v464 = vshrl.u32 %v463, 7
      %v465 = vsub.s32 0, %v464
      %v466 = vrot.slane %v452, %v465
      %v467 = vlaneseq
      %v468 = vshrl.u32 %v467, 7
      %v469 = vsub.s32 0, %v468
      %v470 = vrot.slane %v453, %v469
      %v471 = vlaneseq
      %v472 = vshrl.u32 %v471, 7
      %v473 = vsub.s32 0, %v472
      %v474 = vrot.slane %v454, %v473
      %v475 = vmul.f32 %v457, %v462
      %v476 = vmul.f32 %v457, %v466
      %v477 = vmul.f32 %v457, %v470
      %v478 = vmul.f32 %v457, %v474
      %v479 = vadd.f32 %v411, %v475
      %v480 = vadd.f32 %v412, %v476
      %v481 = vadd.f32 %v413, %v477
      %v482 = vadd.f32 %v414, %v478
      %483 = vset.pattern.permute.xlu0 5
      %484 = vperm.xlu0 %483, %v254
      %v485 = vpop.permute.xlu0 %484
      %v487 = vlaneseq
      %v488 = vshrl.u32 %v487, 7
      %v489 = vsub.s32 1, %v488
      %v490 = vrot.slane %v451, %v489
      %v491 = vlaneseq
      %v492 = vshrl.u32 %v491, 7
      %v493 = vsub.s32 1, %v492
      %v494 = vrot.slane %v452, %v493
      %v495 = vlaneseq
      %v496 = vshrl.u32 %v495, 7
      %v497 = vsub.s32 1, %v496
      %v498 = vrot.slane %v453, %v497
      %v499 = vlaneseq
      %v500 = vshrl.u32 %v499, 7
      %v501 = vsub.s32 1, %v500
      %v502 = vrot.slane %v454, %v501
      %v503 = vmul.f32 %v485, %v490
      %v504 = vmul.f32 %v485, %v494
      %v505 = vmul.f32 %v485, %v498
      %v506 = vmul.f32 %v485, %v502
      %v507 = vadd.f32 %v479, %v503
      %v508 = vadd.f32 %v480, %v504
      %v509 = vadd.f32 %v481, %v505
      %v510 = vadd.f32 %v482, %v506
      %511 = vset.pattern.permute.xlu0 6
      %512 = vperm.xlu0 %511, %v254
      %v513 = vpop.permute.xlu0 %512
      %v515 = vlaneseq
      %v516 = vshrl.u32 %v515, 7
      %v517 = vsub.s32 2, %v516
      %v518 = vrot.slane %v451, %v517
      %v519 = vlaneseq
      %v520 = vshrl.u32 %v519, 7
      %v521 = vsub.s32 2, %v520
      %v522 = vrot.slane %v452, %v521
      %v523 = vlaneseq
      %v524 = vshrl.u32 %v523, 7
      %v525 = vsub.s32 2, %v524
      %v526 = vrot.slane %v453, %v525
      %v527 = vlaneseq
      %v528 = vshrl.u32 %v527, 7
      %v529 = vsub.s32 2, %v528
      %v530 = vrot.slane %v454, %v529
      %v531 = vmul.f32 %v513, %v518
      %v532 = vmul.f32 %v513, %v522
      %v533 = vmul.f32 %v513, %v526
      %v534 = vmul.f32 %v513, %v530
      %v535 = vadd.f32 %v507, %v531
      %v536 = vadd.f32 %v508, %v532
      %v537 = vadd.f32 %v509, %v533
      %v538 = vadd.f32 %v510, %v534
      %539 = vset.pattern.permute.xlu0 7
      %540 = vperm.xlu0 %539, %v254
      %v541 = vpop.permute.xlu0 %540
      %v543 = vlaneseq
      %v544 = vshrl.u32 %v543, 7
      %v545 = vsub.s32 3, %v544
      %v546 = vrot.slane %v451, %v545
      %v547 = vlaneseq
      %v548 = vshrl.u32 %v547, 7
      %v549 = vsub.s32 3, %v548
      %v550 = vrot.slane %v452, %v549
      %v551 = vlaneseq
      %v552 = vshrl.u32 %v551, 7
      %v553 = vsub.s32 3, %v552
      %v554 = vrot.slane %v453, %v553
      %v555 = vlaneseq
      %v556 = vshrl.u32 %v555, 7
      %v557 = vsub.s32 3, %v556
      %v558 = vrot.slane %v454, %v557
      %v559 = vmul.f32 %v541, %v546
      %v560 = vmul.f32 %v541, %v550
      %v561 = vmul.f32 %v541, %v554
      %v562 = vmul.f32 %v541, %v558
      %v563 = vadd.f32 %v535, %v559
      %v564 = vadd.f32 %v536, %v560
      %v565 = vadd.f32 %v537, %v561
      %v566 = vadd.f32 %v538, %v562
      %567 = vrot.lane.b32.xlu0 %v252, 71
      %v568 = vpop.permute.xlu0 %567
      %569 = vrot.lane.b32.xlu0 %v257, 71
      %v570 = vpop.permute.xlu0 %569
      %571 = vrot.lane.b32.xlu0 %v253, 71
      %v572 = vpop.permute.xlu0 %571
      %573 = vrot.lane.b32.xlu0 %v258, 71
      %v574 = vpop.permute.xlu0 %573
      %vm575 = vcmp.lt.s32.totalorder %v270, 71
      %v576 = vsel %vm575, %v572, %v574
      %v577 = vsel %vm575, %v570, %v572
      %v578 = vsel %vm575, %v568, %v570
      %v579 = vsel %vm575, %v574, %v568
      %s580 = scalar_lea.vmem %s5, 2
      %v581 = vld [vmem:[%s580] ss:$8 sm:$0xf]
      %v583 = vlaneseq
      %v584 = vshrl.u32 %v583, 7
      %v585 = vsub.s32 0, %v584
      %v586 = vrot.slane %v581, %v585
      %v587 = vlaneseq
      %v588 = vshrl.u32 %v587, 7
      %v589 = vsub.s32 1, %v588
      %v590 = vrot.slane %v581, %v589
      %v591 = vlaneseq
      %v592 = vshrl.u32 %v591, 7
      %v593 = vsub.s32 2, %v592
      %v594 = vrot.slane %v581, %v593
      %v595 = vlaneseq
      %v596 = vshrl.u32 %v595, 7
      %v597 = vsub.s32 3, %v596
      %v598 = vrot.slane %v581, %v597
      %v603 = vmul.f32 %v579, %v586
      %v604 = vmul.f32 %v578, %v590
      %v605 = vmul.f32 %v577, %v594
      %v606 = vmul.f32 %v576, %v598
      %607 = vset.pattern.permute.xlu0 8
      %608 = vperm.xlu0 %607, %v254
      %v609 = vpop.permute.xlu0 %608
      %v611 = vlaneseq
      %v612 = vshrl.u32 %v611, 7
      %v613 = vsub.s32 0, %v612
      %v614 = vrot.slane %v603, %v613
      %v615 = vlaneseq
      %v616 = vshrl.u32 %v615, 7
      %v617 = vsub.s32 0, %v616
      %v618 = vrot.slane %v604, %v617
      %v619 = vlaneseq
      %v620 = vshrl.u32 %v619, 7
      %v621 = vsub.s32 0, %v620
      %v622 = vrot.slane %v605, %v621
      %v623 = vlaneseq
      %v624 = vshrl.u32 %v623, 7
      %v625 = vsub.s32 0, %v624
      %v626 = vrot.slane %v606, %v625
      %v627 = vmul.f32 %v609, %v614
      %v628 = vmul.f32 %v609, %v618
      %v629 = vmul.f32 %v609, %v622
      %v630 = vmul.f32 %v609, %v626
      %v631 = vadd.f32 %v563, %v627
      %v632 = vadd.f32 %v564, %v628
      %v633 = vadd.f32 %v565, %v629
      %v634 = vadd.f32 %v566, %v630
      %635 = vset.pattern.permute.xlu0 9
      %636 = vperm.xlu0 %635, %v254
      %v637 = vpop.permute.xlu0 %636
      %v639 = vlaneseq
      %v640 = vshrl.u32 %v639, 7
      %v641 = vsub.s32 1, %v640
      %v642 = vrot.slane %v603, %v641
      %v643 = vlaneseq
      %v644 = vshrl.u32 %v643, 7
      %v645 = vsub.s32 1, %v644
      %v646 = vrot.slane %v604, %v645
      %v647 = vlaneseq
      %v648 = vshrl.u32 %v647, 7
      %v649 = vsub.s32 1, %v648
      %v650 = vrot.slane %v605, %v649
      %v651 = vlaneseq
      %v652 = vshrl.u32 %v651, 7
      %v653 = vsub.s32 1, %v652
      %v654 = vrot.slane %v606, %v653
      %v655 = vmul.f32 %v637, %v642
      %v656 = vmul.f32 %v637, %v646
      %v657 = vmul.f32 %v637, %v650
      %v658 = vmul.f32 %v637, %v654
      %v659 = vadd.f32 %v631, %v655
      %v660 = vadd.f32 %v632, %v656
      %v661 = vadd.f32 %v633, %v657
      %v662 = vadd.f32 %v634, %v658
      %663 = vset.pattern.permute.xlu0 10
      %664 = vperm.xlu0 %663, %v254
      %v665 = vpop.permute.xlu0 %664
      %v667 = vlaneseq
      %v668 = vshrl.u32 %v667, 7
      %v669 = vsub.s32 2, %v668
      %v670 = vrot.slane %v603, %v669
      %v671 = vlaneseq
      %v672 = vshrl.u32 %v671, 7
      %v673 = vsub.s32 2, %v672
      %v674 = vrot.slane %v604, %v673
      %v675 = vlaneseq
      %v676 = vshrl.u32 %v675, 7
      %v677 = vsub.s32 2, %v676
      %v678 = vrot.slane %v605, %v677
      %v679 = vlaneseq
      %v680 = vshrl.u32 %v679, 7
      %v681 = vsub.s32 2, %v680
      %v682 = vrot.slane %v606, %v681
      %v683 = vmul.f32 %v665, %v670
      %v684 = vmul.f32 %v665, %v674
      %v685 = vmul.f32 %v665, %v678
      %v686 = vmul.f32 %v665, %v682
      %v687 = vadd.f32 %v659, %v683
      %v688 = vadd.f32 %v660, %v684
      %v689 = vadd.f32 %v661, %v685
      %v690 = vadd.f32 %v662, %v686
      %691 = vset.pattern.permute.xlu0 11
      %692 = vperm.xlu0 %691, %v254
      %v693 = vpop.permute.xlu0 %692
      %v695 = vlaneseq
      %v696 = vshrl.u32 %v695, 7
      %v697 = vsub.s32 3, %v696
      %v698 = vrot.slane %v603, %v697
      %v699 = vlaneseq
      %v700 = vshrl.u32 %v699, 7
      %v701 = vsub.s32 3, %v700
      %v702 = vrot.slane %v604, %v701
      %v703 = vlaneseq
      %v704 = vshrl.u32 %v703, 7
      %v705 = vsub.s32 3, %v704
      %v706 = vrot.slane %v605, %v705
      %v707 = vlaneseq
      %v708 = vshrl.u32 %v707, 7
      %v709 = vsub.s32 3, %v708
      %v710 = vrot.slane %v606, %v709
      %v711 = vmul.f32 %v693, %v698
      %v712 = vmul.f32 %v693, %v702
      %v713 = vmul.f32 %v693, %v706
      %v714 = vmul.f32 %v693, %v710
      %v715 = vadd.f32 %v687, %v711
      %v716 = vadd.f32 %v688, %v712
      %v717 = vadd.f32 %v689, %v713
      %v718 = vadd.f32 %v690, %v714
      %719 = vrot.lane.b32.xlu0 %v252, 65
      %v720 = vpop.permute.xlu0 %719
      %721 = vrot.lane.b32.xlu0 %v257, 65
      %v722 = vpop.permute.xlu0 %721
      %723 = vrot.lane.b32.xlu0 %v253, 65
      %v724 = vpop.permute.xlu0 %723
      %725 = vrot.lane.b32.xlu0 %v258, 65
      %v726 = vpop.permute.xlu0 %725
      %vm727 = vcmp.lt.s32.totalorder %v270, 65
      %v728 = vsel %vm727, %v724, %v726
      %v729 = vsel %vm727, %v722, %v724
      %v730 = vsel %vm727, %v720, %v722
      %v731 = vsel %vm727, %v726, %v720
      %s732 = scalar_lea.vmem %s5, 3
      %v733 = vld [vmem:[%s732] ss:$8 sm:$0xf]
      %v735 = vlaneseq
      %v736 = vshrl.u32 %v735, 7
      %v737 = vsub.s32 0, %v736
      %v738 = vrot.slane %v733, %v737
      %v739 = vlaneseq
      %v740 = vshrl.u32 %v739, 7
      %v741 = vsub.s32 1, %v740
      %v742 = vrot.slane %v733, %v741
      %v743 = vlaneseq
      %v744 = vshrl.u32 %v743, 7
      %v745 = vsub.s32 2, %v744
      %v746 = vrot.slane %v733, %v745
      %v747 = vlaneseq
      %v748 = vshrl.u32 %v747, 7
      %v749 = vsub.s32 3, %v748
      %v750 = vrot.slane %v733, %v749
      %v755 = vmul.f32 %v731, %v738
      %v756 = vmul.f32 %v730, %v742
      %v757 = vmul.f32 %v729, %v746
      %v758 = vmul.f32 %v728, %v750
      %759 = vset.pattern.permute.xlu0 12
      %760 = vperm.xlu0 %759, %v254
      %v761 = vpop.permute.xlu0 %760
      %v763 = vlaneseq
      %v764 = vshrl.u32 %v763, 7
      %v765 = vsub.s32 0, %v764
      %v766 = vrot.slane %v755, %v765
      %v767 = vlaneseq
      %v768 = vshrl.u32 %v767, 7
      %v769 = vsub.s32 0, %v768
      %v770 = vrot.slane %v756, %v769
      %v771 = vlaneseq
      %v772 = vshrl.u32 %v771, 7
      %v773 = vsub.s32 0, %v772
      %v774 = vrot.slane %v757, %v773
      %v775 = vlaneseq
      %v776 = vshrl.u32 %v775, 7
      %v777 = vsub.s32 0, %v776
      %v778 = vrot.slane %v758, %v777
      %v779 = vmul.f32 %v761, %v766
      %v780 = vmul.f32 %v761, %v770
      %v781 = vmul.f32 %v761, %v774
      %v782 = vmul.f32 %v761, %v778
      %v783 = vadd.f32 %v715, %v779
      %v784 = vadd.f32 %v716, %v780
      %v785 = vadd.f32 %v717, %v781
      %v786 = vadd.f32 %v718, %v782
      %787 = vset.pattern.permute.xlu0 13
      %788 = vperm.xlu0 %787, %v254
      %v789 = vpop.permute.xlu0 %788
      %v791 = vlaneseq
      %v792 = vshrl.u32 %v791, 7
      %v793 = vsub.s32 1, %v792
      %v794 = vrot.slane %v755, %v793
      %v795 = vlaneseq
      %v796 = vshrl.u32 %v795, 7
      %v797 = vsub.s32 1, %v796
      %v798 = vrot.slane %v756, %v797
      %v799 = vlaneseq
      %v800 = vshrl.u32 %v799, 7
      %v801 = vsub.s32 1, %v800
      %v802 = vrot.slane %v757, %v801
      %v803 = vlaneseq
      %v804 = vshrl.u32 %v803, 7
      %v805 = vsub.s32 1, %v804
      %v806 = vrot.slane %v758, %v805
      %v807 = vmul.f32 %v789, %v794
      %v808 = vmul.f32 %v789, %v798
      %v809 = vmul.f32 %v789, %v802
      %v810 = vmul.f32 %v789, %v806
      %v811 = vadd.f32 %v783, %v807
      %v812 = vadd.f32 %v784, %v808
      %v813 = vadd.f32 %v785, %v809
      %v814 = vadd.f32 %v786, %v810
      %815 = vset.pattern.permute.xlu0 14
      %816 = vperm.xlu0 %815, %v254
      %v817 = vpop.permute.xlu0 %816
      %v819 = vlaneseq
      %v820 = vshrl.u32 %v819, 7
      %v821 = vsub.s32 2, %v820
      %v822 = vrot.slane %v755, %v821
      %v823 = vlaneseq
      %v824 = vshrl.u32 %v823, 7
      %v825 = vsub.s32 2, %v824
      %v826 = vrot.slane %v756, %v825
      %v827 = vlaneseq
      %v828 = vshrl.u32 %v827, 7
      %v829 = vsub.s32 2, %v828
      %v830 = vrot.slane %v757, %v829
      %v831 = vlaneseq
      %v832 = vshrl.u32 %v831, 7
      %v833 = vsub.s32 2, %v832
      %v834 = vrot.slane %v758, %v833
      %v835 = vmul.f32 %v817, %v822
      %v836 = vmul.f32 %v817, %v826
      %v837 = vmul.f32 %v817, %v830
      %v838 = vmul.f32 %v817, %v834
      %v839 = vadd.f32 %v811, %v835
      %v840 = vadd.f32 %v812, %v836
      %v841 = vadd.f32 %v813, %v837
      %v842 = vadd.f32 %v814, %v838
      %843 = vset.pattern.permute.xlu0 15
      %844 = vperm.xlu0 %843, %v254
      %v845 = vpop.permute.xlu0 %844
      %v847 = vlaneseq
      %v848 = vshrl.u32 %v847, 7
      %v849 = vsub.s32 3, %v848
      %v850 = vrot.slane %v755, %v849
      %v851 = vlaneseq
      %v852 = vshrl.u32 %v851, 7
      %v853 = vsub.s32 3, %v852
      %v854 = vrot.slane %v756, %v853
      %v855 = vlaneseq
      %v856 = vshrl.u32 %v855, 7
      %v857 = vsub.s32 3, %v856
      %v858 = vrot.slane %v757, %v857
      %v859 = vlaneseq
      %v860 = vshrl.u32 %v859, 7
      %v861 = vsub.s32 3, %v860
      %v862 = vrot.slane %v758, %v861
      %v863 = vmul.f32 %v845, %v850
      %v864 = vmul.f32 %v845, %v854
      %v865 = vmul.f32 %v845, %v858
      %v866 = vmul.f32 %v845, %v862
      %v867 = vadd.f32 %v839, %v863
      %v868 = vadd.f32 %v840, %v864
      %v869 = vadd.f32 %v841, %v865
      %v870 = vadd.f32 %v842, %v866
      %871 = vrot.lane.b32.xlu0 %v252, 64
      %v872 = vpop.permute.xlu0 %871
      %873 = vrot.lane.b32.xlu0 %v257, 64
      %v874 = vpop.permute.xlu0 %873
      %875 = vrot.lane.b32.xlu0 %v253, 64
      %v876 = vpop.permute.xlu0 %875
      %877 = vrot.lane.b32.xlu0 %v258, 64
      %v878 = vpop.permute.xlu0 %877
      %vm879 = vcmp.lt.s32.totalorder %v270, 64
      %v880 = vsel %vm879, %v876, %v878
      %v881 = vsel %vm879, %v874, %v876
      %v882 = vsel %vm879, %v872, %v874
      %v883 = vsel %vm879, %v878, %v872
      %s884 = scalar_lea.vmem %s5, 4
      %v885 = vld [vmem:[%s884] ss:$8 sm:$0xf]
      %v887 = vlaneseq
      %v888 = vshrl.u32 %v887, 7
      %v889 = vsub.s32 0, %v888
      %v890 = vrot.slane %v885, %v889
      %v891 = vlaneseq
      %v892 = vshrl.u32 %v891, 7
      %v893 = vsub.s32 1, %v892
      %v894 = vrot.slane %v885, %v893
      %v895 = vlaneseq
      %v896 = vshrl.u32 %v895, 7
      %v897 = vsub.s32 2, %v896
      %v898 = vrot.slane %v885, %v897
      %v899 = vlaneseq
      %v900 = vshrl.u32 %v899, 7
      %v901 = vsub.s32 3, %v900
      %v902 = vrot.slane %v885, %v901
      %v907 = vmul.f32 %v883, %v890
      %v908 = vmul.f32 %v882, %v894
      %v909 = vmul.f32 %v881, %v898
      %v910 = vmul.f32 %v880, %v902
      %911 = vset.pattern.permute.xlu0 16
      %912 = vperm.xlu0 %911, %v254
      %v913 = vpop.permute.xlu0 %912
      %v915 = vlaneseq
      %v916 = vshrl.u32 %v915, 7
      %v917 = vsub.s32 0, %v916
      %v918 = vrot.slane %v907, %v917
      %v919 = vlaneseq
      %v920 = vshrl.u32 %v919, 7
      %v921 = vsub.s32 0, %v920
      %v922 = vrot.slane %v908, %v921
      %v923 = vlaneseq
      %v924 = vshrl.u32 %v923, 7
      %v925 = vsub.s32 0, %v924
      %v926 = vrot.slane %v909, %v925
      %v927 = vlaneseq
      %v928 = vshrl.u32 %v927, 7
      %v929 = vsub.s32 0, %v928
      %v930 = vrot.slane %v910, %v929
      %v931 = vmul.f32 %v913, %v918
      %v932 = vmul.f32 %v913, %v922
      %v933 = vmul.f32 %v913, %v926
      %v934 = vmul.f32 %v913, %v930
      %v935 = vadd.f32 %v867, %v931
      %v936 = vadd.f32 %v868, %v932
      %v937 = vadd.f32 %v869, %v933
      %v938 = vadd.f32 %v870, %v934
      %939 = vset.pattern.permute.xlu0 17
      %940 = vperm.xlu0 %939, %v254
      %v941 = vpop.permute.xlu0 %940
      %v943 = vlaneseq
      %v944 = vshrl.u32 %v943, 7
      %v945 = vsub.s32 1, %v944
      %v946 = vrot.slane %v907, %v945
      %v947 = vlaneseq
      %v948 = vshrl.u32 %v947, 7
      %v949 = vsub.s32 1, %v948
      %v950 = vrot.slane %v908, %v949
      %v951 = vlaneseq
      %v952 = vshrl.u32 %v951, 7
      %v953 = vsub.s32 1, %v952
      %v954 = vrot.slane %v909, %v953
      %v955 = vlaneseq
      %v956 = vshrl.u32 %v955, 7
      %v957 = vsub.s32 1, %v956
      %v958 = vrot.slane %v910, %v957
      %v959 = vmul.f32 %v941, %v946
      %v960 = vmul.f32 %v941, %v950
      %v961 = vmul.f32 %v941, %v954
      %v962 = vmul.f32 %v941, %v958
      %v963 = vadd.f32 %v935, %v959
      %v964 = vadd.f32 %v936, %v960
      %v965 = vadd.f32 %v937, %v961
      %v966 = vadd.f32 %v938, %v962
      %967 = vset.pattern.permute.xlu0 18
      %968 = vperm.xlu0 %967, %v254
      %v969 = vpop.permute.xlu0 %968
      %v971 = vlaneseq
      %v972 = vshrl.u32 %v971, 7
      %v973 = vsub.s32 2, %v972
      %v974 = vrot.slane %v907, %v973
      %v975 = vlaneseq
      %v976 = vshrl.u32 %v975, 7
      %v977 = vsub.s32 2, %v976
      %v978 = vrot.slane %v908, %v977
      %v979 = vlaneseq
      %v980 = vshrl.u32 %v979, 7
      %v981 = vsub.s32 2, %v980
      %v982 = vrot.slane %v909, %v981
      %v983 = vlaneseq
      %v984 = vshrl.u32 %v983, 7
      %v985 = vsub.s32 2, %v984
      %v986 = vrot.slane %v910, %v985
      %v987 = vmul.f32 %v969, %v974
      %v988 = vmul.f32 %v969, %v978
      %v989 = vmul.f32 %v969, %v982
      %v990 = vmul.f32 %v969, %v986
      %v991 = vadd.f32 %v963, %v987
      %v992 = vadd.f32 %v964, %v988
      %v993 = vadd.f32 %v965, %v989
      %v994 = vadd.f32 %v966, %v990
      %995 = vset.pattern.permute.xlu0 19
      %996 = vperm.xlu0 %995, %v254
      %v997 = vpop.permute.xlu0 %996
      %v999 = vlaneseq
      %v1000 = vshrl.u32 %v999, 7
      %v1001 = vsub.s32 3, %v1000
      %v1002 = vrot.slane %v907, %v1001
      %v1003 = vlaneseq
      %v1004 = vshrl.u32 %v1003, 7
      %v1005 = vsub.s32 3, %v1004
      %v1006 = vrot.slane %v908, %v1005
      %v1007 = vlaneseq
      %v1008 = vshrl.u32 %v1007, 7
      %v1009 = vsub.s32 3, %v1008
      %v1010 = vrot.slane %v909, %v1009
      %v1011 = vlaneseq
      %v1012 = vshrl.u32 %v1011, 7
      %v1013 = vsub.s32 3, %v1012
      %v1014 = vrot.slane %v910, %v1013
      %v1015 = vmul.f32 %v997, %v1002
      %v1016 = vmul.f32 %v997, %v1006
      %v1017 = vmul.f32 %v997, %v1010
      %v1018 = vmul.f32 %v997, %v1014
      %v1019 = vadd.f32 %v991, %v1015
      %v1020 = vadd.f32 %v992, %v1016
      %v1021 = vadd.f32 %v993, %v1017
      %v1022 = vadd.f32 %v994, %v1018
      %1023 = vrot.lane.b32.xlu0 %v252, 63
      %v1024 = vpop.permute.xlu0 %1023
      %1025 = vrot.lane.b32.xlu0 %v257, 63
      %v1026 = vpop.permute.xlu0 %1025
      %1027 = vrot.lane.b32.xlu0 %v253, 63
      %v1028 = vpop.permute.xlu0 %1027
      %1029 = vrot.lane.b32.xlu0 %v258, 63
      %v1030 = vpop.permute.xlu0 %1029
      %vm1031 = vcmp.lt.s32.totalorder %v270, 63
      %v1032 = vsel %vm1031, %v1028, %v1030
      %v1033 = vsel %vm1031, %v1026, %v1028
      %v1034 = vsel %vm1031, %v1024, %v1026
      %v1035 = vsel %vm1031, %v1030, %v1024
      %s1036 = scalar_lea.vmem %s5, 5
      %v1037 = vld [vmem:[%s1036] ss:$8 sm:$0xf]
      %v1039 = vlaneseq
      %v1040 = vshrl.u32 %v1039, 7
      %v1041 = vsub.s32 0, %v1040
      %v1042 = vrot.slane %v1037, %v1041
      %v1043 = vlaneseq
      %v1044 = vshrl.u32 %v1043, 7
      %v1045 = vsub.s32 1, %v1044
      %v1046 = vrot.slane %v1037, %v1045
      %v1047 = vlaneseq
      %v1048 = vshrl.u32 %v1047, 7
      %v1049 = vsub.s32 2, %v1048
      %v1050 = vrot.slane %v1037, %v1049
      %v1051 = vlaneseq
      %v1052 = vshrl.u32 %v1051, 7
      %v1053 = vsub.s32 3, %v1052
      %v1054 = vrot.slane %v1037, %v1053
      %v1059 = vmul.f32 %v1035, %v1042
      %v1060 = vmul.f32 %v1034, %v1046
      %v1061 = vmul.f32 %v1033, %v1050
      %v1062 = vmul.f32 %v1032, %v1054
      %1063 = vset.pattern.permute.xlu0 20
      %1064 = vperm.xlu0 %1063, %v254
      %v1065 = vpop.permute.xlu0 %1064
      %v1067 = vlaneseq
      %v1068 = vshrl.u32 %v1067, 7
      %v1069 = vsub.s32 0, %v1068
      %v1070 = vrot.slane %v1059, %v1069
      %v1071 = vlaneseq
      %v1072 = vshrl.u32 %v1071, 7
      %v1073 = vsub.s32 0, %v1072
      %v1074 = vrot.slane %v1060, %v1073
      %v1075 = vlaneseq
      %v1076 = vshrl.u32 %v1075, 7
      %v1077 = vsub.s32 0, %v1076
      %v1078 = vrot.slane %v1061, %v1077
      %v1079 = vlaneseq
      %v1080 = vshrl.u32 %v1079, 7
      %v1081 = vsub.s32 0, %v1080
      %v1082 = vrot.slane %v1062, %v1081
      %v1083 = vmul.f32 %v1065, %v1070
      %v1084 = vmul.f32 %v1065, %v1074
      %v1085 = vmul.f32 %v1065, %v1078
      %v1086 = vmul.f32 %v1065, %v1082
      %v1087 = vadd.f32 %v1019, %v1083
      %v1088 = vadd.f32 %v1020, %v1084
      %v1089 = vadd.f32 %v1021, %v1085
      %v1090 = vadd.f32 %v1022, %v1086
      %1091 = vset.pattern.permute.xlu0 21
      %1092 = vperm.xlu0 %1091, %v254
      %v1093 = vpop.permute.xlu0 %1092
      %v1095 = vlaneseq
      %v1096 = vshrl.u32 %v1095, 7
      %v1097 = vsub.s32 1, %v1096
      %v1098 = vrot.slane %v1059, %v1097
      %v1099 = vlaneseq
      %v1100 = vshrl.u32 %v1099, 7
      %v1101 = vsub.s32 1, %v1100
      %v1102 = vrot.slane %v1060, %v1101
      %v1103 = vlaneseq
      %v1104 = vshrl.u32 %v1103, 7
      %v1105 = vsub.s32 1, %v1104
      %v1106 = vrot.slane %v1061, %v1105
      %v1107 = vlaneseq
      %v1108 = vshrl.u32 %v1107, 7
      %v1109 = vsub.s32 1, %v1108
      %v1110 = vrot.slane %v1062, %v1109
      %v1111 = vmul.f32 %v1093, %v1098
      %v1112 = vmul.f32 %v1093, %v1102
      %v1113 = vmul.f32 %v1093, %v1106
      %v1114 = vmul.f32 %v1093, %v1110
      %v1115 = vadd.f32 %v1087, %v1111
      %v1116 = vadd.f32 %v1088, %v1112
      %v1117 = vadd.f32 %v1089, %v1113
      %v1118 = vadd.f32 %v1090, %v1114
      %1119 = vset.pattern.permute.xlu0 22
      %1120 = vperm.xlu0 %1119, %v254
      %v1121 = vpop.permute.xlu0 %1120
      %v1123 = vlaneseq
      %v1124 = vshrl.u32 %v1123, 7
      %v1125 = vsub.s32 2, %v1124
      %v1126 = vrot.slane %v1059, %v1125
      %v1127 = vlaneseq
      %v1128 = vshrl.u32 %v1127, 7
      %v1129 = vsub.s32 2, %v1128
      %v1130 = vrot.slane %v1060, %v1129
      %v1131 = vlaneseq
      %v1132 = vshrl.u32 %v1131, 7
      %v1133 = vsub.s32 2, %v1132
      %v1134 = vrot.slane %v1061, %v1133
      %v1135 = vlaneseq
      %v1136 = vshrl.u32 %v1135, 7
      %v1137 = vsub.s32 2, %v1136
      %v1138 = vrot.slane %v1062, %v1137
      %v1139 = vmul.f32 %v1121, %v1126
      %v1140 = vmul.f32 %v1121, %v1130
      %v1141 = vmul.f32 %v1121, %v1134
      %v1142 = vmul.f32 %v1121, %v1138
      %v1143 = vadd.f32 %v1115, %v1139
      %v1144 = vadd.f32 %v1116, %v1140
      %v1145 = vadd.f32 %v1117, %v1141
      %v1146 = vadd.f32 %v1118, %v1142
      %1147 = vset.pattern.permute.xlu0 23
      %1148 = vperm.xlu0 %1147, %v254
      %v1149 = vpop.permute.xlu0 %1148
      %v1151 = vlaneseq
      %v1152 = vshrl.u32 %v1151, 7
      %v1153 = vsub.s32 3, %v1152
      %v1154 = vrot.slane %v1059, %v1153
      %v1155 = vlaneseq
      %v1156 = vshrl.u32 %v1155, 7
      %v1157 = vsub.s32 3, %v1156
      %v1158 = vrot.slane %v1060, %v1157
      %v1159 = vlaneseq
      %v1160 = vshrl.u32 %v1159, 7
      %v1161 = vsub.s32 3, %v1160
      %v1162 = vrot.slane %v1061, %v1161
      %v1163 = vlaneseq
      %v1164 = vshrl.u32 %v1163, 7
      %v1165 = vsub.s32 3, %v1164
      %v1166 = vrot.slane %v1062, %v1165
      %v1167 = vmul.f32 %v1149, %v1154
      %v1168 = vmul.f32 %v1149, %v1158
      %v1169 = vmul.f32 %v1149, %v1162
      %v1170 = vmul.f32 %v1149, %v1166
      %v1171 = vadd.f32 %v1143, %v1167
      %v1172 = vadd.f32 %v1144, %v1168
      %v1173 = vadd.f32 %v1145, %v1169
      %v1174 = vadd.f32 %v1146, %v1170
      %1175 = vrot.lane.b32.xlu0 %v252, 57
      %v1176 = vpop.permute.xlu0 %1175
      %1177 = vrot.lane.b32.xlu0 %v257, 57
      %v1178 = vpop.permute.xlu0 %1177
      %1179 = vrot.lane.b32.xlu0 %v253, 57
      %v1180 = vpop.permute.xlu0 %1179
      %1181 = vrot.lane.b32.xlu0 %v258, 57
      %v1182 = vpop.permute.xlu0 %1181
      %vm1183 = vcmp.lt.s32.totalorder %v270, 57
      %v1184 = vsel %vm1183, %v1180, %v1182
      %v1185 = vsel %vm1183, %v1178, %v1180
      %v1186 = vsel %vm1183, %v1176, %v1178
      %v1187 = vsel %vm1183, %v1182, %v1176
      %s1188 = scalar_lea.vmem %s5, 6
      %v1189 = vld [vmem:[%s1188] ss:$8 sm:$0xf]
      %v1191 = vlaneseq
      %v1192 = vshrl.u32 %v1191, 7
      %v1193 = vsub.s32 0, %v1192
      %v1194 = vrot.slane %v1189, %v1193
      %v1195 = vlaneseq
      %v1196 = vshrl.u32 %v1195, 7
      %v1197 = vsub.s32 1, %v1196
      %v1198 = vrot.slane %v1189, %v1197
      %v1199 = vlaneseq
      %v1200 = vshrl.u32 %v1199, 7
      %v1201 = vsub.s32 2, %v1200
      %v1202 = vrot.slane %v1189, %v1201
      %v1203 = vlaneseq
      %v1204 = vshrl.u32 %v1203, 7
      %v1205 = vsub.s32 3, %v1204
      %v1206 = vrot.slane %v1189, %v1205
      %v1211 = vmul.f32 %v1187, %v1194
      %v1212 = vmul.f32 %v1186, %v1198
      %v1213 = vmul.f32 %v1185, %v1202
      %v1214 = vmul.f32 %v1184, %v1206
      %1215 = vset.pattern.permute.xlu0 24
      %1216 = vperm.xlu0 %1215, %v254
      %v1217 = vpop.permute.xlu0 %1216
      %v1219 = vlaneseq
      %v1220 = vshrl.u32 %v1219, 7
      %v1221 = vsub.s32 0, %v1220
      %v1222 = vrot.slane %v1211, %v1221
      %v1223 = vlaneseq
      %v1224 = vshrl.u32 %v1223, 7
      %v1225 = vsub.s32 0, %v1224
      %v1226 = vrot.slane %v1212, %v1225
      %v1227 = vlaneseq
      %v1228 = vshrl.u32 %v1227, 7
      %v1229 = vsub.s32 0, %v1228
      %v1230 = vrot.slane %v1213, %v1229
      %v1231 = vlaneseq
      %v1232 = vshrl.u32 %v1231, 7
      %v1233 = vsub.s32 0, %v1232
      %v1234 = vrot.slane %v1214, %v1233
      %v1235 = vmul.f32 %v1217, %v1222
      %v1236 = vmul.f32 %v1217, %v1226
      %v1237 = vmul.f32 %v1217, %v1230
      %v1238 = vmul.f32 %v1217, %v1234
      %v1239 = vadd.f32 %v1171, %v1235
      %v1240 = vadd.f32 %v1172, %v1236
      %v1241 = vadd.f32 %v1173, %v1237
      %v1242 = vadd.f32 %v1174, %v1238
      %1243 = vset.pattern.permute.xlu0 25
      %1244 = vperm.xlu0 %1243, %v254
      %v1245 = vpop.permute.xlu0 %1244
      %v1247 = vlaneseq
      %v1248 = vshrl.u32 %v1247, 7
      %v1249 = vsub.s32 1, %v1248
      %v1250 = vrot.slane %v1211, %v1249
      %v1251 = vlaneseq
      %v1252 = vshrl.u32 %v1251, 7
      %v1253 = vsub.s32 1, %v1252
      %v1254 = vrot.slane %v1212, %v1253
      %v1255 = vlaneseq
      %v1256 = vshrl.u32 %v1255, 7
      %v1257 = vsub.s32 1, %v1256
      %v1258 = vrot.slane %v1213, %v1257
      %v1259 = vlaneseq
      %v1260 = vshrl.u32 %v1259, 7
      %v1261 = vsub.s32 1, %v1260
      %v1262 = vrot.slane %v1214, %v1261
      %v1263 = vmul.f32 %v1245, %v1250
      %v1264 = vmul.f32 %v1245, %v1254
      %v1265 = vmul.f32 %v1245, %v1258
      %v1266 = vmul.f32 %v1245, %v1262
      %v1267 = vadd.f32 %v1239, %v1263
      %v1268 = vadd.f32 %v1240, %v1264
      %v1269 = vadd.f32 %v1241, %v1265
      %v1270 = vadd.f32 %v1242, %v1266
      %1271 = vset.pattern.permute.xlu0 26
      %1272 = vperm.xlu0 %1271, %v254
      %v1273 = vpop.permute.xlu0 %1272
      %v1275 = vlaneseq
      %v1276 = vshrl.u32 %v1275, 7
      %v1277 = vsub.s32 2, %v1276
      %v1278 = vrot.slane %v1211, %v1277
      %v1279 = vlaneseq
      %v1280 = vshrl.u32 %v1279, 7
      %v1281 = vsub.s32 2, %v1280
      %v1282 = vrot.slane %v1212, %v1281
      %v1283 = vlaneseq
      %v1284 = vshrl.u32 %v1283, 7
      %v1285 = vsub.s32 2, %v1284
      %v1286 = vrot.slane %v1213, %v1285
      %v1287 = vlaneseq
      %v1288 = vshrl.u32 %v1287, 7
      %v1289 = vsub.s32 2, %v1288
      %v1290 = vrot.slane %v1214, %v1289
      %v1291 = vmul.f32 %v1273, %v1278
      %v1292 = vmul.f32 %v1273, %v1282
      %v1293 = vmul.f32 %v1273, %v1286
      %v1294 = vmul.f32 %v1273, %v1290
      %v1295 = vadd.f32 %v1267, %v1291
      %v1296 = vadd.f32 %v1268, %v1292
      %v1297 = vadd.f32 %v1269, %v1293
      %v1298 = vadd.f32 %v1270, %v1294
      %1299 = vset.pattern.permute.xlu0 27
      %1300 = vperm.xlu0 %1299, %v254
      %v1301 = vpop.permute.xlu0 %1300
      %v1303 = vlaneseq
      %v1304 = vshrl.u32 %v1303, 7
      %v1305 = vsub.s32 3, %v1304
      %v1306 = vrot.slane %v1211, %v1305
      %v1307 = vlaneseq
      %v1308 = vshrl.u32 %v1307, 7
      %v1309 = vsub.s32 3, %v1308
      %v1310 = vrot.slane %v1212, %v1309
      %v1311 = vlaneseq
      %v1312 = vshrl.u32 %v1311, 7
      %v1313 = vsub.s32 3, %v1312
      %v1314 = vrot.slane %v1213, %v1313
      %v1315 = vlaneseq
      %v1316 = vshrl.u32 %v1315, 7
      %v1317 = vsub.s32 3, %v1316
      %v1318 = vrot.slane %v1214, %v1317
      %v1319 = vmul.f32 %v1301, %v1306
      %v1320 = vmul.f32 %v1301, %v1310
      %v1321 = vmul.f32 %v1301, %v1314
      %v1322 = vmul.f32 %v1301, %v1318
      %v1323 = vadd.f32 %v1295, %v1319
      %v1324 = vadd.f32 %v1296, %v1320
      %v1325 = vadd.f32 %v1297, %v1321
      %v1326 = vadd.f32 %v1298, %v1322
      %1327 = vrot.lane.b32.xlu0 %v252, 56
      %v1328 = vpop.permute.xlu0 %1327
      %1329 = vrot.lane.b32.xlu0 %v257, 56
      %v1330 = vpop.permute.xlu0 %1329
      %1331 = vrot.lane.b32.xlu0 %v253, 56
      %v1332 = vpop.permute.xlu0 %1331
      %1333 = vrot.lane.b32.xlu0 %v258, 56
      %v1334 = vpop.permute.xlu0 %1333
      %vm1335 = vcmp.lt.s32.totalorder %v270, 56
      %v1336 = vsel %vm1335, %v1332, %v1334
      %v1337 = vsel %vm1335, %v1330, %v1332
      %v1338 = vsel %vm1335, %v1328, %v1330
      %v1339 = vsel %vm1335, %v1334, %v1328
      %s1340 = scalar_lea.vmem %s5, 7
      %v1341 = vld [vmem:[%s1340] ss:$8 sm:$0xf]
      %v1343 = vlaneseq
      %v1344 = vshrl.u32 %v1343, 7
      %v1345 = vsub.s32 0, %v1344
      %v1346 = vrot.slane %v1341, %v1345
      %v1347 = vlaneseq
      %v1348 = vshrl.u32 %v1347, 7
      %v1349 = vsub.s32 1, %v1348
      %v1350 = vrot.slane %v1341, %v1349
      %v1351 = vlaneseq
      %v1352 = vshrl.u32 %v1351, 7
      %v1353 = vsub.s32 2, %v1352
      %v1354 = vrot.slane %v1341, %v1353
      %v1355 = vlaneseq
      %v1356 = vshrl.u32 %v1355, 7
      %v1357 = vsub.s32 3, %v1356
      %v1358 = vrot.slane %v1341, %v1357
      %v1363 = vmul.f32 %v1339, %v1346
      %v1364 = vmul.f32 %v1338, %v1350
      %v1365 = vmul.f32 %v1337, %v1354
      %v1366 = vmul.f32 %v1336, %v1358
      %1367 = vset.pattern.permute.xlu0 28
      %1368 = vperm.xlu0 %1367, %v254
      %v1369 = vpop.permute.xlu0 %1368
      %v1371 = vlaneseq
      %v1372 = vshrl.u32 %v1371, 7
      %v1373 = vsub.s32 0, %v1372
      %v1374 = vrot.slane %v1363, %v1373
      %v1375 = vlaneseq
      %v1376 = vshrl.u32 %v1375, 7
      %v1377 = vsub.s32 0, %v1376
      %v1378 = vrot.slane %v1364, %v1377
      %v1379 = vlaneseq
      %v1380 = vshrl.u32 %v1379, 7
      %v1381 = vsub.s32 0, %v1380
      %v1382 = vrot.slane %v1365, %v1381
      %v1383 = vlaneseq
      %v1384 = vshrl.u32 %v1383, 7
      %v1385 = vsub.s32 0, %v1384
      %v1386 = vrot.slane %v1366, %v1385
      %v1387 = vmul.f32 %v1369, %v1374
      %v1388 = vmul.f32 %v1369, %v1378
      %v1389 = vmul.f32 %v1369, %v1382
      %v1390 = vmul.f32 %v1369, %v1386
      %v1391 = vadd.f32 %v1323, %v1387
      %v1392 = vadd.f32 %v1324, %v1388
      %v1393 = vadd.f32 %v1325, %v1389
      %v1394 = vadd.f32 %v1326, %v1390
      %1395 = vset.pattern.permute.xlu0 29
      %1396 = vperm.xlu0 %1395, %v254
      %v1397 = vpop.permute.xlu0 %1396
      %v1399 = vlaneseq
      %v1400 = vshrl.u32 %v1399, 7
      %v1401 = vsub.s32 1, %v1400
      %v1402 = vrot.slane %v1363, %v1401
      %v1403 = vlaneseq
      %v1404 = vshrl.u32 %v1403, 7
      %v1405 = vsub.s32 1, %v1404
      %v1406 = vrot.slane %v1364, %v1405
      %v1407 = vlaneseq
      %v1408 = vshrl.u32 %v1407, 7
      %v1409 = vsub.s32 1, %v1408
      %v1410 = vrot.slane %v1365, %v1409
      %v1411 = vlaneseq
      %v1412 = vshrl.u32 %v1411, 7
      %v1413 = vsub.s32 1, %v1412
      %v1414 = vrot.slane %v1366, %v1413
      %v1415 = vmul.f32 %v1397, %v1402
      %v1416 = vmul.f32 %v1397, %v1406
      %v1417 = vmul.f32 %v1397, %v1410
      %v1418 = vmul.f32 %v1397, %v1414
      %v1419 = vadd.f32 %v1391, %v1415
      %v1420 = vadd.f32 %v1392, %v1416
      %v1421 = vadd.f32 %v1393, %v1417
      %v1422 = vadd.f32 %v1394, %v1418
      %1423 = vset.pattern.permute.xlu0 30
      %1424 = vperm.xlu0 %1423, %v254
      %v1425 = vpop.permute.xlu0 %1424
      %v1427 = vlaneseq
      %v1428 = vshrl.u32 %v1427, 7
      %v1429 = vsub.s32 2, %v1428
      %v1430 = vrot.slane %v1363, %v1429
      %v1431 = vlaneseq
      %v1432 = vshrl.u32 %v1431, 7
      %v1433 = vsub.s32 2, %v1432
      %v1434 = vrot.slane %v1364, %v1433
      %v1435 = vlaneseq
      %v1436 = vshrl.u32 %v1435, 7
      %v1437 = vsub.s32 2, %v1436
      %v1438 = vrot.slane %v1365, %v1437
      %v1439 = vlaneseq
      %v1440 = vshrl.u32 %v1439, 7
      %v1441 = vsub.s32 2, %v1440
      %v1442 = vrot.slane %v1366, %v1441
      %v1443 = vmul.f32 %v1425, %v1430
      %v1444 = vmul.f32 %v1425, %v1434
      %v1445 = vmul.f32 %v1425, %v1438
      %v1446 = vmul.f32 %v1425, %v1442
      %v1447 = vadd.f32 %v1419, %v1443
      %v1448 = vadd.f32 %v1420, %v1444
      %v1449 = vadd.f32 %v1421, %v1445
      %v1450 = vadd.f32 %v1422, %v1446
      %1451 = vset.pattern.permute.xlu0 31
      %1452 = vperm.xlu0 %1451, %v254
      %v1453 = vpop.permute.xlu0 %1452
      %v1455 = vlaneseq
      %v1456 = vshrl.u32 %v1455, 7
      %v1457 = vsub.s32 3, %v1456
      %v1458 = vrot.slane %v1363, %v1457
      %v1459 = vlaneseq
      %v1460 = vshrl.u32 %v1459, 7
      %v1461 = vsub.s32 3, %v1460
      %v1462 = vrot.slane %v1364, %v1461
      %v1463 = vlaneseq
      %v1464 = vshrl.u32 %v1463, 7
      %v1465 = vsub.s32 3, %v1464
      %v1466 = vrot.slane %v1365, %v1465
      %v1467 = vlaneseq
      %v1468 = vshrl.u32 %v1467, 7
      %v1469 = vsub.s32 3, %v1468
      %v1470 = vrot.slane %v1366, %v1469
      %v1471 = vmul.f32 %v1453, %v1458
      %v1472 = vmul.f32 %v1453, %v1462
      %v1473 = vmul.f32 %v1453, %v1466
      %v1474 = vmul.f32 %v1453, %v1470
      %v1475 = vadd.f32 %v1447, %v1471
      %v1476 = vadd.f32 %v1448, %v1472
      %v1477 = vadd.f32 %v1449, %v1473
      %v1478 = vadd.f32 %v1450, %v1474
      %1479 = vrot.lane.b32.xlu0 %v252, 55
      %v1480 = vpop.permute.xlu0 %1479
      %1481 = vrot.lane.b32.xlu0 %v257, 55
      %v1482 = vpop.permute.xlu0 %1481
      %1483 = vrot.lane.b32.xlu0 %v253, 55
      %v1484 = vpop.permute.xlu0 %1483
      %1485 = vrot.lane.b32.xlu0 %v258, 55
      %v1486 = vpop.permute.xlu0 %1485
      %vm1487 = vcmp.lt.s32.totalorder %v270, 55
      %v1488 = vsel %vm1487, %v1484, %v1486
      %v1489 = vsel %vm1487, %v1482, %v1484
      %v1490 = vsel %vm1487, %v1480, %v1482
      %v1491 = vsel %vm1487, %v1486, %v1480
      %s1492 = scalar_lea.vmem %s5, 32
      %v1493 = vld [vmem:[%s1492] ss:$8 sm:$0xf]
      %v1495 = vlaneseq
      %v1496 = vshrl.u32 %v1495, 7
      %v1497 = vsub.s32 0, %v1496
      %v1498 = vrot.slane %v1493, %v1497
      %v1499 = vlaneseq
      %v1500 = vshrl.u32 %v1499, 7
      %v1501 = vsub.s32 1, %v1500
      %v1502 = vrot.slane %v1493, %v1501
      %v1503 = vlaneseq
      %v1504 = vshrl.u32 %v1503, 7
      %v1505 = vsub.s32 2, %v1504
      %v1506 = vrot.slane %v1493, %v1505
      %v1507 = vlaneseq
      %v1508 = vshrl.u32 %v1507, 7
      %v1509 = vsub.s32 3, %v1508
      %v1510 = vrot.slane %v1493, %v1509
      %v1515 = vmul.f32 %v1491, %v1498
      %v1516 = vmul.f32 %v1490, %v1502
      %v1517 = vmul.f32 %v1489, %v1506
      %v1518 = vmul.f32 %v1488, %v1510
      %1519 = vset.pattern.permute.xlu0 32
      %1520 = vperm.xlu0 %1519, %v254
      %v1521 = vpop.permute.xlu0 %1520
      %v1523 = vlaneseq
      %v1524 = vshrl.u32 %v1523, 7
      %v1525 = vsub.s32 0, %v1524
      %v1526 = vrot.slane %v1515, %v1525
      %v1527 = vlaneseq
      %v1528 = vshrl.u32 %v1527, 7
      %v1529 = vsub.s32 0, %v1528
      %v1530 = vrot.slane %v1516, %v1529
      %v1531 = vlaneseq
      %v1532 = vshrl.u32 %v1531, 7
      %v1533 = vsub.s32 0, %v1532
      %v1534 = vrot.slane %v1517, %v1533
      %v1535 = vlaneseq
      %v1536 = vshrl.u32 %v1535, 7
      %v1537 = vsub.s32 0, %v1536
      %v1538 = vrot.slane %v1518, %v1537
      %v1539 = vmul.f32 %v1521, %v1526
      %v1540 = vmul.f32 %v1521, %v1530
      %v1541 = vmul.f32 %v1521, %v1534
      %v1542 = vmul.f32 %v1521, %v1538
      %v1543 = vadd.f32 %v1475, %v1539
      %v1544 = vadd.f32 %v1476, %v1540
      %v1545 = vadd.f32 %v1477, %v1541
      %v1546 = vadd.f32 %v1478, %v1542
      %1547 = vset.pattern.permute.xlu0 33
      %1548 = vperm.xlu0 %1547, %v254
      %v1549 = vpop.permute.xlu0 %1548
      %v1551 = vlaneseq
      %v1552 = vshrl.u32 %v1551, 7
      %v1553 = vsub.s32 1, %v1552
      %v1554 = vrot.slane %v1515, %v1553
      %v1555 = vlaneseq
      %v1556 = vshrl.u32 %v1555, 7
      %v1557 = vsub.s32 1, %v1556
      %v1558 = vrot.slane %v1516, %v1557
      %v1559 = vlaneseq
      %v1560 = vshrl.u32 %v1559, 7
      %v1561 = vsub.s32 1, %v1560
      %v1562 = vrot.slane %v1517, %v1561
      %v1563 = vlaneseq
      %v1564 = vshrl.u32 %v1563, 7
      %v1565 = vsub.s32 1, %v1564
      %v1566 = vrot.slane %v1518, %v1565
      %v1567 = vmul.f32 %v1549, %v1554
      %v1568 = vmul.f32 %v1549, %v1558
      %v1569 = vmul.f32 %v1549, %v1562
      %v1570 = vmul.f32 %v1549, %v1566
      %v1571 = vadd.f32 %v1543, %v1567
      %v1572 = vadd.f32 %v1544, %v1568
      %v1573 = vadd.f32 %v1545, %v1569
      %v1574 = vadd.f32 %v1546, %v1570
      %1575 = vset.pattern.permute.xlu0 34
      %1576 = vperm.xlu0 %1575, %v254
      %v1577 = vpop.permute.xlu0 %1576
      %v1579 = vlaneseq
      %v1580 = vshrl.u32 %v1579, 7
      %v1581 = vsub.s32 2, %v1580
      %v1582 = vrot.slane %v1515, %v1581
      %v1583 = vlaneseq
      %v1584 = vshrl.u32 %v1583, 7
      %v1585 = vsub.s32 2, %v1584
      %v1586 = vrot.slane %v1516, %v1585
      %v1587 = vlaneseq
      %v1588 = vshrl.u32 %v1587, 7
      %v1589 = vsub.s32 2, %v1588
      %v1590 = vrot.slane %v1517, %v1589
      %v1591 = vlaneseq
      %v1592 = vshrl.u32 %v1591, 7
      %v1593 = vsub.s32 2, %v1592
      %v1594 = vrot.slane %v1518, %v1593
      %v1595 = vmul.f32 %v1577, %v1582
      %v1596 = vmul.f32 %v1577, %v1586
      %v1597 = vmul.f32 %v1577, %v1590
      %v1598 = vmul.f32 %v1577, %v1594
      %v1599 = vadd.f32 %v1571, %v1595
      %v1600 = vadd.f32 %v1572, %v1596
      %v1601 = vadd.f32 %v1573, %v1597
      %v1602 = vadd.f32 %v1574, %v1598
      %1603 = vset.pattern.permute.xlu0 35
      %1604 = vperm.xlu0 %1603, %v254
      %v1605 = vpop.permute.xlu0 %1604
      %v1607 = vlaneseq
      %v1608 = vshrl.u32 %v1607, 7
      %v1609 = vsub.s32 3, %v1608
      %v1610 = vrot.slane %v1515, %v1609
      %v1611 = vlaneseq
      %v1612 = vshrl.u32 %v1611, 7
      %v1613 = vsub.s32 3, %v1612
      %v1614 = vrot.slane %v1516, %v1613
      %v1615 = vlaneseq
      %v1616 = vshrl.u32 %v1615, 7
      %v1617 = vsub.s32 3, %v1616
      %v1618 = vrot.slane %v1517, %v1617
      %v1619 = vlaneseq
      %v1620 = vshrl.u32 %v1619, 7
      %v1621 = vsub.s32 3, %v1620
      %v1622 = vrot.slane %v1518, %v1621
      %v1623 = vmul.f32 %v1605, %v1610
      %v1624 = vmul.f32 %v1605, %v1614
      %v1625 = vmul.f32 %v1605, %v1618
      %v1626 = vmul.f32 %v1605, %v1622
      %v1627 = vadd.f32 %v1599, %v1623
      %v1628 = vadd.f32 %v1600, %v1624
      %v1629 = vadd.f32 %v1601, %v1625
      %v1630 = vadd.f32 %v1602, %v1626
      %1631 = vrot.lane.b32.xlu0 %v252, 9
      %v1632 = vpop.permute.xlu0 %1631
      %1633 = vrot.lane.b32.xlu0 %v257, 9
      %v1634 = vpop.permute.xlu0 %1633
      %1635 = vrot.lane.b32.xlu0 %v253, 9
      %v1636 = vpop.permute.xlu0 %1635
      %1637 = vrot.lane.b32.xlu0 %v258, 9
      %v1638 = vpop.permute.xlu0 %1637
      %vm1639 = vcmp.lt.s32.totalorder %v270, 9
      %v1640 = vsel %vm1639, %v1636, %v1638
      %v1641 = vsel %vm1639, %v1634, %v1636
      %v1642 = vsel %vm1639, %v1632, %v1634
      %v1643 = vsel %vm1639, %v1638, %v1632
      %s1644 = scalar_lea.vmem %s5, 33
      %v1645 = vld [vmem:[%s1644] ss:$8 sm:$0xf]
      %v1647 = vlaneseq
      %v1648 = vshrl.u32 %v1647, 7
      %v1649 = vsub.s32 0, %v1648
      %v1650 = vrot.slane %v1645, %v1649
      %v1651 = vlaneseq
      %v1652 = vshrl.u32 %v1651, 7
      %v1653 = vsub.s32 1, %v1652
      %v1654 = vrot.slane %v1645, %v1653
      %v1655 = vlaneseq
      %v1656 = vshrl.u32 %v1655, 7
      %v1657 = vsub.s32 2, %v1656
      %v1658 = vrot.slane %v1645, %v1657
      %v1659 = vlaneseq
      %v1660 = vshrl.u32 %v1659, 7
      %v1661 = vsub.s32 3, %v1660
      %v1662 = vrot.slane %v1645, %v1661
      %v1667 = vmul.f32 %v1643, %v1650
      %v1668 = vmul.f32 %v1642, %v1654
      %v1669 = vmul.f32 %v1641, %v1658
      %v1670 = vmul.f32 %v1640, %v1662
      %1671 = vset.pattern.permute.xlu0 36
      %1672 = vperm.xlu0 %1671, %v254
      %v1673 = vpop.permute.xlu0 %1672
      %v1675 = vlaneseq
      %v1676 = vshrl.u32 %v1675, 7
      %v1677 = vsub.s32 0, %v1676
      %v1678 = vrot.slane %v1667, %v1677
      %v1679 = vlaneseq
      %v1680 = vshrl.u32 %v1679, 7
      %v1681 = vsub.s32 0, %v1680
      %v1682 = vrot.slane %v1668, %v1681
      %v1683 = vlaneseq
      %v1684 = vshrl.u32 %v1683, 7
      %v1685 = vsub.s32 0, %v1684
      %v1686 = vrot.slane %v1669, %v1685
      %v1687 = vlaneseq
      %v1688 = vshrl.u32 %v1687, 7
      %v1689 = vsub.s32 0, %v1688
      %v1690 = vrot.slane %v1670, %v1689
      %v1691 = vmul.f32 %v1673, %v1678
      %v1692 = vmul.f32 %v1673, %v1682
      %v1693 = vmul.f32 %v1673, %v1686
      %v1694 = vmul.f32 %v1673, %v1690
      %v1695 = vadd.f32 %v1627, %v1691
      %v1696 = vadd.f32 %v1628, %v1692
      %v1697 = vadd.f32 %v1629, %v1693
      %v1698 = vadd.f32 %v1630, %v1694
      %1699 = vset.pattern.permute.xlu0 37
      %1700 = vperm.xlu0 %1699, %v254
      %v1701 = vpop.permute.xlu0 %1700
      %v1703 = vlaneseq
      %v1704 = vshrl.u32 %v1703, 7
      %v1705 = vsub.s32 1, %v1704
      %v1706 = vrot.slane %v1667, %v1705
      %v1707 = vlaneseq
      %v1708 = vshrl.u32 %v1707, 7
      %v1709 = vsub.s32 1, %v1708
      %v1710 = vrot.slane %v1668, %v1709
      %v1711 = vlaneseq
      %v1712 = vshrl.u32 %v1711, 7
      %v1713 = vsub.s32 1, %v1712
      %v1714 = vrot.slane %v1669, %v1713
      %v1715 = vlaneseq
      %v1716 = vshrl.u32 %v1715, 7
      %v1717 = vsub.s32 1, %v1716
      %v1718 = vrot.slane %v1670, %v1717
      %v1719 = vmul.f32 %v1701, %v1706
      %v1720 = vmul.f32 %v1701, %v1710
      %v1721 = vmul.f32 %v1701, %v1714
      %v1722 = vmul.f32 %v1701, %v1718
      %v1723 = vadd.f32 %v1695, %v1719
      %v1724 = vadd.f32 %v1696, %v1720
      %v1725 = vadd.f32 %v1697, %v1721
      %v1726 = vadd.f32 %v1698, %v1722
      %1727 = vset.pattern.permute.xlu0 38
      %1728 = vperm.xlu0 %1727, %v254
      %v1729 = vpop.permute.xlu0 %1728
      %v1731 = vlaneseq
      %v1732 = vshrl.u32 %v1731, 7
      %v1733 = vsub.s32 2, %v1732
      %v1734 = vrot.slane %v1667, %v1733
      %v1735 = vlaneseq
      %v1736 = vshrl.u32 %v1735, 7
      %v1737 = vsub.s32 2, %v1736
      %v1738 = vrot.slane %v1668, %v1737
      %v1739 = vlaneseq
      %v1740 = vshrl.u32 %v1739, 7
      %v1741 = vsub.s32 2, %v1740
      %v1742 = vrot.slane %v1669, %v1741
      %v1743 = vlaneseq
      %v1744 = vshrl.u32 %v1743, 7
      %v1745 = vsub.s32 2, %v1744
      %v1746 = vrot.slane %v1670, %v1745
      %v1747 = vmul.f32 %v1729, %v1734
      %v1748 = vmul.f32 %v1729, %v1738
      %v1749 = vmul.f32 %v1729, %v1742
      %v1750 = vmul.f32 %v1729, %v1746
      %v1751 = vadd.f32 %v1723, %v1747
      %v1752 = vadd.f32 %v1724, %v1748
      %v1753 = vadd.f32 %v1725, %v1749
      %v1754 = vadd.f32 %v1726, %v1750
      %1755 = vset.pattern.permute.xlu0 39
      %1756 = vperm.xlu0 %1755, %v254
      %v1757 = vpop.permute.xlu0 %1756
      %v1759 = vlaneseq
      %v1760 = vshrl.u32 %v1759, 7
      %v1761 = vsub.s32 3, %v1760
      %v1762 = vrot.slane %v1667, %v1761
      %v1763 = vlaneseq
      %v1764 = vshrl.u32 %v1763, 7
      %v1765 = vsub.s32 3, %v1764
      %v1766 = vrot.slane %v1668, %v1765
      %v1767 = vlaneseq
      %v1768 = vshrl.u32 %v1767, 7
      %v1769 = vsub.s32 3, %v1768
      %v1770 = vrot.slane %v1669, %v1769
      %v1771 = vlaneseq
      %v1772 = vshrl.u32 %v1771, 7
      %v1773 = vsub.s32 3, %v1772
      %v1774 = vrot.slane %v1670, %v1773
      %v1775 = vmul.f32 %v1757, %v1762
      %v1776 = vmul.f32 %v1757, %v1766
      %v1777 = vmul.f32 %v1757, %v1770
      %v1778 = vmul.f32 %v1757, %v1774
      %v1779 = vadd.f32 %v1751, %v1775
      %v1780 = vadd.f32 %v1752, %v1776
      %v1781 = vadd.f32 %v1753, %v1777
      %v1782 = vadd.f32 %v1754, %v1778
      %1783 = vrot.lane.b32.xlu0 %v252, 8
      %v1784 = vpop.permute.xlu0 %1783
      %1785 = vrot.lane.b32.xlu0 %v257, 8
      %v1786 = vpop.permute.xlu0 %1785
      %1787 = vrot.lane.b32.xlu0 %v253, 8
      %v1788 = vpop.permute.xlu0 %1787
      %1789 = vrot.lane.b32.xlu0 %v258, 8
      %v1790 = vpop.permute.xlu0 %1789
      %vm1791 = vcmp.lt.s32.totalorder %v270, 8
      %v1792 = vsel %vm1791, %v1788, %v1790
      %v1793 = vsel %vm1791, %v1786, %v1788
      %v1794 = vsel %vm1791, %v1784, %v1786
      %v1795 = vsel %vm1791, %v1790, %v1784
      %s1796 = scalar_lea.vmem %s5, 34
      %v1797 = vld [vmem:[%s1796] ss:$8 sm:$0xf]
      %v1799 = vlaneseq
      %v1800 = vshrl.u32 %v1799, 7
      %v1801 = vsub.s32 0, %v1800
      %v1802 = vrot.slane %v1797, %v1801
      %v1803 = vlaneseq
      %v1804 = vshrl.u32 %v1803, 7
      %v1805 = vsub.s32 1, %v1804
      %v1806 = vrot.slane %v1797, %v1805
      %v1807 = vlaneseq
      %v1808 = vshrl.u32 %v1807, 7
      %v1809 = vsub.s32 2, %v1808
      %v1810 = vrot.slane %v1797, %v1809
      %v1811 = vlaneseq
      %v1812 = vshrl.u32 %v1811, 7
      %v1813 = vsub.s32 3, %v1812
      %v1814 = vrot.slane %v1797, %v1813
      %v1819 = vmul.f32 %v1795, %v1802
      %v1820 = vmul.f32 %v1794, %v1806
      %v1821 = vmul.f32 %v1793, %v1810
      %v1822 = vmul.f32 %v1792, %v1814
      %1823 = vset.pattern.permute.xlu0 40
      %1824 = vperm.xlu0 %1823, %v254
      %v1825 = vpop.permute.xlu0 %1824
      %v1827 = vlaneseq
      %v1828 = vshrl.u32 %v1827, 7
      %v1829 = vsub.s32 0, %v1828
      %v1830 = vrot.slane %v1819, %v1829
      %v1831 = vlaneseq
      %v1832 = vshrl.u32 %v1831, 7
      %v1833 = vsub.s32 0, %v1832
      %v1834 = vrot.slane %v1820, %v1833
      %v1835 = vlaneseq
      %v1836 = vshrl.u32 %v1835, 7
      %v1837 = vsub.s32 0, %v1836
      %v1838 = vrot.slane %v1821, %v1837
      %v1839 = vlaneseq
      %v1840 = vshrl.u32 %v1839, 7
      %v1841 = vsub.s32 0, %v1840
      %v1842 = vrot.slane %v1822, %v1841
      %v1843 = vmul.f32 %v1825, %v1830
      %v1844 = vmul.f32 %v1825, %v1834
      %v1845 = vmul.f32 %v1825, %v1838
      %v1846 = vmul.f32 %v1825, %v1842
      %v1847 = vadd.f32 %v1779, %v1843
      %v1848 = vadd.f32 %v1780, %v1844
      %v1849 = vadd.f32 %v1781, %v1845
      %v1850 = vadd.f32 %v1782, %v1846
      %1851 = vset.pattern.permute.xlu0 41
      %1852 = vperm.xlu0 %1851, %v254
      %v1853 = vpop.permute.xlu0 %1852
      %v1855 = vlaneseq
      %v1856 = vshrl.u32 %v1855, 7
      %v1857 = vsub.s32 1, %v1856
      %v1858 = vrot.slane %v1819, %v1857
      %v1859 = vlaneseq
      %v1860 = vshrl.u32 %v1859, 7
      %v1861 = vsub.s32 1, %v1860
      %v1862 = vrot.slane %v1820, %v1861
      %v1863 = vlaneseq
      %v1864 = vshrl.u32 %v1863, 7
      %v1865 = vsub.s32 1, %v1864
      %v1866 = vrot.slane %v1821, %v1865
      %v1867 = vlaneseq
      %v1868 = vshrl.u32 %v1867, 7
      %v1869 = vsub.s32 1, %v1868
      %v1870 = vrot.slane %v1822, %v1869
      %v1871 = vmul.f32 %v1853, %v1858
      %v1872 = vmul.f32 %v1853, %v1862
      %v1873 = vmul.f32 %v1853, %v1866
      %v1874 = vmul.f32 %v1853, %v1870
      %v1875 = vadd.f32 %v1847, %v1871
      %v1876 = vadd.f32 %v1848, %v1872
      %v1877 = vadd.f32 %v1849, %v1873
      %v1878 = vadd.f32 %v1850, %v1874
      %1879 = vset.pattern.permute.xlu0 42
      %1880 = vperm.xlu0 %1879, %v254
      %v1881 = vpop.permute.xlu0 %1880
      %v1883 = vlaneseq
      %v1884 = vshrl.u32 %v1883, 7
      %v1885 = vsub.s32 2, %v1884
      %v1886 = vrot.slane %v1819, %v1885
      %v1887 = vlaneseq
      %v1888 = vshrl.u32 %v1887, 7
      %v1889 = vsub.s32 2, %v1888
      %v1890 = vrot.slane %v1820, %v1889
      %v1891 = vlaneseq
      %v1892 = vshrl.u32 %v1891, 7
      %v1893 = vsub.s32 2, %v1892
      %v1894 = vrot.slane %v1821, %v1893
      %v1895 = vlaneseq
      %v1896 = vshrl.u32 %v1895, 7
      %v1897 = vsub.s32 2, %v1896
      %v1898 = vrot.slane %v1822, %v1897
      %v1899 = vmul.f32 %v1881, %v1886
      %v1900 = vmul.f32 %v1881, %v1890
      %v1901 = vmul.f32 %v1881, %v1894
      %v1902 = vmul.f32 %v1881, %v1898
      %v1903 = vadd.f32 %v1875, %v1899
      %v1904 = vadd.f32 %v1876, %v1900
      %v1905 = vadd.f32 %v1877, %v1901
      %v1906 = vadd.f32 %v1878, %v1902
      %1907 = vset.pattern.permute.xlu0 43
      %1908 = vperm.xlu0 %1907, %v254
      %v1909 = vpop.permute.xlu0 %1908
      %v1911 = vlaneseq
      %v1912 = vshrl.u32 %v1911, 7
      %v1913 = vsub.s32 3, %v1912
      %v1914 = vrot.slane %v1819, %v1913
      %v1915 = vlaneseq
      %v1916 = vshrl.u32 %v1915, 7
      %v1917 = vsub.s32 3, %v1916
      %v1918 = vrot.slane %v1820, %v1917
      %v1919 = vlaneseq
      %v1920 = vshrl.u32 %v1919, 7
      %v1921 = vsub.s32 3, %v1920
      %v1922 = vrot.slane %v1821, %v1921
      %v1923 = vlaneseq
      %v1924 = vshrl.u32 %v1923, 7
      %v1925 = vsub.s32 3, %v1924
      %v1926 = vrot.slane %v1822, %v1925
      %v1927 = vmul.f32 %v1909, %v1914
      %v1928 = vmul.f32 %v1909, %v1918
      %v1929 = vmul.f32 %v1909, %v1922
      %v1930 = vmul.f32 %v1909, %v1926
      %v1931 = vadd.f32 %v1903, %v1927
      %v1932 = vadd.f32 %v1904, %v1928
      %v1933 = vadd.f32 %v1905, %v1929
      %v1934 = vadd.f32 %v1906, %v1930
      %1935 = vrot.lane.b32.xlu0 %v252, 7
      %v1936 = vpop.permute.xlu0 %1935
      %1937 = vrot.lane.b32.xlu0 %v257, 7
      %v1938 = vpop.permute.xlu0 %1937
      %1939 = vrot.lane.b32.xlu0 %v253, 7
      %v1940 = vpop.permute.xlu0 %1939
      %1941 = vrot.lane.b32.xlu0 %v258, 7
      %v1942 = vpop.permute.xlu0 %1941
      %vm1943 = vcmp.lt.s32.totalorder %v270, 7
      %v1944 = vsel %vm1943, %v1940, %v1942
      %v1945 = vsel %vm1943, %v1938, %v1940
      %v1946 = vsel %vm1943, %v1936, %v1938
      %v1947 = vsel %vm1943, %v1942, %v1936
      %s1948 = scalar_lea.vmem %s5, 35
      %v1949 = vld [vmem:[%s1948] ss:$8 sm:$0xf]
      %v1951 = vlaneseq
      %v1952 = vshrl.u32 %v1951, 7
      %v1953 = vsub.s32 0, %v1952
      %v1954 = vrot.slane %v1949, %v1953
      %v1955 = vlaneseq
      %v1956 = vshrl.u32 %v1955, 7
      %v1957 = vsub.s32 1, %v1956
      %v1958 = vrot.slane %v1949, %v1957
      %v1959 = vlaneseq
      %v1960 = vshrl.u32 %v1959, 7
      %v1961 = vsub.s32 2, %v1960
      %v1962 = vrot.slane %v1949, %v1961
      %v1963 = vlaneseq
      %v1964 = vshrl.u32 %v1963, 7
      %v1965 = vsub.s32 3, %v1964
      %v1966 = vrot.slane %v1949, %v1965
      %v1971 = vmul.f32 %v1947, %v1954
      %v1972 = vmul.f32 %v1946, %v1958
      %v1973 = vmul.f32 %v1945, %v1962
      %v1974 = vmul.f32 %v1944, %v1966
      %1975 = vset.pattern.permute.xlu0 44
      %1976 = vperm.xlu0 %1975, %v254
      %v1977 = vpop.permute.xlu0 %1976
      %v1979 = vlaneseq
      %v1980 = vshrl.u32 %v1979, 7
      %v1981 = vsub.s32 0, %v1980
      %v1982 = vrot.slane %v1971, %v1981
      %v1983 = vlaneseq
      %v1984 = vshrl.u32 %v1983, 7
      %v1985 = vsub.s32 0, %v1984
      %v1986 = vrot.slane %v1972, %v1985
      %v1987 = vlaneseq
      %v1988 = vshrl.u32 %v1987, 7
      %v1989 = vsub.s32 0, %v1988
      %v1990 = vrot.slane %v1973, %v1989
      %v1991 = vlaneseq
      %v1992 = vshrl.u32 %v1991, 7
      %v1993 = vsub.s32 0, %v1992
      %v1994 = vrot.slane %v1974, %v1993
      %v1995 = vmul.f32 %v1977, %v1982
      %v1996 = vmul.f32 %v1977, %v1986
      %v1997 = vmul.f32 %v1977, %v1990
      %v1998 = vmul.f32 %v1977, %v1994
      %v1999 = vadd.f32 %v1931, %v1995
      %v2000 = vadd.f32 %v1932, %v1996
      %v2001 = vadd.f32 %v1933, %v1997
      %v2002 = vadd.f32 %v1934, %v1998
      %2003 = vset.pattern.permute.xlu0 45
      %2004 = vperm.xlu0 %2003, %v254
      %v2005 = vpop.permute.xlu0 %2004
      %v2007 = vlaneseq
      %v2008 = vshrl.u32 %v2007, 7
      %v2009 = vsub.s32 1, %v2008
      %v2010 = vrot.slane %v1971, %v2009
      %v2011 = vlaneseq
      %v2012 = vshrl.u32 %v2011, 7
      %v2013 = vsub.s32 1, %v2012
      %v2014 = vrot.slane %v1972, %v2013
      %v2015 = vlaneseq
      %v2016 = vshrl.u32 %v2015, 7
      %v2017 = vsub.s32 1, %v2016
      %v2018 = vrot.slane %v1973, %v2017
      %v2019 = vlaneseq
      %v2020 = vshrl.u32 %v2019, 7
      %v2021 = vsub.s32 1, %v2020
      %v2022 = vrot.slane %v1974, %v2021
      %v2023 = vmul.f32 %v2005, %v2010
      %v2024 = vmul.f32 %v2005, %v2014
      %v2025 = vmul.f32 %v2005, %v2018
      %v2026 = vmul.f32 %v2005, %v2022
      %v2027 = vadd.f32 %v1999, %v2023
      %v2028 = vadd.f32 %v2000, %v2024
      %v2029 = vadd.f32 %v2001, %v2025
      %v2030 = vadd.f32 %v2002, %v2026
      %2031 = vset.pattern.permute.xlu0 46
      %2032 = vperm.xlu0 %2031, %v254
      %v2033 = vpop.permute.xlu0 %2032
      %v2035 = vlaneseq
      %v2036 = vshrl.u32 %v2035, 7
      %v2037 = vsub.s32 2, %v2036
      %v2038 = vrot.slane %v1971, %v2037
      %v2039 = vlaneseq
      %v2040 = vshrl.u32 %v2039, 7
      %v2041 = vsub.s32 2, %v2040
      %v2042 = vrot.slane %v1972, %v2041
      %v2043 = vlaneseq
      %v2044 = vshrl.u32 %v2043, 7
      %v2045 = vsub.s32 2, %v2044
      %v2046 = vrot.slane %v1973, %v2045
      %v2047 = vlaneseq
      %v2048 = vshrl.u32 %v2047, 7
      %v2049 = vsub.s32 2, %v2048
      %v2050 = vrot.slane %v1974, %v2049
      %v2051 = vmul.f32 %v2033, %v2038
      %v2052 = vmul.f32 %v2033, %v2042
      %v2053 = vmul.f32 %v2033, %v2046
      %v2054 = vmul.f32 %v2033, %v2050
      %v2055 = vadd.f32 %v2027, %v2051
      %v2056 = vadd.f32 %v2028, %v2052
      %v2057 = vadd.f32 %v2029, %v2053
      %v2058 = vadd.f32 %v2030, %v2054
      %2059 = vset.pattern.permute.xlu0 47
      %2060 = vperm.xlu0 %2059, %v254
      %v2061 = vpop.permute.xlu0 %2060
      %v2063 = vlaneseq
      %v2064 = vshrl.u32 %v2063, 7
      %v2065 = vsub.s32 3, %v2064
      %v2066 = vrot.slane %v1971, %v2065
      %v2067 = vlaneseq
      %v2068 = vshrl.u32 %v2067, 7
      %v2069 = vsub.s32 3, %v2068
      %v2070 = vrot.slane %v1972, %v2069
      %v2071 = vlaneseq
      %v2072 = vshrl.u32 %v2071, 7
      %v2073 = vsub.s32 3, %v2072
      %v2074 = vrot.slane %v1973, %v2073
      %v2075 = vlaneseq
      %v2076 = vshrl.u32 %v2075, 7
      %v2077 = vsub.s32 3, %v2076
      %v2078 = vrot.slane %v1974, %v2077
      %v2079 = vmul.f32 %v2061, %v2066
      %v2080 = vmul.f32 %v2061, %v2070
      %v2081 = vmul.f32 %v2061, %v2074
      %v2082 = vmul.f32 %v2061, %v2078
      %v2083 = vadd.f32 %v2055, %v2079
      %v2084 = vadd.f32 %v2056, %v2080
      %v2085 = vadd.f32 %v2057, %v2081
      %v2086 = vadd.f32 %v2058, %v2082
      %2087 = vrot.lane.b32.xlu0 %v252, 1
      %v2088 = vpop.permute.xlu0 %2087
      %2089 = vrot.lane.b32.xlu0 %v257, 1
      %v2090 = vpop.permute.xlu0 %2089
      %2091 = vrot.lane.b32.xlu0 %v253, 1
      %v2092 = vpop.permute.xlu0 %2091
      %2093 = vrot.lane.b32.xlu0 %v258, 1
      %v2094 = vpop.permute.xlu0 %2093
      %vm2095 = vcmp.lt.s32.totalorder %v270, 1
      %v2096 = vsel %vm2095, %v2092, %v2094
      %v2097 = vsel %vm2095, %v2090, %v2092
      %v2098 = vsel %vm2095, %v2088, %v2090
      %v2099 = vsel %vm2095, %v2094, %v2088
      %s2100 = scalar_lea.vmem %s5, 36
      %v2101 = vld [vmem:[%s2100] ss:$8 sm:$0xf]
      %v2103 = vlaneseq
      %v2104 = vshrl.u32 %v2103, 7
      %v2105 = vsub.s32 0, %v2104
      %v2106 = vrot.slane %v2101, %v2105
      %v2107 = vlaneseq
      %v2108 = vshrl.u32 %v2107, 7
      %v2109 = vsub.s32 1, %v2108
      %v2110 = vrot.slane %v2101, %v2109
      %v2111 = vlaneseq
      %v2112 = vshrl.u32 %v2111, 7
      %v2113 = vsub.s32 2, %v2112
      %v2114 = vrot.slane %v2101, %v2113
      %v2115 = vlaneseq
      %v2116 = vshrl.u32 %v2115, 7
      %v2117 = vsub.s32 3, %v2116
      %v2118 = vrot.slane %v2101, %v2117
      %v2123 = vmul.f32 %v2099, %v2106
      %v2124 = vmul.f32 %v2098, %v2110
      %v2125 = vmul.f32 %v2097, %v2114
      %v2126 = vmul.f32 %v2096, %v2118
      %2127 = vset.pattern.permute.xlu0 48
      %2128 = vperm.xlu0 %2127, %v254
      %v2129 = vpop.permute.xlu0 %2128
      %v2131 = vlaneseq
      %v2132 = vshrl.u32 %v2131, 7
      %v2133 = vsub.s32 0, %v2132
      %v2134 = vrot.slane %v2123, %v2133
      %v2135 = vlaneseq
      %v2136 = vshrl.u32 %v2135, 7
      %v2137 = vsub.s32 0, %v2136
      %v2138 = vrot.slane %v2124, %v2137
      %v2139 = vlaneseq
      %v2140 = vshrl.u32 %v2139, 7
      %v2141 = vsub.s32 0, %v2140
      %v2142 = vrot.slane %v2125, %v2141
      %v2143 = vlaneseq
      %v2144 = vshrl.u32 %v2143, 7
      %v2145 = vsub.s32 0, %v2144
      %v2146 = vrot.slane %v2126, %v2145
      %v2147 = vmul.f32 %v2129, %v2134
      %v2148 = vmul.f32 %v2129, %v2138
      %v2149 = vmul.f32 %v2129, %v2142
      %v2150 = vmul.f32 %v2129, %v2146
      %v2151 = vadd.f32 %v2083, %v2147
      %v2152 = vadd.f32 %v2084, %v2148
      %v2153 = vadd.f32 %v2085, %v2149
      %v2154 = vadd.f32 %v2086, %v2150
      %2155 = vset.pattern.permute.xlu0 49
      %2156 = vperm.xlu0 %2155, %v254
      %v2157 = vpop.permute.xlu0 %2156
      %v2159 = vlaneseq
      %v2160 = vshrl.u32 %v2159, 7
      %v2161 = vsub.s32 1, %v2160
      %v2162 = vrot.slane %v2123, %v2161
      %v2163 = vlaneseq
      %v2164 = vshrl.u32 %v2163, 7
      %v2165 = vsub.s32 1, %v2164
      %v2166 = vrot.slane %v2124, %v2165
      %v2167 = vlaneseq
      %v2168 = vshrl.u32 %v2167, 7
      %v2169 = vsub.s32 1, %v2168
      %v2170 = vrot.slane %v2125, %v2169
      %v2171 = vlaneseq
      %v2172 = vshrl.u32 %v2171, 7
      %v2173 = vsub.s32 1, %v2172
      %v2174 = vrot.slane %v2126, %v2173
      %v2175 = vmul.f32 %v2157, %v2162
      %v2176 = vmul.f32 %v2157, %v2166
      %v2177 = vmul.f32 %v2157, %v2170
      %v2178 = vmul.f32 %v2157, %v2174
      %v2179 = vadd.f32 %v2151, %v2175
      %v2180 = vadd.f32 %v2152, %v2176
      %v2181 = vadd.f32 %v2153, %v2177
      %v2182 = vadd.f32 %v2154, %v2178
      %2183 = vset.pattern.permute.xlu0 50
      %2184 = vperm.xlu0 %2183, %v254
      %v2185 = vpop.permute.xlu0 %2184
      %v2187 = vlaneseq
      %v2188 = vshrl.u32 %v2187, 7
      %v2189 = vsub.s32 2, %v2188
      %v2190 = vrot.slane %v2123, %v2189
      %v2191 = vlaneseq
      %v2192 = vshrl.u32 %v2191, 7
      %v2193 = vsub.s32 2, %v2192
      %v2194 = vrot.slane %v2124, %v2193
      %v2195 = vlaneseq
      %v2196 = vshrl.u32 %v2195, 7
      %v2197 = vsub.s32 2, %v2196
      %v2198 = vrot.slane %v2125, %v2197
      %v2199 = vlaneseq
      %v2200 = vshrl.u32 %v2199, 7
      %v2201 = vsub.s32 2, %v2200
      %v2202 = vrot.slane %v2126, %v2201
      %v2203 = vmul.f32 %v2185, %v2190
      %v2204 = vmul.f32 %v2185, %v2194
      %v2205 = vmul.f32 %v2185, %v2198
      %v2206 = vmul.f32 %v2185, %v2202
      %v2207 = vadd.f32 %v2179, %v2203
      %v2208 = vadd.f32 %v2180, %v2204
      %v2209 = vadd.f32 %v2181, %v2205
      %v2210 = vadd.f32 %v2182, %v2206
      %2211 = vset.pattern.permute.xlu0 51
      %2212 = vperm.xlu0 %2211, %v254
      %v2213 = vpop.permute.xlu0 %2212
      %v2215 = vlaneseq
      %v2216 = vshrl.u32 %v2215, 7
      %v2217 = vsub.s32 3, %v2216
      %v2218 = vrot.slane %v2123, %v2217
      %v2219 = vlaneseq
      %v2220 = vshrl.u32 %v2219, 7
      %v2221 = vsub.s32 3, %v2220
      %v2222 = vrot.slane %v2124, %v2221
      %v2223 = vlaneseq
      %v2224 = vshrl.u32 %v2223, 7
      %v2225 = vsub.s32 3, %v2224
      %v2226 = vrot.slane %v2125, %v2225
      %v2227 = vlaneseq
      %v2228 = vshrl.u32 %v2227, 7
      %v2229 = vsub.s32 3, %v2228
      %v2230 = vrot.slane %v2126, %v2229
      %v2231 = vmul.f32 %v2213, %v2218
      %v2232 = vmul.f32 %v2213, %v2222
      %v2233 = vmul.f32 %v2213, %v2226
      %v2234 = vmul.f32 %v2213, %v2230
      %v2235 = vadd.f32 %v2207, %v2231
      %v2236 = vadd.f32 %v2208, %v2232
      %v2237 = vadd.f32 %v2209, %v2233
      %v2238 = vadd.f32 %v2210, %v2234
      %2239 = vset.pattern.permute.xlu0 52
      %2240 = vperm.xlu0 %2239, %v254
      %v2241 = vpop.permute.xlu0 %2240
      %v2243 = vlaneseq
      %v2244 = vshrl.u32 %v2243, 7
      %v2245 = vsub.s32 0, %v2244
      %v2246 = vrot.slane %v252, %v2245
      %v2247 = vlaneseq
      %v2248 = vshrl.u32 %v2247, 7
      %v2249 = vsub.s32 4, %v2248
      %v2250 = vrot.slane %v252, %v2249
      %v2251 = vlaneseq
      %v2252 = vshrl.u32 %v2251, 7
      %v2253 = vsub.s32 0, %v2252
      %v2254 = vrot.slane %v253, %v2253
      %v2255 = vlaneseq
      %v2256 = vshrl.u32 %v2255, 7
      %v2257 = vsub.s32 4, %v2256
      %v2258 = vrot.slane %v253, %v2257
      %v2263 = vlaneseq
      %v2264 = vshrl.u32 %v2263, 7
      %v2265 = vsub.s32 0, %v2264
      %v2266 = vrot.slane %v2246, %v2265
      %v2267 = vlaneseq
      %v2268 = vshrl.u32 %v2267, 7
      %v2269 = vsub.s32 0, %v2268
      %v2270 = vrot.slane %v2250, %v2269
      %v2271 = vlaneseq
      %v2272 = vshrl.u32 %v2271, 7
      %v2273 = vsub.s32 0, %v2272
      %v2274 = vrot.slane %v2254, %v2273
      %v2275 = vlaneseq
      %v2276 = vshrl.u32 %v2275, 7
      %v2277 = vsub.s32 0, %v2276
      %v2278 = vrot.slane %v2258, %v2277
      %v2279 = vmul.f32 %v2241, %v2266
      %v2280 = vmul.f32 %v2241, %v2270
      %v2281 = vmul.f32 %v2241, %v2274
      %v2282 = vmul.f32 %v2241, %v2278
      %v2283 = vadd.f32 %v2235, %v2279
      %v2284 = vadd.f32 %v2236, %v2280
      %v2285 = vadd.f32 %v2237, %v2281
      %v2286 = vadd.f32 %v2238, %v2282
      %2287 = vset.pattern.permute.xlu0 53
      %2288 = vperm.xlu0 %2287, %v254
      %v2289 = vpop.permute.xlu0 %2288
      %v2291 = vlaneseq
      %v2292 = vshrl.u32 %v2291, 7
      %v2293 = vsub.s32 1, %v2292
      %v2294 = vrot.slane %v252, %v2293
      %v2295 = vlaneseq
      %v2296 = vshrl.u32 %v2295, 7
      %v2297 = vsub.s32 5, %v2296
      %v2298 = vrot.slane %v252, %v2297
      %v2299 = vlaneseq
      %v2300 = vshrl.u32 %v2299, 7
      %v2301 = vsub.s32 1, %v2300
      %v2302 = vrot.slane %v253, %v2301
      %v2303 = vlaneseq
      %v2304 = vshrl.u32 %v2303, 7
      %v2305 = vsub.s32 5, %v2304
      %v2306 = vrot.slane %v253, %v2305
      %v2311 = vlaneseq
      %v2312 = vshrl.u32 %v2311, 7
      %v2313 = vsub.s32 1, %v2312
      %v2314 = vrot.slane %v2294, %v2313
      %v2315 = vlaneseq
      %v2316 = vshrl.u32 %v2315, 7
      %v2317 = vsub.s32 1, %v2316
      %v2318 = vrot.slane %v2298, %v2317
      %v2319 = vlaneseq
      %v2320 = vshrl.u32 %v2319, 7
      %v2321 = vsub.s32 1, %v2320
      %v2322 = vrot.slane %v2302, %v2321
      %v2323 = vlaneseq
      %v2324 = vshrl.u32 %v2323, 7
      %v2325 = vsub.s32 1, %v2324
      %v2326 = vrot.slane %v2306, %v2325
      %v2327 = vmul.f32 %v2289, %v2314
      %v2328 = vmul.f32 %v2289, %v2318
      %v2329 = vmul.f32 %v2289, %v2322
      %v2330 = vmul.f32 %v2289, %v2326
      %v2331 = vadd.f32 %v2283, %v2327
      %v2332 = vadd.f32 %v2284, %v2328
      %v2333 = vadd.f32 %v2285, %v2329
      %v2334 = vadd.f32 %v2286, %v2330
      %2335 = vset.pattern.permute.xlu0 54
      %2336 = vperm.xlu0 %2335, %v254
      %v2337 = vpop.permute.xlu0 %2336
      %v2339 = vlaneseq
      %v2340 = vshrl.u32 %v2339, 7
      %v2341 = vsub.s32 2, %v2340
      %v2342 = vrot.slane %v252, %v2341
      %v2343 = vlaneseq
      %v2344 = vshrl.u32 %v2343, 7
      %v2345 = vsub.s32 6, %v2344
      %v2346 = vrot.slane %v252, %v2345
      %v2347 = vlaneseq
      %v2348 = vshrl.u32 %v2347, 7
      %v2349 = vsub.s32 2, %v2348
      %v2350 = vrot.slane %v253, %v2349
      %v2351 = vlaneseq
      %v2352 = vshrl.u32 %v2351, 7
      %v2353 = vsub.s32 6, %v2352
      %v2354 = vrot.slane %v253, %v2353
      %v2359 = vlaneseq
      %v2360 = vshrl.u32 %v2359, 7
      %v2361 = vsub.s32 2, %v2360
      %v2362 = vrot.slane %v2342, %v2361
      %v2363 = vlaneseq
      %v2364 = vshrl.u32 %v2363, 7
      %v2365 = vsub.s32 2, %v2364
      %v2366 = vrot.slane %v2346, %v2365
      %v2367 = vlaneseq
      %v2368 = vshrl.u32 %v2367, 7
      %v2369 = vsub.s32 2, %v2368
      %v2370 = vrot.slane %v2350, %v2369
      %v2371 = vlaneseq
      %v2372 = vshrl.u32 %v2371, 7
      %v2373 = vsub.s32 2, %v2372
      %v2374 = vrot.slane %v2354, %v2373
      %v2375 = vmul.f32 %v2337, %v2362
      %v2376 = vmul.f32 %v2337, %v2366
      %v2377 = vmul.f32 %v2337, %v2370
      %v2378 = vmul.f32 %v2337, %v2374
      %v2379 = vadd.f32 %v2331, %v2375
      %v2380 = vadd.f32 %v2332, %v2376
      %v2381 = vadd.f32 %v2333, %v2377
      %v2382 = vadd.f32 %v2334, %v2378
      %2383 = vset.pattern.permute.xlu0 55
      %2384 = vperm.xlu0 %2383, %v254
      %v2385 = vpop.permute.xlu0 %2384
      %v2387 = vlaneseq
      %v2388 = vshrl.u32 %v2387, 7
      %v2389 = vsub.s32 3, %v2388
      %v2390 = vrot.slane %v252, %v2389
      %v2391 = vlaneseq
      %v2392 = vshrl.u32 %v2391, 7
      %v2393 = vsub.s32 7, %v2392
      %v2394 = vrot.slane %v252, %v2393
      %v2395 = vlaneseq
      %v2396 = vshrl.u32 %v2395, 7
      %v2397 = vsub.s32 3, %v2396
      %v2398 = vrot.slane %v253, %v2397
      %v2399 = vlaneseq
      %v2400 = vshrl.u32 %v2399, 7
      %v2401 = vsub.s32 7, %v2400
      %v2402 = vrot.slane %v253, %v2401
      %v2407 = vlaneseq
      %v2408 = vshrl.u32 %v2407, 7
      %v2409 = vsub.s32 3, %v2408
      %v2410 = vrot.slane %v2390, %v2409
      %v2411 = vlaneseq
      %v2412 = vshrl.u32 %v2411, 7
      %v2413 = vsub.s32 3, %v2412
      %v2414 = vrot.slane %v2394, %v2413
      %v2415 = vlaneseq
      %v2416 = vshrl.u32 %v2415, 7
      %v2417 = vsub.s32 3, %v2416
      %v2418 = vrot.slane %v2398, %v2417
      %v2419 = vlaneseq
      %v2420 = vshrl.u32 %v2419, 7
      %v2421 = vsub.s32 3, %v2420
      %v2422 = vrot.slane %v2402, %v2421
      %v2423 = vmul.f32 %v2385, %v2410
      %v2424 = vmul.f32 %v2385, %v2414
      %v2425 = vmul.f32 %v2385, %v2418
      %v2426 = vmul.f32 %v2385, %v2422
      %v2427 = vadd.f32 %v2379, %v2423
      %v2428 = vadd.f32 %v2380, %v2424
      %v2429 = vadd.f32 %v2381, %v2425
      %v2430 = vadd.f32 %v2382, %v2426
      %2431 = vrot.lane.b32.xlu0 %v252, 127
      %v2432 = vpop.permute.xlu0 %2431
      %2433 = vrot.lane.b32.xlu0 %v257, 127
      %v2434 = vpop.permute.xlu0 %2433
      %2435 = vrot.lane.b32.xlu0 %v253, 127
      %v2436 = vpop.permute.xlu0 %2435
      %2437 = vrot.lane.b32.xlu0 %v258, 127
      %v2438 = vpop.permute.xlu0 %2437
      %vm2439 = vcmp.lt.s32.totalorder %v270, 127
      %v2440 = vsel %vm2439, %v2436, %v2438
      %v2441 = vsel %vm2439, %v2434, %v2436
      %v2442 = vsel %vm2439, %v2432, %v2434
      %v2443 = vsel %vm2439, %v2438, %v2432
      %s2444 = scalar_lea.vmem %s5, 38
      %v2445 = vld [vmem:[%s2444] ss:$8 sm:$0xf]
      %v2447 = vlaneseq
      %v2448 = vshrl.u32 %v2447, 7
      %v2449 = vsub.s32 0, %v2448
      %v2450 = vrot.slane %v2445, %v2449
      %v2451 = vlaneseq
      %v2452 = vshrl.u32 %v2451, 7
      %v2453 = vsub.s32 1, %v2452
      %v2454 = vrot.slane %v2445, %v2453
      %v2455 = vlaneseq
      %v2456 = vshrl.u32 %v2455, 7
      %v2457 = vsub.s32 2, %v2456
      %v2458 = vrot.slane %v2445, %v2457
      %v2459 = vlaneseq
      %v2460 = vshrl.u32 %v2459, 7
      %v2461 = vsub.s32 3, %v2460
      %v2462 = vrot.slane %v2445, %v2461
      %v2467 = vmul.f32 %v2442, %v2450
      %v2468 = vmul.f32 %v2441, %v2454
      %v2469 = vmul.f32 %v2440, %v2458
      %v2470 = vmul.f32 %v2443, %v2462
      %2471 = vset.pattern.permute.xlu0 56
      %2472 = vperm.xlu0 %2471, %v254
      %v2473 = vpop.permute.xlu0 %2472
      %v2475 = vlaneseq
      %v2476 = vshrl.u32 %v2475, 7
      %v2477 = vsub.s32 0, %v2476
      %v2478 = vrot.slane %v2467, %v2477
      %v2479 = vlaneseq
      %v2480 = vshrl.u32 %v2479, 7
      %v2481 = vsub.s32 0, %v2480
      %v2482 = vrot.slane %v2468, %v2481
      %v2483 = vlaneseq
      %v2484 = vshrl.u32 %v2483, 7
      %v2485 = vsub.s32 0, %v2484
      %v2486 = vrot.slane %v2469, %v2485
      %v2487 = vlaneseq
      %v2488 = vshrl.u32 %v2487, 7
      %v2489 = vsub.s32 0, %v2488
      %v2490 = vrot.slane %v2470, %v2489
      %v2491 = vmul.f32 %v2473, %v2478
      %v2492 = vmul.f32 %v2473, %v2482
      %v2493 = vmul.f32 %v2473, %v2486
      %v2494 = vmul.f32 %v2473, %v2490
      %v2495 = vadd.f32 %v2427, %v2491
      %v2496 = vadd.f32 %v2428, %v2492
      %v2497 = vadd.f32 %v2429, %v2493
      %v2498 = vadd.f32 %v2430, %v2494
      %2499 = vset.pattern.permute.xlu0 57
      %2500 = vperm.xlu0 %2499, %v254
      %v2501 = vpop.permute.xlu0 %2500
      %v2503 = vlaneseq
      %v2504 = vshrl.u32 %v2503, 7
      %v2505 = vsub.s32 1, %v2504
      %v2506 = vrot.slane %v2467, %v2505
      %v2507 = vlaneseq
      %v2508 = vshrl.u32 %v2507, 7
      %v2509 = vsub.s32 1, %v2508
      %v2510 = vrot.slane %v2468, %v2509
      %v2511 = vlaneseq
      %v2512 = vshrl.u32 %v2511, 7
      %v2513 = vsub.s32 1, %v2512
      %v2514 = vrot.slane %v2469, %v2513
      %v2515 = vlaneseq
      %v2516 = vshrl.u32 %v2515, 7
      %v2517 = vsub.s32 1, %v2516
      %v2518 = vrot.slane %v2470, %v2517
      %v2519 = vmul.f32 %v2501, %v2506
      %v2520 = vmul.f32 %v2501, %v2510
      %v2521 = vmul.f32 %v2501, %v2514
      %v2522 = vmul.f32 %v2501, %v2518
      %v2523 = vadd.f32 %v2495, %v2519
      %v2524 = vadd.f32 %v2496, %v2520
      %v2525 = vadd.f32 %v2497, %v2521
      %v2526 = vadd.f32 %v2498, %v2522
      %2527 = vset.pattern.permute.xlu0 58
      %2528 = vperm.xlu0 %2527, %v254
      %v2529 = vpop.permute.xlu0 %2528
      %v2531 = vlaneseq
      %v2532 = vshrl.u32 %v2531, 7
      %v2533 = vsub.s32 2, %v2532
      %v2534 = vrot.slane %v2467, %v2533
      %v2535 = vlaneseq
      %v2536 = vshrl.u32 %v2535, 7
      %v2537 = vsub.s32 2, %v2536
      %v2538 = vrot.slane %v2468, %v2537
      %v2539 = vlaneseq
      %v2540 = vshrl.u32 %v2539, 7
      %v2541 = vsub.s32 2, %v2540
      %v2542 = vrot.slane %v2469, %v2541
      %v2543 = vlaneseq
      %v2544 = vshrl.u32 %v2543, 7
      %v2545 = vsub.s32 2, %v2544
      %v2546 = vrot.slane %v2470, %v2545
      %v2547 = vmul.f32 %v2529, %v2534
      %v2548 = vmul.f32 %v2529, %v2538
      %v2549 = vmul.f32 %v2529, %v2542
      %v2550 = vmul.f32 %v2529, %v2546
      %v2551 = vadd.f32 %v2523, %v2547
      %v2552 = vadd.f32 %v2524, %v2548
      %v2553 = vadd.f32 %v2525, %v2549
      %v2554 = vadd.f32 %v2526, %v2550
      %2555 = vset.pattern.permute.xlu0 59
      %2556 = vperm.xlu0 %2555, %v254
      %v2557 = vpop.permute.xlu0 %2556
      %v2559 = vlaneseq
      %v2560 = vshrl.u32 %v2559, 7
      %v2561 = vsub.s32 3, %v2560
      %v2562 = vrot.slane %v2467, %v2561
      %v2563 = vlaneseq
      %v2564 = vshrl.u32 %v2563, 7
      %v2565 = vsub.s32 3, %v2564
      %v2566 = vrot.slane %v2468, %v2565
      %v2567 = vlaneseq
      %v2568 = vshrl.u32 %v2567, 7
      %v2569 = vsub.s32 3, %v2568
      %v2570 = vrot.slane %v2469, %v2569
      %v2571 = vlaneseq
      %v2572 = vshrl.u32 %v2571, 7
      %v2573 = vsub.s32 3, %v2572
      %v2574 = vrot.slane %v2470, %v2573
      %v2575 = vmul.f32 %v2557, %v2562
      %v2576 = vmul.f32 %v2557, %v2566
      %v2577 = vmul.f32 %v2557, %v2570
      %v2578 = vmul.f32 %v2557, %v2574
      %v2579 = vadd.f32 %v2551, %v2575
      %v2580 = vadd.f32 %v2552, %v2576
      %v2581 = vadd.f32 %v2553, %v2577
      %v2582 = vadd.f32 %v2554, %v2578
      %2583 = vrot.lane.b32.xlu0 %v252, 121
      %v2584 = vpop.permute.xlu0 %2583
      %2585 = vrot.lane.b32.xlu0 %v257, 121
      %v2586 = vpop.permute.xlu0 %2585
      %2587 = vrot.lane.b32.xlu0 %v253, 121
      %v2588 = vpop.permute.xlu0 %2587
      %2589 = vrot.lane.b32.xlu0 %v258, 121
      %v2590 = vpop.permute.xlu0 %2589
      %vm2591 = vcmp.lt.s32.totalorder %v270, 121
      %v2592 = vsel %vm2591, %v2588, %v2590
      %v2593 = vsel %vm2591, %v2586, %v2588
      %v2594 = vsel %vm2591, %v2584, %v2586
      %v2595 = vsel %vm2591, %v2590, %v2584
      %s2596 = scalar_lea.vmem %s5, 39
      %v2597 = vld [vmem:[%s2596] ss:$8 sm:$0xf]
      %v2599 = vlaneseq
      %v2600 = vshrl.u32 %v2599, 7
      %v2601 = vsub.s32 0, %v2600
      %v2602 = vrot.slane %v2597, %v2601
      %v2603 = vlaneseq
      %v2604 = vshrl.u32 %v2603, 7
      %v2605 = vsub.s32 1, %v2604
      %v2606 = vrot.slane %v2597, %v2605
      %v2607 = vlaneseq
      %v2608 = vshrl.u32 %v2607, 7
      %v2609 = vsub.s32 2, %v2608
      %v2610 = vrot.slane %v2597, %v2609
      %v2611 = vlaneseq
      %v2612 = vshrl.u32 %v2611, 7
      %v2613 = vsub.s32 3, %v2612
      %v2614 = vrot.slane %v2597, %v2613
      %v2619 = vmul.f32 %v2594, %v2602
      %v2620 = vmul.f32 %v2593, %v2606
      %v2621 = vmul.f32 %v2592, %v2610
      %v2622 = vmul.f32 %v2595, %v2614
      %2623 = vset.pattern.permute.xlu0 60
      %2624 = vperm.xlu0 %2623, %v254
      %v2625 = vpop.permute.xlu0 %2624
      %v2627 = vlaneseq
      %v2628 = vshrl.u32 %v2627, 7
      %v2629 = vsub.s32 0, %v2628
      %v2630 = vrot.slane %v2619, %v2629
      %v2631 = vlaneseq
      %v2632 = vshrl.u32 %v2631, 7
      %v2633 = vsub.s32 0, %v2632
      %v2634 = vrot.slane %v2620, %v2633
      %v2635 = vlaneseq
      %v2636 = vshrl.u32 %v2635, 7
      %v2637 = vsub.s32 0, %v2636
      %v2638 = vrot.slane %v2621, %v2637
      %v2639 = vlaneseq
      %v2640 = vshrl.u32 %v2639, 7
      %v2641 = vsub.s32 0, %v2640
      %v2642 = vrot.slane %v2622, %v2641
      %v2643 = vmul.f32 %v2625, %v2630
      %v2644 = vmul.f32 %v2625, %v2634
      %v2645 = vmul.f32 %v2625, %v2638
      %v2646 = vmul.f32 %v2625, %v2642
      %v2647 = vadd.f32 %v2579, %v2643
      %v2648 = vadd.f32 %v2580, %v2644
      %v2649 = vadd.f32 %v2581, %v2645
      %v2650 = vadd.f32 %v2582, %v2646
      %2651 = vset.pattern.permute.xlu0 61
      %2652 = vperm.xlu0 %2651, %v254
      %v2653 = vpop.permute.xlu0 %2652
      %v2655 = vlaneseq
      %v2656 = vshrl.u32 %v2655, 7
      %v2657 = vsub.s32 1, %v2656
      %v2658 = vrot.slane %v2619, %v2657
      %v2659 = vlaneseq
      %v2660 = vshrl.u32 %v2659, 7
      %v2661 = vsub.s32 1, %v2660
      %v2662 = vrot.slane %v2620, %v2661
      %v2663 = vlaneseq
      %v2664 = vshrl.u32 %v2663, 7
      %v2665 = vsub.s32 1, %v2664
      %v2666 = vrot.slane %v2621, %v2665
      %v2667 = vlaneseq
      %v2668 = vshrl.u32 %v2667, 7
      %v2669 = vsub.s32 1, %v2668
      %v2670 = vrot.slane %v2622, %v2669
      %v2671 = vmul.f32 %v2653, %v2658
      %v2672 = vmul.f32 %v2653, %v2662
      %v2673 = vmul.f32 %v2653, %v2666
      %v2674 = vmul.f32 %v2653, %v2670
      %v2675 = vadd.f32 %v2647, %v2671
      %v2676 = vadd.f32 %v2648, %v2672
      %v2677 = vadd.f32 %v2649, %v2673
      %v2678 = vadd.f32 %v2650, %v2674
      %2679 = vset.pattern.permute.xlu0 62
      %2680 = vperm.xlu0 %2679, %v254
      %v2681 = vpop.permute.xlu0 %2680
      %v2683 = vlaneseq
      %v2684 = vshrl.u32 %v2683, 7
      %v2685 = vsub.s32 2, %v2684
      %v2686 = vrot.slane %v2619, %v2685
      %v2687 = vlaneseq
      %v2688 = vshrl.u32 %v2687, 7
      %v2689 = vsub.s32 2, %v2688
      %v2690 = vrot.slane %v2620, %v2689
      %v2691 = vlaneseq
      %v2692 = vshrl.u32 %v2691, 7
      %v2693 = vsub.s32 2, %v2692
      %v2694 = vrot.slane %v2621, %v2693
      %v2695 = vlaneseq
      %v2696 = vshrl.u32 %v2695, 7
      %v2697 = vsub.s32 2, %v2696
      %v2698 = vrot.slane %v2622, %v2697
      %v2699 = vmul.f32 %v2681, %v2686
      %v2700 = vmul.f32 %v2681, %v2690
      %v2701 = vmul.f32 %v2681, %v2694
      %v2702 = vmul.f32 %v2681, %v2698
      %v2703 = vadd.f32 %v2675, %v2699
      %v2704 = vadd.f32 %v2676, %v2700
      %v2705 = vadd.f32 %v2677, %v2701
      %v2706 = vadd.f32 %v2678, %v2702
      %2707 = vset.pattern.permute.xlu0 63
      %2708 = vperm.xlu0 %2707, %v254
      %v2709 = vpop.permute.xlu0 %2708
      %v2711 = vlaneseq
      %v2712 = vshrl.u32 %v2711, 7
      %v2713 = vsub.s32 3, %v2712
      %v2714 = vrot.slane %v2619, %v2713
      %v2715 = vlaneseq
      %v2716 = vshrl.u32 %v2715, 7
      %v2717 = vsub.s32 3, %v2716
      %v2718 = vrot.slane %v2620, %v2717
      %v2719 = vlaneseq
      %v2720 = vshrl.u32 %v2719, 7
      %v2721 = vsub.s32 3, %v2720
      %v2722 = vrot.slane %v2621, %v2721
      %v2723 = vlaneseq
      %v2724 = vshrl.u32 %v2723, 7
      %v2725 = vsub.s32 3, %v2724
      %v2726 = vrot.slane %v2622, %v2725
      %v2727 = vmul.f32 %v2709, %v2714
      %v2728 = vmul.f32 %v2709, %v2718
      %v2729 = vmul.f32 %v2709, %v2722
      %v2730 = vmul.f32 %v2709, %v2726
      %v2731 = vadd.f32 %v2703, %v2727
      %v2732 = vadd.f32 %v2704, %v2728
      %v2733 = vadd.f32 %v2705, %v2729
      %v2734 = vadd.f32 %v2706, %v2730
      %2735 = vrot.lane.b32.xlu0 %v252, 120
      %v2736 = vpop.permute.xlu0 %2735
      %2737 = vrot.lane.b32.xlu0 %v257, 120
      %v2738 = vpop.permute.xlu0 %2737
      %2739 = vrot.lane.b32.xlu0 %v253, 120
      %v2740 = vpop.permute.xlu0 %2739
      %2741 = vrot.lane.b32.xlu0 %v258, 120
      %v2742 = vpop.permute.xlu0 %2741
      %vm2743 = vcmp.lt.s32.totalorder %v270, 120
      %v2744 = vsel %vm2743, %v2740, %v2742
      %v2745 = vsel %vm2743, %v2738, %v2740
      %v2746 = vsel %vm2743, %v2736, %v2738
      %v2747 = vsel %vm2743, %v2742, %v2736
      %s2748 = scalar_lea.vmem %s5, 64
      %v2749 = vld [vmem:[%s2748] ss:$8 sm:$0xf]
      %v2751 = vlaneseq
      %v2752 = vshrl.u32 %v2751, 7
      %v2753 = vsub.s32 0, %v2752
      %v2754 = vrot.slane %v2749, %v2753
      %v2755 = vlaneseq
      %v2756 = vshrl.u32 %v2755, 7
      %v2757 = vsub.s32 1, %v2756
      %v2758 = vrot.slane %v2749, %v2757
      %v2759 = vlaneseq
      %v2760 = vshrl.u32 %v2759, 7
      %v2761 = vsub.s32 2, %v2760
      %v2762 = vrot.slane %v2749, %v2761
      %v2763 = vlaneseq
      %v2764 = vshrl.u32 %v2763, 7
      %v2765 = vsub.s32 3, %v2764
      %v2766 = vrot.slane %v2749, %v2765
      %v2771 = vmul.f32 %v2746, %v2754
      %v2772 = vmul.f32 %v2745, %v2758
      %v2773 = vmul.f32 %v2744, %v2762
      %v2774 = vmul.f32 %v2747, %v2766
      %2775 = vset.pattern.permute.xlu0 64
      %2776 = vperm.xlu0 %2775, %v254
      %v2777 = vpop.permute.xlu0 %2776
      %v2779 = vlaneseq
      %v2780 = vshrl.u32 %v2779, 7
      %v2781 = vsub.s32 0, %v2780
      %v2782 = vrot.slane %v2771, %v2781
      %v2783 = vlaneseq
      %v2784 = vshrl.u32 %v2783, 7
      %v2785 = vsub.s32 0, %v2784
      %v2786 = vrot.slane %v2772, %v2785
      %v2787 = vlaneseq
      %v2788 = vshrl.u32 %v2787, 7
      %v2789 = vsub.s32 0, %v2788
      %v2790 = vrot.slane %v2773, %v2789
      %v2791 = vlaneseq
      %v2792 = vshrl.u32 %v2791, 7
      %v2793 = vsub.s32 0, %v2792
      %v2794 = vrot.slane %v2774, %v2793
      %v2795 = vmul.f32 %v2777, %v2782
      %v2796 = vmul.f32 %v2777, %v2786
      %v2797 = vmul.f32 %v2777, %v2790
      %v2798 = vmul.f32 %v2777, %v2794
      %v2799 = vadd.f32 %v2731, %v2795
      %v2800 = vadd.f32 %v2732, %v2796
      %v2801 = vadd.f32 %v2733, %v2797
      %v2802 = vadd.f32 %v2734, %v2798
      %2803 = vset.pattern.permute.xlu0 65
      %2804 = vperm.xlu0 %2803, %v254
      %v2805 = vpop.permute.xlu0 %2804
      %v2807 = vlaneseq
      %v2808 = vshrl.u32 %v2807, 7
      %v2809 = vsub.s32 1, %v2808
      %v2810 = vrot.slane %v2771, %v2809
      %v2811 = vlaneseq
      %v2812 = vshrl.u32 %v2811, 7
      %v2813 = vsub.s32 1, %v2812
      %v2814 = vrot.slane %v2772, %v2813
      %v2815 = vlaneseq
      %v2816 = vshrl.u32 %v2815, 7
      %v2817 = vsub.s32 1, %v2816
      %v2818 = vrot.slane %v2773, %v2817
      %v2819 = vlaneseq
      %v2820 = vshrl.u32 %v2819, 7
      %v2821 = vsub.s32 1, %v2820
      %v2822 = vrot.slane %v2774, %v2821
      %v2823 = vmul.f32 %v2805, %v2810
      %v2824 = vmul.f32 %v2805, %v2814
      %v2825 = vmul.f32 %v2805, %v2818
      %v2826 = vmul.f32 %v2805, %v2822
      %v2827 = vadd.f32 %v2799, %v2823
      %v2828 = vadd.f32 %v2800, %v2824
      %v2829 = vadd.f32 %v2801, %v2825
      %v2830 = vadd.f32 %v2802, %v2826
      %2831 = vset.pattern.permute.xlu0 66
      %2832 = vperm.xlu0 %2831, %v254
      %v2833 = vpop.permute.xlu0 %2832
      %v2835 = vlaneseq
      %v2836 = vshrl.u32 %v2835, 7
      %v2837 = vsub.s32 2, %v2836
      %v2838 = vrot.slane %v2771, %v2837
      %v2839 = vlaneseq
      %v2840 = vshrl.u32 %v2839, 7
      %v2841 = vsub.s32 2, %v2840
      %v2842 = vrot.slane %v2772, %v2841
      %v2843 = vlaneseq
      %v2844 = vshrl.u32 %v2843, 7
      %v2845 = vsub.s32 2, %v2844
      %v2846 = vrot.slane %v2773, %v2845
      %v2847 = vlaneseq
      %v2848 = vshrl.u32 %v2847, 7
      %v2849 = vsub.s32 2, %v2848
      %v2850 = vrot.slane %v2774, %v2849
      %v2851 = vmul.f32 %v2833, %v2838
      %v2852 = vmul.f32 %v2833, %v2842
      %v2853 = vmul.f32 %v2833, %v2846
      %v2854 = vmul.f32 %v2833, %v2850
      %v2855 = vadd.f32 %v2827, %v2851
      %v2856 = vadd.f32 %v2828, %v2852
      %v2857 = vadd.f32 %v2829, %v2853
      %v2858 = vadd.f32 %v2830, %v2854
      %2859 = vset.pattern.permute.xlu0 67
      %2860 = vperm.xlu0 %2859, %v254
      %v2861 = vpop.permute.xlu0 %2860
      %v2863 = vlaneseq
      %v2864 = vshrl.u32 %v2863, 7
      %v2865 = vsub.s32 3, %v2864
      %v2866 = vrot.slane %v2771, %v2865
      %v2867 = vlaneseq
      %v2868 = vshrl.u32 %v2867, 7
      %v2869 = vsub.s32 3, %v2868
      %v2870 = vrot.slane %v2772, %v2869
      %v2871 = vlaneseq
      %v2872 = vshrl.u32 %v2871, 7
      %v2873 = vsub.s32 3, %v2872
      %v2874 = vrot.slane %v2773, %v2873
      %v2875 = vlaneseq
      %v2876 = vshrl.u32 %v2875, 7
      %v2877 = vsub.s32 3, %v2876
      %v2878 = vrot.slane %v2774, %v2877
      %v2879 = vmul.f32 %v2861, %v2866
      %v2880 = vmul.f32 %v2861, %v2870
      %v2881 = vmul.f32 %v2861, %v2874
      %v2882 = vmul.f32 %v2861, %v2878
      %v2883 = vadd.f32 %v2855, %v2879
      %v2884 = vadd.f32 %v2856, %v2880
      %v2885 = vadd.f32 %v2857, %v2881
      %v2886 = vadd.f32 %v2858, %v2882
      %2887 = vrot.lane.b32.xlu0 %v252, 119
      %v2888 = vpop.permute.xlu0 %2887
      %2889 = vrot.lane.b32.xlu0 %v257, 119
      %v2890 = vpop.permute.xlu0 %2889
      %2891 = vrot.lane.b32.xlu0 %v253, 119
      %v2892 = vpop.permute.xlu0 %2891
      %2893 = vrot.lane.b32.xlu0 %v258, 119
      %v2894 = vpop.permute.xlu0 %2893
      %vm2895 = vcmp.lt.s32.totalorder %v270, 119
      %v2896 = vsel %vm2895, %v2892, %v2894
      %v2897 = vsel %vm2895, %v2890, %v2892
      %v2898 = vsel %vm2895, %v2888, %v2890
      %v2899 = vsel %vm2895, %v2894, %v2888
      %s2900 = scalar_lea.vmem %s5, 65
      %v2901 = vld [vmem:[%s2900] ss:$8 sm:$0xf]
      %v2903 = vlaneseq
      %v2904 = vshrl.u32 %v2903, 7
      %v2905 = vsub.s32 0, %v2904
      %v2906 = vrot.slane %v2901, %v2905
      %v2907 = vlaneseq
      %v2908 = vshrl.u32 %v2907, 7
      %v2909 = vsub.s32 1, %v2908
      %v2910 = vrot.slane %v2901, %v2909
      %v2911 = vlaneseq
      %v2912 = vshrl.u32 %v2911, 7
      %v2913 = vsub.s32 2, %v2912
      %v2914 = vrot.slane %v2901, %v2913
      %v2915 = vlaneseq
      %v2916 = vshrl.u32 %v2915, 7
      %v2917 = vsub.s32 3, %v2916
      %v2918 = vrot.slane %v2901, %v2917
      %v2923 = vmul.f32 %v2898, %v2906
      %v2924 = vmul.f32 %v2897, %v2910
      %v2925 = vmul.f32 %v2896, %v2914
      %v2926 = vmul.f32 %v2899, %v2918
      %2927 = vset.pattern.permute.xlu0 68
      %2928 = vperm.xlu0 %2927, %v254
      %v2929 = vpop.permute.xlu0 %2928
      %v2931 = vlaneseq
      %v2932 = vshrl.u32 %v2931, 7
      %v2933 = vsub.s32 0, %v2932
      %v2934 = vrot.slane %v2923, %v2933
      %v2935 = vlaneseq
      %v2936 = vshrl.u32 %v2935, 7
      %v2937 = vsub.s32 0, %v2936
      %v2938 = vrot.slane %v2924, %v2937
      %v2939 = vlaneseq
      %v2940 = vshrl.u32 %v2939, 7
      %v2941 = vsub.s32 0, %v2940
      %v2942 = vrot.slane %v2925, %v2941
      %v2943 = vlaneseq
      %v2944 = vshrl.u32 %v2943, 7
      %v2945 = vsub.s32 0, %v2944
      %v2946 = vrot.slane %v2926, %v2945
      %v2947 = vmul.f32 %v2929, %v2934
      %v2948 = vmul.f32 %v2929, %v2938
      %v2949 = vmul.f32 %v2929, %v2942
      %v2950 = vmul.f32 %v2929, %v2946
      %v2951 = vadd.f32 %v2883, %v2947
      %v2952 = vadd.f32 %v2884, %v2948
      %v2953 = vadd.f32 %v2885, %v2949
      %v2954 = vadd.f32 %v2886, %v2950
      %2955 = vset.pattern.permute.xlu0 69
      %2956 = vperm.xlu0 %2955, %v254
      %v2957 = vpop.permute.xlu0 %2956
      %v2959 = vlaneseq
      %v2960 = vshrl.u32 %v2959, 7
      %v2961 = vsub.s32 1, %v2960
      %v2962 = vrot.slane %v2923, %v2961
      %v2963 = vlaneseq
      %v2964 = vshrl.u32 %v2963, 7
      %v2965 = vsub.s32 1, %v2964
      %v2966 = vrot.slane %v2924, %v2965
      %v2967 = vlaneseq
      %v2968 = vshrl.u32 %v2967, 7
      %v2969 = vsub.s32 1, %v2968
      %v2970 = vrot.slane %v2925, %v2969
      %v2971 = vlaneseq
      %v2972 = vshrl.u32 %v2971, 7
      %v2973 = vsub.s32 1, %v2972
      %v2974 = vrot.slane %v2926, %v2973
      %v2975 = vmul.f32 %v2957, %v2962
      %v2976 = vmul.f32 %v2957, %v2966
      %v2977 = vmul.f32 %v2957, %v2970
      %v2978 = vmul.f32 %v2957, %v2974
      %v2979 = vadd.f32 %v2951, %v2975
      %v2980 = vadd.f32 %v2952, %v2976
      %v2981 = vadd.f32 %v2953, %v2977
      %v2982 = vadd.f32 %v2954, %v2978
      %2983 = vset.pattern.permute.xlu0 70
      %2984 = vperm.xlu0 %2983, %v254
      %v2985 = vpop.permute.xlu0 %2984
      %v2987 = vlaneseq
      %v2988 = vshrl.u32 %v2987, 7
      %v2989 = vsub.s32 2, %v2988
      %v2990 = vrot.slane %v2923, %v2989
      %v2991 = vlaneseq
      %v2992 = vshrl.u32 %v2991, 7
      %v2993 = vsub.s32 2, %v2992
      %v2994 = vrot.slane %v2924, %v2993
      %v2995 = vlaneseq
      %v2996 = vshrl.u32 %v2995, 7
      %v2997 = vsub.s32 2, %v2996
      %v2998 = vrot.slane %v2925, %v2997
      %v2999 = vlaneseq
      %v3000 = vshrl.u32 %v2999, 7
      %v3001 = vsub.s32 2, %v3000
      %v3002 = vrot.slane %v2926, %v3001
      %v3003 = vmul.f32 %v2985, %v2990
      %v3004 = vmul.f32 %v2985, %v2994
      %v3005 = vmul.f32 %v2985, %v2998
      %v3006 = vmul.f32 %v2985, %v3002
      %v3007 = vadd.f32 %v2979, %v3003
      %v3008 = vadd.f32 %v2980, %v3004
      %v3009 = vadd.f32 %v2981, %v3005
      %v3010 = vadd.f32 %v2982, %v3006
      %3011 = vset.pattern.permute.xlu0 71
      %3012 = vperm.xlu0 %3011, %v254
      %v3013 = vpop.permute.xlu0 %3012
      %v3015 = vlaneseq
      %v3016 = vshrl.u32 %v3015, 7
      %v3017 = vsub.s32 3, %v3016
      %v3018 = vrot.slane %v2923, %v3017
      %v3019 = vlaneseq
      %v3020 = vshrl.u32 %v3019, 7
      %v3021 = vsub.s32 3, %v3020
      %v3022 = vrot.slane %v2924, %v3021
      %v3023 = vlaneseq
      %v3024 = vshrl.u32 %v3023, 7
      %v3025 = vsub.s32 3, %v3024
      %v3026 = vrot.slane %v2925, %v3025
      %v3027 = vlaneseq
      %v3028 = vshrl.u32 %v3027, 7
      %v3029 = vsub.s32 3, %v3028
      %v3030 = vrot.slane %v2926, %v3029
      %v3031 = vmul.f32 %v3013, %v3018
      %v3032 = vmul.f32 %v3013, %v3022
      %v3033 = vmul.f32 %v3013, %v3026
      %v3034 = vmul.f32 %v3013, %v3030
      %v3035 = vadd.f32 %v3007, %v3031
      %v3036 = vadd.f32 %v3008, %v3032
      %v3037 = vadd.f32 %v3009, %v3033
      %v3038 = vadd.f32 %v3010, %v3034
      %s3039 = scalar_lea.vmem %s5, 66
      %v3040 = vld [vmem:[%s3039] ss:$8 sm:$0xf]
      %v3042 = vlaneseq
      %v3043 = vshrl.u32 %v3042, 7
      %v3044 = vsub.s32 0, %v3043
      %v3045 = vrot.slane %v3040, %v3044
      %v3046 = vlaneseq
      %v3047 = vshrl.u32 %v3046, 7
      %v3048 = vsub.s32 1, %v3047
      %v3049 = vrot.slane %v3040, %v3048
      %v3050 = vlaneseq
      %v3051 = vshrl.u32 %v3050, 7
      %v3052 = vsub.s32 2, %v3051
      %v3053 = vrot.slane %v3040, %v3052
      %v3054 = vlaneseq
      %v3055 = vshrl.u32 %v3054, 7
      %v3056 = vsub.s32 3, %v3055
      %v3057 = vrot.slane %v3040, %v3056
      %v3062 = vmul.f32 %v274, %v3045
      %v3063 = vmul.f32 %v273, %v3049
      %v3064 = vmul.f32 %v272, %v3053
      %v3065 = vmul.f32 %v275, %v3057
      %3066 = vset.pattern.permute.xlu0 72
      %3067 = vperm.xlu0 %3066, %v254
      %v3068 = vpop.permute.xlu0 %3067
      %v3070 = vlaneseq
      %v3071 = vshrl.u32 %v3070, 7
      %v3072 = vsub.s32 0, %v3071
      %v3073 = vrot.slane %v3062, %v3072
      %v3074 = vlaneseq
      %v3075 = vshrl.u32 %v3074, 7
      %v3076 = vsub.s32 0, %v3075
      %v3077 = vrot.slane %v3063, %v3076
      %v3078 = vlaneseq
      %v3079 = vshrl.u32 %v3078, 7
      %v3080 = vsub.s32 0, %v3079
      %v3081 = vrot.slane %v3064, %v3080
      %v3082 = vlaneseq
      %v3083 = vshrl.u32 %v3082, 7
      %v3084 = vsub.s32 0, %v3083
      %v3085 = vrot.slane %v3065, %v3084
      %v3086 = vmul.f32 %v3068, %v3073
      %v3087 = vmul.f32 %v3068, %v3077
      %v3088 = vmul.f32 %v3068, %v3081
      %v3089 = vmul.f32 %v3068, %v3085
      %v3090 = vadd.f32 %v3035, %v3086
      %v3091 = vadd.f32 %v3036, %v3087
      %v3092 = vadd.f32 %v3037, %v3088
      %v3093 = vadd.f32 %v3038, %v3089
      %3094 = vset.pattern.permute.xlu0 73
      %3095 = vperm.xlu0 %3094, %v254
      %v3096 = vpop.permute.xlu0 %3095
      %v3098 = vlaneseq
      %v3099 = vshrl.u32 %v3098, 7
      %v3100 = vsub.s32 1, %v3099
      %v3101 = vrot.slane %v3062, %v3100
      %v3102 = vlaneseq
      %v3103 = vshrl.u32 %v3102, 7
      %v3104 = vsub.s32 1, %v3103
      %v3105 = vrot.slane %v3063, %v3104
      %v3106 = vlaneseq
      %v3107 = vshrl.u32 %v3106, 7
      %v3108 = vsub.s32 1, %v3107
      %v3109 = vrot.slane %v3064, %v3108
      %v3110 = vlaneseq
      %v3111 = vshrl.u32 %v3110, 7
      %v3112 = vsub.s32 1, %v3111
      %v3113 = vrot.slane %v3065, %v3112
      %v3114 = vmul.f32 %v3096, %v3101
      %v3115 = vmul.f32 %v3096, %v3105
      %v3116 = vmul.f32 %v3096, %v3109
      %v3117 = vmul.f32 %v3096, %v3113
      %v3118 = vadd.f32 %v3090, %v3114
      %v3119 = vadd.f32 %v3091, %v3115
      %v3120 = vadd.f32 %v3092, %v3116
      %v3121 = vadd.f32 %v3093, %v3117
      %3122 = vset.pattern.permute.xlu0 74
      %3123 = vperm.xlu0 %3122, %v254
      %v3124 = vpop.permute.xlu0 %3123
      %v3126 = vlaneseq
      %v3127 = vshrl.u32 %v3126, 7
      %v3128 = vsub.s32 2, %v3127
      %v3129 = vrot.slane %v3062, %v3128
      %v3130 = vlaneseq
      %v3131 = vshrl.u32 %v3130, 7
      %v3132 = vsub.s32 2, %v3131
      %v3133 = vrot.slane %v3063, %v3132
      %v3134 = vlaneseq
      %v3135 = vshrl.u32 %v3134, 7
      %v3136 = vsub.s32 2, %v3135
      %v3137 = vrot.slane %v3064, %v3136
      %v3138 = vlaneseq
      %v3139 = vshrl.u32 %v3138, 7
      %v3140 = vsub.s32 2, %v3139
      %v3141 = vrot.slane %v3065, %v3140
      %v3142 = vmul.f32 %v3124, %v3129
      %v3143 = vmul.f32 %v3124, %v3133
      %v3144 = vmul.f32 %v3124, %v3137
      %v3145 = vmul.f32 %v3124, %v3141
      %v3146 = vadd.f32 %v3118, %v3142
      %v3147 = vadd.f32 %v3119, %v3143
      %v3148 = vadd.f32 %v3120, %v3144
      %v3149 = vadd.f32 %v3121, %v3145
      %3150 = vset.pattern.permute.xlu0 75
      %3151 = vperm.xlu0 %3150, %v254
      %v3152 = vpop.permute.xlu0 %3151
      %v3154 = vlaneseq
      %v3155 = vshrl.u32 %v3154, 7
      %v3156 = vsub.s32 3, %v3155
      %v3157 = vrot.slane %v3062, %v3156
      %v3158 = vlaneseq
      %v3159 = vshrl.u32 %v3158, 7
      %v3160 = vsub.s32 3, %v3159
      %v3161 = vrot.slane %v3063, %v3160
      %v3162 = vlaneseq
      %v3163 = vshrl.u32 %v3162, 7
      %v3164 = vsub.s32 3, %v3163
      %v3165 = vrot.slane %v3064, %v3164
      %v3166 = vlaneseq
      %v3167 = vshrl.u32 %v3166, 7
      %v3168 = vsub.s32 3, %v3167
      %v3169 = vrot.slane %v3065, %v3168
      %v3170 = vmul.f32 %v3152, %v3157
      %v3171 = vmul.f32 %v3152, %v3161
      %v3172 = vmul.f32 %v3152, %v3165
      %v3173 = vmul.f32 %v3152, %v3169
      %v3174 = vadd.f32 %v3146, %v3170
      %v3175 = vadd.f32 %v3147, %v3171
      %v3176 = vadd.f32 %v3148, %v3172
      %v3177 = vadd.f32 %v3149, %v3173
      %s3178 = scalar_lea.vmem %s5, 67
      %v3179 = vld [vmem:[%s3178] ss:$8 sm:$0xf]
      %v3181 = vlaneseq
      %v3182 = vshrl.u32 %v3181, 7
      %v3183 = vsub.s32 0, %v3182
      %v3184 = vrot.slane %v3179, %v3183
      %v3185 = vlaneseq
      %v3186 = vshrl.u32 %v3185, 7
      %v3187 = vsub.s32 1, %v3186
      %v3188 = vrot.slane %v3179, %v3187
      %v3189 = vlaneseq
      %v3190 = vshrl.u32 %v3189, 7
      %v3191 = vsub.s32 2, %v3190
      %v3192 = vrot.slane %v3179, %v3191
      %v3193 = vlaneseq
      %v3194 = vshrl.u32 %v3193, 7
      %v3195 = vsub.s32 3, %v3194
      %v3196 = vrot.slane %v3179, %v3195
      %v3201 = vmul.f32 %v426, %v3184
      %v3202 = vmul.f32 %v425, %v3188
      %v3203 = vmul.f32 %v424, %v3192
      %v3204 = vmul.f32 %v427, %v3196
      %3205 = vset.pattern.permute.xlu0 76
      %3206 = vperm.xlu0 %3205, %v254
      %v3207 = vpop.permute.xlu0 %3206
      %v3209 = vlaneseq
      %v3210 = vshrl.u32 %v3209, 7
      %v3211 = vsub.s32 0, %v3210
      %v3212 = vrot.slane %v3201, %v3211
      %v3213 = vlaneseq
      %v3214 = vshrl.u32 %v3213, 7
      %v3215 = vsub.s32 0, %v3214
      %v3216 = vrot.slane %v3202, %v3215
      %v3217 = vlaneseq
      %v3218 = vshrl.u32 %v3217, 7
      %v3219 = vsub.s32 0, %v3218
      %v3220 = vrot.slane %v3203, %v3219
      %v3221 = vlaneseq
      %v3222 = vshrl.u32 %v3221, 7
      %v3223 = vsub.s32 0, %v3222
      %v3224 = vrot.slane %v3204, %v3223
      %v3225 = vmul.f32 %v3207, %v3212
      %v3226 = vmul.f32 %v3207, %v3216
      %v3227 = vmul.f32 %v3207, %v3220
      %v3228 = vmul.f32 %v3207, %v3224
      %v3229 = vadd.f32 %v3174, %v3225
      %v3230 = vadd.f32 %v3175, %v3226
      %v3231 = vadd.f32 %v3176, %v3227
      %v3232 = vadd.f32 %v3177, %v3228
      %3233 = vset.pattern.permute.xlu0 77
      %3234 = vperm.xlu0 %3233, %v254
      %v3235 = vpop.permute.xlu0 %3234
      %v3237 = vlaneseq
      %v3238 = vshrl.u32 %v3237, 7
      %v3239 = vsub.s32 1, %v3238
      %v3240 = vrot.slane %v3201, %v3239
      %v3241 = vlaneseq
      %v3242 = vshrl.u32 %v3241, 7
      %v3243 = vsub.s32 1, %v3242
      %v3244 = vrot.slane %v3202, %v3243
      %v3245 = vlaneseq
      %v3246 = vshrl.u32 %v3245, 7
      %v3247 = vsub.s32 1, %v3246
      %v3248 = vrot.slane %v3203, %v3247
      %v3249 = vlaneseq
      %v3250 = vshrl.u32 %v3249, 7
      %v3251 = vsub.s32 1, %v3250
      %v3252 = vrot.slane %v3204, %v3251
      %v3253 = vmul.f32 %v3235, %v3240
      %v3254 = vmul.f32 %v3235, %v3244
      %v3255 = vmul.f32 %v3235, %v3248
      %v3256 = vmul.f32 %v3235, %v3252
      %v3257 = vadd.f32 %v3229, %v3253
      %v3258 = vadd.f32 %v3230, %v3254
      %v3259 = vadd.f32 %v3231, %v3255
      %v3260 = vadd.f32 %v3232, %v3256
      %3261 = vset.pattern.permute.xlu0 78
      %3262 = vperm.xlu0 %3261, %v254
      %v3263 = vpop.permute.xlu0 %3262
      %v3265 = vlaneseq
      %v3266 = vshrl.u32 %v3265, 7
      %v3267 = vsub.s32 2, %v3266
      %v3268 = vrot.slane %v3201, %v3267
      %v3269 = vlaneseq
      %v3270 = vshrl.u32 %v3269, 7
      %v3271 = vsub.s32 2, %v3270
      %v3272 = vrot.slane %v3202, %v3271
      %v3273 = vlaneseq
      %v3274 = vshrl.u32 %v3273, 7
      %v3275 = vsub.s32 2, %v3274
      %v3276 = vrot.slane %v3203, %v3275
      %v3277 = vlaneseq
      %v3278 = vshrl.u32 %v3277, 7
      %v3279 = vsub.s32 2, %v3278
      %v3280 = vrot.slane %v3204, %v3279
      %v3281 = vmul.f32 %v3263, %v3268
      %v3282 = vmul.f32 %v3263, %v3272
      %v3283 = vmul.f32 %v3263, %v3276
      %v3284 = vmul.f32 %v3263, %v3280
      %v3285 = vadd.f32 %v3257, %v3281
      %v3286 = vadd.f32 %v3258, %v3282
      %v3287 = vadd.f32 %v3259, %v3283
      %v3288 = vadd.f32 %v3260, %v3284
      %3289 = vset.pattern.permute.xlu0 79
      %3290 = vperm.xlu0 %3289, %v254
      %v3291 = vpop.permute.xlu0 %3290
      %v3293 = vlaneseq
      %v3294 = vshrl.u32 %v3293, 7
      %v3295 = vsub.s32 3, %v3294
      %v3296 = vrot.slane %v3201, %v3295
      %v3297 = vlaneseq
      %v3298 = vshrl.u32 %v3297, 7
      %v3299 = vsub.s32 3, %v3298
      %v3300 = vrot.slane %v3202, %v3299
      %v3301 = vlaneseq
      %v3302 = vshrl.u32 %v3301, 7
      %v3303 = vsub.s32 3, %v3302
      %v3304 = vrot.slane %v3203, %v3303
      %v3305 = vlaneseq
      %v3306 = vshrl.u32 %v3305, 7
      %v3307 = vsub.s32 3, %v3306
      %v3308 = vrot.slane %v3204, %v3307
      %v3309 = vmul.f32 %v3291, %v3296
      %v3310 = vmul.f32 %v3291, %v3300
      %v3311 = vmul.f32 %v3291, %v3304
      %v3312 = vmul.f32 %v3291, %v3308
      %v3313 = vadd.f32 %v3285, %v3309
      %v3314 = vadd.f32 %v3286, %v3310
      %v3315 = vadd.f32 %v3287, %v3311
      %v3316 = vadd.f32 %v3288, %v3312
      %s3317 = scalar_lea.vmem %s5, 68
      %v3318 = vld [vmem:[%s3317] ss:$8 sm:$0xf]
      %v3320 = vlaneseq
      %v3321 = vshrl.u32 %v3320, 7
      %v3322 = vsub.s32 0, %v3321
      %v3323 = vrot.slane %v3318, %v3322
      %v3324 = vlaneseq
      %v3325 = vshrl.u32 %v3324, 7
      %v3326 = vsub.s32 1, %v3325
      %v3327 = vrot.slane %v3318, %v3326
      %v3328 = vlaneseq
      %v3329 = vshrl.u32 %v3328, 7
      %v3330 = vsub.s32 2, %v3329
      %v3331 = vrot.slane %v3318, %v3330
      %v3332 = vlaneseq
      %v3333 = vshrl.u32 %v3332, 7
      %v3334 = vsub.s32 3, %v3333
      %v3335 = vrot.slane %v3318, %v3334
      %v3340 = vmul.f32 %v578, %v3323
      %v3341 = vmul.f32 %v577, %v3327
      %v3342 = vmul.f32 %v576, %v3331
      %v3343 = vmul.f32 %v579, %v3335
      %3344 = vset.pattern.permute.xlu0 80
      %3345 = vperm.xlu0 %3344, %v254
      %v3346 = vpop.permute.xlu0 %3345
      %v3348 = vlaneseq
      %v3349 = vshrl.u32 %v3348, 7
      %v3350 = vsub.s32 0, %v3349
      %v3351 = vrot.slane %v3340, %v3350
      %v3352 = vlaneseq
      %v3353 = vshrl.u32 %v3352, 7
      %v3354 = vsub.s32 0, %v3353
      %v3355 = vrot.slane %v3341, %v3354
      %v3356 = vlaneseq
      %v3357 = vshrl.u32 %v3356, 7
      %v3358 = vsub.s32 0, %v3357
      %v3359 = vrot.slane %v3342, %v3358
      %v3360 = vlaneseq
      %v3361 = vshrl.u32 %v3360, 7
      %v3362 = vsub.s32 0, %v3361
      %v3363 = vrot.slane %v3343, %v3362
      %v3364 = vmul.f32 %v3346, %v3351
      %v3365 = vmul.f32 %v3346, %v3355
      %v3366 = vmul.f32 %v3346, %v3359
      %v3367 = vmul.f32 %v3346, %v3363
      %v3368 = vadd.f32 %v3313, %v3364
      %v3369 = vadd.f32 %v3314, %v3365
      %v3370 = vadd.f32 %v3315, %v3366
      %v3371 = vadd.f32 %v3316, %v3367
      %3372 = vset.pattern.permute.xlu0 81
      %3373 = vperm.xlu0 %3372, %v254
      %v3374 = vpop.permute.xlu0 %3373
      %v3376 = vlaneseq
      %v3377 = vshrl.u32 %v3376, 7
      %v3378 = vsub.s32 1, %v3377
      %v3379 = vrot.slane %v3340, %v3378
      %v3380 = vlaneseq
      %v3381 = vshrl.u32 %v3380, 7
      %v3382 = vsub.s32 1, %v3381
      %v3383 = vrot.slane %v3341, %v3382
      %v3384 = vlaneseq
      %v3385 = vshrl.u32 %v3384, 7
      %v3386 = vsub.s32 1, %v3385
      %v3387 = vrot.slane %v3342, %v3386
      %v3388 = vlaneseq
      %v3389 = vshrl.u32 %v3388, 7
      %v3390 = vsub.s32 1, %v3389
      %v3391 = vrot.slane %v3343, %v3390
      %v3392 = vmul.f32 %v3374, %v3379
      %v3393 = vmul.f32 %v3374, %v3383
      %v3394 = vmul.f32 %v3374, %v3387
      %v3395 = vmul.f32 %v3374, %v3391
      %v3396 = vadd.f32 %v3368, %v3392
      %v3397 = vadd.f32 %v3369, %v3393
      %v3398 = vadd.f32 %v3370, %v3394
      %v3399 = vadd.f32 %v3371, %v3395
      %3400 = vset.pattern.permute.xlu0 82
      %3401 = vperm.xlu0 %3400, %v254
      %v3402 = vpop.permute.xlu0 %3401
      %v3404 = vlaneseq
      %v3405 = vshrl.u32 %v3404, 7
      %v3406 = vsub.s32 2, %v3405
      %v3407 = vrot.slane %v3340, %v3406
      %v3408 = vlaneseq
      %v3409 = vshrl.u32 %v3408, 7
      %v3410 = vsub.s32 2, %v3409
      %v3411 = vrot.slane %v3341, %v3410
      %v3412 = vlaneseq
      %v3413 = vshrl.u32 %v3412, 7
      %v3414 = vsub.s32 2, %v3413
      %v3415 = vrot.slane %v3342, %v3414
      %v3416 = vlaneseq
      %v3417 = vshrl.u32 %v3416, 7
      %v3418 = vsub.s32 2, %v3417
      %v3419 = vrot.slane %v3343, %v3418
      %v3420 = vmul.f32 %v3402, %v3407
      %v3421 = vmul.f32 %v3402, %v3411
      %v3422 = vmul.f32 %v3402, %v3415
      %v3423 = vmul.f32 %v3402, %v3419
      %v3424 = vadd.f32 %v3396, %v3420
      %v3425 = vadd.f32 %v3397, %v3421
      %v3426 = vadd.f32 %v3398, %v3422
      %v3427 = vadd.f32 %v3399, %v3423
      %3428 = vset.pattern.permute.xlu0 83
      %3429 = vperm.xlu0 %3428, %v254
      %v3430 = vpop.permute.xlu0 %3429
      %v3432 = vlaneseq
      %v3433 = vshrl.u32 %v3432, 7
      %v3434 = vsub.s32 3, %v3433
      %v3435 = vrot.slane %v3340, %v3434
      %v3436 = vlaneseq
      %v3437 = vshrl.u32 %v3436, 7
      %v3438 = vsub.s32 3, %v3437
      %v3439 = vrot.slane %v3341, %v3438
      %v3440 = vlaneseq
      %v3441 = vshrl.u32 %v3440, 7
      %v3442 = vsub.s32 3, %v3441
      %v3443 = vrot.slane %v3342, %v3442
      %v3444 = vlaneseq
      %v3445 = vshrl.u32 %v3444, 7
      %v3446 = vsub.s32 3, %v3445
      %v3447 = vrot.slane %v3343, %v3446
      %v3448 = vmul.f32 %v3430, %v3435
      %v3449 = vmul.f32 %v3430, %v3439
      %v3450 = vmul.f32 %v3430, %v3443
      %v3451 = vmul.f32 %v3430, %v3447
      %v3452 = vadd.f32 %v3424, %v3448
      %v3453 = vadd.f32 %v3425, %v3449
      %v3454 = vadd.f32 %v3426, %v3450
      %v3455 = vadd.f32 %v3427, %v3451
      %s3456 = scalar_lea.vmem %s5, 69
      %v3457 = vld [vmem:[%s3456] ss:$8 sm:$0xf]
      %v3459 = vlaneseq
      %v3460 = vshrl.u32 %v3459, 7
      %v3461 = vsub.s32 0, %v3460
      %v3462 = vrot.slane %v3457, %v3461
      %v3463 = vlaneseq
      %v3464 = vshrl.u32 %v3463, 7
      %v3465 = vsub.s32 1, %v3464
      %v3466 = vrot.slane %v3457, %v3465
      %v3467 = vlaneseq
      %v3468 = vshrl.u32 %v3467, 7
      %v3469 = vsub.s32 2, %v3468
      %v3470 = vrot.slane %v3457, %v3469
      %v3471 = vlaneseq
      %v3472 = vshrl.u32 %v3471, 7
      %v3473 = vsub.s32 3, %v3472
      %v3474 = vrot.slane %v3457, %v3473
      %v3479 = vmul.f32 %v730, %v3462
      %v3480 = vmul.f32 %v729, %v3466
      %v3481 = vmul.f32 %v728, %v3470
      %v3482 = vmul.f32 %v731, %v3474
      %3483 = vset.pattern.permute.xlu0 84
      %3484 = vperm.xlu0 %3483, %v254
      %v3485 = vpop.permute.xlu0 %3484
      %v3487 = vlaneseq
      %v3488 = vshrl.u32 %v3487, 7
      %v3489 = vsub.s32 0, %v3488
      %v3490 = vrot.slane %v3479, %v3489
      %v3491 = vlaneseq
      %v3492 = vshrl.u32 %v3491, 7
      %v3493 = vsub.s32 0, %v3492
      %v3494 = vrot.slane %v3480, %v3493
      %v3495 = vlaneseq
      %v3496 = vshrl.u32 %v3495, 7
      %v3497 = vsub.s32 0, %v3496
      %v3498 = vrot.slane %v3481, %v3497
      %v3499 = vlaneseq
      %v3500 = vshrl.u32 %v3499, 7
      %v3501 = vsub.s32 0, %v3500
      %v3502 = vrot.slane %v3482, %v3501
      %v3503 = vmul.f32 %v3485, %v3490
      %v3504 = vmul.f32 %v3485, %v3494
      %v3505 = vmul.f32 %v3485, %v3498
      %v3506 = vmul.f32 %v3485, %v3502
      %v3507 = vadd.f32 %v3452, %v3503
      %v3508 = vadd.f32 %v3453, %v3504
      %v3509 = vadd.f32 %v3454, %v3505
      %v3510 = vadd.f32 %v3455, %v3506
      %3511 = vset.pattern.permute.xlu0 85
      %3512 = vperm.xlu0 %3511, %v254
      %v3513 = vpop.permute.xlu0 %3512
      %v3515 = vlaneseq
      %v3516 = vshrl.u32 %v3515, 7
      %v3517 = vsub.s32 1, %v3516
      %v3518 = vrot.slane %v3479, %v3517
      %v3519 = vlaneseq
      %v3520 = vshrl.u32 %v3519, 7
      %v3521 = vsub.s32 1, %v3520
      %v3522 = vrot.slane %v3480, %v3521
      %v3523 = vlaneseq
      %v3524 = vshrl.u32 %v3523, 7
      %v3525 = vsub.s32 1, %v3524
      %v3526 = vrot.slane %v3481, %v3525
      %v3527 = vlaneseq
      %v3528 = vshrl.u32 %v3527, 7
      %v3529 = vsub.s32 1, %v3528
      %v3530 = vrot.slane %v3482, %v3529
      %v3531 = vmul.f32 %v3513, %v3518
      %v3532 = vmul.f32 %v3513, %v3522
      %v3533 = vmul.f32 %v3513, %v3526
      %v3534 = vmul.f32 %v3513, %v3530
      %v3535 = vadd.f32 %v3507, %v3531
      %v3536 = vadd.f32 %v3508, %v3532
      %v3537 = vadd.f32 %v3509, %v3533
      %v3538 = vadd.f32 %v3510, %v3534
      %3539 = vset.pattern.permute.xlu0 86
      %3540 = vperm.xlu0 %3539, %v254
      %v3541 = vpop.permute.xlu0 %3540
      %v3543 = vlaneseq
      %v3544 = vshrl.u32 %v3543, 7
      %v3545 = vsub.s32 2, %v3544
      %v3546 = vrot.slane %v3479, %v3545
      %v3547 = vlaneseq
      %v3548 = vshrl.u32 %v3547, 7
      %v3549 = vsub.s32 2, %v3548
      %v3550 = vrot.slane %v3480, %v3549
      %v3551 = vlaneseq
      %v3552 = vshrl.u32 %v3551, 7
      %v3553 = vsub.s32 2, %v3552
      %v3554 = vrot.slane %v3481, %v3553
      %v3555 = vlaneseq
      %v3556 = vshrl.u32 %v3555, 7
      %v3557 = vsub.s32 2, %v3556
      %v3558 = vrot.slane %v3482, %v3557
      %v3559 = vmul.f32 %v3541, %v3546
      %v3560 = vmul.f32 %v3541, %v3550
      %v3561 = vmul.f32 %v3541, %v3554
      %v3562 = vmul.f32 %v3541, %v3558
      %v3563 = vadd.f32 %v3535, %v3559
      %v3564 = vadd.f32 %v3536, %v3560
      %v3565 = vadd.f32 %v3537, %v3561
      %v3566 = vadd.f32 %v3538, %v3562
      %3567 = vset.pattern.permute.xlu0 87
      %3568 = vperm.xlu0 %3567, %v254
      %v3569 = vpop.permute.xlu0 %3568
      %v3571 = vlaneseq
      %v3572 = vshrl.u32 %v3571, 7
      %v3573 = vsub.s32 3, %v3572
      %v3574 = vrot.slane %v3479, %v3573
      %v3575 = vlaneseq
      %v3576 = vshrl.u32 %v3575, 7
      %v3577 = vsub.s32 3, %v3576
      %v3578 = vrot.slane %v3480, %v3577
      %v3579 = vlaneseq
      %v3580 = vshrl.u32 %v3579, 7
      %v3581 = vsub.s32 3, %v3580
      %v3582 = vrot.slane %v3481, %v3581
      %v3583 = vlaneseq
      %v3584 = vshrl.u32 %v3583, 7
      %v3585 = vsub.s32 3, %v3584
      %v3586 = vrot.slane %v3482, %v3585
      %v3587 = vmul.f32 %v3569, %v3574
      %v3588 = vmul.f32 %v3569, %v3578
      %v3589 = vmul.f32 %v3569, %v3582
      %v3590 = vmul.f32 %v3569, %v3586
      %v3591 = vadd.f32 %v3563, %v3587
      %v3592 = vadd.f32 %v3564, %v3588
      %v3593 = vadd.f32 %v3565, %v3589
      %v3594 = vadd.f32 %v3566, %v3590
      %s3595 = scalar_lea.vmem %s5, 70
      %v3596 = vld [vmem:[%s3595] ss:$8 sm:$0xf]
      %v3598 = vlaneseq
      %v3599 = vshrl.u32 %v3598, 7
      %v3600 = vsub.s32 0, %v3599
      %v3601 = vrot.slane %v3596, %v3600
      %v3602 = vlaneseq
      %v3603 = vshrl.u32 %v3602, 7
      %v3604 = vsub.s32 1, %v3603
      %v3605 = vrot.slane %v3596, %v3604
      %v3606 = vlaneseq
      %v3607 = vshrl.u32 %v3606, 7
      %v3608 = vsub.s32 2, %v3607
      %v3609 = vrot.slane %v3596, %v3608
      %v3610 = vlaneseq
      %v3611 = vshrl.u32 %v3610, 7
      %v3612 = vsub.s32 3, %v3611
      %v3613 = vrot.slane %v3596, %v3612
      %v3618 = vmul.f32 %v882, %v3601
      %v3619 = vmul.f32 %v881, %v3605
      %v3620 = vmul.f32 %v880, %v3609
      %v3621 = vmul.f32 %v883, %v3613
      %3622 = vset.pattern.permute.xlu0 88
      %3623 = vperm.xlu0 %3622, %v254
      %v3624 = vpop.permute.xlu0 %3623
      %v3626 = vlaneseq
      %v3627 = vshrl.u32 %v3626, 7
      %v3628 = vsub.s32 0, %v3627
      %v3629 = vrot.slane %v3618, %v3628
      %v3630 = vlaneseq
      %v3631 = vshrl.u32 %v3630, 7
      %v3632 = vsub.s32 0, %v3631
      %v3633 = vrot.slane %v3619, %v3632
      %v3634 = vlaneseq
      %v3635 = vshrl.u32 %v3634, 7
      %v3636 = vsub.s32 0, %v3635
      %v3637 = vrot.slane %v3620, %v3636
      %v3638 = vlaneseq
      %v3639 = vshrl.u32 %v3638, 7
      %v3640 = vsub.s32 0, %v3639
      %v3641 = vrot.slane %v3621, %v3640
      %v3642 = vmul.f32 %v3624, %v3629
      %v3643 = vmul.f32 %v3624, %v3633
      %v3644 = vmul.f32 %v3624, %v3637
      %v3645 = vmul.f32 %v3624, %v3641
      %v3646 = vadd.f32 %v3591, %v3642
      %v3647 = vadd.f32 %v3592, %v3643
      %v3648 = vadd.f32 %v3593, %v3644
      %v3649 = vadd.f32 %v3594, %v3645
      %3650 = vset.pattern.permute.xlu0 89
      %3651 = vperm.xlu0 %3650, %v254
      %v3652 = vpop.permute.xlu0 %3651
      %v3654 = vlaneseq
      %v3655 = vshrl.u32 %v3654, 7
      %v3656 = vsub.s32 1, %v3655
      %v3657 = vrot.slane %v3618, %v3656
      %v3658 = vlaneseq
      %v3659 = vshrl.u32 %v3658, 7
      %v3660 = vsub.s32 1, %v3659
      %v3661 = vrot.slane %v3619, %v3660
      %v3662 = vlaneseq
      %v3663 = vshrl.u32 %v3662, 7
      %v3664 = vsub.s32 1, %v3663
      %v3665 = vrot.slane %v3620, %v3664
      %v3666 = vlaneseq
      %v3667 = vshrl.u32 %v3666, 7
      %v3668 = vsub.s32 1, %v3667
      %v3669 = vrot.slane %v3621, %v3668
      %v3670 = vmul.f32 %v3652, %v3657
      %v3671 = vmul.f32 %v3652, %v3661
      %v3672 = vmul.f32 %v3652, %v3665
      %v3673 = vmul.f32 %v3652, %v3669
      %v3674 = vadd.f32 %v3646, %v3670
      %v3675 = vadd.f32 %v3647, %v3671
      %v3676 = vadd.f32 %v3648, %v3672
      %v3677 = vadd.f32 %v3649, %v3673
      %3678 = vset.pattern.permute.xlu0 90
      %3679 = vperm.xlu0 %3678, %v254
      %v3680 = vpop.permute.xlu0 %3679
      %v3682 = vlaneseq
      %v3683 = vshrl.u32 %v3682, 7
      %v3684 = vsub.s32 2, %v3683
      %v3685 = vrot.slane %v3618, %v3684
      %v3686 = vlaneseq
      %v3687 = vshrl.u32 %v3686, 7
      %v3688 = vsub.s32 2, %v3687
      %v3689 = vrot.slane %v3619, %v3688
      %v3690 = vlaneseq
      %v3691 = vshrl.u32 %v3690, 7
      %v3692 = vsub.s32 2, %v3691
      %v3693 = vrot.slane %v3620, %v3692
      %v3694 = vlaneseq
      %v3695 = vshrl.u32 %v3694, 7
      %v3696 = vsub.s32 2, %v3695
      %v3697 = vrot.slane %v3621, %v3696
      %v3698 = vmul.f32 %v3680, %v3685
      %v3699 = vmul.f32 %v3680, %v3689
      %v3700 = vmul.f32 %v3680, %v3693
      %v3701 = vmul.f32 %v3680, %v3697
      %v3702 = vadd.f32 %v3674, %v3698
      %v3703 = vadd.f32 %v3675, %v3699
      %v3704 = vadd.f32 %v3676, %v3700
      %v3705 = vadd.f32 %v3677, %v3701
      %3706 = vset.pattern.permute.xlu0 91
      %3707 = vperm.xlu0 %3706, %v254
      %v3708 = vpop.permute.xlu0 %3707
      %v3710 = vlaneseq
      %v3711 = vshrl.u32 %v3710, 7
      %v3712 = vsub.s32 3, %v3711
      %v3713 = vrot.slane %v3618, %v3712
      %v3714 = vlaneseq
      %v3715 = vshrl.u32 %v3714, 7
      %v3716 = vsub.s32 3, %v3715
      %v3717 = vrot.slane %v3619, %v3716
      %v3718 = vlaneseq
      %v3719 = vshrl.u32 %v3718, 7
      %v3720 = vsub.s32 3, %v3719
      %v3721 = vrot.slane %v3620, %v3720
      %v3722 = vlaneseq
      %v3723 = vshrl.u32 %v3722, 7
      %v3724 = vsub.s32 3, %v3723
      %v3725 = vrot.slane %v3621, %v3724
      %v3726 = vmul.f32 %v3708, %v3713
      %v3727 = vmul.f32 %v3708, %v3717
      %v3728 = vmul.f32 %v3708, %v3721
      %v3729 = vmul.f32 %v3708, %v3725
      %v3730 = vadd.f32 %v3702, %v3726
      %v3731 = vadd.f32 %v3703, %v3727
      %v3732 = vadd.f32 %v3704, %v3728
      %v3733 = vadd.f32 %v3705, %v3729
      %s3734 = scalar_lea.vmem %s5, 71
      %v3735 = vld [vmem:[%s3734] ss:$8 sm:$0xf]
      %v3737 = vlaneseq
      %v3738 = vshrl.u32 %v3737, 7
      %v3739 = vsub.s32 0, %v3738
      %v3740 = vrot.slane %v3735, %v3739
      %v3741 = vlaneseq
      %v3742 = vshrl.u32 %v3741, 7
      %v3743 = vsub.s32 1, %v3742
      %v3744 = vrot.slane %v3735, %v3743
      %v3745 = vlaneseq
      %v3746 = vshrl.u32 %v3745, 7
      %v3747 = vsub.s32 2, %v3746
      %v3748 = vrot.slane %v3735, %v3747
      %v3749 = vlaneseq
      %v3750 = vshrl.u32 %v3749, 7
      %v3751 = vsub.s32 3, %v3750
      %v3752 = vrot.slane %v3735, %v3751
      %v3757 = vmul.f32 %v1034, %v3740
      %v3758 = vmul.f32 %v1033, %v3744
      %v3759 = vmul.f32 %v1032, %v3748
      %v3760 = vmul.f32 %v1035, %v3752
      %3761 = vset.pattern.permute.xlu0 92
      %3762 = vperm.xlu0 %3761, %v254
      %v3763 = vpop.permute.xlu0 %3762
      %v3765 = vlaneseq
      %v3766 = vshrl.u32 %v3765, 7
      %v3767 = vsub.s32 0, %v3766
      %v3768 = vrot.slane %v3757, %v3767
      %v3769 = vlaneseq
      %v3770 = vshrl.u32 %v3769, 7
      %v3771 = vsub.s32 0, %v3770
      %v3772 = vrot.slane %v3758, %v3771
      %v3773 = vlaneseq
      %v3774 = vshrl.u32 %v3773, 7
      %v3775 = vsub.s32 0, %v3774
      %v3776 = vrot.slane %v3759, %v3775
      %v3777 = vlaneseq
      %v3778 = vshrl.u32 %v3777, 7
      %v3779 = vsub.s32 0, %v3778
      %v3780 = vrot.slane %v3760, %v3779
      %v3781 = vmul.f32 %v3763, %v3768
      %v3782 = vmul.f32 %v3763, %v3772
      %v3783 = vmul.f32 %v3763, %v3776
      %v3784 = vmul.f32 %v3763, %v3780
      %v3785 = vadd.f32 %v3730, %v3781
      %v3786 = vadd.f32 %v3731, %v3782
      %v3787 = vadd.f32 %v3732, %v3783
      %v3788 = vadd.f32 %v3733, %v3784
      %3789 = vset.pattern.permute.xlu0 93
      %3790 = vperm.xlu0 %3789, %v254
      %v3791 = vpop.permute.xlu0 %3790
      %v3793 = vlaneseq
      %v3794 = vshrl.u32 %v3793, 7
      %v3795 = vsub.s32 1, %v3794
      %v3796 = vrot.slane %v3757, %v3795
      %v3797 = vlaneseq
      %v3798 = vshrl.u32 %v3797, 7
      %v3799 = vsub.s32 1, %v3798
      %v3800 = vrot.slane %v3758, %v3799
      %v3801 = vlaneseq
      %v3802 = vshrl.u32 %v3801, 7
      %v3803 = vsub.s32 1, %v3802
      %v3804 = vrot.slane %v3759, %v3803
      %v3805 = vlaneseq
      %v3806 = vshrl.u32 %v3805, 7
      %v3807 = vsub.s32 1, %v3806
      %v3808 = vrot.slane %v3760, %v3807
      %v3809 = vmul.f32 %v3791, %v3796
      %v3810 = vmul.f32 %v3791, %v3800
      %v3811 = vmul.f32 %v3791, %v3804
      %v3812 = vmul.f32 %v3791, %v3808
      %v3813 = vadd.f32 %v3785, %v3809
      %v3814 = vadd.f32 %v3786, %v3810
      %v3815 = vadd.f32 %v3787, %v3811
      %v3816 = vadd.f32 %v3788, %v3812
      %3817 = vset.pattern.permute.xlu0 94
      %3818 = vperm.xlu0 %3817, %v254
      %v3819 = vpop.permute.xlu0 %3818
      %v3821 = vlaneseq
      %v3822 = vshrl.u32 %v3821, 7
      %v3823 = vsub.s32 2, %v3822
      %v3824 = vrot.slane %v3757, %v3823
      %v3825 = vlaneseq
      %v3826 = vshrl.u32 %v3825, 7
      %v3827 = vsub.s32 2, %v3826
      %v3828 = vrot.slane %v3758, %v3827
      %v3829 = vlaneseq
      %v3830 = vshrl.u32 %v3829, 7
      %v3831 = vsub.s32 2, %v3830
      %v3832 = vrot.slane %v3759, %v3831
      %v3833 = vlaneseq
      %v3834 = vshrl.u32 %v3833, 7
      %v3835 = vsub.s32 2, %v3834
      %v3836 = vrot.slane %v3760, %v3835
      %v3837 = vmul.f32 %v3819, %v3824
      %v3838 = vmul.f32 %v3819, %v3828
      %v3839 = vmul.f32 %v3819, %v3832
      %v3840 = vmul.f32 %v3819, %v3836
      %v3841 = vadd.f32 %v3813, %v3837
      %v3842 = vadd.f32 %v3814, %v3838
      %v3843 = vadd.f32 %v3815, %v3839
      %v3844 = vadd.f32 %v3816, %v3840
      %3845 = vset.pattern.permute.xlu0 95
      %3846 = vperm.xlu0 %3845, %v254
      %v3847 = vpop.permute.xlu0 %3846
      %v3849 = vlaneseq
      %v3850 = vshrl.u32 %v3849, 7
      %v3851 = vsub.s32 3, %v3850
      %v3852 = vrot.slane %v3757, %v3851
      %v3853 = vlaneseq
      %v3854 = vshrl.u32 %v3853, 7
      %v3855 = vsub.s32 3, %v3854
      %v3856 = vrot.slane %v3758, %v3855
      %v3857 = vlaneseq
      %v3858 = vshrl.u32 %v3857, 7
      %v3859 = vsub.s32 3, %v3858
      %v3860 = vrot.slane %v3759, %v3859
      %v3861 = vlaneseq
      %v3862 = vshrl.u32 %v3861, 7
      %v3863 = vsub.s32 3, %v3862
      %v3864 = vrot.slane %v3760, %v3863
      %v3865 = vmul.f32 %v3847, %v3852
      %v3866 = vmul.f32 %v3847, %v3856
      %v3867 = vmul.f32 %v3847, %v3860
      %v3868 = vmul.f32 %v3847, %v3864
      %v3869 = vadd.f32 %v3841, %v3865
      %v3870 = vadd.f32 %v3842, %v3866
      %v3871 = vadd.f32 %v3843, %v3867
      %v3872 = vadd.f32 %v3844, %v3868
      %s3873 = scalar_lea.vmem %s5, 96
      %v3874 = vld [vmem:[%s3873] ss:$8 sm:$0xf]
      %v3876 = vlaneseq
      %v3877 = vshrl.u32 %v3876, 7
      %v3878 = vsub.s32 0, %v3877
      %v3879 = vrot.slane %v3874, %v3878
      %v3880 = vlaneseq
      %v3881 = vshrl.u32 %v3880, 7
      %v3882 = vsub.s32 1, %v3881
      %v3883 = vrot.slane %v3874, %v3882
      %v3884 = vlaneseq
      %v3885 = vshrl.u32 %v3884, 7
      %v3886 = vsub.s32 2, %v3885
      %v3887 = vrot.slane %v3874, %v3886
      %v3888 = vlaneseq
      %v3889 = vshrl.u32 %v3888, 7
      %v3890 = vsub.s32 3, %v3889
      %v3891 = vrot.slane %v3874, %v3890
      %v3896 = vmul.f32 %v1186, %v3879
      %v3897 = vmul.f32 %v1185, %v3883
      %v3898 = vmul.f32 %v1184, %v3887
      %v3899 = vmul.f32 %v1187, %v3891
      %3900 = vset.pattern.permute.xlu0 96
      %3901 = vperm.xlu0 %3900, %v254
      %v3902 = vpop.permute.xlu0 %3901
      %v3904 = vlaneseq
      %v3905 = vshrl.u32 %v3904, 7
      %v3906 = vsub.s32 0, %v3905
      %v3907 = vrot.slane %v3896, %v3906
      %v3908 = vlaneseq
      %v3909 = vshrl.u32 %v3908, 7
      %v3910 = vsub.s32 0, %v3909
      %v3911 = vrot.slane %v3897, %v3910
      %v3912 = vlaneseq
      %v3913 = vshrl.u32 %v3912, 7
      %v3914 = vsub.s32 0, %v3913
      %v3915 = vrot.slane %v3898, %v3914
      %v3916 = vlaneseq
      %v3917 = vshrl.u32 %v3916, 7
      %v3918 = vsub.s32 0, %v3917
      %v3919 = vrot.slane %v3899, %v3918
      %v3920 = vmul.f32 %v3902, %v3907
      %v3921 = vmul.f32 %v3902, %v3911
      %v3922 = vmul.f32 %v3902, %v3915
      %v3923 = vmul.f32 %v3902, %v3919
      %v3924 = vadd.f32 %v3869, %v3920
      %v3925 = vadd.f32 %v3870, %v3921
      %v3926 = vadd.f32 %v3871, %v3922
      %v3927 = vadd.f32 %v3872, %v3923
      %3928 = vset.pattern.permute.xlu0 97
      %3929 = vperm.xlu0 %3928, %v254
      %v3930 = vpop.permute.xlu0 %3929
      %v3932 = vlaneseq
      %v3933 = vshrl.u32 %v3932, 7
      %v3934 = vsub.s32 1, %v3933
      %v3935 = vrot.slane %v3896, %v3934
      %v3936 = vlaneseq
      %v3937 = vshrl.u32 %v3936, 7
      %v3938 = vsub.s32 1, %v3937
      %v3939 = vrot.slane %v3897, %v3938
      %v3940 = vlaneseq
      %v3941 = vshrl.u32 %v3940, 7
      %v3942 = vsub.s32 1, %v3941
      %v3943 = vrot.slane %v3898, %v3942
      %v3944 = vlaneseq
      %v3945 = vshrl.u32 %v3944, 7
      %v3946 = vsub.s32 1, %v3945
      %v3947 = vrot.slane %v3899, %v3946
      %v3948 = vmul.f32 %v3930, %v3935
      %v3949 = vmul.f32 %v3930, %v3939
      %v3950 = vmul.f32 %v3930, %v3943
      %v3951 = vmul.f32 %v3930, %v3947
      %v3952 = vadd.f32 %v3924, %v3948
      %v3953 = vadd.f32 %v3925, %v3949
      %v3954 = vadd.f32 %v3926, %v3950
      %v3955 = vadd.f32 %v3927, %v3951
      %3956 = vset.pattern.permute.xlu0 98
      %3957 = vperm.xlu0 %3956, %v254
      %v3958 = vpop.permute.xlu0 %3957
      %v3960 = vlaneseq
      %v3961 = vshrl.u32 %v3960, 7
      %v3962 = vsub.s32 2, %v3961
      %v3963 = vrot.slane %v3896, %v3962
      %v3964 = vlaneseq
      %v3965 = vshrl.u32 %v3964, 7
      %v3966 = vsub.s32 2, %v3965
      %v3967 = vrot.slane %v3897, %v3966
      %v3968 = vlaneseq
      %v3969 = vshrl.u32 %v3968, 7
      %v3970 = vsub.s32 2, %v3969
      %v3971 = vrot.slane %v3898, %v3970
      %v3972 = vlaneseq
      %v3973 = vshrl.u32 %v3972, 7
      %v3974 = vsub.s32 2, %v3973
      %v3975 = vrot.slane %v3899, %v3974
      %v3976 = vmul.f32 %v3958, %v3963
      %v3977 = vmul.f32 %v3958, %v3967
      %v3978 = vmul.f32 %v3958, %v3971
      %v3979 = vmul.f32 %v3958, %v3975
      %v3980 = vadd.f32 %v3952, %v3976
      %v3981 = vadd.f32 %v3953, %v3977
      %v3982 = vadd.f32 %v3954, %v3978
      %v3983 = vadd.f32 %v3955, %v3979
      %3984 = vset.pattern.permute.xlu0 99
      %3985 = vperm.xlu0 %3984, %v254
      %v3986 = vpop.permute.xlu0 %3985
      %v3988 = vlaneseq
      %v3989 = vshrl.u32 %v3988, 7
      %v3990 = vsub.s32 3, %v3989
      %v3991 = vrot.slane %v3896, %v3990
      %v3992 = vlaneseq
      %v3993 = vshrl.u32 %v3992, 7
      %v3994 = vsub.s32 3, %v3993
      %v3995 = vrot.slane %v3897, %v3994
      %v3996 = vlaneseq
      %v3997 = vshrl.u32 %v3996, 7
      %v3998 = vsub.s32 3, %v3997
      %v3999 = vrot.slane %v3898, %v3998
      %v4000 = vlaneseq
      %v4001 = vshrl.u32 %v4000, 7
      %v4002 = vsub.s32 3, %v4001
      %v4003 = vrot.slane %v3899, %v4002
      %v4004 = vmul.f32 %v3986, %v3991
      %v4005 = vmul.f32 %v3986, %v3995
      %v4006 = vmul.f32 %v3986, %v3999
      %v4007 = vmul.f32 %v3986, %v4003
      %v4008 = vadd.f32 %v3980, %v4004
      %v4009 = vadd.f32 %v3981, %v4005
      %v4010 = vadd.f32 %v3982, %v4006
      %v4011 = vadd.f32 %v3983, %v4007
      %s4012 = scalar_lea.vmem %s5, 97
      %v4013 = vld [vmem:[%s4012] ss:$8 sm:$0xf]
      %v4015 = vlaneseq
      %v4016 = vshrl.u32 %v4015, 7
      %v4017 = vsub.s32 0, %v4016
      %v4018 = vrot.slane %v4013, %v4017
      %v4019 = vlaneseq
      %v4020 = vshrl.u32 %v4019, 7
      %v4021 = vsub.s32 1, %v4020
      %v4022 = vrot.slane %v4013, %v4021
      %v4023 = vlaneseq
      %v4024 = vshrl.u32 %v4023, 7
      %v4025 = vsub.s32 2, %v4024
      %v4026 = vrot.slane %v4013, %v4025
      %v4027 = vlaneseq
      %v4028 = vshrl.u32 %v4027, 7
      %v4029 = vsub.s32 3, %v4028
      %v4030 = vrot.slane %v4013, %v4029
      %v4035 = vmul.f32 %v1338, %v4018
      %v4036 = vmul.f32 %v1337, %v4022
      %v4037 = vmul.f32 %v1336, %v4026
      %v4038 = vmul.f32 %v1339, %v4030
      %4039 = vset.pattern.permute.xlu0 100
      %4040 = vperm.xlu0 %4039, %v254
      %v4041 = vpop.permute.xlu0 %4040
      %v4043 = vlaneseq
      %v4044 = vshrl.u32 %v4043, 7
      %v4045 = vsub.s32 0, %v4044
      %v4046 = vrot.slane %v4035, %v4045
      %v4047 = vlaneseq
      %v4048 = vshrl.u32 %v4047, 7
      %v4049 = vsub.s32 0, %v4048
      %v4050 = vrot.slane %v4036, %v4049
      %v4051 = vlaneseq
      %v4052 = vshrl.u32 %v4051, 7
      %v4053 = vsub.s32 0, %v4052
      %v4054 = vrot.slane %v4037, %v4053
      %v4055 = vlaneseq
      %v4056 = vshrl.u32 %v4055, 7
      %v4057 = vsub.s32 0, %v4056
      %v4058 = vrot.slane %v4038, %v4057
      %v4059 = vmul.f32 %v4041, %v4046
      %v4060 = vmul.f32 %v4041, %v4050
      %v4061 = vmul.f32 %v4041, %v4054
      %v4062 = vmul.f32 %v4041, %v4058
      %v4063 = vadd.f32 %v4008, %v4059
      %v4064 = vadd.f32 %v4009, %v4060
      %v4065 = vadd.f32 %v4010, %v4061
      %v4066 = vadd.f32 %v4011, %v4062
      %4067 = vset.pattern.permute.xlu0 101
      %4068 = vperm.xlu0 %4067, %v254
      %v4069 = vpop.permute.xlu0 %4068
      %v4071 = vlaneseq
      %v4072 = vshrl.u32 %v4071, 7
      %v4073 = vsub.s32 1, %v4072
      %v4074 = vrot.slane %v4035, %v4073
      %v4075 = vlaneseq
      %v4076 = vshrl.u32 %v4075, 7
      %v4077 = vsub.s32 1, %v4076
      %v4078 = vrot.slane %v4036, %v4077
      %v4079 = vlaneseq
      %v4080 = vshrl.u32 %v4079, 7
      %v4081 = vsub.s32 1, %v4080
      %v4082 = vrot.slane %v4037, %v4081
      %v4083 = vlaneseq
      %v4084 = vshrl.u32 %v4083, 7
      %v4085 = vsub.s32 1, %v4084
      %v4086 = vrot.slane %v4038, %v4085
      %v4087 = vmul.f32 %v4069, %v4074
      %v4088 = vmul.f32 %v4069, %v4078
      %v4089 = vmul.f32 %v4069, %v4082
      %v4090 = vmul.f32 %v4069, %v4086
      %v4091 = vadd.f32 %v4063, %v4087
      %v4092 = vadd.f32 %v4064, %v4088
      %v4093 = vadd.f32 %v4065, %v4089
      %v4094 = vadd.f32 %v4066, %v4090
      %4095 = vset.pattern.permute.xlu0 102
      %4096 = vperm.xlu0 %4095, %v254
      %v4097 = vpop.permute.xlu0 %4096
      %v4099 = vlaneseq
      %v4100 = vshrl.u32 %v4099, 7
      %v4101 = vsub.s32 2, %v4100
      %v4102 = vrot.slane %v4035, %v4101
      %v4103 = vlaneseq
      %v4104 = vshrl.u32 %v4103, 7
      %v4105 = vsub.s32 2, %v4104
      %v4106 = vrot.slane %v4036, %v4105
      %v4107 = vlaneseq
      %v4108 = vshrl.u32 %v4107, 7
      %v4109 = vsub.s32 2, %v4108
      %v4110 = vrot.slane %v4037, %v4109
      %v4111 = vlaneseq
      %v4112 = vshrl.u32 %v4111, 7
      %v4113 = vsub.s32 2, %v4112
      %v4114 = vrot.slane %v4038, %v4113
      %v4115 = vmul.f32 %v4097, %v4102
      %v4116 = vmul.f32 %v4097, %v4106
      %v4117 = vmul.f32 %v4097, %v4110
      %v4118 = vmul.f32 %v4097, %v4114
      %v4119 = vadd.f32 %v4091, %v4115
      %v4120 = vadd.f32 %v4092, %v4116
      %v4121 = vadd.f32 %v4093, %v4117
      %v4122 = vadd.f32 %v4094, %v4118
      %4123 = vset.pattern.permute.xlu0 103
      %4124 = vperm.xlu0 %4123, %v254
      %v4125 = vpop.permute.xlu0 %4124
      %v4127 = vlaneseq
      %v4128 = vshrl.u32 %v4127, 7
      %v4129 = vsub.s32 3, %v4128
      %v4130 = vrot.slane %v4035, %v4129
      %v4131 = vlaneseq
      %v4132 = vshrl.u32 %v4131, 7
      %v4133 = vsub.s32 3, %v4132
      %v4134 = vrot.slane %v4036, %v4133
      %v4135 = vlaneseq
      %v4136 = vshrl.u32 %v4135, 7
      %v4137 = vsub.s32 3, %v4136
      %v4138 = vrot.slane %v4037, %v4137
      %v4139 = vlaneseq
      %v4140 = vshrl.u32 %v4139, 7
      %v4141 = vsub.s32 3, %v4140
      %v4142 = vrot.slane %v4038, %v4141
      %v4143 = vmul.f32 %v4125, %v4130
      %v4144 = vmul.f32 %v4125, %v4134
      %v4145 = vmul.f32 %v4125, %v4138
      %v4146 = vmul.f32 %v4125, %v4142
      %v4147 = vadd.f32 %v4119, %v4143
      %v4148 = vadd.f32 %v4120, %v4144
      %v4149 = vadd.f32 %v4121, %v4145
      %v4150 = vadd.f32 %v4122, %v4146
      %s4151 = scalar_lea.vmem %s5, 98
      %v4152 = vld [vmem:[%s4151] ss:$8 sm:$0xf]
      %v4154 = vlaneseq
      %v4155 = vshrl.u32 %v4154, 7
      %v4156 = vsub.s32 0, %v4155
      %v4157 = vrot.slane %v4152, %v4156
      %v4158 = vlaneseq
      %v4159 = vshrl.u32 %v4158, 7
      %v4160 = vsub.s32 1, %v4159
      %v4161 = vrot.slane %v4152, %v4160
      %v4162 = vlaneseq
      %v4163 = vshrl.u32 %v4162, 7
      %v4164 = vsub.s32 2, %v4163
      %v4165 = vrot.slane %v4152, %v4164
      %v4166 = vlaneseq
      %v4167 = vshrl.u32 %v4166, 7
      %v4168 = vsub.s32 3, %v4167
      %v4169 = vrot.slane %v4152, %v4168
      %v4174 = vmul.f32 %v1490, %v4157
      %v4175 = vmul.f32 %v1489, %v4161
      %v4176 = vmul.f32 %v1488, %v4165
      %v4177 = vmul.f32 %v1491, %v4169
      %4178 = vset.pattern.permute.xlu0 104
      %4179 = vperm.xlu0 %4178, %v254
      %v4180 = vpop.permute.xlu0 %4179
      %v4182 = vlaneseq
      %v4183 = vshrl.u32 %v4182, 7
      %v4184 = vsub.s32 0, %v4183
      %v4185 = vrot.slane %v4174, %v4184
      %v4186 = vlaneseq
      %v4187 = vshrl.u32 %v4186, 7
      %v4188 = vsub.s32 0, %v4187
      %v4189 = vrot.slane %v4175, %v4188
      %v4190 = vlaneseq
      %v4191 = vshrl.u32 %v4190, 7
      %v4192 = vsub.s32 0, %v4191
      %v4193 = vrot.slane %v4176, %v4192
      %v4194 = vlaneseq
      %v4195 = vshrl.u32 %v4194, 7
      %v4196 = vsub.s32 0, %v4195
      %v4197 = vrot.slane %v4177, %v4196
      %v4198 = vmul.f32 %v4180, %v4185
      %v4199 = vmul.f32 %v4180, %v4189
      %v4200 = vmul.f32 %v4180, %v4193
      %v4201 = vmul.f32 %v4180, %v4197
      %v4202 = vadd.f32 %v4147, %v4198
      %v4203 = vadd.f32 %v4148, %v4199
      %v4204 = vadd.f32 %v4149, %v4200
      %v4205 = vadd.f32 %v4150, %v4201
      %4206 = vset.pattern.permute.xlu0 105
      %4207 = vperm.xlu0 %4206, %v254
      %v4208 = vpop.permute.xlu0 %4207
      %v4210 = vlaneseq
      %v4211 = vshrl.u32 %v4210, 7
      %v4212 = vsub.s32 1, %v4211
      %v4213 = vrot.slane %v4174, %v4212
      %v4214 = vlaneseq
      %v4215 = vshrl.u32 %v4214, 7
      %v4216 = vsub.s32 1, %v4215
      %v4217 = vrot.slane %v4175, %v4216
      %v4218 = vlaneseq
      %v4219 = vshrl.u32 %v4218, 7
      %v4220 = vsub.s32 1, %v4219
      %v4221 = vrot.slane %v4176, %v4220
      %v4222 = vlaneseq
      %v4223 = vshrl.u32 %v4222, 7
      %v4224 = vsub.s32 1, %v4223
      %v4225 = vrot.slane %v4177, %v4224
      %v4226 = vmul.f32 %v4208, %v4213
      %v4227 = vmul.f32 %v4208, %v4217
      %v4228 = vmul.f32 %v4208, %v4221
      %v4229 = vmul.f32 %v4208, %v4225
      %v4230 = vadd.f32 %v4202, %v4226
      %v4231 = vadd.f32 %v4203, %v4227
      %v4232 = vadd.f32 %v4204, %v4228
      %v4233 = vadd.f32 %v4205, %v4229
      %4234 = vset.pattern.permute.xlu0 106
      %4235 = vperm.xlu0 %4234, %v254
      %v4236 = vpop.permute.xlu0 %4235
      %v4238 = vlaneseq
      %v4239 = vshrl.u32 %v4238, 7
      %v4240 = vsub.s32 2, %v4239
      %v4241 = vrot.slane %v4174, %v4240
      %v4242 = vlaneseq
      %v4243 = vshrl.u32 %v4242, 7
      %v4244 = vsub.s32 2, %v4243
      %v4245 = vrot.slane %v4175, %v4244
      %v4246 = vlaneseq
      %v4247 = vshrl.u32 %v4246, 7
      %v4248 = vsub.s32 2, %v4247
      %v4249 = vrot.slane %v4176, %v4248
      %v4250 = vlaneseq
      %v4251 = vshrl.u32 %v4250, 7
      %v4252 = vsub.s32 2, %v4251
      %v4253 = vrot.slane %v4177, %v4252
      %v4254 = vmul.f32 %v4236, %v4241
      %v4255 = vmul.f32 %v4236, %v4245
      %v4256 = vmul.f32 %v4236, %v4249
      %v4257 = vmul.f32 %v4236, %v4253
      %v4258 = vadd.f32 %v4230, %v4254
      %v4259 = vadd.f32 %v4231, %v4255
      %v4260 = vadd.f32 %v4232, %v4256
      %v4261 = vadd.f32 %v4233, %v4257
      %4262 = vset.pattern.permute.xlu0 107
      %4263 = vperm.xlu0 %4262, %v254
      %v4264 = vpop.permute.xlu0 %4263
      %v4266 = vlaneseq
      %v4267 = vshrl.u32 %v4266, 7
      %v4268 = vsub.s32 3, %v4267
      %v4269 = vrot.slane %v4174, %v4268
      %v4270 = vlaneseq
      %v4271 = vshrl.u32 %v4270, 7
      %v4272 = vsub.s32 3, %v4271
      %v4273 = vrot.slane %v4175, %v4272
      %v4274 = vlaneseq
      %v4275 = vshrl.u32 %v4274, 7
      %v4276 = vsub.s32 3, %v4275
      %v4277 = vrot.slane %v4176, %v4276
      %v4278 = vlaneseq
      %v4279 = vshrl.u32 %v4278, 7
      %v4280 = vsub.s32 3, %v4279
      %v4281 = vrot.slane %v4177, %v4280
      %v4282 = vmul.f32 %v4264, %v4269
      %v4283 = vmul.f32 %v4264, %v4273
      %v4284 = vmul.f32 %v4264, %v4277
      %v4285 = vmul.f32 %v4264, %v4281
      %v4286 = vadd.f32 %v4258, %v4282
      %v4287 = vadd.f32 %v4259, %v4283
      %v4288 = vadd.f32 %v4260, %v4284
      %v4289 = vadd.f32 %v4261, %v4285
      %v4290 = vld [vmem:[%s2] sm:$0xf]
      %4292 = vset.pattern.permute.xlu0 0
      %4293 = vperm.xlu0 %4292, %v4290
      %v4294 = vpop.permute.xlu0 %4293
      %v4296 = vadd.f32 %v4286, %v4294
      %v4297 = vadd.f32 %v4287, %v4294
      %v4298 = vadd.f32 %v4288, %v4294
      %v4299 = vadd.f32 %v4289, %v4294
      %v4300 = vmax.f32 %v4296, 0.0
      %v4301 = vmax.f32 %v4297, 0.0
      %v4302 = vmax.f32 %v4298, 0.0
      %v4303 = vmax.f32 %v4299, 0.0
      %v4304 = vld [vmem:[%s3] sm:$0xf]
      %4305 = vrot.lane.b32.xlu0 %v4300, 73
      %v4306 = vpop.permute.xlu0 %4305
      %4307 = vrot.lane.b32.xlu0 %v4301, 73
      %v4308 = vpop.permute.xlu0 %4307
      %4309 = vrot.lane.b32.xlu0 %v4302, 73
      %v4310 = vpop.permute.xlu0 %4309
      %4311 = vrot.lane.b32.xlu0 %v4303, 73
      %v4312 = vpop.permute.xlu0 %4311
      %v4313 = vsel %vm271, %v4310, %v4312
      %v4314 = vsel %vm271, %v4308, %v4310
      %v4315 = vsel %vm271, %v4306, %v4308
      %v4316 = vsel %vm271, %v4312, %v4306
      %v4317 = vmul.f32 %v4316, %v281
      %v4318 = vmul.f32 %v4315, %v285
      %v4319 = vmul.f32 %v4314, %v289
      %v4320 = vmul.f32 %v4313, %v293
      %4322 = vset.pattern.permute.xlu0 0
      %4323 = vperm.xlu0 %4322, %v4304
      %v4324 = vpop.permute.xlu0 %4323
      %v4326 = vlaneseq
      %v4327 = vshrl.u32 %v4326, 7
      %v4328 = vsub.s32 0, %v4327
      %v4329 = vrot.slane %v4317, %v4328
      %v4330 = vlaneseq
      %v4331 = vshrl.u32 %v4330, 7
      %v4332 = vsub.s32 0, %v4331
      %v4333 = vrot.slane %v4318, %v4332
      %v4334 = vlaneseq
      %v4335 = vshrl.u32 %v4334, 7
      %v4336 = vsub.s32 0, %v4335
      %v4337 = vrot.slane %v4319, %v4336
      %v4338 = vlaneseq
      %v4339 = vshrl.u32 %v4338, 7
      %v4340 = vsub.s32 0, %v4339
      %v4341 = vrot.slane %v4320, %v4340
      %v4342 = vmul.f32 %v4324, %v4329
      %v4343 = vmul.f32 %v4324, %v4333
      %v4344 = vmul.f32 %v4324, %v4337
      %v4345 = vmul.f32 %v4324, %v4341
      %v4346 = vadd.f32 %v4342, 0.0
      %v4347 = vadd.f32 %v4343, 0.0
      %v4348 = vadd.f32 %v4344, 0.0
      %v4349 = vadd.f32 %v4345, 0.0
      %4350 = vset.pattern.permute.xlu0 1
      %4351 = vperm.xlu0 %4350, %v4304
      %v4352 = vpop.permute.xlu0 %4351
      %v4354 = vlaneseq
      %v4355 = vshrl.u32 %v4354, 7
      %v4356 = vsub.s32 1, %v4355
      %v4357 = vrot.slane %v4317, %v4356
      %v4358 = vlaneseq
      %v4359 = vshrl.u32 %v4358, 7
      %v4360 = vsub.s32 1, %v4359
      %v4361 = vrot.slane %v4318, %v4360
      %v4362 = vlaneseq
      %v4363 = vshrl.u32 %v4362, 7
      %v4364 = vsub.s32 1, %v4363
      %v4365 = vrot.slane %v4319, %v4364
      %v4366 = vlaneseq
      %v4367 = vshrl.u32 %v4366, 7
      %v4368 = vsub.s32 1, %v4367
      %v4369 = vrot.slane %v4320, %v4368
      %v4370 = vmul.f32 %v4352, %v4357
      %v4371 = vmul.f32 %v4352, %v4361
      %v4372 = vmul.f32 %v4352, %v4365
      %v4373 = vmul.f32 %v4352, %v4369
      %v4374 = vadd.f32 %v4346, %v4370
      %v4375 = vadd.f32 %v4347, %v4371
      %v4376 = vadd.f32 %v4348, %v4372
      %v4377 = vadd.f32 %v4349, %v4373
      %4378 = vset.pattern.permute.xlu0 2
      %4379 = vperm.xlu0 %4378, %v4304
      %v4380 = vpop.permute.xlu0 %4379
      %v4382 = vlaneseq
      %v4383 = vshrl.u32 %v4382, 7
      %v4384 = vsub.s32 2, %v4383
      %v4385 = vrot.slane %v4317, %v4384
      %v4386 = vlaneseq
      %v4387 = vshrl.u32 %v4386, 7
      %v4388 = vsub.s32 2, %v4387
      %v4389 = vrot.slane %v4318, %v4388
      %v4390 = vlaneseq
      %v4391 = vshrl.u32 %v4390, 7
      %v4392 = vsub.s32 2, %v4391
      %v4393 = vrot.slane %v4319, %v4392
      %v4394 = vlaneseq
      %v4395 = vshrl.u32 %v4394, 7
      %v4396 = vsub.s32 2, %v4395
      %v4397 = vrot.slane %v4320, %v4396
      %v4398 = vmul.f32 %v4380, %v4385
      %v4399 = vmul.f32 %v4380, %v4389
      %v4400 = vmul.f32 %v4380, %v4393
      %v4401 = vmul.f32 %v4380, %v4397
      %v4402 = vadd.f32 %v4374, %v4398
      %v4403 = vadd.f32 %v4375, %v4399
      %v4404 = vadd.f32 %v4376, %v4400
      %v4405 = vadd.f32 %v4377, %v4401
      %4406 = vset.pattern.permute.xlu0 3
      %4407 = vperm.xlu0 %4406, %v4304
      %v4408 = vpop.permute.xlu0 %4407
      %v4410 = vlaneseq
      %v4411 = vshrl.u32 %v4410, 7
      %v4412 = vsub.s32 3, %v4411
      %v4413 = vrot.slane %v4317, %v4412
      %v4414 = vlaneseq
      %v4415 = vshrl.u32 %v4414, 7
      %v4416 = vsub.s32 3, %v4415
      %v4417 = vrot.slane %v4318, %v4416
      %v4418 = vlaneseq
      %v4419 = vshrl.u32 %v4418, 7
      %v4420 = vsub.s32 3, %v4419
      %v4421 = vrot.slane %v4319, %v4420
      %v4422 = vlaneseq
      %v4423 = vshrl.u32 %v4422, 7
      %v4424 = vsub.s32 3, %v4423
      %v4425 = vrot.slane %v4320, %v4424
      %v4426 = vmul.f32 %v4408, %v4413
      %v4427 = vmul.f32 %v4408, %v4417
      %v4428 = vmul.f32 %v4408, %v4421
      %v4429 = vmul.f32 %v4408, %v4425
      %v4430 = vadd.f32 %v4402, %v4426
      %v4431 = vadd.f32 %v4403, %v4427
      %v4432 = vadd.f32 %v4404, %v4428
      %v4433 = vadd.f32 %v4405, %v4429
      %4434 = vrot.lane.b32.xlu0 %v4300, 72
      %v4435 = vpop.permute.xlu0 %4434
      %4436 = vrot.lane.b32.xlu0 %v4301, 72
      %v4437 = vpop.permute.xlu0 %4436
      %4438 = vrot.lane.b32.xlu0 %v4302, 72
      %v4439 = vpop.permute.xlu0 %4438
      %4440 = vrot.lane.b32.xlu0 %v4303, 72
      %v4441 = vpop.permute.xlu0 %4440
      %v4442 = vsel %vm423, %v4439, %v4441
      %v4443 = vsel %vm423, %v4437, %v4439
      %v4444 = vsel %vm423, %v4435, %v4437
      %v4445 = vsel %vm423, %v4441, %v4435
      %v4446 = vmul.f32 %v4445, %v434
      %v4447 = vmul.f32 %v4444, %v438
      %v4448 = vmul.f32 %v4443, %v442
      %v4449 = vmul.f32 %v4442, %v446
      %4450 = vset.pattern.permute.xlu0 4
      %4451 = vperm.xlu0 %4450, %v4304
      %v4452 = vpop.permute.xlu0 %4451
      %v4454 = vlaneseq
      %v4455 = vshrl.u32 %v4454, 7
      %v4456 = vsub.s32 0, %v4455
      %v4457 = vrot.slane %v4446, %v4456
      %v4458 = vlaneseq
      %v4459 = vshrl.u32 %v4458, 7
      %v4460 = vsub.s32 0, %v4459
      %v4461 = vrot.slane %v4447, %v4460
      %v4462 = vlaneseq
      %v4463 = vshrl.u32 %v4462, 7
      %v4464 = vsub.s32 0, %v4463
      %v4465 = vrot.slane %v4448, %v4464
      %v4466 = vlaneseq
      %v4467 = vshrl.u32 %v4466, 7
      %v4468 = vsub.s32 0, %v4467
      %v4469 = vrot.slane %v4449, %v4468
      %v4470 = vmul.f32 %v4452, %v4457
      %v4471 = vmul.f32 %v4452, %v4461
      %v4472 = vmul.f32 %v4452, %v4465
      %v4473 = vmul.f32 %v4452, %v4469
      %v4474 = vadd.f32 %v4430, %v4470
      %v4475 = vadd.f32 %v4431, %v4471
      %v4476 = vadd.f32 %v4432, %v4472
      %v4477 = vadd.f32 %v4433, %v4473
      %4478 = vset.pattern.permute.xlu0 5
      %4479 = vperm.xlu0 %4478, %v4304
      %v4480 = vpop.permute.xlu0 %4479
      %v4482 = vlaneseq
      %v4483 = vshrl.u32 %v4482, 7
      %v4484 = vsub.s32 1, %v4483
      %v4485 = vrot.slane %v4446, %v4484
      %v4486 = vlaneseq
      %v4487 = vshrl.u32 %v4486, 7
      %v4488 = vsub.s32 1, %v4487
      %v4489 = vrot.slane %v4447, %v4488
      %v4490 = vlaneseq
      %v4491 = vshrl.u32 %v4490, 7
      %v4492 = vsub.s32 1, %v4491
      %v4493 = vrot.slane %v4448, %v4492
      %v4494 = vlaneseq
      %v4495 = vshrl.u32 %v4494, 7
      %v4496 = vsub.s32 1, %v4495
      %v4497 = vrot.slane %v4449, %v4496
      %v4498 = vmul.f32 %v4480, %v4485
      %v4499 = vmul.f32 %v4480, %v4489
      %v4500 = vmul.f32 %v4480, %v4493
      %v4501 = vmul.f32 %v4480, %v4497
      %v4502 = vadd.f32 %v4474, %v4498
      %v4503 = vadd.f32 %v4475, %v4499
      %v4504 = vadd.f32 %v4476, %v4500
      %v4505 = vadd.f32 %v4477, %v4501
      %4506 = vset.pattern.permute.xlu0 6
      %4507 = vperm.xlu0 %4506, %v4304
      %v4508 = vpop.permute.xlu0 %4507
      %v4510 = vlaneseq
      %v4511 = vshrl.u32 %v4510, 7
      %v4512 = vsub.s32 2, %v4511
      %v4513 = vrot.slane %v4446, %v4512
      %v4514 = vlaneseq
      %v4515 = vshrl.u32 %v4514, 7
      %v4516 = vsub.s32 2, %v4515
      %v4517 = vrot.slane %v4447, %v4516
      %v4518 = vlaneseq
      %v4519 = vshrl.u32 %v4518, 7
      %v4520 = vsub.s32 2, %v4519
      %v4521 = vrot.slane %v4448, %v4520
      %v4522 = vlaneseq
      %v4523 = vshrl.u32 %v4522, 7
      %v4524 = vsub.s32 2, %v4523
      %v4525 = vrot.slane %v4449, %v4524
      %v4526 = vmul.f32 %v4508, %v4513
      %v4527 = vmul.f32 %v4508, %v4517
      %v4528 = vmul.f32 %v4508, %v4521
      %v4529 = vmul.f32 %v4508, %v4525
      %v4530 = vadd.f32 %v4502, %v4526
      %v4531 = vadd.f32 %v4503, %v4527
      %v4532 = vadd.f32 %v4504, %v4528
      %v4533 = vadd.f32 %v4505, %v4529
      %4534 = vset.pattern.permute.xlu0 7
      %4535 = vperm.xlu0 %4534, %v4304
      %v4536 = vpop.permute.xlu0 %4535
      %v4538 = vlaneseq
      %v4539 = vshrl.u32 %v4538, 7
      %v4540 = vsub.s32 3, %v4539
      %v4541 = vrot.slane %v4446, %v4540
      %v4542 = vlaneseq
      %v4543 = vshrl.u32 %v4542, 7
      %v4544 = vsub.s32 3, %v4543
      %v4545 = vrot.slane %v4447, %v4544
      %v4546 = vlaneseq
      %v4547 = vshrl.u32 %v4546, 7
      %v4548 = vsub.s32 3, %v4547
      %v4549 = vrot.slane %v4448, %v4548
      %v4550 = vlaneseq
      %v4551 = vshrl.u32 %v4550, 7
      %v4552 = vsub.s32 3, %v4551
      %v4553 = vrot.slane %v4449, %v4552
      %v4554 = vmul.f32 %v4536, %v4541
      %v4555 = vmul.f32 %v4536, %v4545
      %v4556 = vmul.f32 %v4536, %v4549
      %v4557 = vmul.f32 %v4536, %v4553
      %v4558 = vadd.f32 %v4530, %v4554
      %v4559 = vadd.f32 %v4531, %v4555
      %v4560 = vadd.f32 %v4532, %v4556
      %v4561 = vadd.f32 %v4533, %v4557
      %4562 = vrot.lane.b32.xlu0 %v4300, 71
      %v4563 = vpop.permute.xlu0 %4562
      %4564 = vrot.lane.b32.xlu0 %v4301, 71
      %v4565 = vpop.permute.xlu0 %4564
      %4566 = vrot.lane.b32.xlu0 %v4302, 71
      %v4567 = vpop.permute.xlu0 %4566
      %4568 = vrot.lane.b32.xlu0 %v4303, 71
      %v4569 = vpop.permute.xlu0 %4568
      %v4570 = vsel %vm575, %v4567, %v4569
      %v4571 = vsel %vm575, %v4565, %v4567
      %v4572 = vsel %vm575, %v4563, %v4565
      %v4573 = vsel %vm575, %v4569, %v4563
      %v4574 = vmul.f32 %v4573, %v586
      %v4575 = vmul.f32 %v4572, %v590
      %v4576 = vmul.f32 %v4571, %v594
      %v4577 = vmul.f32 %v4570, %v598
      %4578 = vset.pattern.permute.xlu0 8
      %4579 = vperm.xlu0 %4578, %v4304
      %v4580 = vpop.permute.xlu0 %4579
      %v4582 = vlaneseq
      %v4583 = vshrl.u32 %v4582, 7
      %v4584 = vsub.s32 0, %v4583
      %v4585 = vrot.slane %v4574, %v4584
      %v4586 = vlaneseq
      %v4587 = vshrl.u32 %v4586, 7
      %v4588 = vsub.s32 0, %v4587
      %v4589 = vrot.slane %v4575, %v4588
      %v4590 = vlaneseq
      %v4591 = vshrl.u32 %v4590, 7
      %v4592 = vsub.s32 0, %v4591
      %v4593 = vrot.slane %v4576, %v4592
      %v4594 = vlaneseq
      %v4595 = vshrl.u32 %v4594, 7
      %v4596 = vsub.s32 0, %v4595
      %v4597 = vrot.slane %v4577, %v4596
      %v4598 = vmul.f32 %v4580, %v4585
      %v4599 = vmul.f32 %v4580, %v4589
      %v4600 = vmul.f32 %v4580, %v4593
      %v4601 = vmul.f32 %v4580, %v4597
      %v4602 = vadd.f32 %v4558, %v4598
      %v4603 = vadd.f32 %v4559, %v4599
      %v4604 = vadd.f32 %v4560, %v4600
      %v4605 = vadd.f32 %v4561, %v4601
      %4606 = vset.pattern.permute.xlu0 9
      %4607 = vperm.xlu0 %4606, %v4304
      %v4608 = vpop.permute.xlu0 %4607
      %v4610 = vlaneseq
      %v4611 = vshrl.u32 %v4610, 7
      %v4612 = vsub.s32 1, %v4611
      %v4613 = vrot.slane %v4574, %v4612
      %v4614 = vlaneseq
      %v4615 = vshrl.u32 %v4614, 7
      %v4616 = vsub.s32 1, %v4615
      %v4617 = vrot.slane %v4575, %v4616
      %v4618 = vlaneseq
      %v4619 = vshrl.u32 %v4618, 7
      %v4620 = vsub.s32 1, %v4619
      %v4621 = vrot.slane %v4576, %v4620
      %v4622 = vlaneseq
      %v4623 = vshrl.u32 %v4622, 7
      %v4624 = vsub.s32 1, %v4623
      %v4625 = vrot.slane %v4577, %v4624
      %v4626 = vmul.f32 %v4608, %v4613
      %v4627 = vmul.f32 %v4608, %v4617
      %v4628 = vmul.f32 %v4608, %v4621
      %v4629 = vmul.f32 %v4608, %v4625
      %v4630 = vadd.f32 %v4602, %v4626
      %v4631 = vadd.f32 %v4603, %v4627
      %v4632 = vadd.f32 %v4604, %v4628
      %v4633 = vadd.f32 %v4605, %v4629
      %4634 = vset.pattern.permute.xlu0 10
      %4635 = vperm.xlu0 %4634, %v4304
      %v4636 = vpop.permute.xlu0 %4635
      %v4638 = vlaneseq
      %v4639 = vshrl.u32 %v4638, 7
      %v4640 = vsub.s32 2, %v4639
      %v4641 = vrot.slane %v4574, %v4640
      %v4642 = vlaneseq
      %v4643 = vshrl.u32 %v4642, 7
      %v4644 = vsub.s32 2, %v4643
      %v4645 = vrot.slane %v4575, %v4644
      %v4646 = vlaneseq
      %v4647 = vshrl.u32 %v4646, 7
      %v4648 = vsub.s32 2, %v4647
      %v4649 = vrot.slane %v4576, %v4648
      %v4650 = vlaneseq
      %v4651 = vshrl.u32 %v4650, 7
      %v4652 = vsub.s32 2, %v4651
      %v4653 = vrot.slane %v4577, %v4652
      %v4654 = vmul.f32 %v4636, %v4641
      %v4655 = vmul.f32 %v4636, %v4645
      %v4656 = vmul.f32 %v4636, %v4649
      %v4657 = vmul.f32 %v4636, %v4653
      %v4658 = vadd.f32 %v4630, %v4654
      %v4659 = vadd.f32 %v4631, %v4655
      %v4660 = vadd.f32 %v4632, %v4656
      %v4661 = vadd.f32 %v4633, %v4657
      %4662 = vset.pattern.permute.xlu0 11
      %4663 = vperm.xlu0 %4662, %v4304
      %v4664 = vpop.permute.xlu0 %4663
      %v4666 = vlaneseq
      %v4667 = vshrl.u32 %v4666, 7
      %v4668 = vsub.s32 3, %v4667
      %v4669 = vrot.slane %v4574, %v4668
      %v4670 = vlaneseq
      %v4671 = vshrl.u32 %v4670, 7
      %v4672 = vsub.s32 3, %v4671
      %v4673 = vrot.slane %v4575, %v4672
      %v4674 = vlaneseq
      %v4675 = vshrl.u32 %v4674, 7
      %v4676 = vsub.s32 3, %v4675
      %v4677 = vrot.slane %v4576, %v4676
      %v4678 = vlaneseq
      %v4679 = vshrl.u32 %v4678, 7
      %v4680 = vsub.s32 3, %v4679
      %v4681 = vrot.slane %v4577, %v4680
      %v4682 = vmul.f32 %v4664, %v4669
      %v4683 = vmul.f32 %v4664, %v4673
      %v4684 = vmul.f32 %v4664, %v4677
      %v4685 = vmul.f32 %v4664, %v4681
      %v4686 = vadd.f32 %v4658, %v4682
      %v4687 = vadd.f32 %v4659, %v4683
      %v4688 = vadd.f32 %v4660, %v4684
      %v4689 = vadd.f32 %v4661, %v4685
      %4690 = vrot.lane.b32.xlu0 %v4300, 65
      %v4691 = vpop.permute.xlu0 %4690
      %4692 = vrot.lane.b32.xlu0 %v4301, 65
      %v4693 = vpop.permute.xlu0 %4692
      %4694 = vrot.lane.b32.xlu0 %v4302, 65
      %v4695 = vpop.permute.xlu0 %4694
      %4696 = vrot.lane.b32.xlu0 %v4303, 65
      %v4697 = vpop.permute.xlu0 %4696
      %v4698 = vsel %vm727, %v4695, %v4697
      %v4699 = vsel %vm727, %v4693, %v4695
      %v4700 = vsel %vm727, %v4691, %v4693
      %v4701 = vsel %vm727, %v4697, %v4691
      %v4702 = vmul.f32 %v4701, %v738
      %v4703 = vmul.f32 %v4700, %v742
      %v4704 = vmul.f32 %v4699, %v746
      %v4705 = vmul.f32 %v4698, %v750
      %4706 = vset.pattern.permute.xlu0 12
      %4707 = vperm.xlu0 %4706, %v4304
      %v4708 = vpop.permute.xlu0 %4707
      %v4710 = vlaneseq
      %v4711 = vshrl.u32 %v4710, 7
      %v4712 = vsub.s32 0, %v4711
      %v4713 = vrot.slane %v4702, %v4712
      %v4714 = vlaneseq
      %v4715 = vshrl.u32 %v4714, 7
      %v4716 = vsub.s32 0, %v4715
      %v4717 = vrot.slane %v4703, %v4716
      %v4718 = vlaneseq
      %v4719 = vshrl.u32 %v4718, 7
      %v4720 = vsub.s32 0, %v4719
      %v4721 = vrot.slane %v4704, %v4720
      %v4722 = vlaneseq
      %v4723 = vshrl.u32 %v4722, 7
      %v4724 = vsub.s32 0, %v4723
      %v4725 = vrot.slane %v4705, %v4724
      %v4726 = vmul.f32 %v4708, %v4713
      %v4727 = vmul.f32 %v4708, %v4717
      %v4728 = vmul.f32 %v4708, %v4721
      %v4729 = vmul.f32 %v4708, %v4725
      %v4730 = vadd.f32 %v4686, %v4726
      %v4731 = vadd.f32 %v4687, %v4727
      %v4732 = vadd.f32 %v4688, %v4728
      %v4733 = vadd.f32 %v4689, %v4729
      %4734 = vset.pattern.permute.xlu0 13
      %4735 = vperm.xlu0 %4734, %v4304
      %v4736 = vpop.permute.xlu0 %4735
      %v4738 = vlaneseq
      %v4739 = vshrl.u32 %v4738, 7
      %v4740 = vsub.s32 1, %v4739
      %v4741 = vrot.slane %v4702, %v4740
      %v4742 = vlaneseq
      %v4743 = vshrl.u32 %v4742, 7
      %v4744 = vsub.s32 1, %v4743
      %v4745 = vrot.slane %v4703, %v4744
      %v4746 = vlaneseq
      %v4747 = vshrl.u32 %v4746, 7
      %v4748 = vsub.s32 1, %v4747
      %v4749 = vrot.slane %v4704, %v4748
      %v4750 = vlaneseq
      %v4751 = vshrl.u32 %v4750, 7
      %v4752 = vsub.s32 1, %v4751
      %v4753 = vrot.slane %v4705, %v4752
      %v4754 = vmul.f32 %v4736, %v4741
      %v4755 = vmul.f32 %v4736, %v4745
      %v4756 = vmul.f32 %v4736, %v4749
      %v4757 = vmul.f32 %v4736, %v4753
      %v4758 = vadd.f32 %v4730, %v4754
      %v4759 = vadd.f32 %v4731, %v4755
      %v4760 = vadd.f32 %v4732, %v4756
      %v4761 = vadd.f32 %v4733, %v4757
      %4762 = vset.pattern.permute.xlu0 14
      %4763 = vperm.xlu0 %4762, %v4304
      %v4764 = vpop.permute.xlu0 %4763
      %v4766 = vlaneseq
      %v4767 = vshrl.u32 %v4766, 7
      %v4768 = vsub.s32 2, %v4767
      %v4769 = vrot.slane %v4702, %v4768
      %v4770 = vlaneseq
      %v4771 = vshrl.u32 %v4770, 7
      %v4772 = vsub.s32 2, %v4771
      %v4773 = vrot.slane %v4703, %v4772
      %v4774 = vlaneseq
      %v4775 = vshrl.u32 %v4774, 7
      %v4776 = vsub.s32 2, %v4775
      %v4777 = vrot.slane %v4704, %v4776
      %v4778 = vlaneseq
      %v4779 = vshrl.u32 %v4778, 7
      %v4780 = vsub.s32 2, %v4779
      %v4781 = vrot.slane %v4705, %v4780
      %v4782 = vmul.f32 %v4764, %v4769
      %v4783 = vmul.f32 %v4764, %v4773
      %v4784 = vmul.f32 %v4764, %v4777
      %v4785 = vmul.f32 %v4764, %v4781
      %v4786 = vadd.f32 %v4758, %v4782
      %v4787 = vadd.f32 %v4759, %v4783
      %v4788 = vadd.f32 %v4760, %v4784
      %v4789 = vadd.f32 %v4761, %v4785
      %4790 = vset.pattern.permute.xlu0 15
      %4791 = vperm.xlu0 %4790, %v4304
      %v4792 = vpop.permute.xlu0 %4791
      %v4794 = vlaneseq
      %v4795 = vshrl.u32 %v4794, 7
      %v4796 = vsub.s32 3, %v4795
      %v4797 = vrot.slane %v4702, %v4796
      %v4798 = vlaneseq
      %v4799 = vshrl.u32 %v4798, 7
      %v4800 = vsub.s32 3, %v4799
      %v4801 = vrot.slane %v4703, %v4800
      %v4802 = vlaneseq
      %v4803 = vshrl.u32 %v4802, 7
      %v4804 = vsub.s32 3, %v4803
      %v4805 = vrot.slane %v4704, %v4804
      %v4806 = vlaneseq
      %v4807 = vshrl.u32 %v4806, 7
      %v4808 = vsub.s32 3, %v4807
      %v4809 = vrot.slane %v4705, %v4808
      %v4810 = vmul.f32 %v4792, %v4797
      %v4811 = vmul.f32 %v4792, %v4801
      %v4812 = vmul.f32 %v4792, %v4805
      %v4813 = vmul.f32 %v4792, %v4809
      %v4814 = vadd.f32 %v4786, %v4810
      %v4815 = vadd.f32 %v4787, %v4811
      %v4816 = vadd.f32 %v4788, %v4812
      %v4817 = vadd.f32 %v4789, %v4813
      %4818 = vrot.lane.b32.xlu0 %v4300, 64
      %v4819 = vpop.permute.xlu0 %4818
      %4820 = vrot.lane.b32.xlu0 %v4301, 64
      %v4821 = vpop.permute.xlu0 %4820
      %4822 = vrot.lane.b32.xlu0 %v4302, 64
      %v4823 = vpop.permute.xlu0 %4822
      %4824 = vrot.lane.b32.xlu0 %v4303, 64
      %v4825 = vpop.permute.xlu0 %4824
      %v4826 = vsel %vm879, %v4823, %v4825
      %v4827 = vsel %vm879, %v4821, %v4823
      %v4828 = vsel %vm879, %v4819, %v4821
      %v4829 = vsel %vm879, %v4825, %v4819
      %v4830 = vmul.f32 %v4829, %v890
      %v4831 = vmul.f32 %v4828, %v894
      %v4832 = vmul.f32 %v4827, %v898
      %v4833 = vmul.f32 %v4826, %v902
      %4834 = vset.pattern.permute.xlu0 16
      %4835 = vperm.xlu0 %4834, %v4304
      %v4836 = vpop.permute.xlu0 %4835
      %v4838 = vlaneseq
      %v4839 = vshrl.u32 %v4838, 7
      %v4840 = vsub.s32 0, %v4839
      %v4841 = vrot.slane %v4830, %v4840
      %v4842 = vlaneseq
      %v4843 = vshrl.u32 %v4842, 7
      %v4844 = vsub.s32 0, %v4843
      %v4845 = vrot.slane %v4831, %v4844
      %v4846 = vlaneseq
      %v4847 = vshrl.u32 %v4846, 7
      %v4848 = vsub.s32 0, %v4847
      %v4849 = vrot.slane %v4832, %v4848
      %v4850 = vlaneseq
      %v4851 = vshrl.u32 %v4850, 7
      %v4852 = vsub.s32 0, %v4851
      %v4853 = vrot.slane %v4833, %v4852
      %v4854 = vmul.f32 %v4836, %v4841
      %v4855 = vmul.f32 %v4836, %v4845
      %v4856 = vmul.f32 %v4836, %v4849
      %v4857 = vmul.f32 %v4836, %v4853
      %v4858 = vadd.f32 %v4814, %v4854
      %v4859 = vadd.f32 %v4815, %v4855
      %v4860 = vadd.f32 %v4816, %v4856
      %v4861 = vadd.f32 %v4817, %v4857
      %4862 = vset.pattern.permute.xlu0 17
      %4863 = vperm.xlu0 %4862, %v4304
      %v4864 = vpop.permute.xlu0 %4863
      %v4866 = vlaneseq
      %v4867 = vshrl.u32 %v4866, 7
      %v4868 = vsub.s32 1, %v4867
      %v4869 = vrot.slane %v4830, %v4868
      %v4870 = vlaneseq
      %v4871 = vshrl.u32 %v4870, 7
      %v4872 = vsub.s32 1, %v4871
      %v4873 = vrot.slane %v4831, %v4872
      %v4874 = vlaneseq
      %v4875 = vshrl.u32 %v4874, 7
      %v4876 = vsub.s32 1, %v4875
      %v4877 = vrot.slane %v4832, %v4876
      %v4878 = vlaneseq
      %v4879 = vshrl.u32 %v4878, 7
      %v4880 = vsub.s32 1, %v4879
      %v4881 = vrot.slane %v4833, %v4880
      %v4882 = vmul.f32 %v4864, %v4869
      %v4883 = vmul.f32 %v4864, %v4873
      %v4884 = vmul.f32 %v4864, %v4877
      %v4885 = vmul.f32 %v4864, %v4881
      %v4886 = vadd.f32 %v4858, %v4882
      %v4887 = vadd.f32 %v4859, %v4883
      %v4888 = vadd.f32 %v4860, %v4884
      %v4889 = vadd.f32 %v4861, %v4885
      %4890 = vset.pattern.permute.xlu0 18
      %4891 = vperm.xlu0 %4890, %v4304
      %v4892 = vpop.permute.xlu0 %4891
      %v4894 = vlaneseq
      %v4895 = vshrl.u32 %v4894, 7
      %v4896 = vsub.s32 2, %v4895
      %v4897 = vrot.slane %v4830, %v4896
      %v4898 = vlaneseq
      %v4899 = vshrl.u32 %v4898, 7
      %v4900 = vsub.s32 2, %v4899
      %v4901 = vrot.slane %v4831, %v4900
      %v4902 = vlaneseq
      %v4903 = vshrl.u32 %v4902, 7
      %v4904 = vsub.s32 2, %v4903
      %v4905 = vrot.slane %v4832, %v4904
      %v4906 = vlaneseq
      %v4907 = vshrl.u32 %v4906, 7
      %v4908 = vsub.s32 2, %v4907
      %v4909 = vrot.slane %v4833, %v4908
      %v4910 = vmul.f32 %v4892, %v4897
      %v4911 = vmul.f32 %v4892, %v4901
      %v4912 = vmul.f32 %v4892, %v4905
      %v4913 = vmul.f32 %v4892, %v4909
      %v4914 = vadd.f32 %v4886, %v4910
      %v4915 = vadd.f32 %v4887, %v4911
      %v4916 = vadd.f32 %v4888, %v4912
      %v4917 = vadd.f32 %v4889, %v4913
      %4918 = vset.pattern.permute.xlu0 19
      %4919 = vperm.xlu0 %4918, %v4304
      %v4920 = vpop.permute.xlu0 %4919
      %v4922 = vlaneseq
      %v4923 = vshrl.u32 %v4922, 7
      %v4924 = vsub.s32 3, %v4923
      %v4925 = vrot.slane %v4830, %v4924
      %v4926 = vlaneseq
      %v4927 = vshrl.u32 %v4926, 7
      %v4928 = vsub.s32 3, %v4927
      %v4929 = vrot.slane %v4831, %v4928
      %v4930 = vlaneseq
      %v4931 = vshrl.u32 %v4930, 7
      %v4932 = vsub.s32 3, %v4931
      %v4933 = vrot.slane %v4832, %v4932
      %v4934 = vlaneseq
      %v4935 = vshrl.u32 %v4934, 7
      %v4936 = vsub.s32 3, %v4935
      %v4937 = vrot.slane %v4833, %v4936
      %v4938 = vmul.f32 %v4920, %v4925
      %v4939 = vmul.f32 %v4920, %v4929
      %v4940 = vmul.f32 %v4920, %v4933
      %v4941 = vmul.f32 %v4920, %v4937
      %v4942 = vadd.f32 %v4914, %v4938
      %v4943 = vadd.f32 %v4915, %v4939
      %v4944 = vadd.f32 %v4916, %v4940
      %v4945 = vadd.f32 %v4917, %v4941
      %4946 = vrot.lane.b32.xlu0 %v4300, 63
      %v4947 = vpop.permute.xlu0 %4946
      %4948 = vrot.lane.b32.xlu0 %v4301, 63
      %v4949 = vpop.permute.xlu0 %4948
      %4950 = vrot.lane.b32.xlu0 %v4302, 63
      %v4951 = vpop.permute.xlu0 %4950
      %4952 = vrot.lane.b32.xlu0 %v4303, 63
      %v4953 = vpop.permute.xlu0 %4952
      %v4954 = vsel %vm1031, %v4951, %v4953
      %v4955 = vsel %vm1031, %v4949, %v4951
      %v4956 = vsel %vm1031, %v4947, %v4949
      %v4957 = vsel %vm1031, %v4953, %v4947
      %v4958 = vmul.f32 %v4957, %v1042
      %v4959 = vmul.f32 %v4956, %v1046
      %v4960 = vmul.f32 %v4955, %v1050
      %v4961 = vmul.f32 %v4954, %v1054
      %4962 = vset.pattern.permute.xlu0 20
      %4963 = vperm.xlu0 %4962, %v4304
      %v4964 = vpop.permute.xlu0 %4963
      %v4966 = vlaneseq
      %v4967 = vshrl.u32 %v4966, 7
      %v4968 = vsub.s32 0, %v4967
      %v4969 = vrot.slane %v4958, %v4968
      %v4970 = vlaneseq
      %v4971 = vshrl.u32 %v4970, 7
      %v4972 = vsub.s32 0, %v4971
      %v4973 = vrot.slane %v4959, %v4972
      %v4974 = vlaneseq
      %v4975 = vshrl.u32 %v4974, 7
      %v4976 = vsub.s32 0, %v4975
      %v4977 = vrot.slane %v4960, %v4976
      %v4978 = vlaneseq
      %v4979 = vshrl.u32 %v4978, 7
      %v4980 = vsub.s32 0, %v4979
      %v4981 = vrot.slane %v4961, %v4980
      %v4982 = vmul.f32 %v4964, %v4969
      %v4983 = vmul.f32 %v4964, %v4973
      %v4984 = vmul.f32 %v4964, %v4977
      %v4985 = vmul.f32 %v4964, %v4981
      %v4986 = vadd.f32 %v4942, %v4982
      %v4987 = vadd.f32 %v4943, %v4983
      %v4988 = vadd.f32 %v4944, %v4984
      %v4989 = vadd.f32 %v4945, %v4985
      %4990 = vset.pattern.permute.xlu0 21
      %4991 = vperm.xlu0 %4990, %v4304
      %v4992 = vpop.permute.xlu0 %4991
      %v4994 = vlaneseq
      %v4995 = vshrl.u32 %v4994, 7
      %v4996 = vsub.s32 1, %v4995
      %v4997 = vrot.slane %v4958, %v4996
      %v4998 = vlaneseq
      %v4999 = vshrl.u32 %v4998, 7
      %v5000 = vsub.s32 1, %v4999
      %v5001 = vrot.slane %v4959, %v5000
      %v5002 = vlaneseq
      %v5003 = vshrl.u32 %v5002, 7
      %v5004 = vsub.s32 1, %v5003
      %v5005 = vrot.slane %v4960, %v5004
      %v5006 = vlaneseq
      %v5007 = vshrl.u32 %v5006, 7
      %v5008 = vsub.s32 1, %v5007
      %v5009 = vrot.slane %v4961, %v5008
      %v5010 = vmul.f32 %v4992, %v4997
      %v5011 = vmul.f32 %v4992, %v5001
      %v5012 = vmul.f32 %v4992, %v5005
      %v5013 = vmul.f32 %v4992, %v5009
      %v5014 = vadd.f32 %v4986, %v5010
      %v5015 = vadd.f32 %v4987, %v5011
      %v5016 = vadd.f32 %v4988, %v5012
      %v5017 = vadd.f32 %v4989, %v5013
      %5018 = vset.pattern.permute.xlu0 22
      %5019 = vperm.xlu0 %5018, %v4304
      %v5020 = vpop.permute.xlu0 %5019
      %v5022 = vlaneseq
      %v5023 = vshrl.u32 %v5022, 7
      %v5024 = vsub.s32 2, %v5023
      %v5025 = vrot.slane %v4958, %v5024
      %v5026 = vlaneseq
      %v5027 = vshrl.u32 %v5026, 7
      %v5028 = vsub.s32 2, %v5027
      %v5029 = vrot.slane %v4959, %v5028
      %v5030 = vlaneseq
      %v5031 = vshrl.u32 %v5030, 7
      %v5032 = vsub.s32 2, %v5031
      %v5033 = vrot.slane %v4960, %v5032
      %v5034 = vlaneseq
      %v5035 = vshrl.u32 %v5034, 7
      %v5036 = vsub.s32 2, %v5035
      %v5037 = vrot.slane %v4961, %v5036
      %v5038 = vmul.f32 %v5020, %v5025
      %v5039 = vmul.f32 %v5020, %v5029
      %v5040 = vmul.f32 %v5020, %v5033
      %v5041 = vmul.f32 %v5020, %v5037
      %v5042 = vadd.f32 %v5014, %v5038
      %v5043 = vadd.f32 %v5015, %v5039
      %v5044 = vadd.f32 %v5016, %v5040
      %v5045 = vadd.f32 %v5017, %v5041
      %5046 = vset.pattern.permute.xlu0 23
      %5047 = vperm.xlu0 %5046, %v4304
      %v5048 = vpop.permute.xlu0 %5047
      %v5050 = vlaneseq
      %v5051 = vshrl.u32 %v5050, 7
      %v5052 = vsub.s32 3, %v5051
      %v5053 = vrot.slane %v4958, %v5052
      %v5054 = vlaneseq
      %v5055 = vshrl.u32 %v5054, 7
      %v5056 = vsub.s32 3, %v5055
      %v5057 = vrot.slane %v4959, %v5056
      %v5058 = vlaneseq
      %v5059 = vshrl.u32 %v5058, 7
      %v5060 = vsub.s32 3, %v5059
      %v5061 = vrot.slane %v4960, %v5060
      %v5062 = vlaneseq
      %v5063 = vshrl.u32 %v5062, 7
      %v5064 = vsub.s32 3, %v5063
      %v5065 = vrot.slane %v4961, %v5064
      %v5066 = vmul.f32 %v5048, %v5053
      %v5067 = vmul.f32 %v5048, %v5057
      %v5068 = vmul.f32 %v5048, %v5061
      %v5069 = vmul.f32 %v5048, %v5065
      %v5070 = vadd.f32 %v5042, %v5066
      %v5071 = vadd.f32 %v5043, %v5067
      %v5072 = vadd.f32 %v5044, %v5068
      %v5073 = vadd.f32 %v5045, %v5069
      %5074 = vrot.lane.b32.xlu0 %v4300, 57
      %v5075 = vpop.permute.xlu0 %5074
      %5076 = vrot.lane.b32.xlu0 %v4301, 57
      %v5077 = vpop.permute.xlu0 %5076
      %5078 = vrot.lane.b32.xlu0 %v4302, 57
      %v5079 = vpop.permute.xlu0 %5078
      %5080 = vrot.lane.b32.xlu0 %v4303, 57
      %v5081 = vpop.permute.xlu0 %5080
      %v5082 = vsel %vm1183, %v5079, %v5081
      %v5083 = vsel %vm1183, %v5077, %v5079
      %v5084 = vsel %vm1183, %v5075, %v5077
      %v5085 = vsel %vm1183, %v5081, %v5075
      %v5086 = vmul.f32 %v5085, %v1194
      %v5087 = vmul.f32 %v5084, %v1198
      %v5088 = vmul.f32 %v5083, %v1202
      %v5089 = vmul.f32 %v5082, %v1206
      %5090 = vset.pattern.permute.xlu0 24
      %5091 = vperm.xlu0 %5090, %v4304
      %v5092 = vpop.permute.xlu0 %5091
      %v5094 = vlaneseq
      %v5095 = vshrl.u32 %v5094, 7
      %v5096 = vsub.s32 0, %v5095
      %v5097 = vrot.slane %v5086, %v5096
      %v5098 = vlaneseq
      %v5099 = vshrl.u32 %v5098, 7
      %v5100 = vsub.s32 0, %v5099
      %v5101 = vrot.slane %v5087, %v5100
      %v5102 = vlaneseq
      %v5103 = vshrl.u32 %v5102, 7
      %v5104 = vsub.s32 0, %v5103
      %v5105 = vrot.slane %v5088, %v5104
      %v5106 = vlaneseq
      %v5107 = vshrl.u32 %v5106, 7
      %v5108 = vsub.s32 0, %v5107
      %v5109 = vrot.slane %v5089, %v5108
      %v5110 = vmul.f32 %v5092, %v5097
      %v5111 = vmul.f32 %v5092, %v5101
      %v5112 = vmul.f32 %v5092, %v5105
      %v5113 = vmul.f32 %v5092, %v5109
      %v5114 = vadd.f32 %v5070, %v5110
      %v5115 = vadd.f32 %v5071, %v5111
      %v5116 = vadd.f32 %v5072, %v5112
      %v5117 = vadd.f32 %v5073, %v5113
      %5118 = vset.pattern.permute.xlu0 25
      %5119 = vperm.xlu0 %5118, %v4304
      %v5120 = vpop.permute.xlu0 %5119
      %v5122 = vlaneseq
      %v5123 = vshrl.u32 %v5122, 7
      %v5124 = vsub.s32 1, %v5123
      %v5125 = vrot.slane %v5086, %v5124
      %v5126 = vlaneseq
      %v5127 = vshrl.u32 %v5126, 7
      %v5128 = vsub.s32 1, %v5127
      %v5129 = vrot.slane %v5087, %v5128
      %v5130 = vlaneseq
      %v5131 = vshrl.u32 %v5130, 7
      %v5132 = vsub.s32 1, %v5131
      %v5133 = vrot.slane %v5088, %v5132
      %v5134 = vlaneseq
      %v5135 = vshrl.u32 %v5134, 7
      %v5136 = vsub.s32 1, %v5135
      %v5137 = vrot.slane %v5089, %v5136
      %v5138 = vmul.f32 %v5120, %v5125
      %v5139 = vmul.f32 %v5120, %v5129
      %v5140 = vmul.f32 %v5120, %v5133
      %v5141 = vmul.f32 %v5120, %v5137
      %v5142 = vadd.f32 %v5114, %v5138
      %v5143 = vadd.f32 %v5115, %v5139
      %v5144 = vadd.f32 %v5116, %v5140
      %v5145 = vadd.f32 %v5117, %v5141
      %5146 = vset.pattern.permute.xlu0 26
      %5147 = vperm.xlu0 %5146, %v4304
      %v5148 = vpop.permute.xlu0 %5147
      %v5150 = vlaneseq
      %v5151 = vshrl.u32 %v5150, 7
      %v5152 = vsub.s32 2, %v5151
      %v5153 = vrot.slane %v5086, %v5152
      %v5154 = vlaneseq
      %v5155 = vshrl.u32 %v5154, 7
      %v5156 = vsub.s32 2, %v5155
      %v5157 = vrot.slane %v5087, %v5156
      %v5158 = vlaneseq
      %v5159 = vshrl.u32 %v5158, 7
      %v5160 = vsub.s32 2, %v5159
      %v5161 = vrot.slane %v5088, %v5160
      %v5162 = vlaneseq
      %v5163 = vshrl.u32 %v5162, 7
      %v5164 = vsub.s32 2, %v5163
      %v5165 = vrot.slane %v5089, %v5164
      %v5166 = vmul.f32 %v5148, %v5153
      %v5167 = vmul.f32 %v5148, %v5157
      %v5168 = vmul.f32 %v5148, %v5161
      %v5169 = vmul.f32 %v5148, %v5165
      %v5170 = vadd.f32 %v5142, %v5166
      %v5171 = vadd.f32 %v5143, %v5167
      %v5172 = vadd.f32 %v5144, %v5168
      %v5173 = vadd.f32 %v5145, %v5169
      %5174 = vset.pattern.permute.xlu0 27
      %5175 = vperm.xlu0 %5174, %v4304
      %v5176 = vpop.permute.xlu0 %5175
      %v5178 = vlaneseq
      %v5179 = vshrl.u32 %v5178, 7
      %v5180 = vsub.s32 3, %v5179
      %v5181 = vrot.slane %v5086, %v5180
      %v5182 = vlaneseq
      %v5183 = vshrl.u32 %v5182, 7
      %v5184 = vsub.s32 3, %v5183
      %v5185 = vrot.slane %v5087, %v5184
      %v5186 = vlaneseq
      %v5187 = vshrl.u32 %v5186, 7
      %v5188 = vsub.s32 3, %v5187
      %v5189 = vrot.slane %v5088, %v5188
      %v5190 = vlaneseq
      %v5191 = vshrl.u32 %v5190, 7
      %v5192 = vsub.s32 3, %v5191
      %v5193 = vrot.slane %v5089, %v5192
      %v5194 = vmul.f32 %v5176, %v5181
      %v5195 = vmul.f32 %v5176, %v5185
      %v5196 = vmul.f32 %v5176, %v5189
      %v5197 = vmul.f32 %v5176, %v5193
      %v5198 = vadd.f32 %v5170, %v5194
      %v5199 = vadd.f32 %v5171, %v5195
      %v5200 = vadd.f32 %v5172, %v5196
      %v5201 = vadd.f32 %v5173, %v5197
      %5202 = vrot.lane.b32.xlu0 %v4300, 56
      %v5203 = vpop.permute.xlu0 %5202
      %5204 = vrot.lane.b32.xlu0 %v4301, 56
      %v5205 = vpop.permute.xlu0 %5204
      %5206 = vrot.lane.b32.xlu0 %v4302, 56
      %v5207 = vpop.permute.xlu0 %5206
      %5208 = vrot.lane.b32.xlu0 %v4303, 56
      %v5209 = vpop.permute.xlu0 %5208
      %v5210 = vsel %vm1335, %v5207, %v5209
      %v5211 = vsel %vm1335, %v5205, %v5207
      %v5212 = vsel %vm1335, %v5203, %v5205
      %v5213 = vsel %vm1335, %v5209, %v5203
      %v5214 = vmul.f32 %v5213, %v1346
      %v5215 = vmul.f32 %v5212, %v1350
      %v5216 = vmul.f32 %v5211, %v1354
      %v5217 = vmul.f32 %v5210, %v1358
      %5218 = vset.pattern.permute.xlu0 28
      %5219 = vperm.xlu0 %5218, %v4304
      %v5220 = vpop.permute.xlu0 %5219
      %v5222 = vlaneseq
      %v5223 = vshrl.u32 %v5222, 7
      %v5224 = vsub.s32 0, %v5223
      %v5225 = vrot.slane %v5214, %v5224
      %v5226 = vlaneseq
      %v5227 = vshrl.u32 %v5226, 7
      %v5228 = vsub.s32 0, %v5227
      %v5229 = vrot.slane %v5215, %v5228
      %v5230 = vlaneseq
      %v5231 = vshrl.u32 %v5230, 7
      %v5232 = vsub.s32 0, %v5231
      %v5233 = vrot.slane %v5216, %v5232
      %v5234 = vlaneseq
      %v5235 = vshrl.u32 %v5234, 7
      %v5236 = vsub.s32 0, %v5235
      %v5237 = vrot.slane %v5217, %v5236
      %v5238 = vmul.f32 %v5220, %v5225
      %v5239 = vmul.f32 %v5220, %v5229
      %v5240 = vmul.f32 %v5220, %v5233
      %v5241 = vmul.f32 %v5220, %v5237
      %v5242 = vadd.f32 %v5198, %v5238
      %v5243 = vadd.f32 %v5199, %v5239
      %v5244 = vadd.f32 %v5200, %v5240
      %v5245 = vadd.f32 %v5201, %v5241
      %5246 = vset.pattern.permute.xlu0 29
      %5247 = vperm.xlu0 %5246, %v4304
      %v5248 = vpop.permute.xlu0 %5247
      %v5250 = vlaneseq
      %v5251 = vshrl.u32 %v5250, 7
      %v5252 = vsub.s32 1, %v5251
      %v5253 = vrot.slane %v5214, %v5252
      %v5254 = vlaneseq
      %v5255 = vshrl.u32 %v5254, 7
      %v5256 = vsub.s32 1, %v5255
      %v5257 = vrot.slane %v5215, %v5256
      %v5258 = vlaneseq
      %v5259 = vshrl.u32 %v5258, 7
      %v5260 = vsub.s32 1, %v5259
      %v5261 = vrot.slane %v5216, %v5260
      %v5262 = vlaneseq
      %v5263 = vshrl.u32 %v5262, 7
      %v5264 = vsub.s32 1, %v5263
      %v5265 = vrot.slane %v5217, %v5264
      %v5266 = vmul.f32 %v5248, %v5253
      %v5267 = vmul.f32 %v5248, %v5257
      %v5268 = vmul.f32 %v5248, %v5261
      %v5269 = vmul.f32 %v5248, %v5265
      %v5270 = vadd.f32 %v5242, %v5266
      %v5271 = vadd.f32 %v5243, %v5267
      %v5272 = vadd.f32 %v5244, %v5268
      %v5273 = vadd.f32 %v5245, %v5269
      %5274 = vset.pattern.permute.xlu0 30
      %5275 = vperm.xlu0 %5274, %v4304
      %v5276 = vpop.permute.xlu0 %5275
      %v5278 = vlaneseq
      %v5279 = vshrl.u32 %v5278, 7
      %v5280 = vsub.s32 2, %v5279
      %v5281 = vrot.slane %v5214, %v5280
      %v5282 = vlaneseq
      %v5283 = vshrl.u32 %v5282, 7
      %v5284 = vsub.s32 2, %v5283
      %v5285 = vrot.slane %v5215, %v5284
      %v5286 = vlaneseq
      %v5287 = vshrl.u32 %v5286, 7
      %v5288 = vsub.s32 2, %v5287
      %v5289 = vrot.slane %v5216, %v5288
      %v5290 = vlaneseq
      %v5291 = vshrl.u32 %v5290, 7
      %v5292 = vsub.s32 2, %v5291
      %v5293 = vrot.slane %v5217, %v5292
      %v5294 = vmul.f32 %v5276, %v5281
      %v5295 = vmul.f32 %v5276, %v5285
      %v5296 = vmul.f32 %v5276, %v5289
      %v5297 = vmul.f32 %v5276, %v5293
      %v5298 = vadd.f32 %v5270, %v5294
      %v5299 = vadd.f32 %v5271, %v5295
      %v5300 = vadd.f32 %v5272, %v5296
      %v5301 = vadd.f32 %v5273, %v5297
      %5302 = vset.pattern.permute.xlu0 31
      %5303 = vperm.xlu0 %5302, %v4304
      %v5304 = vpop.permute.xlu0 %5303
      %v5306 = vlaneseq
      %v5307 = vshrl.u32 %v5306, 7
      %v5308 = vsub.s32 3, %v5307
      %v5309 = vrot.slane %v5214, %v5308
      %v5310 = vlaneseq
      %v5311 = vshrl.u32 %v5310, 7
      %v5312 = vsub.s32 3, %v5311
      %v5313 = vrot.slane %v5215, %v5312
      %v5314 = vlaneseq
      %v5315 = vshrl.u32 %v5314, 7
      %v5316 = vsub.s32 3, %v5315
      %v5317 = vrot.slane %v5216, %v5316
      %v5318 = vlaneseq
      %v5319 = vshrl.u32 %v5318, 7
      %v5320 = vsub.s32 3, %v5319
      %v5321 = vrot.slane %v5217, %v5320
      %v5322 = vmul.f32 %v5304, %v5309
      %v5323 = vmul.f32 %v5304, %v5313
      %v5324 = vmul.f32 %v5304, %v5317
      %v5325 = vmul.f32 %v5304, %v5321
      %v5326 = vadd.f32 %v5298, %v5322
      %v5327 = vadd.f32 %v5299, %v5323
      %v5328 = vadd.f32 %v5300, %v5324
      %v5329 = vadd.f32 %v5301, %v5325
      %5330 = vrot.lane.b32.xlu0 %v4300, 55
      %v5331 = vpop.permute.xlu0 %5330
      %5332 = vrot.lane.b32.xlu0 %v4301, 55
      %v5333 = vpop.permute.xlu0 %5332
      %5334 = vrot.lane.b32.xlu0 %v4302, 55
      %v5335 = vpop.permute.xlu0 %5334
      %5336 = vrot.lane.b32.xlu0 %v4303, 55
      %v5337 = vpop.permute.xlu0 %5336
      %v5338 = vsel %vm1487, %v5335, %v5337
      %v5339 = vsel %vm1487, %v5333, %v5335
      %v5340 = vsel %vm1487, %v5331, %v5333
      %v5341 = vsel %vm1487, %v5337, %v5331
      %v5342 = vmul.f32 %v5341, %v1498
      %v5343 = vmul.f32 %v5340, %v1502
      %v5344 = vmul.f32 %v5339, %v1506
      %v5345 = vmul.f32 %v5338, %v1510
      %5346 = vset.pattern.permute.xlu0 32
      %5347 = vperm.xlu0 %5346, %v4304
      %v5348 = vpop.permute.xlu0 %5347
      %v5350 = vlaneseq
      %v5351 = vshrl.u32 %v5350, 7
      %v5352 = vsub.s32 0, %v5351
      %v5353 = vrot.slane %v5342, %v5352
      %v5354 = vlaneseq
      %v5355 = vshrl.u32 %v5354, 7
      %v5356 = vsub.s32 0, %v5355
      %v5357 = vrot.slane %v5343, %v5356
      %v5358 = vlaneseq
      %v5359 = vshrl.u32 %v5358, 7
      %v5360 = vsub.s32 0, %v5359
      %v5361 = vrot.slane %v5344, %v5360
      %v5362 = vlaneseq
      %v5363 = vshrl.u32 %v5362, 7
      %v5364 = vsub.s32 0, %v5363
      %v5365 = vrot.slane %v5345, %v5364
      %v5366 = vmul.f32 %v5348, %v5353
      %v5367 = vmul.f32 %v5348, %v5357
      %v5368 = vmul.f32 %v5348, %v5361
      %v5369 = vmul.f32 %v5348, %v5365
      %v5370 = vadd.f32 %v5326, %v5366
      %v5371 = vadd.f32 %v5327, %v5367
      %v5372 = vadd.f32 %v5328, %v5368
      %v5373 = vadd.f32 %v5329, %v5369
      %5374 = vset.pattern.permute.xlu0 33
      %5375 = vperm.xlu0 %5374, %v4304
      %v5376 = vpop.permute.xlu0 %5375
      %v5378 = vlaneseq
      %v5379 = vshrl.u32 %v5378, 7
      %v5380 = vsub.s32 1, %v5379
      %v5381 = vrot.slane %v5342, %v5380
      %v5382 = vlaneseq
      %v5383 = vshrl.u32 %v5382, 7
      %v5384 = vsub.s32 1, %v5383
      %v5385 = vrot.slane %v5343, %v5384
      %v5386 = vlaneseq
      %v5387 = vshrl.u32 %v5386, 7
      %v5388 = vsub.s32 1, %v5387
      %v5389 = vrot.slane %v5344, %v5388
      %v5390 = vlaneseq
      %v5391 = vshrl.u32 %v5390, 7
      %v5392 = vsub.s32 1, %v5391
      %v5393 = vrot.slane %v5345, %v5392
      %v5394 = vmul.f32 %v5376, %v5381
      %v5395 = vmul.f32 %v5376, %v5385
      %v5396 = vmul.f32 %v5376, %v5389
      %v5397 = vmul.f32 %v5376, %v5393
      %v5398 = vadd.f32 %v5370, %v5394
      %v5399 = vadd.f32 %v5371, %v5395
      %v5400 = vadd.f32 %v5372, %v5396
      %v5401 = vadd.f32 %v5373, %v5397
      %5402 = vset.pattern.permute.xlu0 34
      %5403 = vperm.xlu0 %5402, %v4304
      %v5404 = vpop.permute.xlu0 %5403
      %v5406 = vlaneseq
      %v5407 = vshrl.u32 %v5406, 7
      %v5408 = vsub.s32 2, %v5407
      %v5409 = vrot.slane %v5342, %v5408
      %v5410 = vlaneseq
      %v5411 = vshrl.u32 %v5410, 7
      %v5412 = vsub.s32 2, %v5411
      %v5413 = vrot.slane %v5343, %v5412
      %v5414 = vlaneseq
      %v5415 = vshrl.u32 %v5414, 7
      %v5416 = vsub.s32 2, %v5415
      %v5417 = vrot.slane %v5344, %v5416
      %v5418 = vlaneseq
      %v5419 = vshrl.u32 %v5418, 7
      %v5420 = vsub.s32 2, %v5419
      %v5421 = vrot.slane %v5345, %v5420
      %v5422 = vmul.f32 %v5404, %v5409
      %v5423 = vmul.f32 %v5404, %v5413
      %v5424 = vmul.f32 %v5404, %v5417
      %v5425 = vmul.f32 %v5404, %v5421
      %v5426 = vadd.f32 %v5398, %v5422
      %v5427 = vadd.f32 %v5399, %v5423
      %v5428 = vadd.f32 %v5400, %v5424
      %v5429 = vadd.f32 %v5401, %v5425
      %5430 = vset.pattern.permute.xlu0 35
      %5431 = vperm.xlu0 %5430, %v4304
      %v5432 = vpop.permute.xlu0 %5431
      %v5434 = vlaneseq
      %v5435 = vshrl.u32 %v5434, 7
      %v5436 = vsub.s32 3, %v5435
      %v5437 = vrot.slane %v5342, %v5436
      %v5438 = vlaneseq
      %v5439 = vshrl.u32 %v5438, 7
      %v5440 = vsub.s32 3, %v5439
      %v5441 = vrot.slane %v5343, %v5440
      %v5442 = vlaneseq
      %v5443 = vshrl.u32 %v5442, 7
      %v5444 = vsub.s32 3, %v5443
      %v5445 = vrot.slane %v5344, %v5444
      %v5446 = vlaneseq
      %v5447 = vshrl.u32 %v5446, 7
      %v5448 = vsub.s32 3, %v5447
      %v5449 = vrot.slane %v5345, %v5448
      %v5450 = vmul.f32 %v5432, %v5437
      %v5451 = vmul.f32 %v5432, %v5441
      %v5452 = vmul.f32 %v5432, %v5445
      %v5453 = vmul.f32 %v5432, %v5449
      %v5454 = vadd.f32 %v5426, %v5450
      %v5455 = vadd.f32 %v5427, %v5451
      %v5456 = vadd.f32 %v5428, %v5452
      %v5457 = vadd.f32 %v5429, %v5453
      %5458 = vrot.lane.b32.xlu0 %v4300, 9
      %v5459 = vpop.permute.xlu0 %5458
      %5460 = vrot.lane.b32.xlu0 %v4301, 9
      %v5461 = vpop.permute.xlu0 %5460
      %5462 = vrot.lane.b32.xlu0 %v4302, 9
      %v5463 = vpop.permute.xlu0 %5462
      %5464 = vrot.lane.b32.xlu0 %v4303, 9
      %v5465 = vpop.permute.xlu0 %5464
      %v5466 = vsel %vm1639, %v5463, %v5465
      %v5467 = vsel %vm1639, %v5461, %v5463
      %v5468 = vsel %vm1639, %v5459, %v5461
      %v5469 = vsel %vm1639, %v5465, %v5459
      %v5470 = vmul.f32 %v5469, %v1650
      %v5471 = vmul.f32 %v5468, %v1654
      %v5472 = vmul.f32 %v5467, %v1658
      %v5473 = vmul.f32 %v5466, %v1662
      %5474 = vset.pattern.permute.xlu0 36
      %5475 = vperm.xlu0 %5474, %v4304
      %v5476 = vpop.permute.xlu0 %5475
      %v5478 = vlaneseq
      %v5479 = vshrl.u32 %v5478, 7
      %v5480 = vsub.s32 0, %v5479
      %v5481 = vrot.slane %v5470, %v5480
      %v5482 = vlaneseq
      %v5483 = vshrl.u32 %v5482, 7
      %v5484 = vsub.s32 0, %v5483
      %v5485 = vrot.slane %v5471, %v5484
      %v5486 = vlaneseq
      %v5487 = vshrl.u32 %v5486, 7
      %v5488 = vsub.s32 0, %v5487
      %v5489 = vrot.slane %v5472, %v5488
      %v5490 = vlaneseq
      %v5491 = vshrl.u32 %v5490, 7
      %v5492 = vsub.s32 0, %v5491
      %v5493 = vrot.slane %v5473, %v5492
      %v5494 = vmul.f32 %v5476, %v5481
      %v5495 = vmul.f32 %v5476, %v5485
      %v5496 = vmul.f32 %v5476, %v5489
      %v5497 = vmul.f32 %v5476, %v5493
      %v5498 = vadd.f32 %v5454, %v5494
      %v5499 = vadd.f32 %v5455, %v5495
      %v5500 = vadd.f32 %v5456, %v5496
      %v5501 = vadd.f32 %v5457, %v5497
      %5502 = vset.pattern.permute.xlu0 37
      %5503 = vperm.xlu0 %5502, %v4304
      %v5504 = vpop.permute.xlu0 %5503
      %v5506 = vlaneseq
      %v5507 = vshrl.u32 %v5506, 7
      %v5508 = vsub.s32 1, %v5507
      %v5509 = vrot.slane %v5470, %v5508
      %v5510 = vlaneseq
      %v5511 = vshrl.u32 %v5510, 7
      %v5512 = vsub.s32 1, %v5511
      %v5513 = vrot.slane %v5471, %v5512
      %v5514 = vlaneseq
      %v5515 = vshrl.u32 %v5514, 7
      %v5516 = vsub.s32 1, %v5515
      %v5517 = vrot.slane %v5472, %v5516
      %v5518 = vlaneseq
      %v5519 = vshrl.u32 %v5518, 7
      %v5520 = vsub.s32 1, %v5519
      %v5521 = vrot.slane %v5473, %v5520
      %v5522 = vmul.f32 %v5504, %v5509
      %v5523 = vmul.f32 %v5504, %v5513
      %v5524 = vmul.f32 %v5504, %v5517
      %v5525 = vmul.f32 %v5504, %v5521
      %v5526 = vadd.f32 %v5498, %v5522
      %v5527 = vadd.f32 %v5499, %v5523
      %v5528 = vadd.f32 %v5500, %v5524
      %v5529 = vadd.f32 %v5501, %v5525
      %5530 = vset.pattern.permute.xlu0 38
      %5531 = vperm.xlu0 %5530, %v4304
      %v5532 = vpop.permute.xlu0 %5531
      %v5534 = vlaneseq
      %v5535 = vshrl.u32 %v5534, 7
      %v5536 = vsub.s32 2, %v5535
      %v5537 = vrot.slane %v5470, %v5536
      %v5538 = vlaneseq
      %v5539 = vshrl.u32 %v5538, 7
      %v5540 = vsub.s32 2, %v5539
      %v5541 = vrot.slane %v5471, %v5540
      %v5542 = vlaneseq
      %v5543 = vshrl.u32 %v5542, 7
      %v5544 = vsub.s32 2, %v5543
      %v5545 = vrot.slane %v5472, %v5544
      %v5546 = vlaneseq
      %v5547 = vshrl.u32 %v5546, 7
      %v5548 = vsub.s32 2, %v5547
      %v5549 = vrot.slane %v5473, %v5548
      %v5550 = vmul.f32 %v5532, %v5537
      %v5551 = vmul.f32 %v5532, %v5541
      %v5552 = vmul.f32 %v5532, %v5545
      %v5553 = vmul.f32 %v5532, %v5549
      %v5554 = vadd.f32 %v5526, %v5550
      %v5555 = vadd.f32 %v5527, %v5551
      %v5556 = vadd.f32 %v5528, %v5552
      %v5557 = vadd.f32 %v5529, %v5553
      %5558 = vset.pattern.permute.xlu0 39
      %5559 = vperm.xlu0 %5558, %v4304
      %v5560 = vpop.permute.xlu0 %5559
      %v5562 = vlaneseq
      %v5563 = vshrl.u32 %v5562, 7
      %v5564 = vsub.s32 3, %v5563
      %v5565 = vrot.slane %v5470, %v5564
      %v5566 = vlaneseq
      %v5567 = vshrl.u32 %v5566, 7
      %v5568 = vsub.s32 3, %v5567
      %v5569 = vrot.slane %v5471, %v5568
      %v5570 = vlaneseq
      %v5571 = vshrl.u32 %v5570, 7
      %v5572 = vsub.s32 3, %v5571
      %v5573 = vrot.slane %v5472, %v5572
      %v5574 = vlaneseq
      %v5575 = vshrl.u32 %v5574, 7
      %v5576 = vsub.s32 3, %v5575
      %v5577 = vrot.slane %v5473, %v5576
      %v5578 = vmul.f32 %v5560, %v5565
      %v5579 = vmul.f32 %v5560, %v5569
      %v5580 = vmul.f32 %v5560, %v5573
      %v5581 = vmul.f32 %v5560, %v5577
      %v5582 = vadd.f32 %v5554, %v5578
      %v5583 = vadd.f32 %v5555, %v5579
      %v5584 = vadd.f32 %v5556, %v5580
      %v5585 = vadd.f32 %v5557, %v5581
      %5586 = vrot.lane.b32.xlu0 %v4300, 8
      %v5587 = vpop.permute.xlu0 %5586
      %5588 = vrot.lane.b32.xlu0 %v4301, 8
      %v5589 = vpop.permute.xlu0 %5588
      %5590 = vrot.lane.b32.xlu0 %v4302, 8
      %v5591 = vpop.permute.xlu0 %5590
      %5592 = vrot.lane.b32.xlu0 %v4303, 8
      %v5593 = vpop.permute.xlu0 %5592
      %v5594 = vsel %vm1791, %v5591, %v5593
      %v5595 = vsel %vm1791, %v5589, %v5591
      %v5596 = vsel %vm1791, %v5587, %v5589
      %v5597 = vsel %vm1791, %v5593, %v5587
      %v5598 = vmul.f32 %v5597, %v1802
      %v5599 = vmul.f32 %v5596, %v1806
      %v5600 = vmul.f32 %v5595, %v1810
      %v5601 = vmul.f32 %v5594, %v1814
      %5602 = vset.pattern.permute.xlu0 40
      %5603 = vperm.xlu0 %5602, %v4304
      %v5604 = vpop.permute.xlu0 %5603
      %v5606 = vlaneseq
      %v5607 = vshrl.u32 %v5606, 7
      %v5608 = vsub.s32 0, %v5607
      %v5609 = vrot.slane %v5598, %v5608
      %v5610 = vlaneseq
      %v5611 = vshrl.u32 %v5610, 7
      %v5612 = vsub.s32 0, %v5611
      %v5613 = vrot.slane %v5599, %v5612
      %v5614 = vlaneseq
      %v5615 = vshrl.u32 %v5614, 7
      %v5616 = vsub.s32 0, %v5615
      %v5617 = vrot.slane %v5600, %v5616
      %v5618 = vlaneseq
      %v5619 = vshrl.u32 %v5618, 7
      %v5620 = vsub.s32 0, %v5619
      %v5621 = vrot.slane %v5601, %v5620
      %v5622 = vmul.f32 %v5604, %v5609
      %v5623 = vmul.f32 %v5604, %v5613
      %v5624 = vmul.f32 %v5604, %v5617
      %v5625 = vmul.f32 %v5604, %v5621
      %v5626 = vadd.f32 %v5582, %v5622
      %v5627 = vadd.f32 %v5583, %v5623
      %v5628 = vadd.f32 %v5584, %v5624
      %v5629 = vadd.f32 %v5585, %v5625
      %5630 = vset.pattern.permute.xlu0 41
      %5631 = vperm.xlu0 %5630, %v4304
      %v5632 = vpop.permute.xlu0 %5631
      %v5634 = vlaneseq
      %v5635 = vshrl.u32 %v5634, 7
      %v5636 = vsub.s32 1, %v5635
      %v5637 = vrot.slane %v5598, %v5636
      %v5638 = vlaneseq
      %v5639 = vshrl.u32 %v5638, 7
      %v5640 = vsub.s32 1, %v5639
      %v5641 = vrot.slane %v5599, %v5640
      %v5642 = vlaneseq
      %v5643 = vshrl.u32 %v5642, 7
      %v5644 = vsub.s32 1, %v5643
      %v5645 = vrot.slane %v5600, %v5644
      %v5646 = vlaneseq
      %v5647 = vshrl.u32 %v5646, 7
      %v5648 = vsub.s32 1, %v5647
      %v5649 = vrot.slane %v5601, %v5648
      %v5650 = vmul.f32 %v5632, %v5637
      %v5651 = vmul.f32 %v5632, %v5641
      %v5652 = vmul.f32 %v5632, %v5645
      %v5653 = vmul.f32 %v5632, %v5649
      %v5654 = vadd.f32 %v5626, %v5650
      %v5655 = vadd.f32 %v5627, %v5651
      %v5656 = vadd.f32 %v5628, %v5652
      %v5657 = vadd.f32 %v5629, %v5653
      %5658 = vset.pattern.permute.xlu0 42
      %5659 = vperm.xlu0 %5658, %v4304
      %v5660 = vpop.permute.xlu0 %5659
      %v5662 = vlaneseq
      %v5663 = vshrl.u32 %v5662, 7
      %v5664 = vsub.s32 2, %v5663
      %v5665 = vrot.slane %v5598, %v5664
      %v5666 = vlaneseq
      %v5667 = vshrl.u32 %v5666, 7
      %v5668 = vsub.s32 2, %v5667
      %v5669 = vrot.slane %v5599, %v5668
      %v5670 = vlaneseq
      %v5671 = vshrl.u32 %v5670, 7
      %v5672 = vsub.s32 2, %v5671
      %v5673 = vrot.slane %v5600, %v5672
      %v5674 = vlaneseq
      %v5675 = vshrl.u32 %v5674, 7
      %v5676 = vsub.s32 2, %v5675
      %v5677 = vrot.slane %v5601, %v5676
      %v5678 = vmul.f32 %v5660, %v5665
      %v5679 = vmul.f32 %v5660, %v5669
      %v5680 = vmul.f32 %v5660, %v5673
      %v5681 = vmul.f32 %v5660, %v5677
      %v5682 = vadd.f32 %v5654, %v5678
      %v5683 = vadd.f32 %v5655, %v5679
      %v5684 = vadd.f32 %v5656, %v5680
      %v5685 = vadd.f32 %v5657, %v5681
      %5686 = vset.pattern.permute.xlu0 43
      %5687 = vperm.xlu0 %5686, %v4304
      %v5688 = vpop.permute.xlu0 %5687
      %v5690 = vlaneseq
      %v5691 = vshrl.u32 %v5690, 7
      %v5692 = vsub.s32 3, %v5691
      %v5693 = vrot.slane %v5598, %v5692
      %v5694 = vlaneseq
      %v5695 = vshrl.u32 %v5694, 7
      %v5696 = vsub.s32 3, %v5695
      %v5697 = vrot.slane %v5599, %v5696
      %v5698 = vlaneseq
      %v5699 = vshrl.u32 %v5698, 7
      %v5700 = vsub.s32 3, %v5699
      %v5701 = vrot.slane %v5600, %v5700
      %v5702 = vlaneseq
      %v5703 = vshrl.u32 %v5702, 7
      %v5704 = vsub.s32 3, %v5703
      %v5705 = vrot.slane %v5601, %v5704
      %v5706 = vmul.f32 %v5688, %v5693
      %v5707 = vmul.f32 %v5688, %v5697
      %v5708 = vmul.f32 %v5688, %v5701
      %v5709 = vmul.f32 %v5688, %v5705
      %v5710 = vadd.f32 %v5682, %v5706
      %v5711 = vadd.f32 %v5683, %v5707
      %v5712 = vadd.f32 %v5684, %v5708
      %v5713 = vadd.f32 %v5685, %v5709
      %5714 = vrot.lane.b32.xlu0 %v4300, 7
      %v5715 = vpop.permute.xlu0 %5714
      %5716 = vrot.lane.b32.xlu0 %v4301, 7
      %v5717 = vpop.permute.xlu0 %5716
      %5718 = vrot.lane.b32.xlu0 %v4302, 7
      %v5719 = vpop.permute.xlu0 %5718
      %5720 = vrot.lane.b32.xlu0 %v4303, 7
      %v5721 = vpop.permute.xlu0 %5720
      %v5722 = vsel %vm1943, %v5719, %v5721
      %v5723 = vsel %vm1943, %v5717, %v5719
      %v5724 = vsel %vm1943, %v5715, %v5717
      %v5725 = vsel %vm1943, %v5721, %v5715
      %v5726 = vmul.f32 %v5725, %v1954
      %v5727 = vmul.f32 %v5724, %v1958
      %v5728 = vmul.f32 %v5723, %v1962
      %v5729 = vmul.f32 %v5722, %v1966
      %5730 = vset.pattern.permute.xlu0 44
      %5731 = vperm.xlu0 %5730, %v4304
      %v5732 = vpop.permute.xlu0 %5731
      %v5734 = vlaneseq
      %v5735 = vshrl.u32 %v5734, 7
      %v5736 = vsub.s32 0, %v5735
      %v5737 = vrot.slane %v5726, %v5736
      %v5738 = vlaneseq
      %v5739 = vshrl.u32 %v5738, 7
      %v5740 = vsub.s32 0, %v5739
      %v5741 = vrot.slane %v5727, %v5740
      %v5742 = vlaneseq
      %v5743 = vshrl.u32 %v5742, 7
      %v5744 = vsub.s32 0, %v5743
      %v5745 = vrot.slane %v5728, %v5744
      %v5746 = vlaneseq
      %v5747 = vshrl.u32 %v5746, 7
      %v5748 = vsub.s32 0, %v5747
      %v5749 = vrot.slane %v5729, %v5748
      %v5750 = vmul.f32 %v5732, %v5737
      %v5751 = vmul.f32 %v5732, %v5741
      %v5752 = vmul.f32 %v5732, %v5745
      %v5753 = vmul.f32 %v5732, %v5749
      %v5754 = vadd.f32 %v5710, %v5750
      %v5755 = vadd.f32 %v5711, %v5751
      %v5756 = vadd.f32 %v5712, %v5752
      %v5757 = vadd.f32 %v5713, %v5753
      %5758 = vset.pattern.permute.xlu0 45
      %5759 = vperm.xlu0 %5758, %v4304
      %v5760 = vpop.permute.xlu0 %5759
      %v5762 = vlaneseq
      %v5763 = vshrl.u32 %v5762, 7
      %v5764 = vsub.s32 1, %v5763
      %v5765 = vrot.slane %v5726, %v5764
      %v5766 = vlaneseq
      %v5767 = vshrl.u32 %v5766, 7
      %v5768 = vsub.s32 1, %v5767
      %v5769 = vrot.slane %v5727, %v5768
      %v5770 = vlaneseq
      %v5771 = vshrl.u32 %v5770, 7
      %v5772 = vsub.s32 1, %v5771
      %v5773 = vrot.slane %v5728, %v5772
      %v5774 = vlaneseq
      %v5775 = vshrl.u32 %v5774, 7
      %v5776 = vsub.s32 1, %v5775
      %v5777 = vrot.slane %v5729, %v5776
      %v5778 = vmul.f32 %v5760, %v5765
      %v5779 = vmul.f32 %v5760, %v5769
      %v5780 = vmul.f32 %v5760, %v5773
      %v5781 = vmul.f32 %v5760, %v5777
      %v5782 = vadd.f32 %v5754, %v5778
      %v5783 = vadd.f32 %v5755, %v5779
      %v5784 = vadd.f32 %v5756, %v5780
      %v5785 = vadd.f32 %v5757, %v5781
      %5786 = vset.pattern.permute.xlu0 46
      %5787 = vperm.xlu0 %5786, %v4304
      %v5788 = vpop.permute.xlu0 %5787
      %v5790 = vlaneseq
      %v5791 = vshrl.u32 %v5790, 7
      %v5792 = vsub.s32 2, %v5791
      %v5793 = vrot.slane %v5726, %v5792
      %v5794 = vlaneseq
      %v5795 = vshrl.u32 %v5794, 7
      %v5796 = vsub.s32 2, %v5795
      %v5797 = vrot.slane %v5727, %v5796
      %v5798 = vlaneseq
      %v5799 = vshrl.u32 %v5798, 7
      %v5800 = vsub.s32 2, %v5799
      %v5801 = vrot.slane %v5728, %v5800
      %v5802 = vlaneseq
      %v5803 = vshrl.u32 %v5802, 7
      %v5804 = vsub.s32 2, %v5803
      %v5805 = vrot.slane %v5729, %v5804
      %v5806 = vmul.f32 %v5788, %v5793
      %v5807 = vmul.f32 %v5788, %v5797
      %v5808 = vmul.f32 %v5788, %v5801
      %v5809 = vmul.f32 %v5788, %v5805
      %v5810 = vadd.f32 %v5782, %v5806
      %v5811 = vadd.f32 %v5783, %v5807
      %v5812 = vadd.f32 %v5784, %v5808
      %v5813 = vadd.f32 %v5785, %v5809
      %5814 = vset.pattern.permute.xlu0 47
      %5815 = vperm.xlu0 %5814, %v4304
      %v5816 = vpop.permute.xlu0 %5815
      %v5818 = vlaneseq
      %v5819 = vshrl.u32 %v5818, 7
      %v5820 = vsub.s32 3, %v5819
      %v5821 = vrot.slane %v5726, %v5820
      %v5822 = vlaneseq
      %v5823 = vshrl.u32 %v5822, 7
      %v5824 = vsub.s32 3, %v5823
      %v5825 = vrot.slane %v5727, %v5824
      %v5826 = vlaneseq
      %v5827 = vshrl.u32 %v5826, 7
      %v5828 = vsub.s32 3, %v5827
      %v5829 = vrot.slane %v5728, %v5828
      %v5830 = vlaneseq
      %v5831 = vshrl.u32 %v5830, 7
      %v5832 = vsub.s32 3, %v5831
      %v5833 = vrot.slane %v5729, %v5832
      %v5834 = vmul.f32 %v5816, %v5821
      %v5835 = vmul.f32 %v5816, %v5825
      %v5836 = vmul.f32 %v5816, %v5829
      %v5837 = vmul.f32 %v5816, %v5833
      %v5838 = vadd.f32 %v5810, %v5834
      %v5839 = vadd.f32 %v5811, %v5835
      %v5840 = vadd.f32 %v5812, %v5836
      %v5841 = vadd.f32 %v5813, %v5837
      %5842 = vrot.lane.b32.xlu0 %v4300, 1
      %v5843 = vpop.permute.xlu0 %5842
      %5844 = vrot.lane.b32.xlu0 %v4301, 1
      %v5845 = vpop.permute.xlu0 %5844
      %5846 = vrot.lane.b32.xlu0 %v4302, 1
      %v5847 = vpop.permute.xlu0 %5846
      %5848 = vrot.lane.b32.xlu0 %v4303, 1
      %v5849 = vpop.permute.xlu0 %5848
      %v5850 = vsel %vm2095, %v5847, %v5849
      %v5851 = vsel %vm2095, %v5845, %v5847
      %v5852 = vsel %vm2095, %v5843, %v5845
      %v5853 = vsel %vm2095, %v5849, %v5843
      %v5854 = vmul.f32 %v5853, %v2106
      %v5855 = vmul.f32 %v5852, %v2110
      %v5856 = vmul.f32 %v5851, %v2114
      %v5857 = vmul.f32 %v5850, %v2118
      %5858 = vset.pattern.permute.xlu0 48
      %5859 = vperm.xlu0 %5858, %v4304
      %v5860 = vpop.permute.xlu0 %5859
      %v5862 = vlaneseq
      %v5863 = vshrl.u32 %v5862, 7
      %v5864 = vsub.s32 0, %v5863
      %v5865 = vrot.slane %v5854, %v5864
      %v5866 = vlaneseq
      %v5867 = vshrl.u32 %v5866, 7
      %v5868 = vsub.s32 0, %v5867
      %v5869 = vrot.slane %v5855, %v5868
      %v5870 = vlaneseq
      %v5871 = vshrl.u32 %v5870, 7
      %v5872 = vsub.s32 0, %v5871
      %v5873 = vrot.slane %v5856, %v5872
      %v5874 = vlaneseq
      %v5875 = vshrl.u32 %v5874, 7
      %v5876 = vsub.s32 0, %v5875
      %v5877 = vrot.slane %v5857, %v5876
      %v5878 = vmul.f32 %v5860, %v5865
      %v5879 = vmul.f32 %v5860, %v5869
      %v5880 = vmul.f32 %v5860, %v5873
      %v5881 = vmul.f32 %v5860, %v5877
      %v5882 = vadd.f32 %v5838, %v5878
      %v5883 = vadd.f32 %v5839, %v5879
      %v5884 = vadd.f32 %v5840, %v5880
      %v5885 = vadd.f32 %v5841, %v5881
      %5886 = vset.pattern.permute.xlu0 49
      %5887 = vperm.xlu0 %5886, %v4304
      %v5888 = vpop.permute.xlu0 %5887
      %v5890 = vlaneseq
      %v5891 = vshrl.u32 %v5890, 7
      %v5892 = vsub.s32 1, %v5891
      %v5893 = vrot.slane %v5854, %v5892
      %v5894 = vlaneseq
      %v5895 = vshrl.u32 %v5894, 7
      %v5896 = vsub.s32 1, %v5895
      %v5897 = vrot.slane %v5855, %v5896
      %v5898 = vlaneseq
      %v5899 = vshrl.u32 %v5898, 7
      %v5900 = vsub.s32 1, %v5899
      %v5901 = vrot.slane %v5856, %v5900
      %v5902 = vlaneseq
      %v5903 = vshrl.u32 %v5902, 7
      %v5904 = vsub.s32 1, %v5903
      %v5905 = vrot.slane %v5857, %v5904
      %v5906 = vmul.f32 %v5888, %v5893
      %v5907 = vmul.f32 %v5888, %v5897
      %v5908 = vmul.f32 %v5888, %v5901
      %v5909 = vmul.f32 %v5888, %v5905
      %v5910 = vadd.f32 %v5882, %v5906
      %v5911 = vadd.f32 %v5883, %v5907
      %v5912 = vadd.f32 %v5884, %v5908
      %v5913 = vadd.f32 %v5885, %v5909
      %5914 = vset.pattern.permute.xlu0 50
      %5915 = vperm.xlu0 %5914, %v4304
      %v5916 = vpop.permute.xlu0 %5915
      %v5918 = vlaneseq
      %v5919 = vshrl.u32 %v5918, 7
      %v5920 = vsub.s32 2, %v5919
      %v5921 = vrot.slane %v5854, %v5920
      %v5922 = vlaneseq
      %v5923 = vshrl.u32 %v5922, 7
      %v5924 = vsub.s32 2, %v5923
      %v5925 = vrot.slane %v5855, %v5924
      %v5926 = vlaneseq
      %v5927 = vshrl.u32 %v5926, 7
      %v5928 = vsub.s32 2, %v5927
      %v5929 = vrot.slane %v5856, %v5928
      %v5930 = vlaneseq
      %v5931 = vshrl.u32 %v5930, 7
      %v5932 = vsub.s32 2, %v5931
      %v5933 = vrot.slane %v5857, %v5932
      %v5934 = vmul.f32 %v5916, %v5921
      %v5935 = vmul.f32 %v5916, %v5925
      %v5936 = vmul.f32 %v5916, %v5929
      %v5937 = vmul.f32 %v5916, %v5933
      %v5938 = vadd.f32 %v5910, %v5934
      %v5939 = vadd.f32 %v5911, %v5935
      %v5940 = vadd.f32 %v5912, %v5936
      %v5941 = vadd.f32 %v5913, %v5937
      %5942 = vset.pattern.permute.xlu0 51
      %5943 = vperm.xlu0 %5942, %v4304
      %v5944 = vpop.permute.xlu0 %5943
      %v5946 = vlaneseq
      %v5947 = vshrl.u32 %v5946, 7
      %v5948 = vsub.s32 3, %v5947
      %v5949 = vrot.slane %v5854, %v5948
      %v5950 = vlaneseq
      %v5951 = vshrl.u32 %v5950, 7
      %v5952 = vsub.s32 3, %v5951
      %v5953 = vrot.slane %v5855, %v5952
      %v5954 = vlaneseq
      %v5955 = vshrl.u32 %v5954, 7
      %v5956 = vsub.s32 3, %v5955
      %v5957 = vrot.slane %v5856, %v5956
      %v5958 = vlaneseq
      %v5959 = vshrl.u32 %v5958, 7
      %v5960 = vsub.s32 3, %v5959
      %v5961 = vrot.slane %v5857, %v5960
      %v5962 = vmul.f32 %v5944, %v5949
      %v5963 = vmul.f32 %v5944, %v5953
      %v5964 = vmul.f32 %v5944, %v5957
      %v5965 = vmul.f32 %v5944, %v5961
      %v5966 = vadd.f32 %v5938, %v5962
      %v5967 = vadd.f32 %v5939, %v5963
      %v5968 = vadd.f32 %v5940, %v5964
      %v5969 = vadd.f32 %v5941, %v5965
      %5970 = vset.pattern.permute.xlu0 52
      %5971 = vperm.xlu0 %5970, %v4304
      %v5972 = vpop.permute.xlu0 %5971
      %v5974 = vlaneseq
      %v5975 = vshrl.u32 %v5974, 7
      %v5976 = vsub.s32 0, %v5975
      %v5977 = vrot.slane %v4300, %v5976
      %v5978 = vlaneseq
      %v5979 = vshrl.u32 %v5978, 7
      %v5980 = vsub.s32 0, %v5979
      %v5981 = vrot.slane %v4301, %v5980
      %v5982 = vlaneseq
      %v5983 = vshrl.u32 %v5982, 7
      %v5984 = vsub.s32 0, %v5983
      %v5985 = vrot.slane %v4302, %v5984
      %v5986 = vlaneseq
      %v5987 = vshrl.u32 %v5986, 7
      %v5988 = vsub.s32 0, %v5987
      %v5989 = vrot.slane %v4303, %v5988
      %v5990 = vmul.f32 %v5972, %v5977
      %v5991 = vmul.f32 %v5972, %v5981
      %v5992 = vmul.f32 %v5972, %v5985
      %v5993 = vmul.f32 %v5972, %v5989
      %v5994 = vadd.f32 %v5966, %v5990
      %v5995 = vadd.f32 %v5967, %v5991
      %v5996 = vadd.f32 %v5968, %v5992
      %v5997 = vadd.f32 %v5969, %v5993
      %5998 = vset.pattern.permute.xlu0 53
      %5999 = vperm.xlu0 %5998, %v4304
      %v6000 = vpop.permute.xlu0 %5999
      %v6002 = vlaneseq
      %v6003 = vshrl.u32 %v6002, 7
      %v6004 = vsub.s32 1, %v6003
      %v6005 = vrot.slane %v4300, %v6004
      %v6006 = vlaneseq
      %v6007 = vshrl.u32 %v6006, 7
      %v6008 = vsub.s32 1, %v6007
      %v6009 = vrot.slane %v4301, %v6008
      %v6010 = vlaneseq
      %v6011 = vshrl.u32 %v6010, 7
      %v6012 = vsub.s32 1, %v6011
      %v6013 = vrot.slane %v4302, %v6012
      %v6014 = vlaneseq
      %v6015 = vshrl.u32 %v6014, 7
      %v6016 = vsub.s32 1, %v6015
      %v6017 = vrot.slane %v4303, %v6016
      %v6018 = vmul.f32 %v6000, %v6005
      %v6019 = vmul.f32 %v6000, %v6009
      %v6020 = vmul.f32 %v6000, %v6013
      %v6021 = vmul.f32 %v6000, %v6017
      %v6022 = vadd.f32 %v5994, %v6018
      %v6023 = vadd.f32 %v5995, %v6019
      %v6024 = vadd.f32 %v5996, %v6020
      %v6025 = vadd.f32 %v5997, %v6021
      %6026 = vset.pattern.permute.xlu0 54
      %6027 = vperm.xlu0 %6026, %v4304
      %v6028 = vpop.permute.xlu0 %6027
      %v6030 = vlaneseq
      %v6031 = vshrl.u32 %v6030, 7
      %v6032 = vsub.s32 2, %v6031
      %v6033 = vrot.slane %v4300, %v6032
      %v6034 = vlaneseq
      %v6035 = vshrl.u32 %v6034, 7
      %v6036 = vsub.s32 2, %v6035
      %v6037 = vrot.slane %v4301, %v6036
      %v6038 = vlaneseq
      %v6039 = vshrl.u32 %v6038, 7
      %v6040 = vsub.s32 2, %v6039
      %v6041 = vrot.slane %v4302, %v6040
      %v6042 = vlaneseq
      %v6043 = vshrl.u32 %v6042, 7
      %v6044 = vsub.s32 2, %v6043
      %v6045 = vrot.slane %v4303, %v6044
      %v6046 = vmul.f32 %v6028, %v6033
      %v6047 = vmul.f32 %v6028, %v6037
      %v6048 = vmul.f32 %v6028, %v6041
      %v6049 = vmul.f32 %v6028, %v6045
      %v6050 = vadd.f32 %v6022, %v6046
      %v6051 = vadd.f32 %v6023, %v6047
      %v6052 = vadd.f32 %v6024, %v6048
      %v6053 = vadd.f32 %v6025, %v6049
      %6054 = vset.pattern.permute.xlu0 55
      %6055 = vperm.xlu0 %6054, %v4304
      %v6056 = vpop.permute.xlu0 %6055
      %v6058 = vlaneseq
      %v6059 = vshrl.u32 %v6058, 7
      %v6060 = vsub.s32 3, %v6059
      %v6061 = vrot.slane %v4300, %v6060
      %v6062 = vlaneseq
      %v6063 = vshrl.u32 %v6062, 7
      %v6064 = vsub.s32 3, %v6063
      %v6065 = vrot.slane %v4301, %v6064
      %v6066 = vlaneseq
      %v6067 = vshrl.u32 %v6066, 7
      %v6068 = vsub.s32 3, %v6067
      %v6069 = vrot.slane %v4302, %v6068
      %v6070 = vlaneseq
      %v6071 = vshrl.u32 %v6070, 7
      %v6072 = vsub.s32 3, %v6071
      %v6073 = vrot.slane %v4303, %v6072
      %v6074 = vmul.f32 %v6056, %v6061
      %v6075 = vmul.f32 %v6056, %v6065
      %v6076 = vmul.f32 %v6056, %v6069
      %v6077 = vmul.f32 %v6056, %v6073
      %v6078 = vadd.f32 %v6050, %v6074
      %v6079 = vadd.f32 %v6051, %v6075
      %v6080 = vadd.f32 %v6052, %v6076
      %v6081 = vadd.f32 %v6053, %v6077
      %6082 = vrot.lane.b32.xlu0 %v4300, 127
      %v6083 = vpop.permute.xlu0 %6082
      %6084 = vrot.lane.b32.xlu0 %v4301, 127
      %v6085 = vpop.permute.xlu0 %6084
      %6086 = vrot.lane.b32.xlu0 %v4302, 127
      %v6087 = vpop.permute.xlu0 %6086
      %6088 = vrot.lane.b32.xlu0 %v4303, 127
      %v6089 = vpop.permute.xlu0 %6088
      %v6090 = vsel %vm2439, %v6087, %v6089
      %v6091 = vsel %vm2439, %v6085, %v6087
      %v6092 = vsel %vm2439, %v6083, %v6085
      %v6093 = vsel %vm2439, %v6089, %v6083
      %v6094 = vmul.f32 %v6092, %v2450
      %v6095 = vmul.f32 %v6091, %v2454
      %v6096 = vmul.f32 %v6090, %v2458
      %v6097 = vmul.f32 %v6093, %v2462
      %6098 = vset.pattern.permute.xlu0 56
      %6099 = vperm.xlu0 %6098, %v4304
      %v6100 = vpop.permute.xlu0 %6099
      %v6102 = vlaneseq
      %v6103 = vshrl.u32 %v6102, 7
      %v6104 = vsub.s32 0, %v6103
      %v6105 = vrot.slane %v6094, %v6104
      %v6106 = vlaneseq
      %v6107 = vshrl.u32 %v6106, 7
      %v6108 = vsub.s32 0, %v6107
      %v6109 = vrot.slane %v6095, %v6108
      %v6110 = vlaneseq
      %v6111 = vshrl.u32 %v6110, 7
      %v6112 = vsub.s32 0, %v6111
      %v6113 = vrot.slane %v6096, %v6112
      %v6114 = vlaneseq
      %v6115 = vshrl.u32 %v6114, 7
      %v6116 = vsub.s32 0, %v6115
      %v6117 = vrot.slane %v6097, %v6116
      %v6118 = vmul.f32 %v6100, %v6105
      %v6119 = vmul.f32 %v6100, %v6109
      %v6120 = vmul.f32 %v6100, %v6113
      %v6121 = vmul.f32 %v6100, %v6117
      %v6122 = vadd.f32 %v6078, %v6118
      %v6123 = vadd.f32 %v6079, %v6119
      %v6124 = vadd.f32 %v6080, %v6120
      %v6125 = vadd.f32 %v6081, %v6121
      %6126 = vset.pattern.permute.xlu0 57
      %6127 = vperm.xlu0 %6126, %v4304
      %v6128 = vpop.permute.xlu0 %6127
      %v6130 = vlaneseq
      %v6131 = vshrl.u32 %v6130, 7
      %v6132 = vsub.s32 1, %v6131
      %v6133 = vrot.slane %v6094, %v6132
      %v6134 = vlaneseq
      %v6135 = vshrl.u32 %v6134, 7
      %v6136 = vsub.s32 1, %v6135
      %v6137 = vrot.slane %v6095, %v6136
      %v6138 = vlaneseq
      %v6139 = vshrl.u32 %v6138, 7
      %v6140 = vsub.s32 1, %v6139
      %v6141 = vrot.slane %v6096, %v6140
      %v6142 = vlaneseq
      %v6143 = vshrl.u32 %v6142, 7
      %v6144 = vsub.s32 1, %v6143
      %v6145 = vrot.slane %v6097, %v6144
      %v6146 = vmul.f32 %v6128, %v6133
      %v6147 = vmul.f32 %v6128, %v6137
      %v6148 = vmul.f32 %v6128, %v6141
      %v6149 = vmul.f32 %v6128, %v6145
      %v6150 = vadd.f32 %v6122, %v6146
      %v6151 = vadd.f32 %v6123, %v6147
      %v6152 = vadd.f32 %v6124, %v6148
      %v6153 = vadd.f32 %v6125, %v6149
      %6154 = vset.pattern.permute.xlu0 58
      %6155 = vperm.xlu0 %6154, %v4304
      %v6156 = vpop.permute.xlu0 %6155
      %v6158 = vlaneseq
      %v6159 = vshrl.u32 %v6158, 7
      %v6160 = vsub.s32 2, %v6159
      %v6161 = vrot.slane %v6094, %v6160
      %v6162 = vlaneseq
      %v6163 = vshrl.u32 %v6162, 7
      %v6164 = vsub.s32 2, %v6163
      %v6165 = vrot.slane %v6095, %v6164
      %v6166 = vlaneseq
      %v6167 = vshrl.u32 %v6166, 7
      %v6168 = vsub.s32 2, %v6167
      %v6169 = vrot.slane %v6096, %v6168
      %v6170 = vlaneseq
      %v6171 = vshrl.u32 %v6170, 7
      %v6172 = vsub.s32 2, %v6171
      %v6173 = vrot.slane %v6097, %v6172
      %v6174 = vmul.f32 %v6156, %v6161
      %v6175 = vmul.f32 %v6156, %v6165
      %v6176 = vmul.f32 %v6156, %v6169
      %v6177 = vmul.f32 %v6156, %v6173
      %v6178 = vadd.f32 %v6150, %v6174
      %v6179 = vadd.f32 %v6151, %v6175
      %v6180 = vadd.f32 %v6152, %v6176
      %v6181 = vadd.f32 %v6153, %v6177
      %6182 = vset.pattern.permute.xlu0 59
      %6183 = vperm.xlu0 %6182, %v4304
      %v6184 = vpop.permute.xlu0 %6183
      %v6186 = vlaneseq
      %v6187 = vshrl.u32 %v6186, 7
      %v6188 = vsub.s32 3, %v6187
      %v6189 = vrot.slane %v6094, %v6188
      %v6190 = vlaneseq
      %v6191 = vshrl.u32 %v6190, 7
      %v6192 = vsub.s32 3, %v6191
      %v6193 = vrot.slane %v6095, %v6192
      %v6194 = vlaneseq
      %v6195 = vshrl.u32 %v6194, 7
      %v6196 = vsub.s32 3, %v6195
      %v6197 = vrot.slane %v6096, %v6196
      %v6198 = vlaneseq
      %v6199 = vshrl.u32 %v6198, 7
      %v6200 = vsub.s32 3, %v6199
      %v6201 = vrot.slane %v6097, %v6200
      %v6202 = vmul.f32 %v6184, %v6189
      %v6203 = vmul.f32 %v6184, %v6193
      %v6204 = vmul.f32 %v6184, %v6197
      %v6205 = vmul.f32 %v6184, %v6201
      %v6206 = vadd.f32 %v6178, %v6202
      %v6207 = vadd.f32 %v6179, %v6203
      %v6208 = vadd.f32 %v6180, %v6204
      %v6209 = vadd.f32 %v6181, %v6205
      %6210 = vrot.lane.b32.xlu0 %v4300, 121
      %v6211 = vpop.permute.xlu0 %6210
      %6212 = vrot.lane.b32.xlu0 %v4301, 121
      %v6213 = vpop.permute.xlu0 %6212
      %6214 = vrot.lane.b32.xlu0 %v4302, 121
      %v6215 = vpop.permute.xlu0 %6214
      %6216 = vrot.lane.b32.xlu0 %v4303, 121
      %v6217 = vpop.permute.xlu0 %6216
      %v6218 = vsel %vm2591, %v6215, %v6217
      %v6219 = vsel %vm2591, %v6213, %v6215
      %v6220 = vsel %vm2591, %v6211, %v6213
      %v6221 = vsel %vm2591, %v6217, %v6211
      %v6222 = vmul.f32 %v6220, %v2602
      %v6223 = vmul.f32 %v6219, %v2606
      %v6224 = vmul.f32 %v6218, %v2610
      %v6225 = vmul.f32 %v6221, %v2614
      %6226 = vset.pattern.permute.xlu0 60
      %6227 = vperm.xlu0 %6226, %v4304
      %v6228 = vpop.permute.xlu0 %6227
      %v6230 = vlaneseq
      %v6231 = vshrl.u32 %v6230, 7
      %v6232 = vsub.s32 0, %v6231
      %v6233 = vrot.slane %v6222, %v6232
      %v6234 = vlaneseq
      %v6235 = vshrl.u32 %v6234, 7
      %v6236 = vsub.s32 0, %v6235
      %v6237 = vrot.slane %v6223, %v6236
      %v6238 = vlaneseq
      %v6239 = vshrl.u32 %v6238, 7
      %v6240 = vsub.s32 0, %v6239
      %v6241 = vrot.slane %v6224, %v6240
      %v6242 = vlaneseq
      %v6243 = vshrl.u32 %v6242, 7
      %v6244 = vsub.s32 0, %v6243
      %v6245 = vrot.slane %v6225, %v6244
      %v6246 = vmul.f32 %v6228, %v6233
      %v6247 = vmul.f32 %v6228, %v6237
      %v6248 = vmul.f32 %v6228, %v6241
      %v6249 = vmul.f32 %v6228, %v6245
      %v6250 = vadd.f32 %v6206, %v6246
      %v6251 = vadd.f32 %v6207, %v6247
      %v6252 = vadd.f32 %v6208, %v6248
      %v6253 = vadd.f32 %v6209, %v6249
      %6254 = vset.pattern.permute.xlu0 61
      %6255 = vperm.xlu0 %6254, %v4304
      %v6256 = vpop.permute.xlu0 %6255
      %v6258 = vlaneseq
      %v6259 = vshrl.u32 %v6258, 7
      %v6260 = vsub.s32 1, %v6259
      %v6261 = vrot.slane %v6222, %v6260
      %v6262 = vlaneseq
      %v6263 = vshrl.u32 %v6262, 7
      %v6264 = vsub.s32 1, %v6263
      %v6265 = vrot.slane %v6223, %v6264
      %v6266 = vlaneseq
      %v6267 = vshrl.u32 %v6266, 7
      %v6268 = vsub.s32 1, %v6267
      %v6269 = vrot.slane %v6224, %v6268
      %v6270 = vlaneseq
      %v6271 = vshrl.u32 %v6270, 7
      %v6272 = vsub.s32 1, %v6271
      %v6273 = vrot.slane %v6225, %v6272
      %v6274 = vmul.f32 %v6256, %v6261
      %v6275 = vmul.f32 %v6256, %v6265
      %v6276 = vmul.f32 %v6256, %v6269
      %v6277 = vmul.f32 %v6256, %v6273
      %v6278 = vadd.f32 %v6250, %v6274
      %v6279 = vadd.f32 %v6251, %v6275
      %v6280 = vadd.f32 %v6252, %v6276
      %v6281 = vadd.f32 %v6253, %v6277
      %6282 = vset.pattern.permute.xlu0 62
      %6283 = vperm.xlu0 %6282, %v4304
      %v6284 = vpop.permute.xlu0 %6283
      %v6286 = vlaneseq
      %v6287 = vshrl.u32 %v6286, 7
      %v6288 = vsub.s32 2, %v6287
      %v6289 = vrot.slane %v6222, %v6288
      %v6290 = vlaneseq
      %v6291 = vshrl.u32 %v6290, 7
      %v6292 = vsub.s32 2, %v6291
      %v6293 = vrot.slane %v6223, %v6292
      %v6294 = vlaneseq
      %v6295 = vshrl.u32 %v6294, 7
      %v6296 = vsub.s32 2, %v6295
      %v6297 = vrot.slane %v6224, %v6296
      %v6298 = vlaneseq
      %v6299 = vshrl.u32 %v6298, 7
      %v6300 = vsub.s32 2, %v6299
      %v6301 = vrot.slane %v6225, %v6300
      %v6302 = vmul.f32 %v6284, %v6289
      %v6303 = vmul.f32 %v6284, %v6293
      %v6304 = vmul.f32 %v6284, %v6297
      %v6305 = vmul.f32 %v6284, %v6301
      %v6306 = vadd.f32 %v6278, %v6302
      %v6307 = vadd.f32 %v6279, %v6303
      %v6308 = vadd.f32 %v6280, %v6304
      %v6309 = vadd.f32 %v6281, %v6305
      %6310 = vset.pattern.permute.xlu0 63
      %6311 = vperm.xlu0 %6310, %v4304
      %v6312 = vpop.permute.xlu0 %6311
      %v6314 = vlaneseq
      %v6315 = vshrl.u32 %v6314, 7
      %v6316 = vsub.s32 3, %v6315
      %v6317 = vrot.slane %v6222, %v6316
      %v6318 = vlaneseq
      %v6319 = vshrl.u32 %v6318, 7
      %v6320 = vsub.s32 3, %v6319
      %v6321 = vrot.slane %v6223, %v6320
      %v6322 = vlaneseq
      %v6323 = vshrl.u32 %v6322, 7
      %v6324 = vsub.s32 3, %v6323
      %v6325 = vrot.slane %v6224, %v6324
      %v6326 = vlaneseq
      %v6327 = vshrl.u32 %v6326, 7
      %v6328 = vsub.s32 3, %v6327
      %v6329 = vrot.slane %v6225, %v6328
      %v6330 = vmul.f32 %v6312, %v6317
      %v6331 = vmul.f32 %v6312, %v6321
      %v6332 = vmul.f32 %v6312, %v6325
      %v6333 = vmul.f32 %v6312, %v6329
      %v6334 = vadd.f32 %v6306, %v6330
      %v6335 = vadd.f32 %v6307, %v6331
      %v6336 = vadd.f32 %v6308, %v6332
      %v6337 = vadd.f32 %v6309, %v6333
      %6338 = vrot.lane.b32.xlu0 %v4300, 120
      %v6339 = vpop.permute.xlu0 %6338
      %6340 = vrot.lane.b32.xlu0 %v4301, 120
      %v6341 = vpop.permute.xlu0 %6340
      %6342 = vrot.lane.b32.xlu0 %v4302, 120
      %v6343 = vpop.permute.xlu0 %6342
      %6344 = vrot.lane.b32.xlu0 %v4303, 120
      %v6345 = vpop.permute.xlu0 %6344
      %v6346 = vsel %vm2743, %v6343, %v6345
      %v6347 = vsel %vm2743, %v6341, %v6343
      %v6348 = vsel %vm2743, %v6339, %v6341
      %v6349 = vsel %vm2743, %v6345, %v6339
      %v6350 = vmul.f32 %v6348, %v2754
      %v6351 = vmul.f32 %v6347, %v2758
      %v6352 = vmul.f32 %v6346, %v2762
      %v6353 = vmul.f32 %v6349, %v2766
      %6354 = vset.pattern.permute.xlu0 64
      %6355 = vperm.xlu0 %6354, %v4304
      %v6356 = vpop.permute.xlu0 %6355
      %v6358 = vlaneseq
      %v6359 = vshrl.u32 %v6358, 7
      %v6360 = vsub.s32 0, %v6359
      %v6361 = vrot.slane %v6350, %v6360
      %v6362 = vlaneseq
      %v6363 = vshrl.u32 %v6362, 7
      %v6364 = vsub.s32 0, %v6363
      %v6365 = vrot.slane %v6351, %v6364
      %v6366 = vlaneseq
      %v6367 = vshrl.u32 %v6366, 7
      %v6368 = vsub.s32 0, %v6367
      %v6369 = vrot.slane %v6352, %v6368
      %v6370 = vlaneseq
      %v6371 = vshrl.u32 %v6370, 7
      %v6372 = vsub.s32 0, %v6371
      %v6373 = vrot.slane %v6353, %v6372
      %v6374 = vmul.f32 %v6356, %v6361
      %v6375 = vmul.f32 %v6356, %v6365
      %v6376 = vmul.f32 %v6356, %v6369
      %v6377 = vmul.f32 %v6356, %v6373
      %v6378 = vadd.f32 %v6334, %v6374
      %v6379 = vadd.f32 %v6335, %v6375
      %v6380 = vadd.f32 %v6336, %v6376
      %v6381 = vadd.f32 %v6337, %v6377
      %6382 = vset.pattern.permute.xlu0 65
      %6383 = vperm.xlu0 %6382, %v4304
      %v6384 = vpop.permute.xlu0 %6383
      %v6386 = vlaneseq
      %v6387 = vshrl.u32 %v6386, 7
      %v6388 = vsub.s32 1, %v6387
      %v6389 = vrot.slane %v6350, %v6388
      %v6390 = vlaneseq
      %v6391 = vshrl.u32 %v6390, 7
      %v6392 = vsub.s32 1, %v6391
      %v6393 = vrot.slane %v6351, %v6392
      %v6394 = vlaneseq
      %v6395 = vshrl.u32 %v6394, 7
      %v6396 = vsub.s32 1, %v6395
      %v6397 = vrot.slane %v6352, %v6396
      %v6398 = vlaneseq
      %v6399 = vshrl.u32 %v6398, 7
      %v6400 = vsub.s32 1, %v6399
      %v6401 = vrot.slane %v6353, %v6400
      %v6402 = vmul.f32 %v6384, %v6389
      %v6403 = vmul.f32 %v6384, %v6393
      %v6404 = vmul.f32 %v6384, %v6397
      %v6405 = vmul.f32 %v6384, %v6401
      %v6406 = vadd.f32 %v6378, %v6402
      %v6407 = vadd.f32 %v6379, %v6403
      %v6408 = vadd.f32 %v6380, %v6404
      %v6409 = vadd.f32 %v6381, %v6405
      %6410 = vset.pattern.permute.xlu0 66
      %6411 = vperm.xlu0 %6410, %v4304
      %v6412 = vpop.permute.xlu0 %6411
      %v6414 = vlaneseq
      %v6415 = vshrl.u32 %v6414, 7
      %v6416 = vsub.s32 2, %v6415
      %v6417 = vrot.slane %v6350, %v6416
      %v6418 = vlaneseq
      %v6419 = vshrl.u32 %v6418, 7
      %v6420 = vsub.s32 2, %v6419
      %v6421 = vrot.slane %v6351, %v6420
      %v6422 = vlaneseq
      %v6423 = vshrl.u32 %v6422, 7
      %v6424 = vsub.s32 2, %v6423
      %v6425 = vrot.slane %v6352, %v6424
      %v6426 = vlaneseq
      %v6427 = vshrl.u32 %v6426, 7
      %v6428 = vsub.s32 2, %v6427
      %v6429 = vrot.slane %v6353, %v6428
      %v6430 = vmul.f32 %v6412, %v6417
      %v6431 = vmul.f32 %v6412, %v6421
      %v6432 = vmul.f32 %v6412, %v6425
      %v6433 = vmul.f32 %v6412, %v6429
      %v6434 = vadd.f32 %v6406, %v6430
      %v6435 = vadd.f32 %v6407, %v6431
      %v6436 = vadd.f32 %v6408, %v6432
      %v6437 = vadd.f32 %v6409, %v6433
      %6438 = vset.pattern.permute.xlu0 67
      %6439 = vperm.xlu0 %6438, %v4304
      %v6440 = vpop.permute.xlu0 %6439
      %v6442 = vlaneseq
      %v6443 = vshrl.u32 %v6442, 7
      %v6444 = vsub.s32 3, %v6443
      %v6445 = vrot.slane %v6350, %v6444
      %v6446 = vlaneseq
      %v6447 = vshrl.u32 %v6446, 7
      %v6448 = vsub.s32 3, %v6447
      %v6449 = vrot.slane %v6351, %v6448
      %v6450 = vlaneseq
      %v6451 = vshrl.u32 %v6450, 7
      %v6452 = vsub.s32 3, %v6451
      %v6453 = vrot.slane %v6352, %v6452
      %v6454 = vlaneseq
      %v6455 = vshrl.u32 %v6454, 7
      %v6456 = vsub.s32 3, %v6455
      %v6457 = vrot.slane %v6353, %v6456
      %v6458 = vmul.f32 %v6440, %v6445
      %v6459 = vmul.f32 %v6440, %v6449
      %v6460 = vmul.f32 %v6440, %v6453
      %v6461 = vmul.f32 %v6440, %v6457
      %v6462 = vadd.f32 %v6434, %v6458
      %v6463 = vadd.f32 %v6435, %v6459
      %v6464 = vadd.f32 %v6436, %v6460
      %v6465 = vadd.f32 %v6437, %v6461
      %6466 = vrot.lane.b32.xlu0 %v4300, 119
      %v6467 = vpop.permute.xlu0 %6466
      %6468 = vrot.lane.b32.xlu0 %v4301, 119
      %v6469 = vpop.permute.xlu0 %6468
      %6470 = vrot.lane.b32.xlu0 %v4302, 119
      %v6471 = vpop.permute.xlu0 %6470
      %6472 = vrot.lane.b32.xlu0 %v4303, 119
      %v6473 = vpop.permute.xlu0 %6472
      %v6474 = vsel %vm2895, %v6471, %v6473
      %v6475 = vsel %vm2895, %v6469, %v6471
      %v6476 = vsel %vm2895, %v6467, %v6469
      %v6477 = vsel %vm2895, %v6473, %v6467
      %v6478 = vmul.f32 %v6476, %v2906
      %v6479 = vmul.f32 %v6475, %v2910
      %v6480 = vmul.f32 %v6474, %v2914
      %v6481 = vmul.f32 %v6477, %v2918
      %6482 = vset.pattern.permute.xlu0 68
      %6483 = vperm.xlu0 %6482, %v4304
      %v6484 = vpop.permute.xlu0 %6483
      %v6486 = vlaneseq
      %v6487 = vshrl.u32 %v6486, 7
      %v6488 = vsub.s32 0, %v6487
      %v6489 = vrot.slane %v6478, %v6488
      %v6490 = vlaneseq
      %v6491 = vshrl.u32 %v6490, 7
      %v6492 = vsub.s32 0, %v6491
      %v6493 = vrot.slane %v6479, %v6492
      %v6494 = vlaneseq
      %v6495 = vshrl.u32 %v6494, 7
      %v6496 = vsub.s32 0, %v6495
      %v6497 = vrot.slane %v6480, %v6496
      %v6498 = vlaneseq
      %v6499 = vshrl.u32 %v6498, 7
      %v6500 = vsub.s32 0, %v6499
      %v6501 = vrot.slane %v6481, %v6500
      %v6502 = vmul.f32 %v6484, %v6489
      %v6503 = vmul.f32 %v6484, %v6493
      %v6504 = vmul.f32 %v6484, %v6497
      %v6505 = vmul.f32 %v6484, %v6501
      %v6506 = vadd.f32 %v6462, %v6502
      %v6507 = vadd.f32 %v6463, %v6503
      %v6508 = vadd.f32 %v6464, %v6504
      %v6509 = vadd.f32 %v6465, %v6505
      %6510 = vset.pattern.permute.xlu0 69
      %6511 = vperm.xlu0 %6510, %v4304
      %v6512 = vpop.permute.xlu0 %6511
      %v6514 = vlaneseq
      %v6515 = vshrl.u32 %v6514, 7
      %v6516 = vsub.s32 1, %v6515
      %v6517 = vrot.slane %v6478, %v6516
      %v6518 = vlaneseq
      %v6519 = vshrl.u32 %v6518, 7
      %v6520 = vsub.s32 1, %v6519
      %v6521 = vrot.slane %v6479, %v6520
      %v6522 = vlaneseq
      %v6523 = vshrl.u32 %v6522, 7
      %v6524 = vsub.s32 1, %v6523
      %v6525 = vrot.slane %v6480, %v6524
      %v6526 = vlaneseq
      %v6527 = vshrl.u32 %v6526, 7
      %v6528 = vsub.s32 1, %v6527
      %v6529 = vrot.slane %v6481, %v6528
      %v6530 = vmul.f32 %v6512, %v6517
      %v6531 = vmul.f32 %v6512, %v6521
      %v6532 = vmul.f32 %v6512, %v6525
      %v6533 = vmul.f32 %v6512, %v6529
      %v6534 = vadd.f32 %v6506, %v6530
      %v6535 = vadd.f32 %v6507, %v6531
      %v6536 = vadd.f32 %v6508, %v6532
      %v6537 = vadd.f32 %v6509, %v6533
      %6538 = vset.pattern.permute.xlu0 70
      %6539 = vperm.xlu0 %6538, %v4304
      %v6540 = vpop.permute.xlu0 %6539
      %v6542 = vlaneseq
      %v6543 = vshrl.u32 %v6542, 7
      %v6544 = vsub.s32 2, %v6543
      %v6545 = vrot.slane %v6478, %v6544
      %v6546 = vlaneseq
      %v6547 = vshrl.u32 %v6546, 7
      %v6548 = vsub.s32 2, %v6547
      %v6549 = vrot.slane %v6479, %v6548
      %v6550 = vlaneseq
      %v6551 = vshrl.u32 %v6550, 7
      %v6552 = vsub.s32 2, %v6551
      %v6553 = vrot.slane %v6480, %v6552
      %v6554 = vlaneseq
      %v6555 = vshrl.u32 %v6554, 7
      %v6556 = vsub.s32 2, %v6555
      %v6557 = vrot.slane %v6481, %v6556
      %v6558 = vmul.f32 %v6540, %v6545
      %v6559 = vmul.f32 %v6540, %v6549
      %v6560 = vmul.f32 %v6540, %v6553
      %v6561 = vmul.f32 %v6540, %v6557
      %v6562 = vadd.f32 %v6534, %v6558
      %v6563 = vadd.f32 %v6535, %v6559
      %v6564 = vadd.f32 %v6536, %v6560
      %v6565 = vadd.f32 %v6537, %v6561
      %6566 = vset.pattern.permute.xlu0 71
      %6567 = vperm.xlu0 %6566, %v4304
      %v6568 = vpop.permute.xlu0 %6567
      %v6570 = vlaneseq
      %v6571 = vshrl.u32 %v6570, 7
      %v6572 = vsub.s32 3, %v6571
      %v6573 = vrot.slane %v6478, %v6572
      %v6574 = vlaneseq
      %v6575 = vshrl.u32 %v6574, 7
      %v6576 = vsub.s32 3, %v6575
      %v6577 = vrot.slane %v6479, %v6576
      %v6578 = vlaneseq
      %v6579 = vshrl.u32 %v6578, 7
      %v6580 = vsub.s32 3, %v6579
      %v6581 = vrot.slane %v6480, %v6580
      %v6582 = vlaneseq
      %v6583 = vshrl.u32 %v6582, 7
      %v6584 = vsub.s32 3, %v6583
      %v6585 = vrot.slane %v6481, %v6584
      %v6586 = vmul.f32 %v6568, %v6573
      %v6587 = vmul.f32 %v6568, %v6577
      %v6588 = vmul.f32 %v6568, %v6581
      %v6589 = vmul.f32 %v6568, %v6585
      %v6590 = vadd.f32 %v6562, %v6586
      %v6591 = vadd.f32 %v6563, %v6587
      %v6592 = vadd.f32 %v6564, %v6588
      %v6593 = vadd.f32 %v6565, %v6589
      %v6594 = vmul.f32 %v4315, %v3045
      %v6595 = vmul.f32 %v4314, %v3049
      %v6596 = vmul.f32 %v4313, %v3053
      %v6597 = vmul.f32 %v4316, %v3057
      %6598 = vset.pattern.permute.xlu0 72
      %6599 = vperm.xlu0 %6598, %v4304
      %v6600 = vpop.permute.xlu0 %6599
      %v6602 = vlaneseq
      %v6603 = vshrl.u32 %v6602, 7
      %v6604 = vsub.s32 0, %v6603
      %v6605 = vrot.slane %v6594, %v6604
      %v6606 = vlaneseq
      %v6607 = vshrl.u32 %v6606, 7
      %v6608 = vsub.s32 0, %v6607
      %v6609 = vrot.slane %v6595, %v6608
      %v6610 = vlaneseq
      %v6611 = vshrl.u32 %v6610, 7
      %v6612 = vsub.s32 0, %v6611
      %v6613 = vrot.slane %v6596, %v6612
      %v6614 = vlaneseq
      %v6615 = vshrl.u32 %v6614, 7
      %v6616 = vsub.s32 0, %v6615
      %v6617 = vrot.slane %v6597, %v6616
      %v6618 = vmul.f32 %v6600, %v6605
      %v6619 = vmul.f32 %v6600, %v6609
      %v6620 = vmul.f32 %v6600, %v6613
      %v6621 = vmul.f32 %v6600, %v6617
      %v6622 = vadd.f32 %v6590, %v6618
      %v6623 = vadd.f32 %v6591, %v6619
      %v6624 = vadd.f32 %v6592, %v6620
      %v6625 = vadd.f32 %v6593, %v6621
      %6626 = vset.pattern.permute.xlu0 73
      %6627 = vperm.xlu0 %6626, %v4304
      %v6628 = vpop.permute.xlu0 %6627
      %v6630 = vlaneseq
      %v6631 = vshrl.u32 %v6630, 7
      %v6632 = vsub.s32 1, %v6631
      %v6633 = vrot.slane %v6594, %v6632
      %v6634 = vlaneseq
      %v6635 = vshrl.u32 %v6634, 7
      %v6636 = vsub.s32 1, %v6635
      %v6637 = vrot.slane %v6595, %v6636
      %v6638 = vlaneseq
      %v6639 = vshrl.u32 %v6638, 7
      %v6640 = vsub.s32 1, %v6639
      %v6641 = vrot.slane %v6596, %v6640
      %v6642 = vlaneseq
      %v6643 = vshrl.u32 %v6642, 7
      %v6644 = vsub.s32 1, %v6643
      %v6645 = vrot.slane %v6597, %v6644
      %v6646 = vmul.f32 %v6628, %v6633
      %v6647 = vmul.f32 %v6628, %v6637
      %v6648 = vmul.f32 %v6628, %v6641
      %v6649 = vmul.f32 %v6628, %v6645
      %v6650 = vadd.f32 %v6622, %v6646
      %v6651 = vadd.f32 %v6623, %v6647
      %v6652 = vadd.f32 %v6624, %v6648
      %v6653 = vadd.f32 %v6625, %v6649
      %6654 = vset.pattern.permute.xlu0 74
      %6655 = vperm.xlu0 %6654, %v4304
      %v6656 = vpop.permute.xlu0 %6655
      %v6658 = vlaneseq
      %v6659 = vshrl.u32 %v6658, 7
      %v6660 = vsub.s32 2, %v6659
      %v6661 = vrot.slane %v6594, %v6660
      %v6662 = vlaneseq
      %v6663 = vshrl.u32 %v6662, 7
      %v6664 = vsub.s32 2, %v6663
      %v6665 = vrot.slane %v6595, %v6664
      %v6666 = vlaneseq
      %v6667 = vshrl.u32 %v6666, 7
      %v6668 = vsub.s32 2, %v6667
      %v6669 = vrot.slane %v6596, %v6668
      %v6670 = vlaneseq
      %v6671 = vshrl.u32 %v6670, 7
      %v6672 = vsub.s32 2, %v6671
      %v6673 = vrot.slane %v6597, %v6672
      %v6674 = vmul.f32 %v6656, %v6661
      %v6675 = vmul.f32 %v6656, %v6665
      %v6676 = vmul.f32 %v6656, %v6669
      %v6677 = vmul.f32 %v6656, %v6673
      %v6678 = vadd.f32 %v6650, %v6674
      %v6679 = vadd.f32 %v6651, %v6675
      %v6680 = vadd.f32 %v6652, %v6676
      %v6681 = vadd.f32 %v6653, %v6677
      %6682 = vset.pattern.permute.xlu0 75
      %6683 = vperm.xlu0 %6682, %v4304
      %v6684 = vpop.permute.xlu0 %6683
      %v6686 = vlaneseq
      %v6687 = vshrl.u32 %v6686, 7
      %v6688 = vsub.s32 3, %v6687
      %v6689 = vrot.slane %v6594, %v6688
      %v6690 = vlaneseq
      %v6691 = vshrl.u32 %v6690, 7
      %v6692 = vsub.s32 3, %v6691
      %v6693 = vrot.slane %v6595, %v6692
      %v6694 = vlaneseq
      %v6695 = vshrl.u32 %v6694, 7
      %v6696 = vsub.s32 3, %v6695
      %v6697 = vrot.slane %v6596, %v6696
      %v6698 = vlaneseq
      %v6699 = vshrl.u32 %v6698, 7
      %v6700 = vsub.s32 3, %v6699
      %v6701 = vrot.slane %v6597, %v6700
      %v6702 = vmul.f32 %v6684, %v6689
      %v6703 = vmul.f32 %v6684, %v6693
      %v6704 = vmul.f32 %v6684, %v6697
      %v6705 = vmul.f32 %v6684, %v6701
      %v6706 = vadd.f32 %v6678, %v6702
      %v6707 = vadd.f32 %v6679, %v6703
      %v6708 = vadd.f32 %v6680, %v6704
      %v6709 = vadd.f32 %v6681, %v6705
      %v6710 = vmul.f32 %v4444, %v3184
      %v6711 = vmul.f32 %v4443, %v3188
      %v6712 = vmul.f32 %v4442, %v3192
      %v6713 = vmul.f32 %v4445, %v3196
      %6714 = vset.pattern.permute.xlu0 76
      %6715 = vperm.xlu0 %6714, %v4304
      %v6716 = vpop.permute.xlu0 %6715
      %v6718 = vlaneseq
      %v6719 = vshrl.u32 %v6718, 7
      %v6720 = vsub.s32 0, %v6719
      %v6721 = vrot.slane %v6710, %v6720
      %v6722 = vlaneseq
      %v6723 = vshrl.u32 %v6722, 7
      %v6724 = vsub.s32 0, %v6723
      %v6725 = vrot.slane %v6711, %v6724
      %v6726 = vlaneseq
      %v6727 = vshrl.u32 %v6726, 7
      %v6728 = vsub.s32 0, %v6727
      %v6729 = vrot.slane %v6712, %v6728
      %v6730 = vlaneseq
      %v6731 = vshrl.u32 %v6730, 7
      %v6732 = vsub.s32 0, %v6731
      %v6733 = vrot.slane %v6713, %v6732
      %v6734 = vmul.f32 %v6716, %v6721
      %v6735 = vmul.f32 %v6716, %v6725
      %v6736 = vmul.f32 %v6716, %v6729
      %v6737 = vmul.f32 %v6716, %v6733
      %v6738 = vadd.f32 %v6706, %v6734
      %v6739 = vadd.f32 %v6707, %v6735
      %v6740 = vadd.f32 %v6708, %v6736
      %v6741 = vadd.f32 %v6709, %v6737
      %6742 = vset.pattern.permute.xlu0 77
      %6743 = vperm.xlu0 %6742, %v4304
      %v6744 = vpop.permute.xlu0 %6743
      %v6746 = vlaneseq
      %v6747 = vshrl.u32 %v6746, 7
      %v6748 = vsub.s32 1, %v6747
      %v6749 = vrot.slane %v6710, %v6748
      %v6750 = vlaneseq
      %v6751 = vshrl.u32 %v6750, 7
      %v6752 = vsub.s32 1, %v6751
      %v6753 = vrot.slane %v6711, %v6752
      %v6754 = vlaneseq
      %v6755 = vshrl.u32 %v6754, 7
      %v6756 = vsub.s32 1, %v6755
      %v6757 = vrot.slane %v6712, %v6756
      %v6758 = vlaneseq
      %v6759 = vshrl.u32 %v6758, 7
      %v6760 = vsub.s32 1, %v6759
      %v6761 = vrot.slane %v6713, %v6760
      %v6762 = vmul.f32 %v6744, %v6749
      %v6763 = vmul.f32 %v6744, %v6753
      %v6764 = vmul.f32 %v6744, %v6757
      %v6765 = vmul.f32 %v6744, %v6761
      %v6766 = vadd.f32 %v6738, %v6762
      %v6767 = vadd.f32 %v6739, %v6763
      %v6768 = vadd.f32 %v6740, %v6764
      %v6769 = vadd.f32 %v6741, %v6765
      %6770 = vset.pattern.permute.xlu0 78
      %6771 = vperm.xlu0 %6770, %v4304
      %v6772 = vpop.permute.xlu0 %6771
      %v6774 = vlaneseq
      %v6775 = vshrl.u32 %v6774, 7
      %v6776 = vsub.s32 2, %v6775
      %v6777 = vrot.slane %v6710, %v6776
      %v6778 = vlaneseq
      %v6779 = vshrl.u32 %v6778, 7
      %v6780 = vsub.s32 2, %v6779
      %v6781 = vrot.slane %v6711, %v6780
      %v6782 = vlaneseq
      %v6783 = vshrl.u32 %v6782, 7
      %v6784 = vsub.s32 2, %v6783
      %v6785 = vrot.slane %v6712, %v6784
      %v6786 = vlaneseq
      %v6787 = vshrl.u32 %v6786, 7
      %v6788 = vsub.s32 2, %v6787
      %v6789 = vrot.slane %v6713, %v6788
      %v6790 = vmul.f32 %v6772, %v6777
      %v6791 = vmul.f32 %v6772, %v6781
      %v6792 = vmul.f32 %v6772, %v6785
      %v6793 = vmul.f32 %v6772, %v6789
      %v6794 = vadd.f32 %v6766, %v6790
      %v6795 = vadd.f32 %v6767, %v6791
      %v6796 = vadd.f32 %v6768, %v6792
      %v6797 = vadd.f32 %v6769, %v6793
      %6798 = vset.pattern.permute.xlu0 79
      %6799 = vperm.xlu0 %6798, %v4304
      %v6800 = vpop.permute.xlu0 %6799
      %v6802 = vlaneseq
      %v6803 = vshrl.u32 %v6802, 7
      %v6804 = vsub.s32 3, %v6803
      %v6805 = vrot.slane %v6710, %v6804
      %v6806 = vlaneseq
      %v6807 = vshrl.u32 %v6806, 7
      %v6808 = vsub.s32 3, %v6807
      %v6809 = vrot.slane %v6711, %v6808
      %v6810 = vlaneseq
      %v6811 = vshrl.u32 %v6810, 7
      %v6812 = vsub.s32 3, %v6811
      %v6813 = vrot.slane %v6712, %v6812
      %v6814 = vlaneseq
      %v6815 = vshrl.u32 %v6814, 7
      %v6816 = vsub.s32 3, %v6815
      %v6817 = vrot.slane %v6713, %v6816
      %v6818 = vmul.f32 %v6800, %v6805
      %v6819 = vmul.f32 %v6800, %v6809
      %v6820 = vmul.f32 %v6800, %v6813
      %v6821 = vmul.f32 %v6800, %v6817
      %v6822 = vadd.f32 %v6794, %v6818
      %v6823 = vadd.f32 %v6795, %v6819
      %v6824 = vadd.f32 %v6796, %v6820
      %v6825 = vadd.f32 %v6797, %v6821
      %v6826 = vmul.f32 %v4572, %v3323
      %v6827 = vmul.f32 %v4571, %v3327
      %v6828 = vmul.f32 %v4570, %v3331
      %v6829 = vmul.f32 %v4573, %v3335
      %6830 = vset.pattern.permute.xlu0 80
      %6831 = vperm.xlu0 %6830, %v4304
      %v6832 = vpop.permute.xlu0 %6831
      %v6834 = vlaneseq
      %v6835 = vshrl.u32 %v6834, 7
      %v6836 = vsub.s32 0, %v6835
      %v6837 = vrot.slane %v6826, %v6836
      %v6838 = vlaneseq
      %v6839 = vshrl.u32 %v6838, 7
      %v6840 = vsub.s32 0, %v6839
      %v6841 = vrot.slane %v6827, %v6840
      %v6842 = vlaneseq
      %v6843 = vshrl.u32 %v6842, 7
      %v6844 = vsub.s32 0, %v6843
      %v6845 = vrot.slane %v6828, %v6844
      %v6846 = vlaneseq
      %v6847 = vshrl.u32 %v6846, 7
      %v6848 = vsub.s32 0, %v6847
      %v6849 = vrot.slane %v6829, %v6848
      %v6850 = vmul.f32 %v6832, %v6837
      %v6851 = vmul.f32 %v6832, %v6841
      %v6852 = vmul.f32 %v6832, %v6845
      %v6853 = vmul.f32 %v6832, %v6849
      %v6854 = vadd.f32 %v6822, %v6850
      %v6855 = vadd.f32 %v6823, %v6851
      %v6856 = vadd.f32 %v6824, %v6852
      %v6857 = vadd.f32 %v6825, %v6853
      %6858 = vset.pattern.permute.xlu0 81
      %6859 = vperm.xlu0 %6858, %v4304
      %v6860 = vpop.permute.xlu0 %6859
      %v6862 = vlaneseq
      %v6863 = vshrl.u32 %v6862, 7
      %v6864 = vsub.s32 1, %v6863
      %v6865 = vrot.slane %v6826, %v6864
      %v6866 = vlaneseq
      %v6867 = vshrl.u32 %v6866, 7
      %v6868 = vsub.s32 1, %v6867
      %v6869 = vrot.slane %v6827, %v6868
      %v6870 = vlaneseq
      %v6871 = vshrl.u32 %v6870, 7
      %v6872 = vsub.s32 1, %v6871
      %v6873 = vrot.slane %v6828, %v6872
      %v6874 = vlaneseq
      %v6875 = vshrl.u32 %v6874, 7
      %v6876 = vsub.s32 1, %v6875
      %v6877 = vrot.slane %v6829, %v6876
      %v6878 = vmul.f32 %v6860, %v6865
      %v6879 = vmul.f32 %v6860, %v6869
      %v6880 = vmul.f32 %v6860, %v6873
      %v6881 = vmul.f32 %v6860, %v6877
      %v6882 = vadd.f32 %v6854, %v6878
      %v6883 = vadd.f32 %v6855, %v6879
      %v6884 = vadd.f32 %v6856, %v6880
      %v6885 = vadd.f32 %v6857, %v6881
      %6886 = vset.pattern.permute.xlu0 82
      %6887 = vperm.xlu0 %6886, %v4304
      %v6888 = vpop.permute.xlu0 %6887
      %v6890 = vlaneseq
      %v6891 = vshrl.u32 %v6890, 7
      %v6892 = vsub.s32 2, %v6891
      %v6893 = vrot.slane %v6826, %v6892
      %v6894 = vlaneseq
      %v6895 = vshrl.u32 %v6894, 7
      %v6896 = vsub.s32 2, %v6895
      %v6897 = vrot.slane %v6827, %v6896
      %v6898 = vlaneseq
      %v6899 = vshrl.u32 %v6898, 7
      %v6900 = vsub.s32 2, %v6899
      %v6901 = vrot.slane %v6828, %v6900
      %v6902 = vlaneseq
      %v6903 = vshrl.u32 %v6902, 7
      %v6904 = vsub.s32 2, %v6903
      %v6905 = vrot.slane %v6829, %v6904
      %v6906 = vmul.f32 %v6888, %v6893
      %v6907 = vmul.f32 %v6888, %v6897
      %v6908 = vmul.f32 %v6888, %v6901
      %v6909 = vmul.f32 %v6888, %v6905
      %v6910 = vadd.f32 %v6882, %v6906
      %v6911 = vadd.f32 %v6883, %v6907
      %v6912 = vadd.f32 %v6884, %v6908
      %v6913 = vadd.f32 %v6885, %v6909
      %6914 = vset.pattern.permute.xlu0 83
      %6915 = vperm.xlu0 %6914, %v4304
      %v6916 = vpop.permute.xlu0 %6915
      %v6918 = vlaneseq
      %v6919 = vshrl.u32 %v6918, 7
      %v6920 = vsub.s32 3, %v6919
      %v6921 = vrot.slane %v6826, %v6920
      %v6922 = vlaneseq
      %v6923 = vshrl.u32 %v6922, 7
      %v6924 = vsub.s32 3, %v6923
      %v6925 = vrot.slane %v6827, %v6924
      %v6926 = vlaneseq
      %v6927 = vshrl.u32 %v6926, 7
      %v6928 = vsub.s32 3, %v6927
      %v6929 = vrot.slane %v6828, %v6928
      %v6930 = vlaneseq
      %v6931 = vshrl.u32 %v6930, 7
      %v6932 = vsub.s32 3, %v6931
      %v6933 = vrot.slane %v6829, %v6932
      %v6934 = vmul.f32 %v6916, %v6921
      %v6935 = vmul.f32 %v6916, %v6925
      %v6936 = vmul.f32 %v6916, %v6929
      %v6937 = vmul.f32 %v6916, %v6933
      %v6938 = vadd.f32 %v6910, %v6934
      %v6939 = vadd.f32 %v6911, %v6935
      %v6940 = vadd.f32 %v6912, %v6936
      %v6941 = vadd.f32 %v6913, %v6937
      %v6942 = vmul.f32 %v4700, %v3462
      %v6943 = vmul.f32 %v4699, %v3466
      %v6944 = vmul.f32 %v4698, %v3470
      %v6945 = vmul.f32 %v4701, %v3474
      %6946 = vset.pattern.permute.xlu0 84
      %6947 = vperm.xlu0 %6946, %v4304
      %v6948 = vpop.permute.xlu0 %6947
      %v6950 = vlaneseq
      %v6951 = vshrl.u32 %v6950, 7
      %v6952 = vsub.s32 0, %v6951
      %v6953 = vrot.slane %v6942, %v6952
      %v6954 = vlaneseq
      %v6955 = vshrl.u32 %v6954, 7
      %v6956 = vsub.s32 0, %v6955
      %v6957 = vrot.slane %v6943, %v6956
      %v6958 = vlaneseq
      %v6959 = vshrl.u32 %v6958, 7
      %v6960 = vsub.s32 0, %v6959
      %v6961 = vrot.slane %v6944, %v6960
      %v6962 = vlaneseq
      %v6963 = vshrl.u32 %v6962, 7
      %v6964 = vsub.s32 0, %v6963
      %v6965 = vrot.slane %v6945, %v6964
      %v6966 = vmul.f32 %v6948, %v6953
      %v6967 = vmul.f32 %v6948, %v6957
      %v6968 = vmul.f32 %v6948, %v6961
      %v6969 = vmul.f32 %v6948, %v6965
      %v6970 = vadd.f32 %v6938, %v6966
      %v6971 = vadd.f32 %v6939, %v6967
      %v6972 = vadd.f32 %v6940, %v6968
      %v6973 = vadd.f32 %v6941, %v6969
      %6974 = vset.pattern.permute.xlu0 85
      %6975 = vperm.xlu0 %6974, %v4304
      %v6976 = vpop.permute.xlu0 %6975
      %v6978 = vlaneseq
      %v6979 = vshrl.u32 %v6978, 7
      %v6980 = vsub.s32 1, %v6979
      %v6981 = vrot.slane %v6942, %v6980
      %v6982 = vlaneseq
      %v6983 = vshrl.u32 %v6982, 7
      %v6984 = vsub.s32 1, %v6983
      %v6985 = vrot.slane %v6943, %v6984
      %v6986 = vlaneseq
      %v6987 = vshrl.u32 %v6986, 7
      %v6988 = vsub.s32 1, %v6987
      %v6989 = vrot.slane %v6944, %v6988
      %v6990 = vlaneseq
      %v6991 = vshrl.u32 %v6990, 7
      %v6992 = vsub.s32 1, %v6991
      %v6993 = vrot.slane %v6945, %v6992
      %v6994 = vmul.f32 %v6976, %v6981
      %v6995 = vmul.f32 %v6976, %v6985
      %v6996 = vmul.f32 %v6976, %v6989
      %v6997 = vmul.f32 %v6976, %v6993
      %v6998 = vadd.f32 %v6970, %v6994
      %v6999 = vadd.f32 %v6971, %v6995
      %v7000 = vadd.f32 %v6972, %v6996
      %v7001 = vadd.f32 %v6973, %v6997
      %7002 = vset.pattern.permute.xlu0 86
      %7003 = vperm.xlu0 %7002, %v4304
      %v7004 = vpop.permute.xlu0 %7003
      %v7006 = vlaneseq
      %v7007 = vshrl.u32 %v7006, 7
      %v7008 = vsub.s32 2, %v7007
      %v7009 = vrot.slane %v6942, %v7008
      %v7010 = vlaneseq
      %v7011 = vshrl.u32 %v7010, 7
      %v7012 = vsub.s32 2, %v7011
      %v7013 = vrot.slane %v6943, %v7012
      %v7014 = vlaneseq
      %v7015 = vshrl.u32 %v7014, 7
      %v7016 = vsub.s32 2, %v7015
      %v7017 = vrot.slane %v6944, %v7016
      %v7018 = vlaneseq
      %v7019 = vshrl.u32 %v7018, 7
      %v7020 = vsub.s32 2, %v7019
      %v7021 = vrot.slane %v6945, %v7020
      %v7022 = vmul.f32 %v7004, %v7009
      %v7023 = vmul.f32 %v7004, %v7013
      %v7024 = vmul.f32 %v7004, %v7017
      %v7025 = vmul.f32 %v7004, %v7021
      %v7026 = vadd.f32 %v6998, %v7022
      %v7027 = vadd.f32 %v6999, %v7023
      %v7028 = vadd.f32 %v7000, %v7024
      %v7029 = vadd.f32 %v7001, %v7025
      %7030 = vset.pattern.permute.xlu0 87
      %7031 = vperm.xlu0 %7030, %v4304
      %v7032 = vpop.permute.xlu0 %7031
      %v7034 = vlaneseq
      %v7035 = vshrl.u32 %v7034, 7
      %v7036 = vsub.s32 3, %v7035
      %v7037 = vrot.slane %v6942, %v7036
      %v7038 = vlaneseq
      %v7039 = vshrl.u32 %v7038, 7
      %v7040 = vsub.s32 3, %v7039
      %v7041 = vrot.slane %v6943, %v7040
      %v7042 = vlaneseq
      %v7043 = vshrl.u32 %v7042, 7
      %v7044 = vsub.s32 3, %v7043
      %v7045 = vrot.slane %v6944, %v7044
      %v7046 = vlaneseq
      %v7047 = vshrl.u32 %v7046, 7
      %v7048 = vsub.s32 3, %v7047
      %v7049 = vrot.slane %v6945, %v7048
      %v7050 = vmul.f32 %v7032, %v7037
      %v7051 = vmul.f32 %v7032, %v7041
      %v7052 = vmul.f32 %v7032, %v7045
      %v7053 = vmul.f32 %v7032, %v7049
      %v7054 = vadd.f32 %v7026, %v7050
      %v7055 = vadd.f32 %v7027, %v7051
      %v7056 = vadd.f32 %v7028, %v7052
      %v7057 = vadd.f32 %v7029, %v7053
      %v7058 = vmul.f32 %v4828, %v3601
      %v7059 = vmul.f32 %v4827, %v3605
      %v7060 = vmul.f32 %v4826, %v3609
      %v7061 = vmul.f32 %v4829, %v3613
      %7062 = vset.pattern.permute.xlu0 88
      %7063 = vperm.xlu0 %7062, %v4304
      %v7064 = vpop.permute.xlu0 %7063
      %v7066 = vlaneseq
      %v7067 = vshrl.u32 %v7066, 7
      %v7068 = vsub.s32 0, %v7067
      %v7069 = vrot.slane %v7058, %v7068
      %v7070 = vlaneseq
      %v7071 = vshrl.u32 %v7070, 7
      %v7072 = vsub.s32 0, %v7071
      %v7073 = vrot.slane %v7059, %v7072
      %v7074 = vlaneseq
      %v7075 = vshrl.u32 %v7074, 7
      %v7076 = vsub.s32 0, %v7075
      %v7077 = vrot.slane %v7060, %v7076
      %v7078 = vlaneseq
      %v7079 = vshrl.u32 %v7078, 7
      %v7080 = vsub.s32 0, %v7079
      %v7081 = vrot.slane %v7061, %v7080
      %v7082 = vmul.f32 %v7064, %v7069
      %v7083 = vmul.f32 %v7064, %v7073
      %v7084 = vmul.f32 %v7064, %v7077
      %v7085 = vmul.f32 %v7064, %v7081
      %v7086 = vadd.f32 %v7054, %v7082
      %v7087 = vadd.f32 %v7055, %v7083
      %v7088 = vadd.f32 %v7056, %v7084
      %v7089 = vadd.f32 %v7057, %v7085
      %7090 = vset.pattern.permute.xlu0 89
      %7091 = vperm.xlu0 %7090, %v4304
      %v7092 = vpop.permute.xlu0 %7091
      %v7094 = vlaneseq
      %v7095 = vshrl.u32 %v7094, 7
      %v7096 = vsub.s32 1, %v7095
      %v7097 = vrot.slane %v7058, %v7096
      %v7098 = vlaneseq
      %v7099 = vshrl.u32 %v7098, 7
      %v7100 = vsub.s32 1, %v7099
      %v7101 = vrot.slane %v7059, %v7100
      %v7102 = vlaneseq
      %v7103 = vshrl.u32 %v7102, 7
      %v7104 = vsub.s32 1, %v7103
      %v7105 = vrot.slane %v7060, %v7104
      %v7106 = vlaneseq
      %v7107 = vshrl.u32 %v7106, 7
      %v7108 = vsub.s32 1, %v7107
      %v7109 = vrot.slane %v7061, %v7108
      %v7110 = vmul.f32 %v7092, %v7097
      %v7111 = vmul.f32 %v7092, %v7101
      %v7112 = vmul.f32 %v7092, %v7105
      %v7113 = vmul.f32 %v7092, %v7109
      %v7114 = vadd.f32 %v7086, %v7110
      %v7115 = vadd.f32 %v7087, %v7111
      %v7116 = vadd.f32 %v7088, %v7112
      %v7117 = vadd.f32 %v7089, %v7113
      %7118 = vset.pattern.permute.xlu0 90
      %7119 = vperm.xlu0 %7118, %v4304
      %v7120 = vpop.permute.xlu0 %7119
      %v7122 = vlaneseq
      %v7123 = vshrl.u32 %v7122, 7
      %v7124 = vsub.s32 2, %v7123
      %v7125 = vrot.slane %v7058, %v7124
      %v7126 = vlaneseq
      %v7127 = vshrl.u32 %v7126, 7
      %v7128 = vsub.s32 2, %v7127
      %v7129 = vrot.slane %v7059, %v7128
      %v7130 = vlaneseq
      %v7131 = vshrl.u32 %v7130, 7
      %v7132 = vsub.s32 2, %v7131
      %v7133 = vrot.slane %v7060, %v7132
      %v7134 = vlaneseq
      %v7135 = vshrl.u32 %v7134, 7
      %v7136 = vsub.s32 2, %v7135
      %v7137 = vrot.slane %v7061, %v7136
      %v7138 = vmul.f32 %v7120, %v7125
      %v7139 = vmul.f32 %v7120, %v7129
      %v7140 = vmul.f32 %v7120, %v7133
      %v7141 = vmul.f32 %v7120, %v7137
      %v7142 = vadd.f32 %v7114, %v7138
      %v7143 = vadd.f32 %v7115, %v7139
      %v7144 = vadd.f32 %v7116, %v7140
      %v7145 = vadd.f32 %v7117, %v7141
      %7146 = vset.pattern.permute.xlu0 91
      %7147 = vperm.xlu0 %7146, %v4304
      %v7148 = vpop.permute.xlu0 %7147
      %v7150 = vlaneseq
      %v7151 = vshrl.u32 %v7150, 7
      %v7152 = vsub.s32 3, %v7151
      %v7153 = vrot.slane %v7058, %v7152
      %v7154 = vlaneseq
      %v7155 = vshrl.u32 %v7154, 7
      %v7156 = vsub.s32 3, %v7155
      %v7157 = vrot.slane %v7059, %v7156
      %v7158 = vlaneseq
      %v7159 = vshrl.u32 %v7158, 7
      %v7160 = vsub.s32 3, %v7159
      %v7161 = vrot.slane %v7060, %v7160
      %v7162 = vlaneseq
      %v7163 = vshrl.u32 %v7162, 7
      %v7164 = vsub.s32 3, %v7163
      %v7165 = vrot.slane %v7061, %v7164
      %v7166 = vmul.f32 %v7148, %v7153
      %v7167 = vmul.f32 %v7148, %v7157
      %v7168 = vmul.f32 %v7148, %v7161
      %v7169 = vmul.f32 %v7148, %v7165
      %v7170 = vadd.f32 %v7142, %v7166
      %v7171 = vadd.f32 %v7143, %v7167
      %v7172 = vadd.f32 %v7144, %v7168
      %v7173 = vadd.f32 %v7145, %v7169
      %v7174 = vmul.f32 %v4956, %v3740
      %v7175 = vmul.f32 %v4955, %v3744
      %v7176 = vmul.f32 %v4954, %v3748
      %v7177 = vmul.f32 %v4957, %v3752
      %7178 = vset.pattern.permute.xlu0 92
      %7179 = vperm.xlu0 %7178, %v4304
      %v7180 = vpop.permute.xlu0 %7179
      %v7182 = vlaneseq
      %v7183 = vshrl.u32 %v7182, 7
      %v7184 = vsub.s32 0, %v7183
      %v7185 = vrot.slane %v7174, %v7184
      %v7186 = vlaneseq
      %v7187 = vshrl.u32 %v7186, 7
      %v7188 = vsub.s32 0, %v7187
      %v7189 = vrot.slane %v7175, %v7188
      %v7190 = vlaneseq
      %v7191 = vshrl.u32 %v7190, 7
      %v7192 = vsub.s32 0, %v7191
      %v7193 = vrot.slane %v7176, %v7192
      %v7194 = vlaneseq
      %v7195 = vshrl.u32 %v7194, 7
      %v7196 = vsub.s32 0, %v7195
      %v7197 = vrot.slane %v7177, %v7196
      %v7198 = vmul.f32 %v7180, %v7185
      %v7199 = vmul.f32 %v7180, %v7189
      %v7200 = vmul.f32 %v7180, %v7193
      %v7201 = vmul.f32 %v7180, %v7197
      %v7202 = vadd.f32 %v7170, %v7198
      %v7203 = vadd.f32 %v7171, %v7199
      %v7204 = vadd.f32 %v7172, %v7200
      %v7205 = vadd.f32 %v7173, %v7201
      %7206 = vset.pattern.permute.xlu0 93
      %7207 = vperm.xlu0 %7206, %v4304
      %v7208 = vpop.permute.xlu0 %7207
      %v7210 = vlaneseq
      %v7211 = vshrl.u32 %v7210, 7
      %v7212 = vsub.s32 1, %v7211
      %v7213 = vrot.slane %v7174, %v7212
      %v7214 = vlaneseq
      %v7215 = vshrl.u32 %v7214, 7
      %v7216 = vsub.s32 1, %v7215
      %v7217 = vrot.slane %v7175, %v7216
      %v7218 = vlaneseq
      %v7219 = vshrl.u32 %v7218, 7
      %v7220 = vsub.s32 1, %v7219
      %v7221 = vrot.slane %v7176, %v7220
      %v7222 = vlaneseq
      %v7223 = vshrl.u32 %v7222, 7
      %v7224 = vsub.s32 1, %v7223
      %v7225 = vrot.slane %v7177, %v7224
      %v7226 = vmul.f32 %v7208, %v7213
      %v7227 = vmul.f32 %v7208, %v7217
      %v7228 = vmul.f32 %v7208, %v7221
      %v7229 = vmul.f32 %v7208, %v7225
      %v7230 = vadd.f32 %v7202, %v7226
      %v7231 = vadd.f32 %v7203, %v7227
      %v7232 = vadd.f32 %v7204, %v7228
      %v7233 = vadd.f32 %v7205, %v7229
      %7234 = vset.pattern.permute.xlu0 94
      %7235 = vperm.xlu0 %7234, %v4304
      %v7236 = vpop.permute.xlu0 %7235
      %v7238 = vlaneseq
      %v7239 = vshrl.u32 %v7238, 7
      %v7240 = vsub.s32 2, %v7239
      %v7241 = vrot.slane %v7174, %v7240
      %v7242 = vlaneseq
      %v7243 = vshrl.u32 %v7242, 7
      %v7244 = vsub.s32 2, %v7243
      %v7245 = vrot.slane %v7175, %v7244
      %v7246 = vlaneseq
      %v7247 = vshrl.u32 %v7246, 7
      %v7248 = vsub.s32 2, %v7247
      %v7249 = vrot.slane %v7176, %v7248
      %v7250 = vlaneseq
      %v7251 = vshrl.u32 %v7250, 7
      %v7252 = vsub.s32 2, %v7251
      %v7253 = vrot.slane %v7177, %v7252
      %v7254 = vmul.f32 %v7236, %v7241
      %v7255 = vmul.f32 %v7236, %v7245
      %v7256 = vmul.f32 %v7236, %v7249
      %v7257 = vmul.f32 %v7236, %v7253
      %v7258 = vadd.f32 %v7230, %v7254
      %v7259 = vadd.f32 %v7231, %v7255
      %v7260 = vadd.f32 %v7232, %v7256
      %v7261 = vadd.f32 %v7233, %v7257
      %7262 = vset.pattern.permute.xlu0 95
      %7263 = vperm.xlu0 %7262, %v4304
      %v7264 = vpop.permute.xlu0 %7263
      %v7266 = vlaneseq
      %v7267 = vshrl.u32 %v7266, 7
      %v7268 = vsub.s32 3, %v7267
      %v7269 = vrot.slane %v7174, %v7268
      %v7270 = vlaneseq
      %v7271 = vshrl.u32 %v7270, 7
      %v7272 = vsub.s32 3, %v7271
      %v7273 = vrot.slane %v7175, %v7272
      %v7274 = vlaneseq
      %v7275 = vshrl.u32 %v7274, 7
      %v7276 = vsub.s32 3, %v7275
      %v7277 = vrot.slane %v7176, %v7276
      %v7278 = vlaneseq
      %v7279 = vshrl.u32 %v7278, 7
      %v7280 = vsub.s32 3, %v7279
      %v7281 = vrot.slane %v7177, %v7280
      %v7282 = vmul.f32 %v7264, %v7269
      %v7283 = vmul.f32 %v7264, %v7273
      %v7284 = vmul.f32 %v7264, %v7277
      %v7285 = vmul.f32 %v7264, %v7281
      %v7286 = vadd.f32 %v7258, %v7282
      %v7287 = vadd.f32 %v7259, %v7283
      %v7288 = vadd.f32 %v7260, %v7284
      %v7289 = vadd.f32 %v7261, %v7285
      %v7290 = vmul.f32 %v5084, %v3879
      %v7291 = vmul.f32 %v5083, %v3883
      %v7292 = vmul.f32 %v5082, %v3887
      %v7293 = vmul.f32 %v5085, %v3891
      %7294 = vset.pattern.permute.xlu0 96
      %7295 = vperm.xlu0 %7294, %v4304
      %v7296 = vpop.permute.xlu0 %7295
      %v7298 = vlaneseq
      %v7299 = vshrl.u32 %v7298, 7
      %v7300 = vsub.s32 0, %v7299
      %v7301 = vrot.slane %v7290, %v7300
      %v7302 = vlaneseq
      %v7303 = vshrl.u32 %v7302, 7
      %v7304 = vsub.s32 0, %v7303
      %v7305 = vrot.slane %v7291, %v7304
      %v7306 = vlaneseq
      %v7307 = vshrl.u32 %v7306, 7
      %v7308 = vsub.s32 0, %v7307
      %v7309 = vrot.slane %v7292, %v7308
      %v7310 = vlaneseq
      %v7311 = vshrl.u32 %v7310, 7
      %v7312 = vsub.s32 0, %v7311
      %v7313 = vrot.slane %v7293, %v7312
      %v7314 = vmul.f32 %v7296, %v7301
      %v7315 = vmul.f32 %v7296, %v7305
      %v7316 = vmul.f32 %v7296, %v7309
      %v7317 = vmul.f32 %v7296, %v7313
      %v7318 = vadd.f32 %v7286, %v7314
      %v7319 = vadd.f32 %v7287, %v7315
      %v7320 = vadd.f32 %v7288, %v7316
      %v7321 = vadd.f32 %v7289, %v7317
      %7322 = vset.pattern.permute.xlu0 97
      %7323 = vperm.xlu0 %7322, %v4304
      %v7324 = vpop.permute.xlu0 %7323
      %v7326 = vlaneseq
      %v7327 = vshrl.u32 %v7326, 7
      %v7328 = vsub.s32 1, %v7327
      %v7329 = vrot.slane %v7290, %v7328
      %v7330 = vlaneseq
      %v7331 = vshrl.u32 %v7330, 7
      %v7332 = vsub.s32 1, %v7331
      %v7333 = vrot.slane %v7291, %v7332
      %v7334 = vlaneseq
      %v7335 = vshrl.u32 %v7334, 7
      %v7336 = vsub.s32 1, %v7335
      %v7337 = vrot.slane %v7292, %v7336
      %v7338 = vlaneseq
      %v7339 = vshrl.u32 %v7338, 7
      %v7340 = vsub.s32 1, %v7339
      %v7341 = vrot.slane %v7293, %v7340
      %v7342 = vmul.f32 %v7324, %v7329
      %v7343 = vmul.f32 %v7324, %v7333
      %v7344 = vmul.f32 %v7324, %v7337
      %v7345 = vmul.f32 %v7324, %v7341
      %v7346 = vadd.f32 %v7318, %v7342
      %v7347 = vadd.f32 %v7319, %v7343
      %v7348 = vadd.f32 %v7320, %v7344
      %v7349 = vadd.f32 %v7321, %v7345
      %7350 = vset.pattern.permute.xlu0 98
      %7351 = vperm.xlu0 %7350, %v4304
      %v7352 = vpop.permute.xlu0 %7351
      %v7354 = vlaneseq
      %v7355 = vshrl.u32 %v7354, 7
      %v7356 = vsub.s32 2, %v7355
      %v7357 = vrot.slane %v7290, %v7356
      %v7358 = vlaneseq
      %v7359 = vshrl.u32 %v7358, 7
      %v7360 = vsub.s32 2, %v7359
      %v7361 = vrot.slane %v7291, %v7360
      %v7362 = vlaneseq
      %v7363 = vshrl.u32 %v7362, 7
      %v7364 = vsub.s32 2, %v7363
      %v7365 = vrot.slane %v7292, %v7364
      %v7366 = vlaneseq
      %v7367 = vshrl.u32 %v7366, 7
      %v7368 = vsub.s32 2, %v7367
      %v7369 = vrot.slane %v7293, %v7368
      %v7370 = vmul.f32 %v7352, %v7357
      %v7371 = vmul.f32 %v7352, %v7361
      %v7372 = vmul.f32 %v7352, %v7365
      %v7373 = vmul.f32 %v7352, %v7369
      %v7374 = vadd.f32 %v7346, %v7370
      %v7375 = vadd.f32 %v7347, %v7371
      %v7376 = vadd.f32 %v7348, %v7372
      %v7377 = vadd.f32 %v7349, %v7373
      %7378 = vset.pattern.permute.xlu0 99
      %7379 = vperm.xlu0 %7378, %v4304
      %v7380 = vpop.permute.xlu0 %7379
      %v7382 = vlaneseq
      %v7383 = vshrl.u32 %v7382, 7
      %v7384 = vsub.s32 3, %v7383
      %v7385 = vrot.slane %v7290, %v7384
      %v7386 = vlaneseq
      %v7387 = vshrl.u32 %v7386, 7
      %v7388 = vsub.s32 3, %v7387
      %v7389 = vrot.slane %v7291, %v7388
      %v7390 = vlaneseq
      %v7391 = vshrl.u32 %v7390, 7
      %v7392 = vsub.s32 3, %v7391
      %v7393 = vrot.slane %v7292, %v7392
      %v7394 = vlaneseq
      %v7395 = vshrl.u32 %v7394, 7
      %v7396 = vsub.s32 3, %v7395
      %v7397 = vrot.slane %v7293, %v7396
      %v7398 = vmul.f32 %v7380, %v7385
      %v7399 = vmul.f32 %v7380, %v7389
      %v7400 = vmul.f32 %v7380, %v7393
      %v7401 = vmul.f32 %v7380, %v7397
      %v7402 = vadd.f32 %v7374, %v7398
      %v7403 = vadd.f32 %v7375, %v7399
      %v7404 = vadd.f32 %v7376, %v7400
      %v7405 = vadd.f32 %v7377, %v7401
      %v7406 = vmul.f32 %v5212, %v4018
      %v7407 = vmul.f32 %v5211, %v4022
      %v7408 = vmul.f32 %v5210, %v4026
      %v7409 = vmul.f32 %v5213, %v4030
      %7410 = vset.pattern.permute.xlu0 100
      %7411 = vperm.xlu0 %7410, %v4304
      %v7412 = vpop.permute.xlu0 %7411
      %v7414 = vlaneseq
      %v7415 = vshrl.u32 %v7414, 7
      %v7416 = vsub.s32 0, %v7415
      %v7417 = vrot.slane %v7406, %v7416
      %v7418 = vlaneseq
      %v7419 = vshrl.u32 %v7418, 7
      %v7420 = vsub.s32 0, %v7419
      %v7421 = vrot.slane %v7407, %v7420
      %v7422 = vlaneseq
      %v7423 = vshrl.u32 %v7422, 7
      %v7424 = vsub.s32 0, %v7423
      %v7425 = vrot.slane %v7408, %v7424
      %v7426 = vlaneseq
      %v7427 = vshrl.u32 %v7426, 7
      %v7428 = vsub.s32 0, %v7427
      %v7429 = vrot.slane %v7409, %v7428
      %v7430 = vmul.f32 %v7412, %v7417
      %v7431 = vmul.f32 %v7412, %v7421
      %v7432 = vmul.f32 %v7412, %v7425
      %v7433 = vmul.f32 %v7412, %v7429
      %v7434 = vadd.f32 %v7402, %v7430
      %v7435 = vadd.f32 %v7403, %v7431
      %v7436 = vadd.f32 %v7404, %v7432
      %v7437 = vadd.f32 %v7405, %v7433
      %7438 = vset.pattern.permute.xlu0 101
      %7439 = vperm.xlu0 %7438, %v4304
      %v7440 = vpop.permute.xlu0 %7439
      %v7442 = vlaneseq
      %v7443 = vshrl.u32 %v7442, 7
      %v7444 = vsub.s32 1, %v7443
      %v7445 = vrot.slane %v7406, %v7444
      %v7446 = vlaneseq
      %v7447 = vshrl.u32 %v7446, 7
      %v7448 = vsub.s32 1, %v7447
      %v7449 = vrot.slane %v7407, %v7448
      %v7450 = vlaneseq
      %v7451 = vshrl.u32 %v7450, 7
      %v7452 = vsub.s32 1, %v7451
      %v7453 = vrot.slane %v7408, %v7452
      %v7454 = vlaneseq
      %v7455 = vshrl.u32 %v7454, 7
      %v7456 = vsub.s32 1, %v7455
      %v7457 = vrot.slane %v7409, %v7456
      %v7458 = vmul.f32 %v7440, %v7445
      %v7459 = vmul.f32 %v7440, %v7449
      %v7460 = vmul.f32 %v7440, %v7453
      %v7461 = vmul.f32 %v7440, %v7457
      %v7462 = vadd.f32 %v7434, %v7458
      %v7463 = vadd.f32 %v7435, %v7459
      %v7464 = vadd.f32 %v7436, %v7460
      %v7465 = vadd.f32 %v7437, %v7461
      %7466 = vset.pattern.permute.xlu0 102
      %7467 = vperm.xlu0 %7466, %v4304
      %v7468 = vpop.permute.xlu0 %7467
      %v7470 = vlaneseq
      %v7471 = vshrl.u32 %v7470, 7
      %v7472 = vsub.s32 2, %v7471
      %v7473 = vrot.slane %v7406, %v7472
      %v7474 = vlaneseq
      %v7475 = vshrl.u32 %v7474, 7
      %v7476 = vsub.s32 2, %v7475
      %v7477 = vrot.slane %v7407, %v7476
      %v7478 = vlaneseq
      %v7479 = vshrl.u32 %v7478, 7
      %v7480 = vsub.s32 2, %v7479
      %v7481 = vrot.slane %v7408, %v7480
      %v7482 = vlaneseq
      %v7483 = vshrl.u32 %v7482, 7
      %v7484 = vsub.s32 2, %v7483
      %v7485 = vrot.slane %v7409, %v7484
      %v7486 = vmul.f32 %v7468, %v7473
      %v7487 = vmul.f32 %v7468, %v7477
      %v7488 = vmul.f32 %v7468, %v7481
      %v7489 = vmul.f32 %v7468, %v7485
      %v7490 = vadd.f32 %v7462, %v7486
      %v7491 = vadd.f32 %v7463, %v7487
      %v7492 = vadd.f32 %v7464, %v7488
      %v7493 = vadd.f32 %v7465, %v7489
      %7494 = vset.pattern.permute.xlu0 103
      %7495 = vperm.xlu0 %7494, %v4304
      %v7496 = vpop.permute.xlu0 %7495
      %v7498 = vlaneseq
      %v7499 = vshrl.u32 %v7498, 7
      %v7500 = vsub.s32 3, %v7499
      %v7501 = vrot.slane %v7406, %v7500
      %v7502 = vlaneseq
      %v7503 = vshrl.u32 %v7502, 7
      %v7504 = vsub.s32 3, %v7503
      %v7505 = vrot.slane %v7407, %v7504
      %v7506 = vlaneseq
      %v7507 = vshrl.u32 %v7506, 7
      %v7508 = vsub.s32 3, %v7507
      %v7509 = vrot.slane %v7408, %v7508
      %v7510 = vlaneseq
      %v7511 = vshrl.u32 %v7510, 7
      %v7512 = vsub.s32 3, %v7511
      %v7513 = vrot.slane %v7409, %v7512
      %v7514 = vmul.f32 %v7496, %v7501
      %v7515 = vmul.f32 %v7496, %v7505
      %v7516 = vmul.f32 %v7496, %v7509
      %v7517 = vmul.f32 %v7496, %v7513
      %v7518 = vadd.f32 %v7490, %v7514
      %v7519 = vadd.f32 %v7491, %v7515
      %v7520 = vadd.f32 %v7492, %v7516
      %v7521 = vadd.f32 %v7493, %v7517
      %v7522 = vmul.f32 %v5340, %v4157
      %v7523 = vmul.f32 %v5339, %v4161
      %v7524 = vmul.f32 %v5338, %v4165
      %v7525 = vmul.f32 %v5341, %v4169
      %7526 = vset.pattern.permute.xlu0 104
      %7527 = vperm.xlu0 %7526, %v4304
      %v7528 = vpop.permute.xlu0 %7527
      %v7530 = vlaneseq
      %v7531 = vshrl.u32 %v7530, 7
      %v7532 = vsub.s32 0, %v7531
      %v7533 = vrot.slane %v7522, %v7532
      %v7534 = vlaneseq
      %v7535 = vshrl.u32 %v7534, 7
      %v7536 = vsub.s32 0, %v7535
      %v7537 = vrot.slane %v7523, %v7536
      %v7538 = vlaneseq
      %v7539 = vshrl.u32 %v7538, 7
      %v7540 = vsub.s32 0, %v7539
      %v7541 = vrot.slane %v7524, %v7540
      %v7542 = vlaneseq
      %v7543 = vshrl.u32 %v7542, 7
      %v7544 = vsub.s32 0, %v7543
      %v7545 = vrot.slane %v7525, %v7544
      %v7546 = vmul.f32 %v7528, %v7533
      %v7547 = vmul.f32 %v7528, %v7537
      %v7548 = vmul.f32 %v7528, %v7541
      %v7549 = vmul.f32 %v7528, %v7545
      %v7550 = vadd.f32 %v7518, %v7546
      %v7551 = vadd.f32 %v7519, %v7547
      %v7552 = vadd.f32 %v7520, %v7548
      %v7553 = vadd.f32 %v7521, %v7549
      %7554 = vset.pattern.permute.xlu0 105
      %7555 = vperm.xlu0 %7554, %v4304
      %v7556 = vpop.permute.xlu0 %7555
      %v7558 = vlaneseq
      %v7559 = vshrl.u32 %v7558, 7
      %v7560 = vsub.s32 1, %v7559
      %v7561 = vrot.slane %v7522, %v7560
      %v7562 = vlaneseq
      %v7563 = vshrl.u32 %v7562, 7
      %v7564 = vsub.s32 1, %v7563
      %v7565 = vrot.slane %v7523, %v7564
      %v7566 = vlaneseq
      %v7567 = vshrl.u32 %v7566, 7
      %v7568 = vsub.s32 1, %v7567
      %v7569 = vrot.slane %v7524, %v7568
      %v7570 = vlaneseq
      %v7571 = vshrl.u32 %v7570, 7
      %v7572 = vsub.s32 1, %v7571
      %v7573 = vrot.slane %v7525, %v7572
      %v7574 = vmul.f32 %v7556, %v7561
      %v7575 = vmul.f32 %v7556, %v7565
      %v7576 = vmul.f32 %v7556, %v7569
      %v7577 = vmul.f32 %v7556, %v7573
      %v7578 = vadd.f32 %v7550, %v7574
      %v7579 = vadd.f32 %v7551, %v7575
      %v7580 = vadd.f32 %v7552, %v7576
      %v7581 = vadd.f32 %v7553, %v7577
      %7582 = vset.pattern.permute.xlu0 106
      %7583 = vperm.xlu0 %7582, %v4304
      %v7584 = vpop.permute.xlu0 %7583
      %v7586 = vlaneseq
      %v7587 = vshrl.u32 %v7586, 7
      %v7588 = vsub.s32 2, %v7587
      %v7589 = vrot.slane %v7522, %v7588
      %v7590 = vlaneseq
      %v7591 = vshrl.u32 %v7590, 7
      %v7592 = vsub.s32 2, %v7591
      %v7593 = vrot.slane %v7523, %v7592
      %v7594 = vlaneseq
      %v7595 = vshrl.u32 %v7594, 7
      %v7596 = vsub.s32 2, %v7595
      %v7597 = vrot.slane %v7524, %v7596
      %v7598 = vlaneseq
      %v7599 = vshrl.u32 %v7598, 7
      %v7600 = vsub.s32 2, %v7599
      %v7601 = vrot.slane %v7525, %v7600
      %v7602 = vmul.f32 %v7584, %v7589
      %v7603 = vmul.f32 %v7584, %v7593
      %v7604 = vmul.f32 %v7584, %v7597
      %v7605 = vmul.f32 %v7584, %v7601
      %v7606 = vadd.f32 %v7578, %v7602
      %v7607 = vadd.f32 %v7579, %v7603
      %v7608 = vadd.f32 %v7580, %v7604
      %v7609 = vadd.f32 %v7581, %v7605
      %7610 = vset.pattern.permute.xlu0 107
      %7611 = vperm.xlu0 %7610, %v4304
      %v7612 = vpop.permute.xlu0 %7611
      %v7614 = vlaneseq
      %v7615 = vshrl.u32 %v7614, 7
      %v7616 = vsub.s32 3, %v7615
      %v7617 = vrot.slane %v7522, %v7616
      %v7618 = vlaneseq
      %v7619 = vshrl.u32 %v7618, 7
      %v7620 = vsub.s32 3, %v7619
      %v7621 = vrot.slane %v7523, %v7620
      %v7622 = vlaneseq
      %v7623 = vshrl.u32 %v7622, 7
      %v7624 = vsub.s32 3, %v7623
      %v7625 = vrot.slane %v7524, %v7624
      %v7626 = vlaneseq
      %v7627 = vshrl.u32 %v7626, 7
      %v7628 = vsub.s32 3, %v7627
      %v7629 = vrot.slane %v7525, %v7628
      %v7630 = vmul.f32 %v7612, %v7617
      %v7631 = vmul.f32 %v7612, %v7621
      %v7632 = vmul.f32 %v7612, %v7625
      %v7633 = vmul.f32 %v7612, %v7629
      %v7634 = vadd.f32 %v7606, %v7630
      %v7635 = vadd.f32 %v7607, %v7631
      %v7636 = vadd.f32 %v7608, %v7632
      %v7637 = vadd.f32 %v7609, %v7633
      %v7638 = vld [vmem:[%s4] sm:$0xf]
      %7640 = vset.pattern.permute.xlu0 0
      %7641 = vperm.xlu0 %7640, %v7638
      %v7642 = vpop.permute.xlu0 %7641
      %v7644 = vadd.f32 %v7634, %v7642
      %v7645 = vadd.f32 %v7635, %v7642
      %v7646 = vadd.f32 %v7636, %v7642
      %v7647 = vadd.f32 %v7637, %v7642
      %v7648 = vadd.f32 %v7644, %v252
      %v7649 = vadd.f32 %v7645, %v257
      %v7650 = vadd.f32 %v7646, %v253
      %v7651 = vadd.f32 %v7647, %v258
      %v7652 = vmax.f32 %v7648, 0.0
      %v7653 = vmax.f32 %v7649, 0.0
      %v7654 = vmax.f32 %v7650, 0.0
      %v7655 = vmax.f32 %v7651, 0.0
      %v7660 = vcombine.low %v7652, %v7653
      %v7661 = vcombine.low %v7654, %v7655
      %7664 = vst [vmem:[%s251] sm:$0xff] %v7660
      %7665 = vst [vmem:[%s251 + $0x8] sm:$0xff] %v7661
      %p7666 = scmp.lt.s32.totalorder %s17, 1
      %s7667 = scalar_select %p7666, %s17, 1
      %s7668 = smul.addr %s7667, 4
      %s7669 = smul.addr %s7668, 4
      %s7670 = scalar_lea.vmem %s6, %s7669
      // Predicated region
      $region45: #{simple_rb_forward.1} parent=43 // pred_check
        %p7671 = pneg %p166
      $region46: #{simple_rb_forward.1} parent=43 // pred_check_branch
        %7673 = sbr.rel (%p7671) target = $region48
      $region47: #{simple_rb_forward.1} parent=43 // pred_region
        _
      $region48: #{simple_rb_forward.1} parent=43 // pred_fallthru
        _
    $region44: #{simple_rb_forward.1} parent=5 // pred_fallthru
      _
    %p7674 = scmp.le.s32.totalorder 2, %s12
    // Predicated region
    $region49: #{simple_rb_forward.1} parent=5 // pred_check
      %p7675 = pneg %p7674
    $region50: #{simple_rb_forward.1} parent=5 // pred_check_branch
      %7677 = sbr.rel (%p7675) target = $region52
    $region51: #{simple_rb_forward.1} parent=5 // pred_region
      %s7678 = ssub.s32 %s12, 2
      // Predicated region
      $region53: #{simple_rb_forward.1} parent=51 // pred_check
        %p7679 = pneg %p172
      $region54: #{simple_rb_forward.1} parent=51 // pred_check_branch
        %7681 = sbr.rel (%p7679) target = $region56
      $region55: #{simple_rb_forward.1} parent=51 // pred_region
        %p7682 = scmp.lt.s32.totalorder %s18, 1
        %s7683 = scalar_select %p7682, %s18, 1
        %s7684 = smul.addr %s7683, 4
        %s7685 = smul.addr %s7684, 4
        %s7686 = scalar_lea.vmem %s6, %s7685
      $region56: #{simple_rb_forward.1} parent=51 // pred_fallthru
        _
    $region52: #{simple_rb_forward.1} parent=5 // pred_fallthru
      _
  $region6: #{simple_rb_forward.1} parent=0 // loop_footer
    %s16 = sadd.s32 1, %s12
  $region7: #{simple_rb_forward.1} parent=0 // loop_footer_branch
    %11 = sbr.rel target = $region3
  $region8: #{simple_rb_forward.1} parent=0 // loop_exit
    _

</llo_original>
